<compile_context>
chip_gen: v7x
topology: tpu7x:2x2x1
jax: 0.10.0
libtpu: 0.0.40
codegen_flags: <defaults>
</compile_context>

<pallas_src>
import functools

import jax
import jax.numpy as jnp
from jax.experimental import pallas as pl
from jax.experimental.pallas import tpu as pltpu

LANE = 128
# bf16 operands: MXU-native on v5e/v6e/v7x, halves weight/activation bytes.
# Accumulation and the epilogue stay f32.
MATMUL_DTYPE = jnp.bfloat16


def _round_up(x, m):
    return (x + m - 1) // m * m


def _geom(cfg):
    """Static geometry shared by the wrapper and the kernel."""
    N, B, Cin, planes, s1, Ho, Wo, CP, flags = cfg
    PW = Wo + 2                        # padded row width of the flat layout
    PH = Ho + 2
    base = PW + 1                      # flat index of the first interior pixel
    SPAN = _round_up(Ho * PW, 8)       # rows computed per conv per image
    S0 = _round_up(base, 8)            # storage row of span start in act_ref
    AROWS_X = _round_up(2 * base + SPAN, 8)   # rows of each input phase buf
    AROWS_A = _round_up(S0 + base + SPAN, 8)  # rows of the activation scratch
    return PW, PH, base, SPAN, S0, AROWS_X, AROWS_A


# ----------------------------------------------------------------------------
# Fused whole-layer Pallas kernel
# ----------------------------------------------------------------------------
def _build_layer_kernel(cfg):
    N, B, Cin, planes, s1, Ho, Wo, CP, flags = cfg
    PW, PH, base, SPAN, S0, AROWS_X, AROWS_A = _geom(cfg)
    n_blocks = len(flags)
    last = n_blocks - 1

    def kernel(*refs):
        x_ref, mask_ref = refs[0], refs[1]        # phases, interior mask
        out_ref = refs[-3]                        # [B, SPAN, CP] f32
        act_ref, col_ref = refs[-2], refs[-1]     # VMEM scratches (bf16)
        prefs = refs[2:-3]                        # packed weights / biases

        mask = mask_ref[...]                      # [B*SPAN, 1] f32

        # Zero ONLY the halo rows of the activation scratch; the span rows are
        # fully rewritten by every conv before being read.  Not gated on
        # program_id: with "parallel" semantics each core needs its own init.
        act_ref[:, 0:S0, :] = jnp.zeros((B, S0, CP), MATMUL_DTYPE)
        act_ref[:, S0 + SPAN:AROWS_A, :] = jnp.zeros(
            (B, AROWS_A - S0 - SPAN, CP), MATMUL_DTYPE)

        def fill_col_from_x():
            # First conv (possibly strided): tap (i,j) = shifted window of
            # phase (i%s1, j%s1) at constant flat offset (i//s1)*PW + (j//s1).
            for t in range(9):
                i, j = divmod(t, 3)
                k = (i % s1) * s1 + (j % s1)
                r0 = (i // s1) * PW + (j // s1)
                for b in range(B):
                    col_ref[b * SPAN:(b + 1) * SPAN, t * CP:(t + 1) * CP] = (
                        x_ref[b, k, r0:r0 + SPAN, :])

        def fill_col_from_act():
            # Stride-1 conv: tap (i,j) = window at constant offset
            # (i-1)*PW + (j-1) from the span start S0.
            for t in range(9):
                i, j = divmod(t, 3)
                r0 = S0 + (i - 1) * PW + (j - 1)
                for b in range(B):
                    col_ref[b * SPAN:(b + 1) * SPAN, t * CP:(t + 1) * CP] = (
                        act_ref[b, r0:r0 + SPAN, :])

        def store_act(v):
            for b in range(B):
                act_ref[b, S0:S0 + SPAN, :] = (
                    v[b * SPAN:(b + 1) * SPAN, :].astype(MATMUL_DTYPE))

        idx = 0
        for bi in range(n_blocks):
            has_sc = flags[bi]
            w1, b1, w2, b2 = (prefs[idx], prefs[idx + 1],
                              prefs[idx + 2], prefs[idx + 3])
            idx += 4
            if has_sc:
                ws, bs = prefs[idx], prefs[idx + 1]
                idx += 2

            # ---- conv1: build im2col slab, one MXU matmul (K = 9*CP) ----
            if bi == 0:
                fill_col_from_x()
            else:
                fill_col_from_act()

            # Shortcut input == center-tap (1,1) chunk of conv1's im2col.
            sc_in = col_ref[:, 4 * CP:5 * CP]
            if has_sc:
                sc = jnp.dot(sc_in, ws[...],
                             preferred_element_type=jnp.float32) + bs[...]
            else:
                sc = sc_in.astype(jnp.float32)

            h = jnp.dot(col_ref[...], w1[...],
                        preferred_element_type=jnp.float32)
            h = jnp.maximum(h + b1[...], 0.0) * mask      # bn1 bias+relu+mask
            store_act(h)

            # ---- conv2 + residual + relu ----
            fill_col_from_act()
            y = jnp.dot(col_ref[...], w2[...],
                        preferred_element_type=jnp.float32)
            y = jnp.maximum(y + b2[...] + sc, 0.0) * mask

            if bi == last:
                out_ref[...] = y.reshape(B, SPAN, CP).astype(jnp.float32)
            else:
                store_act(y)

    return kernel


@functools.partial(jax.jit, static_argnames=("cfg",))
def basic_layer_forward(x_nchw, packed_params, cfg):
    """BasicLayer.forward.  x_nchw: [N, Cin, H, W] -> [N, planes, Ho, Wo]."""
    N, B, Cin, planes, s1, Ho, Wo, CP, flags = cfg
    PW, PH, base, SPAN, S0, AROWS_X, AROWS_A = _geom(cfg)
    assert N % B == 0
    grid = (N // B,)

    # NCHW -> NHWC, spatial "same" pad, channel pad to the lane width.
    x = jnp.transpose(x_nchw, (0, 2, 3, 1))
    x = jnp.pad(x, ((0, 0), (1, 1), (1, 1), (0, CP - Cin)))

    # Stride-phase decomposition, each phase zero-padded to [PH, PW] then
    # flattened row-major and padded to AROWS_X rows (no im2col in HBM).
    phases = []
    for a in range(s1):
        for b in range(s1):
            ph = x[:, a::s1, b::s1, :][:, :PH, :PW, :]
            ph = jnp.pad(ph, ((0, 0), (0, PH - ph.shape[1]),
                              (0, PW - ph.shape[2]), (0, 0)))
            phases.append(ph)
    xp = jnp.stack(phases, axis=1).reshape(N, s1 * s1, PH * PW, CP)
    xp = jnp.pad(xp, ((0, 0), (0, 0), (0, AROWS_X - PH * PW), (0, 0)))
    xp = xp.astype(MATMUL_DTYPE)

    # Interior mask over the span (zeroes the junk border-column positions).
    r = jnp.arange(SPAN, dtype=jnp.int32)
    p = base + r
    interior = ((p // PW >= 1) & (p // PW <= Ho) &
                (p % PW >= 1) & (p % PW <= Wo))
    mask = jnp.tile(interior.astype(jnp.float32)[:, None], (B, 1))

    in_specs = [
        pl.BlockSpec((B, s1 * s1, AROWS_X, CP), lambda n: (n, 0, 0, 0)),
        pl.BlockSpec((B * SPAN, 1), lambda n: (0, 0)),
    ]
    for f in flags:
        in_specs += [
            pl.BlockSpec((9 * CP, CP), lambda n: (0, 0)),    # w1 (BN folded)
            pl.BlockSpec((1, CP), lambda n: (0, 0)),         # b1
            pl.BlockSpec((9 * CP, CP), lambda n: (0, 0)),    # w2 (BN folded)
            pl.BlockSpec((1, CP), lambda n: (0, 0)),         # b2
        ]
        if f:
            in_specs += [
                pl.BlockSpec((CP, CP), lambda n: (0, 0)),    # ws (BN folded)
                pl.BlockSpec((1, CP), lambda n: (0, 0)),     # bs
            ]

    out = pl.pallas_call(
        _build_layer_kernel(cfg),
        out_shape=jax.ShapeDtypeStruct((N, SPAN, CP), jnp.float32),
        grid=grid,
        in_specs=in_specs,
        out_specs=pl.BlockSpec((B, SPAN, CP), lambda n: (n, 0, 0)),
        scratch_shapes=[
            pltpu.VMEM((B, AROWS_A, CP), MATMUL_DTYPE),      # activation (flat)
            pltpu.VMEM((B * SPAN, 9 * CP), MATMUL_DTYPE),    # im2col slab
        ],
        compiler_params=pltpu.CompilerParams(
            dimension_semantics=("parallel",)),
    )(xp, mask, *packed_params)

    # Span row r corresponds to output pixel (r // PW, r % PW) for cols < Wo.
    out = out[:, :Ho * PW, :].reshape(N, Ho, PW, CP)[:, :, :Wo, :planes]
    return jnp.transpose(out, (0, 3, 1, 2))                  # NHWC -> NCHW


# ----------------------------------------------------------------------------
# Parameter packing (done ONCE, outside the forward): fold BN, pad channels.
# ----------------------------------------------------------------------------
def fold_bn(gamma, beta, mean, var, eps=1e-5):
    scale = gamma / jnp.sqrt(var + eps)
    bias = beta - mean * scale
    return scale, bias


def _pack_conv3x3(w, scale, CP):
    """PyTorch [Cout, Cin, 3, 3] -> [9*CP, CP] (tap-major) with BN folded."""
    Cout, Cin, kh, kw = w.shape
    wm = jnp.transpose(w, (2, 3, 1, 0)).reshape(kh * kw, Cin, Cout)
    wm = wm * scale[None, None, :]
    out = jnp.zeros((kh * kw, CP, CP), jnp.float32).at[:, :Cin, :Cout].set(wm)
    return out.reshape(kh * kw * CP, CP).astype(MATMUL_DTYPE)


def _pack_conv1x1(w, scale, CP):
    Cout, Cin = w.shape[0], w.shape[1]
    wm = w[:, :, 0, 0].T * scale[None, :]
    out = jnp.zeros((CP, CP), jnp.float32).at[:Cin, :Cout].set(wm)
    return out.astype(MATMUL_DTYPE)


def _pack_bias(b, CP):
    return jnp.zeros((1, CP), jnp.float32).at[0, :b.shape[0]].set(b)


def pack_layer_params(layer_params, CP):
    arrays, flags = [], []
    for p in layer_params:
        s1_, b1_ = fold_bn(*p["bn1"])
        s2_, b2_ = fold_bn(*p["bn2"])
        arrays += [_pack_conv3x3(p["w1"], s1_, CP), _pack_bias(b1_, CP),
                   _pack_conv3x3(p["w2"], s2_, CP), _pack_bias(b2_, CP)]
        flags.append(bool(p["has_shortcut"]))
        if p["has_shortcut"]:
            ss_, bs_ = fold_bn(*p["bns"])
            arrays += [_pack_conv1x1(p["ws"], ss_, CP), _pack_bias(bs_, CP)]
    return tuple(arrays), tuple(flags)


# ----------------------------------------------------------------------------
# Random parameter construction (mirrors the PyTorch module init shapes)
# ----------------------------------------------------------------------------
def make_bn_params(key, c):
    k1, k2, k3, k4 = jax.random.split(key, 4)
    gamma = 1.0 + 0.1 * jax.random.normal(k1, (c,), jnp.float32)
    beta = 0.1 * jax.random.normal(k2, (c,), jnp.float32)
    mean = 0.1 * jax.random.normal(k3, (c,), jnp.float32)
    var = 1.0 + 0.1 * jax.random.uniform(k4, (c,), jnp.float32)
    return gamma, beta, mean, var


def make_block_params(key, in_planes, planes, stride):
    keys = jax.random.split(key, 6)
    p = {}
    p["w1"] = 0.1 * jax.random.normal(keys[0], (planes, in_planes, 3, 3), jnp.float32)
    p["bn1"] = make_bn_params(keys[1], planes)
    p["w2"] = 0.1 * jax.random.normal(keys[2], (planes, planes, 3, 3), jnp.float32)
    p["bn2"] = make_bn_params(keys[3], planes)
    p["stride"] = stride
    p["has_shortcut"] = (stride != 1) or (in_planes != planes)
    if p["has_shortcut"]:
        p["ws"] = 0.1 * jax.random.normal(keys[4], (planes, in_planes, 1, 1), jnp.float32)
        p["bns"] = make_bn_params(keys[5], planes)
    return p


# ----------------------------------------------------------------------------
# Pure-JAX reference (lax.conv) for correctness check.  NOT jitted: stride /
# has_shortcut live in the param dicts and must stay Python values.
# ----------------------------------------------------------------------------
def _ref_conv(x, w, stride, padding):
    w_hwio = jnp.transpose(w, (2, 3, 1, 0))
    return jax.lax.conv_general_dilated(
        x, w_hwio, window_strides=(stride, stride),
        padding=[(padding, padding), (padding, padding)],
        dimension_numbers=("NHWC", "HWIO", "NHWC"))


def _ref_block(x, p):
    s1, b1 = fold_bn(*p["bn1"])
    out = jnp.maximum(_ref_conv(x, p["w1"], p["stride"], 1) * s1 + b1, 0.0)
    s2, b2 = fold_bn(*p["bn2"])
    out = _ref_conv(out, p["w2"], 1, 1) * s2 + b2
    if p["has_shortcut"]:
        ss, bs = fold_bn(*p["bns"])
        sc = _ref_conv(x, p["ws"], p["stride"], 0) * ss + bs
    else:
        sc = x
    return jnp.maximum(out + sc, 0.0)


def _ref_layer(x_nchw, layer_params):
    x = jnp.transpose(x_nchw, (0, 2, 3, 1))
    for p in layer_params:
        x = _ref_block(x, p)
    return jnp.transpose(x, (0, 3, 1, 2))


# ----------------------------------------------------------------------------
if __name__ == "__main__":
    key = jax.random.PRNGKey(0)
    kx, kp = jax.random.split(key)

    # BasicLayer(resnet(in_planes=4), BasicBlock, planes=8, num_blocks=2, stride=2)
    N, Cin, H, W = 2, 4, 16, 16
    planes, num_blocks, stride = 8, 2, 2

    x = jax.random.normal(kx, (N, Cin, H, W), jnp.float32)   # NCHW like PyTorch

    strides = [stride] + [1] * (num_blocks - 1)
    layer_params, in_planes = [], Cin
    for i, s in enumerate(strides):
        layer_params.append(make_block_params(jax.random.fold_in(kp, i),
                                              in_planes, planes, s))
        in_planes = planes

    CP = _round_up(max(Cin, planes), LANE)
    packed, flags = pack_layer_params(layer_params, CP)      # done once
    Ho = (H + 2 - 3) // stride + 1
    Wo = (W + 2 - 3) // stride + 1
    # B_tile: images per grid step.  Keep >=2 grid steps so v7x megacore
    # splits the batch; raise it for large N to pack more rows per matmul.
    B_tile = 1
    cfg = (N, B_tile, Cin, planes, stride, Ho, Wo, CP, flags)

    out = jax.block_until_ready(basic_layer_forward(x, packed, cfg))
    ref = jax.block_until_ready(_ref_layer(x, layer_params))

    assert out.shape == (N, planes, H // stride, W // stride), out.shape
    tol = 1e-4 if MATMUL_DTYPE == jnp.float32 else 3e-2
    err = float(jnp.max(jnp.abs(out - ref)))
    assert jnp.allclose(out, ref, rtol=tol, atol=tol), err

    print("KERNEL_OK")
</pallas_src>

<mosaic_0001>
module attributes {stable_mosaic.version = 11 : i64} {
  func.func @kernel(%arg0: i32, %arg1: memref<1x4x104x128xbf16, #tpu.memory_space<vmem>>, %arg2: memref<80x1xf32, #tpu.memory_space<vmem>>, %arg3: memref<1152x128xbf16, #tpu.memory_space<vmem>>, %arg4: memref<1x128xf32, #tpu.memory_space<vmem>>, %arg5: memref<1152x128xbf16, #tpu.memory_space<vmem>>, %arg6: memref<1x128xf32, #tpu.memory_space<vmem>>, %arg7: memref<128x128xbf16, #tpu.memory_space<vmem>>, %arg8: memref<1x128xf32, #tpu.memory_space<vmem>>, %arg9: memref<1152x128xbf16, #tpu.memory_space<vmem>>, %arg10: memref<1x128xf32, #tpu.memory_space<vmem>>, %arg11: memref<1152x128xbf16, #tpu.memory_space<vmem>>, %arg12: memref<1x128xf32, #tpu.memory_space<vmem>>, %arg13: memref<1x80x128xf32, #tpu.memory_space<vmem>>, %arg14: memref<1x112x128xbf16, #tpu.memory_space<vmem>>, %arg15: memref<80x1152xbf16, #tpu.memory_space<vmem>>) attributes {dimension_semantics = [#tpu.dimension_semantics<parallel>], iteration_bounds = array<i64: 2>, scalar_prefetch = 0 : i64, scratch_operands = 2 : i64, tpu.core_type = #tpu.core_type<tc>, window_params = [{transform_indices = @transform_0, window_bounds = array<i64: 1, 4, 104, 128>}, {pipeline_mode = #tpu.pipeline_mode<synchronous>, transform_indices = @transform_1, window_bounds = array<i64: 80, 1>}, {pipeline_mode = #tpu.pipeline_mode<synchronous>, transform_indices = @transform_2, window_bounds = array<i64: 1152, 128>}, {pipeline_mode = #tpu.pipeline_mode<synchronous>, transform_indices = @transform_3, window_bounds = array<i64: 1, 128>}, {pipeline_mode = #tpu.pipeline_mode<synchronous>, transform_indices = @transform_4, window_bounds = array<i64: 1152, 128>}, {pipeline_mode = #tpu.pipeline_mode<synchronous>, transform_indices = @transform_5, window_bounds = array<i64: 1, 128>}, {pipeline_mode = #tpu.pipeline_mode<synchronous>, transform_indices = @transform_6, window_bounds = array<i64: 128, 128>}, {pipeline_mode = #tpu.pipeline_mode<synchronous>, transform_indices = @transform_7, window_bounds = array<i64: 1, 128>}, {pipeline_mode = #tpu.pipeline_mode<synchronous>, transform_indices = @transform_8, window_bounds = array<i64: 1152, 128>}, {pipeline_mode = #tpu.pipeline_mode<synchronous>, transform_indices = @transform_9, window_bounds = array<i64: 1, 128>}, {pipeline_mode = #tpu.pipeline_mode<synchronous>, transform_indices = @transform_10, window_bounds = array<i64: 1152, 128>}, {pipeline_mode = #tpu.pipeline_mode<synchronous>, transform_indices = @transform_11, window_bounds = array<i64: 1, 128>}, {transform_indices = @transform_12, window_bounds = array<i64: 1, 80, 128>}]} {
    %c0 = arith.constant 0 : index
    %c0_0 = arith.constant 0 : index
    %0 = vector.load %arg2[%c0, %c0_0] : memref<80x1xf32, #tpu.memory_space<vmem>>, vector<80x1xf32>
    %cst = arith.constant 0.000000e+00 : bf16
    %1 = vector.broadcast %cst : bf16 to vector<1x16x128xbf16>
    %c0_1 = arith.constant 0 : index
    %c0_2 = arith.constant 0 : index
    %c0_3 = arith.constant 0 : index
    %2 = vector.load %arg14[%c0_1, %c0_2, %c0_3] : memref<1x112x128xbf16, #tpu.memory_space<vmem>>, vector<1x16x128xbf16>
    tpu.vector_store %arg14[%c0_1, %c0_2, %c0_3], %1 {strides = array<i32>} : memref<1x112x128xbf16, #tpu.memory_space<vmem>>, vector<1x16x128xbf16>,
    %cst_4 = arith.constant 0.000000e+00 : bf16
    %3 = vector.broadcast %cst_4 : bf16 to vector<1x16x128xbf16>
    %c0_5 = arith.constant 0 : index
    %c96 = arith.constant 96 : index
    %c0_6 = arith.constant 0 : index
    %4 = vector.load %arg14[%c0_5, %c96, %c0_6] : memref<1x112x128xbf16, #tpu.memory_space<vmem>>, vector<1x16x128xbf16>
    tpu.vector_store %arg14[%c0_5, %c96, %c0_6], %3 {strides = array<i32>} : memref<1x112x128xbf16, #tpu.memory_space<vmem>>, vector<1x16x128xbf16>,
    %c0_7 = arith.constant 0 : index
    %c0_8 = arith.constant 0 : index
    %c0_9 = arith.constant 0 : index
    %c0_10 = arith.constant 0 : index
    %5 = vector.load %arg1[%c0_7, %c0_8, %c0_9, %c0_10] : memref<1x4x104x128xbf16, #tpu.memory_space<vmem>>, vector<1x1x80x128xbf16>
    %6 = vector.shape_cast %5 : vector<1x1x80x128xbf16> to vector<80x128xbf16>
    %c0_11 = arith.constant 0 : index
    %c0_12 = arith.constant 0 : index
    %7 = vector.load %arg15[%c0_11, %c0_12] : memref<80x1152xbf16, #tpu.memory_space<vmem>>, vector<80x128xbf16>
    tpu.vector_store %arg15[%c0_11, %c0_12], %6 {strides = array<i32>} : memref<80x1152xbf16, #tpu.memory_space<vmem>>, vector<80x128xbf16>,
    %c0_13 = arith.constant 0 : index
    %c1 = arith.constant 1 : index
    %c0_14 = arith.constant 0 : index
    %c0_15 = arith.constant 0 : index
    %8 = vector.load %arg1[%c0_13, %c1, %c0_14, %c0_15] : memref<1x4x104x128xbf16, #tpu.memory_space<vmem>>, vector<1x1x80x128xbf16>
    %9 = vector.shape_cast %8 : vector<1x1x80x128xbf16> to vector<80x128xbf16>
    %c0_16 = arith.constant 0 : index
    %c128 = arith.constant 128 : index
    %10 = vector.load %arg15[%c0_16, %c128] : memref<80x1152xbf16, #tpu.memory_space<vmem>>, vector<80x128xbf16>
    tpu.vector_store %arg15[%c0_16, %c128], %9 {strides = array<i32>} : memref<80x1152xbf16, #tpu.memory_space<vmem>>, vector<80x128xbf16>,
    %c0_17 = arith.constant 0 : index
    %c0_18 = arith.constant 0 : index
    %c1_19 = arith.constant 1 : index
    %c0_20 = arith.constant 0 : index
    %11 = vector.load %arg1[%c0_17, %c0_18, %c1_19, %c0_20] : memref<1x4x104x128xbf16, #tpu.memory_space<vmem>>, vector<1x1x80x128xbf16>
    %12 = vector.shape_cast %11 : vector<1x1x80x128xbf16> to vector<80x128xbf16>
    %c0_21 = arith.constant 0 : index
    %c256 = arith.constant 256 : index
    %13 = vector.load %arg15[%c0_21, %c256] : memref<80x1152xbf16, #tpu.memory_space<vmem>>, vector<80x128xbf16>
    tpu.vector_store %arg15[%c0_21, %c256], %12 {strides = array<i32>} : memref<80x1152xbf16, #tpu.memory_space<vmem>>, vector<80x128xbf16>,
    %c0_22 = arith.constant 0 : index
    %c2 = arith.constant 2 : index
    %c0_23 = arith.constant 0 : index
    %c0_24 = arith.constant 0 : index
    %14 = vector.load %arg1[%c0_22, %c2, %c0_23, %c0_24] : memref<1x4x104x128xbf16, #tpu.memory_space<vmem>>, vector<1x1x80x128xbf16>
    %15 = vector.shape_cast %14 : vector<1x1x80x128xbf16> to vector<80x128xbf16>
    %c0_25 = arith.constant 0 : index
    %c384 = arith.constant 384 : index
    %16 = vector.load %arg15[%c0_25, %c384] : memref<80x1152xbf16, #tpu.memory_space<vmem>>, vector<80x128xbf16>
    tpu.vector_store %arg15[%c0_25, %c384], %15 {strides = array<i32>} : memref<80x1152xbf16, #tpu.memory_space<vmem>>, vector<80x128xbf16>,
    %c0_26 = arith.constant 0 : index
    %c3 = arith.constant 3 : index
    %c0_27 = arith.constant 0 : index
    %c0_28 = arith.constant 0 : index
    %17 = vector.load %arg1[%c0_26, %c3, %c0_27, %c0_28] : memref<1x4x104x128xbf16, #tpu.memory_space<vmem>>, vector<1x1x80x128xbf16>
    %18 = vector.shape_cast %17 : vector<1x1x80x128xbf16> to vector<80x128xbf16>
    %c0_29 = arith.constant 0 : index
    %c512 = arith.constant 512 : index
    %19 = vector.load %arg15[%c0_29, %c512] : memref<80x1152xbf16, #tpu.memory_space<vmem>>, vector<80x128xbf16>
    tpu.vector_store %arg15[%c0_29, %c512], %18 {strides = array<i32>} : memref<80x1152xbf16, #tpu.memory_space<vmem>>, vector<80x128xbf16>,
    %c0_30 = arith.constant 0 : index
    %c2_31 = arith.constant 2 : index
    %c1_32 = arith.constant 1 : index
    %c0_33 = arith.constant 0 : index
    %20 = vector.load %arg1[%c0_30, %c2_31, %c1_32, %c0_33] : memref<1x4x104x128xbf16, #tpu.memory_space<vmem>>, vector<1x1x80x128xbf16>
    %21 = vector.shape_cast %20 : vector<1x1x80x128xbf16> to vector<80x128xbf16>
    %c0_34 = arith.constant 0 : index
    %c640 = arith.constant 640 : index
    %22 = vector.load %arg15[%c0_34, %c640] : memref<80x1152xbf16, #tpu.memory_space<vmem>>, vector<80x128xbf16>
    tpu.vector_store %arg15[%c0_34, %c640], %21 {strides = array<i32>} : memref<80x1152xbf16, #tpu.memory_space<vmem>>, vector<80x128xbf16>,
    %c0_35 = arith.constant 0 : index
    %c0_36 = arith.constant 0 : index
    %c10 = arith.constant 10 : index
    %c0_37 = arith.constant 0 : index
    %23 = vector.load %arg1[%c0_35, %c0_36, %c10, %c0_37] : memref<1x4x104x128xbf16, #tpu.memory_space<vmem>>, vector<1x1x80x128xbf16>
    %24 = vector.shape_cast %23 : vector<1x1x80x128xbf16> to vector<80x128xbf16>
    %c0_38 = arith.constant 0 : index
    %c768 = arith.constant 768 : index
    %25 = vector.load %arg15[%c0_38, %c768] : memref<80x1152xbf16, #tpu.memory_space<vmem>>, vector<80x128xbf16>
    tpu.vector_store %arg15[%c0_38, %c768], %24 {strides = array<i32>} : memref<80x1152xbf16, #tpu.memory_space<vmem>>, vector<80x128xbf16>,
    %c0_39 = arith.constant 0 : index
    %c1_40 = arith.constant 1 : index
    %c10_41 = arith.constant 10 : index
    %c0_42 = arith.constant 0 : index
    %26 = vector.load %arg1[%c0_39, %c1_40, %c10_41, %c0_42] : memref<1x4x104x128xbf16, #tpu.memory_space<vmem>>, vector<1x1x80x128xbf16>
    %27 = vector.shape_cast %26 : vector<1x1x80x128xbf16> to vector<80x128xbf16>
    %c0_43 = arith.constant 0 : index
    %c896 = arith.constant 896 : index
    %28 = vector.load %arg15[%c0_43, %c896] : memref<80x1152xbf16, #tpu.memory_space<vmem>>, vector<80x128xbf16>
    tpu.vector_store %arg15[%c0_43, %c896], %27 {strides = array<i32>} : memref<80x1152xbf16, #tpu.memory_space<vmem>>, vector<80x128xbf16>,
    %c0_44 = arith.constant 0 : index
    %c0_45 = arith.constant 0 : index
    %c11 = arith.constant 11 : index
    %c0_46 = arith.constant 0 : index
    %29 = vector.load %arg1[%c0_44, %c0_45, %c11, %c0_46] : memref<1x4x104x128xbf16, #tpu.memory_space<vmem>>, vector<1x1x80x128xbf16>
    %30 = vector.shape_cast %29 : vector<1x1x80x128xbf16> to vector<80x128xbf16>
    %c0_47 = arith.constant 0 : index
    %c1024 = arith.constant 1024 : index
    %31 = vector.load %arg15[%c0_47, %c1024] : memref<80x1152xbf16, #tpu.memory_space<vmem>>, vector<80x128xbf16>
    tpu.vector_store %arg15[%c0_47, %c1024], %30 {strides = array<i32>} : memref<80x1152xbf16, #tpu.memory_space<vmem>>, vector<80x128xbf16>,
    %c0_48 = arith.constant 0 : index
    %c512_49 = arith.constant 512 : index
    %32 = vector.load %arg15[%c0_48, %c512_49] : memref<80x1152xbf16, #tpu.memory_space<vmem>>, vector<80x128xbf16>
    %c0_50 = arith.constant 0 : index
    %c0_51 = arith.constant 0 : index
    %33 = vector.load %arg7[%c0_50, %c0_51] : memref<128x128xbf16, #tpu.memory_space<vmem>>, vector<128x128xbf16>
    %cst_52 = arith.constant dense<0.000000e+00> : vector<80x128xf32>
    %34 = tpu.matmul %32, %33, %cst_52 {dimension_numbers = #tpu.dot_dimension_numbers<[1], [0], [0], [1], [0, 0, 1, 1], [], []>} : vector<80x128xbf16>, vector<128x128xbf16>, vector<80x128xf32> -> vector<80x128xf32>
    %c0_53 = arith.constant 0 : index
    %c0_54 = arith.constant 0 : index
    %35 = vector.load %arg8[%c0_53, %c0_54] : memref<1x128xf32, #tpu.memory_space<vmem>>, vector<1x128xf32>
    %36 = vector.broadcast %35 : vector<1x128xf32> to vector<80x128xf32>
    %37 = arith.addf %34, %36 : vector<80x128xf32>
    %c0_55 = arith.constant 0 : index
    %c0_56 = arith.constant 0 : index
    %38 = vector.load %arg15[%c0_55, %c0_56] : memref<80x1152xbf16, #tpu.memory_space<vmem>>, vector<80x1152xbf16>
    %c0_57 = arith.constant 0 : index
    %c0_58 = arith.constant 0 : index
    %39 = vector.load %arg3[%c0_57, %c0_58] : memref<1152x128xbf16, #tpu.memory_space<vmem>>, vector<1152x128xbf16>
    %cst_59 = arith.constant dense<0.000000e+00> : vector<80x128xf32>
    %40 = tpu.matmul %38, %39, %cst_59 {dimension_numbers = #tpu.dot_dimension_numbers<[1], [0], [0], [1], [0, 0, 1, 1], [], []>} : vector<80x1152xbf16>, vector<1152x128xbf16>, vector<80x128xf32> -> vector<80x128xf32>
    %c0_60 = arith.constant 0 : index
    %c0_61 = arith.constant 0 : index
    %41 = vector.load %arg4[%c0_60, %c0_61] : memref<1x128xf32, #tpu.memory_space<vmem>>, vector<1x128xf32>
    %42 = vector.broadcast %41 : vector<1x128xf32> to vector<80x128xf32>
    %43 = arith.addf %40, %42 : vector<80x128xf32>
    %cst_62 = arith.constant 0.000000e+00 : f32
    %44 = vector.broadcast %cst_62 : f32 to vector<80x128xf32>
    %45 = arith.maximumf %43, %44 : vector<80x128xf32>
    %46 = vector.broadcast %0 : vector<80x1xf32> to vector<80x128xf32>
    %47 = arith.mulf %45, %46 : vector<80x128xf32>
    %48 = arith.truncf %47 : vector<80x128xf32> to vector<80x128xbf16>
    %c0_63 = arith.constant 0 : index
    %c16 = arith.constant 16 : index
    %c0_64 = arith.constant 0 : index
    %49 = vector.load %arg14[%c0_63, %c16, %c0_64] : memref<1x112x128xbf16, #tpu.memory_space<vmem>>, vector<1x80x128xbf16>
    %50 = vector.shape_cast %49 : vector<1x80x128xbf16> to vector<80x128xbf16>
    %51 = vector.shape_cast %48 : vector<80x128xbf16> to vector<1x80x128xbf16>
    tpu.vector_store %arg14[%c0_63, %c16, %c0_64], %51 {strides = array<i32>} : memref<1x112x128xbf16, #tpu.memory_space<vmem>>, vector<1x80x128xbf16>,
    %c0_65 = arith.constant 0 : index
    %c5 = arith.constant 5 : index
    %c0_66 = arith.constant 0 : index
    %52 = vector.load %arg14[%c0_65, %c5, %c0_66] : memref<1x112x128xbf16, #tpu.memory_space<vmem>>, vector<1x80x128xbf16>
    %53 = vector.shape_cast %52 : vector<1x80x128xbf16> to vector<80x128xbf16>
    %c0_67 = arith.constant 0 : index
    %c0_68 = arith.constant 0 : index
    %54 = vector.load %arg15[%c0_67, %c0_68] : memref<80x1152xbf16, #tpu.memory_space<vmem>>, vector<80x128xbf16>
    tpu.vector_store %arg15[%c0_67, %c0_68], %53 {strides = array<i32>} : memref<80x1152xbf16, #tpu.memory_space<vmem>>, vector<80x128xbf16>,
    %c0_69 = arith.constant 0 : index
    %c6 = arith.constant 6 : index
    %c0_70 = arith.constant 0 : index
    %55 = vector.load %arg14[%c0_69, %c6, %c0_70] : memref<1x112x128xbf16, #tpu.memory_space<vmem>>, vector<1x80x128xbf16>
    %56 = vector.shape_cast %55 : vector<1x80x128xbf16> to vector<80x128xbf16>
    %c0_71 = arith.constant 0 : index
    %c128_72 = arith.constant 128 : index
    %57 = vector.load %arg15[%c0_71, %c128_72] : memref<80x1152xbf16, #tpu.memory_space<vmem>>, vector<80x128xbf16>
    tpu.vector_store %arg15[%c0_71, %c128_72], %56 {strides = array<i32>} : memref<80x1152xbf16, #tpu.memory_space<vmem>>, vector<80x128xbf16>,
    %c0_73 = arith.constant 0 : index
    %c7 = arith.constant 7 : index
    %c0_74 = arith.constant 0 : index
    %58 = vector.load %arg14[%c0_73, %c7, %c0_74] : memref<1x112x128xbf16, #tpu.memory_space<vmem>>, vector<1x80x128xbf16>
    %59 = vector.shape_cast %58 : vector<1x80x128xbf16> to vector<80x128xbf16>
    %c0_75 = arith.constant 0 : index
    %c256_76 = arith.constant 256 : index
    %60 = vector.load %arg15[%c0_75, %c256_76] : memref<80x1152xbf16, #tpu.memory_space<vmem>>, vector<80x128xbf16>
    tpu.vector_store %arg15[%c0_75, %c256_76], %59 {strides = array<i32>} : memref<80x1152xbf16, #tpu.memory_space<vmem>>, vector<80x128xbf16>,
    %c0_77 = arith.constant 0 : index
    %c15 = arith.constant 15 : index
    %c0_78 = arith.constant 0 : index
    %61 = vector.load %arg14[%c0_77, %c15, %c0_78] : memref<1x112x128xbf16, #tpu.memory_space<vmem>>, vector<1x80x128xbf16>
    %62 = vector.shape_cast %61 : vector<1x80x128xbf16> to vector<80x128xbf16>
    %c0_79 = arith.constant 0 : index
    %c384_80 = arith.constant 384 : index
    %63 = vector.load %arg15[%c0_79, %c384_80] : memref<80x1152xbf16, #tpu.memory_space<vmem>>, vector<80x128xbf16>
    tpu.vector_store %arg15[%c0_79, %c384_80], %62 {strides = array<i32>} : memref<80x1152xbf16, #tpu.memory_space<vmem>>, vector<80x128xbf16>,
    %c0_81 = arith.constant 0 : index
    %c16_82 = arith.constant 16 : index
    %c0_83 = arith.constant 0 : index
    %64 = vector.load %arg14[%c0_81, %c16_82, %c0_83] : memref<1x112x128xbf16, #tpu.memory_space<vmem>>, vector<1x80x128xbf16>
    %65 = vector.shape_cast %64 : vector<1x80x128xbf16> to vector<80x128xbf16>
    %c0_84 = arith.constant 0 : index
    %c512_85 = arith.constant 512 : index
    %66 = vector.load %arg15[%c0_84, %c512_85] : memref<80x1152xbf16, #tpu.memory_space<vmem>>, vector<80x128xbf16>
    tpu.vector_store %arg15[%c0_84, %c512_85], %65 {strides = array<i32>} : memref<80x1152xbf16, #tpu.memory_space<vmem>>, vector<80x128xbf16>,
    %c0_86 = arith.constant 0 : index
    %c17 = arith.constant 17 : index
    %c0_87 = arith.constant 0 : index
    %67 = vector.load %arg14[%c0_86, %c17, %c0_87] : memref<1x112x128xbf16, #tpu.memory_space<vmem>>, vector<1x80x128xbf16>
    %68 = vector.shape_cast %67 : vector<1x80x128xbf16> to vector<80x128xbf16>
    %c0_88 = arith.constant 0 : index
    %c640_89 = arith.constant 640 : index
    %69 = vector.load %arg15[%c0_88, %c640_89] : memref<80x1152xbf16, #tpu.memory_space<vmem>>, vector<80x128xbf16>
    tpu.vector_store %arg15[%c0_88, %c640_89], %68 {strides = array<i32>} : memref<80x1152xbf16, #tpu.memory_space<vmem>>, vector<80x128xbf16>,
    %c0_90 = arith.constant 0 : index
    %c25 = arith.constant 25 : index
    %c0_91 = arith.constant 0 : index
    %70 = vector.load %arg14[%c0_90, %c25, %c0_91] : memref<1x112x128xbf16, #tpu.memory_space<vmem>>, vector<1x80x128xbf16>
    %71 = vector.shape_cast %70 : vector<1x80x128xbf16> to vector<80x128xbf16>
    %c0_92 = arith.constant 0 : index
    %c768_93 = arith.constant 768 : index
    %72 = vector.load %arg15[%c0_92, %c768_93] : memref<80x1152xbf16, #tpu.memory_space<vmem>>, vector<80x128xbf16>
    tpu.vector_store %arg15[%c0_92, %c768_93], %71 {strides = array<i32>} : memref<80x1152xbf16, #tpu.memory_space<vmem>>, vector<80x128xbf16>,
    %c0_94 = arith.constant 0 : index
    %c26 = arith.constant 26 : index
    %c0_95 = arith.constant 0 : index
    %73 = vector.load %arg14[%c0_94, %c26, %c0_95] : memref<1x112x128xbf16, #tpu.memory_space<vmem>>, vector<1x80x128xbf16>
    %74 = vector.shape_cast %73 : vector<1x80x128xbf16> to vector<80x128xbf16>
    %c0_96 = arith.constant 0 : index
    %c896_97 = arith.constant 896 : index
    %75 = vector.load %arg15[%c0_96, %c896_97] : memref<80x1152xbf16, #tpu.memory_space<vmem>>, vector<80x128xbf16>
    tpu.vector_store %arg15[%c0_96, %c896_97], %74 {strides = array<i32>} : memref<80x1152xbf16, #tpu.memory_space<vmem>>, vector<80x128xbf16>,
    %c0_98 = arith.constant 0 : index
    %c27 = arith.constant 27 : index
    %c0_99 = arith.constant 0 : index
    %76 = vector.load %arg14[%c0_98, %c27, %c0_99] : memref<1x112x128xbf16, #tpu.memory_space<vmem>>, vector<1x80x128xbf16>
    %77 = vector.shape_cast %76 : vector<1x80x128xbf16> to vector<80x128xbf16>
    %c0_100 = arith.constant 0 : index
    %c1024_101 = arith.constant 1024 : index
    %78 = vector.load %arg15[%c0_100, %c1024_101] : memref<80x1152xbf16, #tpu.memory_space<vmem>>, vector<80x128xbf16>
    tpu.vector_store %arg15[%c0_100, %c1024_101], %77 {strides = array<i32>} : memref<80x1152xbf16, #tpu.memory_space<vmem>>, vector<80x128xbf16>,
    %c0_102 = arith.constant 0 : index
    %c0_103 = arith.constant 0 : index
    %79 = vector.load %arg15[%c0_102, %c0_103] : memref<80x1152xbf16, #tpu.memory_space<vmem>>, vector<80x1152xbf16>
    %c0_104 = arith.constant 0 : index
    %c0_105 = arith.constant 0 : index
    %80 = vector.load %arg5[%c0_104, %c0_105] : memref<1152x128xbf16, #tpu.memory_space<vmem>>, vector<1152x128xbf16>
    %cst_106 = arith.constant dense<0.000000e+00> : vector<80x128xf32>
    %81 = tpu.matmul %79, %80, %cst_106 {dimension_numbers = #tpu.dot_dimension_numbers<[1], [0], [0], [1], [0, 0, 1, 1], [], []>} : vector<80x1152xbf16>, vector<1152x128xbf16>, vector<80x128xf32> -> vector<80x128xf32>
    %c0_107 = arith.constant 0 : index
    %c0_108 = arith.constant 0 : index
    %82 = vector.load %arg6[%c0_107, %c0_108] : memref<1x128xf32, #tpu.memory_space<vmem>>, vector<1x128xf32>
    %83 = vector.broadcast %82 : vector<1x128xf32> to vector<80x128xf32>
    %84 = arith.addf %81, %83 : vector<80x128xf32>
    %85 = arith.addf %84, %37 : vector<80x128xf32>
    %cst_109 = arith.constant 0.000000e+00 : f32
    %86 = vector.broadcast %cst_109 : f32 to vector<80x128xf32>
    %87 = arith.maximumf %85, %86 : vector<80x128xf32>
    %88 = vector.broadcast %0 : vector<80x1xf32> to vector<80x128xf32>
    %89 = arith.mulf %87, %88 : vector<80x128xf32>
    %90 = arith.truncf %89 : vector<80x128xf32> to vector<80x128xbf16>
    %c0_110 = arith.constant 0 : index
    %c16_111 = arith.constant 16 : index
    %c0_112 = arith.constant 0 : index
    %91 = vector.load %arg14[%c0_110, %c16_111, %c0_112] : memref<1x112x128xbf16, #tpu.memory_space<vmem>>, vector<1x80x128xbf16>
    %92 = vector.shape_cast %91 : vector<1x80x128xbf16> to vector<80x128xbf16>
    %93 = vector.shape_cast %90 : vector<80x128xbf16> to vector<1x80x128xbf16>
    tpu.vector_store %arg14[%c0_110, %c16_111, %c0_112], %93 {strides = array<i32>} : memref<1x112x128xbf16, #tpu.memory_space<vmem>>, vector<1x80x128xbf16>,
    %c0_113 = arith.constant 0 : index
    %c5_114 = arith.constant 5 : index
    %c0_115 = arith.constant 0 : index
    %94 = vector.load %arg14[%c0_113, %c5_114, %c0_115] : memref<1x112x128xbf16, #tpu.memory_space<vmem>>, vector<1x80x128xbf16>
    %95 = vector.shape_cast %94 : vector<1x80x128xbf16> to vector<80x128xbf16>
    %c0_116 = arith.constant 0 : index
    %c0_117 = arith.constant 0 : index
    %96 = vector.load %arg15[%c0_116, %c0_117] : memref<80x1152xbf16, #tpu.memory_space<vmem>>, vector<80x128xbf16>
    tpu.vector_store %arg15[%c0_116, %c0_117], %95 {strides = array<i32>} : memref<80x1152xbf16, #tpu.memory_space<vmem>>, vector<80x128xbf16>,
    %c0_118 = arith.constant 0 : index
    %c6_119 = arith.constant 6 : index
    %c0_120 = arith.constant 0 : index
    %97 = vector.load %arg14[%c0_118, %c6_119, %c0_120] : memref<1x112x128xbf16, #tpu.memory_space<vmem>>, vector<1x80x128xbf16>
    %98 = vector.shape_cast %97 : vector<1x80x128xbf16> to vector<80x128xbf16>
    %c0_121 = arith.constant 0 : index
    %c128_122 = arith.constant 128 : index
    %99 = vector.load %arg15[%c0_121, %c128_122] : memref<80x1152xbf16, #tpu.memory_space<vmem>>, vector<80x128xbf16>
    tpu.vector_store %arg15[%c0_121, %c128_122], %98 {strides = array<i32>} : memref<80x1152xbf16, #tpu.memory_space<vmem>>, vector<80x128xbf16>,
    %c0_123 = arith.constant 0 : index
    %c7_124 = arith.constant 7 : index
    %c0_125 = arith.constant 0 : index
    %100 = vector.load %arg14[%c0_123, %c7_124, %c0_125] : memref<1x112x128xbf16, #tpu.memory_space<vmem>>, vector<1x80x128xbf16>
    %101 = vector.shape_cast %100 : vector<1x80x128xbf16> to vector<80x128xbf16>
    %c0_126 = arith.constant 0 : index
    %c256_127 = arith.constant 256 : index
    %102 = vector.load %arg15[%c0_126, %c256_127] : memref<80x1152xbf16, #tpu.memory_space<vmem>>, vector<80x128xbf16>
    tpu.vector_store %arg15[%c0_126, %c256_127], %101 {strides = array<i32>} : memref<80x1152xbf16, #tpu.memory_space<vmem>>, vector<80x128xbf16>,
    %c0_128 = arith.constant 0 : index
    %c15_129 = arith.constant 15 : index
    %c0_130 = arith.constant 0 : index
    %103 = vector.load %arg14[%c0_128, %c15_129, %c0_130] : memref<1x112x128xbf16, #tpu.memory_space<vmem>>, vector<1x80x128xbf16>
    %104 = vector.shape_cast %103 : vector<1x80x128xbf16> to vector<80x128xbf16>
    %c0_131 = arith.constant 0 : index
    %c384_132 = arith.constant 384 : index
    %105 = vector.load %arg15[%c0_131, %c384_132] : memref<80x1152xbf16, #tpu.memory_space<vmem>>, vector<80x128xbf16>
    tpu.vector_store %arg15[%c0_131, %c384_132], %104 {strides = array<i32>} : memref<80x1152xbf16, #tpu.memory_space<vmem>>, vector<80x128xbf16>,
    %c0_133 = arith.constant 0 : index
    %c16_134 = arith.constant 16 : index
    %c0_135 = arith.constant 0 : index
    %106 = vector.load %arg14[%c0_133, %c16_134, %c0_135] : memref<1x112x128xbf16, #tpu.memory_space<vmem>>, vector<1x80x128xbf16>
    %107 = vector.shape_cast %106 : vector<1x80x128xbf16> to vector<80x128xbf16>
    %c0_136 = arith.constant 0 : index
    %c512_137 = arith.constant 512 : index
    %108 = vector.load %arg15[%c0_136, %c512_137] : memref<80x1152xbf16, #tpu.memory_space<vmem>>, vector<80x128xbf16>
    tpu.vector_store %arg15[%c0_136, %c512_137], %107 {strides = array<i32>} : memref<80x1152xbf16, #tpu.memory_space<vmem>>, vector<80x128xbf16>,
    %c0_138 = arith.constant 0 : index
    %c17_139 = arith.constant 17 : index
    %c0_140 = arith.constant 0 : index
    %109 = vector.load %arg14[%c0_138, %c17_139, %c0_140] : memref<1x112x128xbf16, #tpu.memory_space<vmem>>, vector<1x80x128xbf16>
    %110 = vector.shape_cast %109 : vector<1x80x128xbf16> to vector<80x128xbf16>
    %c0_141 = arith.constant 0 : index
    %c640_142 = arith.constant 640 : index
    %111 = vector.load %arg15[%c0_141, %c640_142] : memref<80x1152xbf16, #tpu.memory_space<vmem>>, vector<80x128xbf16>
    tpu.vector_store %arg15[%c0_141, %c640_142], %110 {strides = array<i32>} : memref<80x1152xbf16, #tpu.memory_space<vmem>>, vector<80x128xbf16>,
    %c0_143 = arith.constant 0 : index
    %c25_144 = arith.constant 25 : index
    %c0_145 = arith.constant 0 : index
    %112 = vector.load %arg14[%c0_143, %c25_144, %c0_145] : memref<1x112x128xbf16, #tpu.memory_space<vmem>>, vector<1x80x128xbf16>
    %113 = vector.shape_cast %112 : vector<1x80x128xbf16> to vector<80x128xbf16>
    %c0_146 = arith.constant 0 : index
    %c768_147 = arith.constant 768 : index
    %114 = vector.load %arg15[%c0_146, %c768_147] : memref<80x1152xbf16, #tpu.memory_space<vmem>>, vector<80x128xbf16>
    tpu.vector_store %arg15[%c0_146, %c768_147], %113 {strides = array<i32>} : memref<80x1152xbf16, #tpu.memory_space<vmem>>, vector<80x128xbf16>,
    %c0_148 = arith.constant 0 : index
    %c26_149 = arith.constant 26 : index
    %c0_150 = arith.constant 0 : index
    %115 = vector.load %arg14[%c0_148, %c26_149, %c0_150] : memref<1x112x128xbf16, #tpu.memory_space<vmem>>, vector<1x80x128xbf16>
    %116 = vector.shape_cast %115 : vector<1x80x128xbf16> to vector<80x128xbf16>
    %c0_151 = arith.constant 0 : index
    %c896_152 = arith.constant 896 : index
    %117 = vector.load %arg15[%c0_151, %c896_152] : memref<80x1152xbf16, #tpu.memory_space<vmem>>, vector<80x128xbf16>
    tpu.vector_store %arg15[%c0_151, %c896_152], %116 {strides = array<i32>} : memref<80x1152xbf16, #tpu.memory_space<vmem>>, vector<80x128xbf16>,
    %c0_153 = arith.constant 0 : index
    %c27_154 = arith.constant 27 : index
    %c0_155 = arith.constant 0 : index
    %118 = vector.load %arg14[%c0_153, %c27_154, %c0_155] : memref<1x112x128xbf16, #tpu.memory_space<vmem>>, vector<1x80x128xbf16>
    %119 = vector.shape_cast %118 : vector<1x80x128xbf16> to vector<80x128xbf16>
    %c0_156 = arith.constant 0 : index
    %c1024_157 = arith.constant 1024 : index
    %120 = vector.load %arg15[%c0_156, %c1024_157] : memref<80x1152xbf16, #tpu.memory_space<vmem>>, vector<80x128xbf16>
    tpu.vector_store %arg15[%c0_156, %c1024_157], %119 {strides = array<i32>} : memref<80x1152xbf16, #tpu.memory_space<vmem>>, vector<80x128xbf16>,
    %c0_158 = arith.constant 0 : index
    %c512_159 = arith.constant 512 : index
    %121 = vector.load %arg15[%c0_158, %c512_159] : memref<80x1152xbf16, #tpu.memory_space<vmem>>, vector<80x128xbf16>
    %122 = arith.extf %121 : vector<80x128xbf16> to vector<80x128xf32>
    %c0_160 = arith.constant 0 : index
    %c0_161 = arith.constant 0 : index
    %123 = vector.load %arg15[%c0_160, %c0_161] : memref<80x1152xbf16, #tpu.memory_space<vmem>>, vector<80x1152xbf16>
    %c0_162 = arith.constant 0 : index
    %c0_163 = arith.constant 0 : index
    %124 = vector.load %arg9[%c0_162, %c0_163] : memref<1152x128xbf16, #tpu.memory_space<vmem>>, vector<1152x128xbf16>
    %cst_164 = arith.constant dense<0.000000e+00> : vector<80x128xf32>
    %125 = tpu.matmul %123, %124, %cst_164 {dimension_numbers = #tpu.dot_dimension_numbers<[1], [0], [0], [1], [0, 0, 1, 1], [], []>} : vector<80x1152xbf16>, vector<1152x128xbf16>, vector<80x128xf32> -> vector<80x128xf32>
    %c0_165 = arith.constant 0 : index
    %c0_166 = arith.constant 0 : index
    %126 = vector.load %arg10[%c0_165, %c0_166] : memref<1x128xf32, #tpu.memory_space<vmem>>, vector<1x128xf32>
    %127 = vector.broadcast %126 : vector<1x128xf32> to vector<80x128xf32>
    %128 = arith.addf %125, %127 : vector<80x128xf32>
    %cst_167 = arith.constant 0.000000e+00 : f32
    %129 = vector.broadcast %cst_167 : f32 to vector<80x128xf32>
    %130 = arith.maximumf %128, %129 : vector<80x128xf32>
    %131 = vector.broadcast %0 : vector<80x1xf32> to vector<80x128xf32>
    %132 = arith.mulf %130, %131 : vector<80x128xf32>
    %133 = arith.truncf %132 : vector<80x128xf32> to vector<80x128xbf16>
    %c0_168 = arith.constant 0 : index
    %c16_169 = arith.constant 16 : index
    %c0_170 = arith.constant 0 : index
    %134 = vector.load %arg14[%c0_168, %c16_169, %c0_170] : memref<1x112x128xbf16, #tpu.memory_space<vmem>>, vector<1x80x128xbf16>
    %135 = vector.shape_cast %134 : vector<1x80x128xbf16> to vector<80x128xbf16>
    %136 = vector.shape_cast %133 : vector<80x128xbf16> to vector<1x80x128xbf16>
    tpu.vector_store %arg14[%c0_168, %c16_169, %c0_170], %136 {strides = array<i32>} : memref<1x112x128xbf16, #tpu.memory_space<vmem>>, vector<1x80x128xbf16>,
    %c0_171 = arith.constant 0 : index
    %c5_172 = arith.constant 5 : index
    %c0_173 = arith.constant 0 : index
    %137 = vector.load %arg14[%c0_171, %c5_172, %c0_173] : memref<1x112x128xbf16, #tpu.memory_space<vmem>>, vector<1x80x128xbf16>
    %138 = vector.shape_cast %137 : vector<1x80x128xbf16> to vector<80x128xbf16>
    %c0_174 = arith.constant 0 : index
    %c0_175 = arith.constant 0 : index
    %139 = vector.load %arg15[%c0_174, %c0_175] : memref<80x1152xbf16, #tpu.memory_space<vmem>>, vector<80x128xbf16>
    tpu.vector_store %arg15[%c0_174, %c0_175], %138 {strides = array<i32>} : memref<80x1152xbf16, #tpu.memory_space<vmem>>, vector<80x128xbf16>,
    %c0_176 = arith.constant 0 : index
    %c6_177 = arith.constant 6 : index
    %c0_178 = arith.constant 0 : index
    %140 = vector.load %arg14[%c0_176, %c6_177, %c0_178] : memref<1x112x128xbf16, #tpu.memory_space<vmem>>, vector<1x80x128xbf16>
    %141 = vector.shape_cast %140 : vector<1x80x128xbf16> to vector<80x128xbf16>
    %c0_179 = arith.constant 0 : index
    %c128_180 = arith.constant 128 : index
    %142 = vector.load %arg15[%c0_179, %c128_180] : memref<80x1152xbf16, #tpu.memory_space<vmem>>, vector<80x128xbf16>
    tpu.vector_store %arg15[%c0_179, %c128_180], %141 {strides = array<i32>} : memref<80x1152xbf16, #tpu.memory_space<vmem>>, vector<80x128xbf16>,
    %c0_181 = arith.constant 0 : index
    %c7_182 = arith.constant 7 : index
    %c0_183 = arith.constant 0 : index
    %143 = vector.load %arg14[%c0_181, %c7_182, %c0_183] : memref<1x112x128xbf16, #tpu.memory_space<vmem>>, vector<1x80x128xbf16>
    %144 = vector.shape_cast %143 : vector<1x80x128xbf16> to vector<80x128xbf16>
    %c0_184 = arith.constant 0 : index
    %c256_185 = arith.constant 256 : index
    %145 = vector.load %arg15[%c0_184, %c256_185] : memref<80x1152xbf16, #tpu.memory_space<vmem>>, vector<80x128xbf16>
    tpu.vector_store %arg15[%c0_184, %c256_185], %144 {strides = array<i32>} : memref<80x1152xbf16, #tpu.memory_space<vmem>>, vector<80x128xbf16>,
    %c0_186 = arith.constant 0 : index
    %c15_187 = arith.constant 15 : index
    %c0_188 = arith.constant 0 : index
    %146 = vector.load %arg14[%c0_186, %c15_187, %c0_188] : memref<1x112x128xbf16, #tpu.memory_space<vmem>>, vector<1x80x128xbf16>
    %147 = vector.shape_cast %146 : vector<1x80x128xbf16> to vector<80x128xbf16>
    %c0_189 = arith.constant 0 : index
    %c384_190 = arith.constant 384 : index
    %148 = vector.load %arg15[%c0_189, %c384_190] : memref<80x1152xbf16, #tpu.memory_space<vmem>>, vector<80x128xbf16>
    tpu.vector_store %arg15[%c0_189, %c384_190], %147 {strides = array<i32>} : memref<80x1152xbf16, #tpu.memory_space<vmem>>, vector<80x128xbf16>,
    %c0_191 = arith.constant 0 : index
    %c16_192 = arith.constant 16 : index
    %c0_193 = arith.constant 0 : index
    %149 = vector.load %arg14[%c0_191, %c16_192, %c0_193] : memref<1x112x128xbf16, #tpu.memory_space<vmem>>, vector<1x80x128xbf16>
    %150 = vector.shape_cast %149 : vector<1x80x128xbf16> to vector<80x128xbf16>
    %c0_194 = arith.constant 0 : index
    %c512_195 = arith.constant 512 : index
    %151 = vector.load %arg15[%c0_194, %c512_195] : memref<80x1152xbf16, #tpu.memory_space<vmem>>, vector<80x128xbf16>
    tpu.vector_store %arg15[%c0_194, %c512_195], %150 {strides = array<i32>} : memref<80x1152xbf16, #tpu.memory_space<vmem>>, vector<80x128xbf16>,
    %c0_196 = arith.constant 0 : index
    %c17_197 = arith.constant 17 : index
    %c0_198 = arith.constant 0 : index
    %152 = vector.load %arg14[%c0_196, %c17_197, %c0_198] : memref<1x112x128xbf16, #tpu.memory_space<vmem>>, vector<1x80x128xbf16>
    %153 = vector.shape_cast %152 : vector<1x80x128xbf16> to vector<80x128xbf16>
    %c0_199 = arith.constant 0 : index
    %c640_200 = arith.constant 640 : index
    %154 = vector.load %arg15[%c0_199, %c640_200] : memref<80x1152xbf16, #tpu.memory_space<vmem>>, vector<80x128xbf16>
    tpu.vector_store %arg15[%c0_199, %c640_200], %153 {strides = array<i32>} : memref<80x1152xbf16, #tpu.memory_space<vmem>>, vector<80x128xbf16>,
    %c0_201 = arith.constant 0 : index
    %c25_202 = arith.constant 25 : index
    %c0_203 = arith.constant 0 : index
    %155 = vector.load %arg14[%c0_201, %c25_202, %c0_203] : memref<1x112x128xbf16, #tpu.memory_space<vmem>>, vector<1x80x128xbf16>
    %156 = vector.shape_cast %155 : vector<1x80x128xbf16> to vector<80x128xbf16>
    %c0_204 = arith.constant 0 : index
    %c768_205 = arith.constant 768 : index
    %157 = vector.load %arg15[%c0_204, %c768_205] : memref<80x1152xbf16, #tpu.memory_space<vmem>>, vector<80x128xbf16>
    tpu.vector_store %arg15[%c0_204, %c768_205], %156 {strides = array<i32>} : memref<80x1152xbf16, #tpu.memory_space<vmem>>, vector<80x128xbf16>,
    %c0_206 = arith.constant 0 : index
    %c26_207 = arith.constant 26 : index
    %c0_208 = arith.constant 0 : index
    %158 = vector.load %arg14[%c0_206, %c26_207, %c0_208] : memref<1x112x128xbf16, #tpu.memory_space<vmem>>, vector<1x80x128xbf16>
    %159 = vector.shape_cast %158 : vector<1x80x128xbf16> to vector<80x128xbf16>
    %c0_209 = arith.constant 0 : index
    %c896_210 = arith.constant 896 : index
    %160 = vector.load %arg15[%c0_209, %c896_210] : memref<80x1152xbf16, #tpu.memory_space<vmem>>, vector<80x128xbf16>
    tpu.vector_store %arg15[%c0_209, %c896_210], %159 {strides = array<i32>} : memref<80x1152xbf16, #tpu.memory_space<vmem>>, vector<80x128xbf16>,
    %c0_211 = arith.constant 0 : index
    %c27_212 = arith.constant 27 : index
    %c0_213 = arith.constant 0 : index
    %161 = vector.load %arg14[%c0_211, %c27_212, %c0_213] : memref<1x112x128xbf16, #tpu.memory_space<vmem>>, vector<1x80x128xbf16>
    %162 = vector.shape_cast %161 : vector<1x80x128xbf16> to vector<80x128xbf16>
    %c0_214 = arith.constant 0 : index
    %c1024_215 = arith.constant 1024 : index
    %163 = vector.load %arg15[%c0_214, %c1024_215] : memref<80x1152xbf16, #tpu.memory_space<vmem>>, vector<80x128xbf16>
    tpu.vector_store %arg15[%c0_214, %c1024_215], %162 {strides = array<i32>} : memref<80x1152xbf16, #tpu.memory_space<vmem>>, vector<80x128xbf16>,
    %c0_216 = arith.constant 0 : index
    %c0_217 = arith.constant 0 : index
    %164 = vector.load %arg15[%c0_216, %c0_217] : memref<80x1152xbf16, #tpu.memory_space<vmem>>, vector<80x1152xbf16>
    %c0_218 = arith.constant 0 : index
    %c0_219 = arith.constant 0 : index
    %165 = vector.load %arg11[%c0_218, %c0_219] : memref<1152x128xbf16, #tpu.memory_space<vmem>>, vector<1152x128xbf16>
    %cst_220 = arith.constant dense<0.000000e+00> : vector<80x128xf32>
    %166 = tpu.matmul %164, %165, %cst_220 {dimension_numbers = #tpu.dot_dimension_numbers<[1], [0], [0], [1], [0, 0, 1, 1], [], []>} : vector<80x1152xbf16>, vector<1152x128xbf16>, vector<80x128xf32> -> vector<80x128xf32>
    %c0_221 = arith.constant 0 : index
    %c0_222 = arith.constant 0 : index
    %167 = vector.load %arg12[%c0_221, %c0_222] : memref<1x128xf32, #tpu.memory_space<vmem>>, vector<1x128xf32>
    %168 = vector.broadcast %167 : vector<1x128xf32> to vector<80x128xf32>
    %169 = arith.addf %166, %168 : vector<80x128xf32>
    %170 = arith.addf %169, %122 : vector<80x128xf32>
    %cst_223 = arith.constant 0.000000e+00 : f32
    %171 = vector.broadcast %cst_223 : f32 to vector<80x128xf32>
    %172 = arith.maximumf %170, %171 : vector<80x128xf32>
    %173 = vector.broadcast %0 : vector<80x1xf32> to vector<80x128xf32>
    %174 = arith.mulf %172, %173 : vector<80x128xf32>
    %175 = vector.shape_cast %174 : vector<80x128xf32> to vector<1x80x128xf32>
    %c0_224 = arith.constant 0 : index
    %c0_225 = arith.constant 0 : index
    %c0_226 = arith.constant 0 : index
    %176 = vector.load %arg13[%c0_224, %c0_225, %c0_226] : memref<1x80x128xf32, #tpu.memory_space<vmem>>, vector<1x80x128xf32>
    tpu.vector_store %arg13[%c0_224, %c0_225, %c0_226], %175 {strides = array<i32>} : memref<1x80x128xf32, #tpu.memory_space<vmem>>, vector<1x80x128xf32>,
    return
  }
  func.func @transform_0(%arg0: i32) -> (i32, i32, i32, i32) {
    %c0_i32 = arith.constant 0 : i32
    %c0_i32_0 = arith.constant 0 : i32
    %c0_i32_1 = arith.constant 0 : i32
    %c0_i32_2 = arith.constant 0 : i32
    return %arg0, %c0_i32, %c0_i32_0, %c0_i32_1 : i32, i32, i32, i32
  }
  func.func @transform_1(%arg0: i32) -> (i32, i32) {
    %c0_i32 = arith.constant 0 : i32
    %c0_i32_0 = arith.constant 0 : i32
    %c0_i32_1 = arith.constant 0 : i32
    return %c0_i32, %c0_i32_0 : i32, i32
  }
  func.func @transform_2(%arg0: i32) -> (i32, i32) {
    %c0_i32 = arith.constant 0 : i32
    %c0_i32_0 = arith.constant 0 : i32
    %c0_i32_1 = arith.constant 0 : i32
    return %c0_i32, %c0_i32_0 : i32, i32
  }
  func.func @transform_3(%arg0: i32) -> (i32, i32) {
    %c0_i32 = arith.constant 0 : i32
    %c0_i32_0 = arith.constant 0 : i32
    %c0_i32_1 = arith.constant 0 : i32
    return %c0_i32, %c0_i32_0 : i32, i32
  }
  func.func @transform_4(%arg0: i32) -> (i32, i32) {
    %c0_i32 = arith.constant 0 : i32
    %c0_i32_0 = arith.constant 0 : i32
    %c0_i32_1 = arith.constant 0 : i32
    return %c0_i32, %c0_i32_0 : i32, i32
  }
  func.func @transform_5(%arg0: i32) -> (i32, i32) {
    %c0_i32 = arith.constant 0 : i32
    %c0_i32_0 = arith.constant 0 : i32
    %c0_i32_1 = arith.constant 0 : i32
    return %c0_i32, %c0_i32_0 : i32, i32
  }
  func.func @transform_6(%arg0: i32) -> (i32, i32) {
    %c0_i32 = arith.constant 0 : i32
    %c0_i32_0 = arith.constant 0 : i32
    %c0_i32_1 = arith.constant 0 : i32
    return %c0_i32, %c0_i32_0 : i32, i32
  }
  func.func @transform_7(%arg0: i32) -> (i32, i32) {
    %c0_i32 = arith.constant 0 : i32
    %c0_i32_0 = arith.constant 0 : i32
    %c0_i32_1 = arith.constant 0 : i32
    return %c0_i32, %c0_i32_0 : i32, i32
  }
  func.func @transform_8(%arg0: i32) -> (i32, i32) {
    %c0_i32 = arith.constant 0 : i32
    %c0_i32_0 = arith.constant 0 : i32
    %c0_i32_1 = arith.constant 0 : i32
    return %c0_i32, %c0_i32_0 : i32, i32
  }
  func.func @transform_9(%arg0: i32) -> (i32, i32) {
    %c0_i32 = arith.constant 0 : i32
    %c0_i32_0 = arith.constant 0 : i32
    %c0_i32_1 = arith.constant 0 : i32
    return %c0_i32, %c0_i32_0 : i32, i32
  }
  func.func @transform_10(%arg0: i32) -> (i32, i32) {
    %c0_i32 = arith.constant 0 : i32
    %c0_i32_0 = arith.constant 0 : i32
    %c0_i32_1 = arith.constant 0 : i32
    return %c0_i32, %c0_i32_0 : i32, i32
  }
  func.func @transform_11(%arg0: i32) -> (i32, i32) {
    %c0_i32 = arith.constant 0 : i32
    %c0_i32_0 = arith.constant 0 : i32
    %c0_i32_1 = arith.constant 0 : i32
    return %c0_i32, %c0_i32_0 : i32, i32
  }
  func.func @transform_12(%arg0: i32) -> (i32, i32, i32) {
    %c0_i32 = arith.constant 0 : i32
    %c0_i32_0 = arith.constant 0 : i32
    %c0_i32_1 = arith.constant 0 : i32
    return %arg0, %c0_i32, %c0_i32_0 : i32, i32, i32
  }
}

</mosaic_0001>

<llo_original>
// kernel: basic_layer_forward.1
$region0: #{basic_layer_forward.1}
  #allocation0 [shape = 'u32[]', space=smem, size = 0x4, offset = 0x4, fixed_abs, tag = 'smem constant byte address 0x4 - core index']
  #allocation1 [shape = 'u32[144,128]{1,0:T(1,128)}', space=vmem, size = 0x12000, scoped, tag = 'internal scratch']
  #allocation2 [shape = 'bf16[1,112,128]{2,1,0:T(16,128)(2,1)}', space=vmem, size = 0x7000, scoped, tag = 'scratch operand']
  #allocation3 [shape = 'bf16[80,1152]{1,0:T(16,128)(2,1)}', space=vmem, size = 0x2d000, scoped, tag = 'scratch operand']
  %s0 = inlined_call_operand.vmem [shape: bf16[2,4,104,128], index: 0, kind: input, shape index: {}]
  %s1 = inlined_call_operand.vmem [shape: f32[80,1], index: 1, kind: input, shape index: {}]
  %s2 = inlined_call_operand.vmem [shape: bf16[1152,128], index: 2, kind: input, shape index: {}]
  %s3 = inlined_call_operand.vmem [shape: f32[1,128], index: 3, kind: input, shape index: {}]
  %s4 = inlined_call_operand.vmem [shape: bf16[1152,128], index: 4, kind: input, shape index: {}]
  %s5 = inlined_call_operand.vmem [shape: f32[1,128], index: 5, kind: input, shape index: {}]
  %s6 = inlined_call_operand.vmem [shape: bf16[128,128], index: 6, kind: input, shape index: {}]
  %s7 = inlined_call_operand.vmem [shape: f32[1,128], index: 7, kind: input, shape index: {}]
  %s8 = inlined_call_operand.vmem [shape: bf16[1152,128], index: 8, kind: input, shape index: {}]
  %s9 = inlined_call_operand.vmem [shape: f32[1,128], index: 9, kind: input, shape index: {}]
  %s10 = inlined_call_operand.vmem [shape: bf16[1152,128], index: 10, kind: input, shape index: {}]
  %s11 = inlined_call_operand.vmem [shape: f32[1,128], index: 11, kind: input, shape index: {}]
  %s12 = inlined_call_operand.vmem [shape: f32[2,80,128], index: 12, kind: output, shape index: {}]
  %s13 = sld [smem:[#allocation0]]
  $region81: #{basic_layer_forward.1} parent=0
    _
  %s15 = ssub.s32 1, %s13
  %s16 = scalar_select 0, %s15, %s13
  loop: start=0, step=1, limit=4
  $region2: #{basic_layer_forward.1} parent=0 // loop_pre_header
    _
  $region3: #{basic_layer_forward.1} parent=0 // loop_header
    %s18 = sphi 0, %s22
    %p19 = scmp.ge.s32.totalorder %s18, 4
    %s28 = sphi 0, %s30
    %s31 = sphi 0, %s28
    %s32 = sphi 0, %s31
    %s48 = sphi 0, %s32
    %s52 = sphi 0, %s52
    %s54 = sphi 0, %s52
    %s55 = sphi 0, %s54
    %s69 = sphi 0, %s55
    %s73 = sphi 0, %s73
    %s75 = sphi 0, %s73
    %s76 = sphi 0, %s75
    %s90 = sphi 0, %s76
    %s94 = sphi 0, %s94
    %s96 = sphi 0, %s94
    %s97 = sphi 0, %s96
    %s111 = sphi 0, %s97
    %s115 = sphi 0, %s115
    %s117 = sphi 0, %s115
    %s118 = sphi 0, %s117
    %s132 = sphi 0, %s118
    %s136 = sphi 0, %s136
    %s138 = sphi 0, %s136
    %s139 = sphi 0, %s138
    %s153 = sphi 0, %s139
    %s157 = sphi 0, %s157
    %s159 = sphi 0, %s157
    %s160 = sphi 0, %s159
    %s174 = sphi 0, %s160
    %s178 = sphi 0, %s178
    %s180 = sphi 0, %s178
    %s181 = sphi 0, %s180
    %s195 = sphi 0, %s181
    %s199 = sphi 0, %s199
    %s201 = sphi 0, %s199
    %s202 = sphi 0, %s201
    %s216 = sphi 0, %s202
    %s220 = sphi 0, %s220
    %s222 = sphi 0, %s220
    %s223 = sphi 0, %s222
    %s237 = sphi 0, %s223
    %s241 = sphi 0, %s241
    %s243 = sphi 0, %s241
    %s244 = sphi 0, %s243
    %s258 = sphi 0, %s244
    %s262 = sphi 0, %s262
    %s264 = sphi 0, %s262
    %s265 = sphi 0, %s264
    %s279 = sphi 0, %s265
    %s285 = sphi 0, %s287
    %s288 = sphi 0, %s285
    %s289 = sphi 0, %s288
    %s305 = sphi 0, %s289
  $region4: #{basic_layer_forward.1} parent=0 // loop_header_branch
    %21 = sbr.rel (%p19) target = $region8
  $region5: #{basic_layer_forward.1} parent=0 // loop_body
    %s23 = ssub.s32 %s18, 1
    %s24 = ssub.s32 %s18, 2
    %s25 = sadd.s32 %s18, 1
    %s26 = ssub.s32 %s18, %s25
    %p27 = scmp.eq.s32.totalorder %s26, 0
    %s29 = sadd.s32 %s28, 1
    %s30 = scalar_select %p27, %s28, %s29
    %p33 = pneg %p27
    %p34 = scmp.eq.s32.totalorder %s18, 1
    %p35 = por %p33, %p34
    %p36 = scmp.ne.s32.totalorder %s28, %s31
    %p37 = scmp.eq.s32.totalorder %s18, 0
    %p38 = por %p36, %p37
    %p39 = scmp.ne.s32.totalorder %s28, %s31
    %p40 = scmp.eq.s32.totalorder %s23, 1
    %p41 = por %p39, %p40
    %p42 = scmp.ne.s32.totalorder %s31, %s32
    %p43 = scmp.eq.s32.totalorder %s23, 0
    %p44 = por %p42, %p43
    %p45 = scmp.ne.s32.totalorder %s31, %s32
    %p46 = scmp.eq.s32.totalorder %s24, 1
    %p47 = por %p45, %p46
    %p49 = scmp.ne.s32.totalorder %s32, %s48
    %p50 = scmp.eq.s32.totalorder %s24, 0
    %p51 = por %p49, %p50
    %s53 = sadd.s32 %s52, 1
    %p56 = scmp.eq.s32.totalorder %s18, 1
    %p57 = scmp.ne.s32.totalorder %s52, %s54
    %p58 = scmp.eq.s32.totalorder %s18, 0
    %p59 = por %p57, %p58
    %p60 = scmp.ne.s32.totalorder %s52, %s54
    %p61 = scmp.eq.s32.totalorder %s23, 1
    %p62 = por %p60, %p61
    %p63 = scmp.ne.s32.totalorder %s54, %s55
    %p64 = scmp.eq.s32.totalorder %s23, 0
    %p65 = por %p63, %p64
    %p66 = scmp.ne.s32.totalorder %s54, %s55
    %p67 = scmp.eq.s32.totalorder %s24, 1
    %p68 = por %p66, %p67
    %p70 = scmp.ne.s32.totalorder %s55, %s69
    %p71 = scmp.eq.s32.totalorder %s24, 0
    %p72 = por %p70, %p71
    %s74 = sadd.s32 %s73, 1
    %p77 = scmp.eq.s32.totalorder %s18, 1
    %p78 = scmp.ne.s32.totalorder %s73, %s75
    %p79 = scmp.eq.s32.totalorder %s18, 0
    %p80 = por %p78, %p79
    %p81 = scmp.ne.s32.totalorder %s73, %s75
    %p82 = scmp.eq.s32.totalorder %s23, 1
    %p83 = por %p81, %p82
    %p84 = scmp.ne.s32.totalorder %s75, %s76
    %p85 = scmp.eq.s32.totalorder %s23, 0
    %p86 = por %p84, %p85
    %p87 = scmp.ne.s32.totalorder %s75, %s76
    %p88 = scmp.eq.s32.totalorder %s24, 1
    %p89 = por %p87, %p88
    %p91 = scmp.ne.s32.totalorder %s76, %s90
    %p92 = scmp.eq.s32.totalorder %s24, 0
    %p93 = por %p91, %p92
    %s95 = sadd.s32 %s94, 1
    %p98 = scmp.eq.s32.totalorder %s18, 1
    %p99 = scmp.ne.s32.totalorder %s94, %s96
    %p100 = scmp.eq.s32.totalorder %s18, 0
    %p101 = por %p99, %p100
    %p102 = scmp.ne.s32.totalorder %s94, %s96
    %p103 = scmp.eq.s32.totalorder %s23, 1
    %p104 = por %p102, %p103
    %p105 = scmp.ne.s32.totalorder %s96, %s97
    %p106 = scmp.eq.s32.totalorder %s23, 0
    %p107 = por %p105, %p106
    %p108 = scmp.ne.s32.totalorder %s96, %s97
    %p109 = scmp.eq.s32.totalorder %s24, 1
    %p110 = por %p108, %p109
    %p112 = scmp.ne.s32.totalorder %s97, %s111
    %p113 = scmp.eq.s32.totalorder %s24, 0
    %p114 = por %p112, %p113
    %s116 = sadd.s32 %s115, 1
    %p119 = scmp.eq.s32.totalorder %s18, 1
    %p120 = scmp.ne.s32.totalorder %s115, %s117
    %p121 = scmp.eq.s32.totalorder %s18, 0
    %p122 = por %p120, %p121
    %p123 = scmp.ne.s32.totalorder %s115, %s117
    %p124 = scmp.eq.s32.totalorder %s23, 1
    %p125 = por %p123, %p124
    %p126 = scmp.ne.s32.totalorder %s117, %s118
    %p127 = scmp.eq.s32.totalorder %s23, 0
    %p128 = por %p126, %p127
    %p129 = scmp.ne.s32.totalorder %s117, %s118
    %p130 = scmp.eq.s32.totalorder %s24, 1
    %p131 = por %p129, %p130
    %p133 = scmp.ne.s32.totalorder %s118, %s132
    %p134 = scmp.eq.s32.totalorder %s24, 0
    %p135 = por %p133, %p134
    %s137 = sadd.s32 %s136, 1
    %p140 = scmp.eq.s32.totalorder %s18, 1
    %p141 = scmp.ne.s32.totalorder %s136, %s138
    %p142 = scmp.eq.s32.totalorder %s18, 0
    %p143 = por %p141, %p142
    %p144 = scmp.ne.s32.totalorder %s136, %s138
    %p145 = scmp.eq.s32.totalorder %s23, 1
    %p146 = por %p144, %p145
    %p147 = scmp.ne.s32.totalorder %s138, %s139
    %p148 = scmp.eq.s32.totalorder %s23, 0
    %p149 = por %p147, %p148
    %p150 = scmp.ne.s32.totalorder %s138, %s139
    %p151 = scmp.eq.s32.totalorder %s24, 1
    %p152 = por %p150, %p151
    %p154 = scmp.ne.s32.totalorder %s139, %s153
    %p155 = scmp.eq.s32.totalorder %s24, 0
    %p156 = por %p154, %p155
    %s158 = sadd.s32 %s157, 1
    %p161 = scmp.eq.s32.totalorder %s18, 1
    %p162 = scmp.ne.s32.totalorder %s157, %s159
    %p163 = scmp.eq.s32.totalorder %s18, 0
    %p164 = por %p162, %p163
    %p165 = scmp.ne.s32.totalorder %s157, %s159
    %p166 = scmp.eq.s32.totalorder %s23, 1
    %p167 = por %p165, %p166
    %p168 = scmp.ne.s32.totalorder %s159, %s160
    %p169 = scmp.eq.s32.totalorder %s23, 0
    %p170 = por %p168, %p169
    %p171 = scmp.ne.s32.totalorder %s159, %s160
    %p172 = scmp.eq.s32.totalorder %s24, 1
    %p173 = por %p171, %p172
    %p175 = scmp.ne.s32.totalorder %s160, %s174
    %p176 = scmp.eq.s32.totalorder %s24, 0
    %p177 = por %p175, %p176
    %s179 = sadd.s32 %s178, 1
    %p182 = scmp.eq.s32.totalorder %s18, 1
    %p183 = scmp.ne.s32.totalorder %s178, %s180
    %p184 = scmp.eq.s32.totalorder %s18, 0
    %p185 = por %p183, %p184
    %p186 = scmp.ne.s32.totalorder %s178, %s180
    %p187 = scmp.eq.s32.totalorder %s23, 1
    %p188 = por %p186, %p187
    %p189 = scmp.ne.s32.totalorder %s180, %s181
    %p190 = scmp.eq.s32.totalorder %s23, 0
    %p191 = por %p189, %p190
    %p192 = scmp.ne.s32.totalorder %s180, %s181
    %p193 = scmp.eq.s32.totalorder %s24, 1
    %p194 = por %p192, %p193
    %p196 = scmp.ne.s32.totalorder %s181, %s195
    %p197 = scmp.eq.s32.totalorder %s24, 0
    %p198 = por %p196, %p197
    %s200 = sadd.s32 %s199, 1
    %p203 = scmp.eq.s32.totalorder %s18, 1
    %p204 = scmp.ne.s32.totalorder %s199, %s201
    %p205 = scmp.eq.s32.totalorder %s18, 0
    %p206 = por %p204, %p205
    %p207 = scmp.ne.s32.totalorder %s199, %s201
    %p208 = scmp.eq.s32.totalorder %s23, 1
    %p209 = por %p207, %p208
    %p210 = scmp.ne.s32.totalorder %s201, %s202
    %p211 = scmp.eq.s32.totalorder %s23, 0
    %p212 = por %p210, %p211
    %p213 = scmp.ne.s32.totalorder %s201, %s202
    %p214 = scmp.eq.s32.totalorder %s24, 1
    %p215 = por %p213, %p214
    %p217 = scmp.ne.s32.totalorder %s202, %s216
    %p218 = scmp.eq.s32.totalorder %s24, 0
    %p219 = por %p217, %p218
    %s221 = sadd.s32 %s220, 1
    %p224 = scmp.eq.s32.totalorder %s18, 1
    %p225 = scmp.ne.s32.totalorder %s220, %s222
    %p226 = scmp.eq.s32.totalorder %s18, 0
    %p227 = por %p225, %p226
    %p228 = scmp.ne.s32.totalorder %s220, %s222
    %p229 = scmp.eq.s32.totalorder %s23, 1
    %p230 = por %p228, %p229
    %p231 = scmp.ne.s32.totalorder %s222, %s223
    %p232 = scmp.eq.s32.totalorder %s23, 0
    %p233 = por %p231, %p232
    %p234 = scmp.ne.s32.totalorder %s222, %s223
    %p235 = scmp.eq.s32.totalorder %s24, 1
    %p236 = por %p234, %p235
    %p238 = scmp.ne.s32.totalorder %s223, %s237
    %p239 = scmp.eq.s32.totalorder %s24, 0
    %p240 = por %p238, %p239
    %s242 = sadd.s32 %s241, 1
    %p245 = scmp.eq.s32.totalorder %s18, 1
    %p246 = scmp.ne.s32.totalorder %s241, %s243
    %p247 = scmp.eq.s32.totalorder %s18, 0
    %p248 = por %p246, %p247
    %p249 = scmp.ne.s32.totalorder %s241, %s243
    %p250 = scmp.eq.s32.totalorder %s23, 1
    %p251 = por %p249, %p250
    %p252 = scmp.ne.s32.totalorder %s243, %s244
    %p253 = scmp.eq.s32.totalorder %s23, 0
    %p254 = por %p252, %p253
    %p255 = scmp.ne.s32.totalorder %s243, %s244
    %p256 = scmp.eq.s32.totalorder %s24, 1
    %p257 = por %p255, %p256
    %p259 = scmp.ne.s32.totalorder %s244, %s258
    %p260 = scmp.eq.s32.totalorder %s24, 0
    %p261 = por %p259, %p260
    %s263 = sadd.s32 %s262, 1
    %p266 = scmp.eq.s32.totalorder %s18, 1
    %p267 = scmp.ne.s32.totalorder %s262, %s264
    %p268 = scmp.eq.s32.totalorder %s18, 0
    %p269 = por %p267, %p268
    %p270 = scmp.ne.s32.totalorder %s262, %s264
    %p271 = scmp.eq.s32.totalorder %s23, 1
    %p272 = por %p270, %p271
    %p273 = scmp.ne.s32.totalorder %s264, %s265
    %p274 = scmp.eq.s32.totalorder %s23, 0
    %p275 = por %p273, %p274
    %p276 = scmp.ne.s32.totalorder %s264, %s265
    %p277 = scmp.eq.s32.totalorder %s24, 1
    %p278 = por %p276, %p277
    %p280 = scmp.ne.s32.totalorder %s265, %s279
    %p281 = scmp.eq.s32.totalorder %s24, 0
    %p282 = por %p280, %p281
    %s283 = ssub.s32 %s18, %s25
    %p284 = scmp.eq.s32.totalorder %s283, 0
    %s286 = sadd.s32 %s285, 1
    %s287 = scalar_select %p284, %s285, %s286
    %p290 = pneg %p284
    %p291 = scmp.eq.s32.totalorder %s18, 1
    %p292 = por %p290, %p291
    %p293 = scmp.ne.s32.totalorder %s285, %s288
    %p294 = scmp.eq.s32.totalorder %s18, 0
    %p295 = por %p293, %p294
    %p296 = scmp.ne.s32.totalorder %s285, %s288
    %p297 = scmp.eq.s32.totalorder %s23, 1
    %p298 = por %p296, %p297
    %p299 = scmp.ne.s32.totalorder %s288, %s289
    %p300 = scmp.eq.s32.totalorder %s23, 0
    %p301 = por %p299, %p300
    %p302 = scmp.ne.s32.totalorder %s288, %s289
    %p303 = scmp.eq.s32.totalorder %s24, 1
    %p304 = por %p302, %p303
    %p306 = scmp.ne.s32.totalorder %s289, %s305
    %p307 = scmp.eq.s32.totalorder %s24, 0
    %p308 = por %p306, %p307
    %p309 = scmp.le.s32.totalorder 1, %s18
    %p310 = scmp.lt.s32.totalorder %s18, 3
    %p311 = pnand %p309, %p310
    %p312 = pneg %p311
    // Predicated region
    $region9: #{basic_layer_forward.1} parent=5 // pred_check
      _
    $region10: #{basic_layer_forward.1} parent=5 // pred_check_branch
      %314 = sbr.rel (%p311) target = $region12
    $region11: #{basic_layer_forward.1} parent=5 // pred_region
      %s315 = ssub.s32 %s18, 1
      // Predicated region
      $region13: #{basic_layer_forward.1} parent=11 // pred_check
        %p316 = pneg %p65
      $region14: #{basic_layer_forward.1} parent=11 // pred_check_branch
        %318 = sbr.rel (%p316) target = $region16
      $region15: #{basic_layer_forward.1} parent=11 // pred_region
        _
      $region16: #{basic_layer_forward.1} parent=11 // pred_fallthru
        _
      // Predicated region
      $region17: #{basic_layer_forward.1} parent=11 // pred_check
        %p319 = pneg %p86
      $region18: #{basic_layer_forward.1} parent=11 // pred_check_branch
        %321 = sbr.rel (%p319) target = $region20
      $region19: #{basic_layer_forward.1} parent=11 // pred_region
        _
      $region20: #{basic_layer_forward.1} parent=11 // pred_fallthru
        _
      // Predicated region
      $region21: #{basic_layer_forward.1} parent=11 // pred_check
        %p322 = pneg %p107
      $region22: #{basic_layer_forward.1} parent=11 // pred_check_branch
        %324 = sbr.rel (%p322) target = $region24
      $region23: #{basic_layer_forward.1} parent=11 // pred_region
        _
      $region24: #{basic_layer_forward.1} parent=11 // pred_fallthru
        _
      // Predicated region
      $region25: #{basic_layer_forward.1} parent=11 // pred_check
        %p325 = pneg %p128
      $region26: #{basic_layer_forward.1} parent=11 // pred_check_branch
        %327 = sbr.rel (%p325) target = $region28
      $region27: #{basic_layer_forward.1} parent=11 // pred_region
        _
      $region28: #{basic_layer_forward.1} parent=11 // pred_fallthru
        _
      // Predicated region
      $region29: #{basic_layer_forward.1} parent=11 // pred_check
        %p328 = pneg %p149
      $region30: #{basic_layer_forward.1} parent=11 // pred_check_branch
        %330 = sbr.rel (%p328) target = $region32
      $region31: #{basic_layer_forward.1} parent=11 // pred_region
        _
      $region32: #{basic_layer_forward.1} parent=11 // pred_fallthru
        _
      // Predicated region
      $region33: #{basic_layer_forward.1} parent=11 // pred_check
        %p331 = pneg %p170
      $region34: #{basic_layer_forward.1} parent=11 // pred_check_branch
        %333 = sbr.rel (%p331) target = $region36
      $region35: #{basic_layer_forward.1} parent=11 // pred_region
        _
      $region36: #{basic_layer_forward.1} parent=11 // pred_fallthru
        _
      // Predicated region
      $region37: #{basic_layer_forward.1} parent=11 // pred_check
        %p334 = pneg %p191
      $region38: #{basic_layer_forward.1} parent=11 // pred_check_branch
        %336 = sbr.rel (%p334) target = $region40
      $region39: #{basic_layer_forward.1} parent=11 // pred_region
        _
      $region40: #{basic_layer_forward.1} parent=11 // pred_fallthru
        _
      // Predicated region
      $region41: #{basic_layer_forward.1} parent=11 // pred_check
        %p337 = pneg %p212
      $region42: #{basic_layer_forward.1} parent=11 // pred_check_branch
        %339 = sbr.rel (%p337) target = $region44
      $region43: #{basic_layer_forward.1} parent=11 // pred_region
        _
      $region44: #{basic_layer_forward.1} parent=11 // pred_fallthru
        _
      // Predicated region
      $region45: #{basic_layer_forward.1} parent=11 // pred_check
        %p340 = pneg %p233
      $region46: #{basic_layer_forward.1} parent=11 // pred_check_branch
        %342 = sbr.rel (%p340) target = $region48
      $region47: #{basic_layer_forward.1} parent=11 // pred_region
        _
      $region48: #{basic_layer_forward.1} parent=11 // pred_fallthru
        _
      // Predicated region
      $region49: #{basic_layer_forward.1} parent=11 // pred_check
        %p343 = pneg %p254
      $region50: #{basic_layer_forward.1} parent=11 // pred_check_branch
        %345 = sbr.rel (%p343) target = $region52
      $region51: #{basic_layer_forward.1} parent=11 // pred_region
        _
      $region52: #{basic_layer_forward.1} parent=11 // pred_fallthru
        _
      // Predicated region
      $region53: #{basic_layer_forward.1} parent=11 // pred_check
        %p346 = pneg %p275
      $region54: #{basic_layer_forward.1} parent=11 // pred_check_branch
        %348 = sbr.rel (%p346) target = $region56
      $region55: #{basic_layer_forward.1} parent=11 // pred_region
        _
      $region56: #{basic_layer_forward.1} parent=11 // pred_fallthru
        _
    $region12: #{basic_layer_forward.1} parent=5 // pred_fallthru
      _
    %p349 = scmp.lt.s32.totalorder %s18, 2
    // Predicated region
    $region57: #{basic_layer_forward.1} parent=5 // pred_check
      %p350 = pneg %p349
    $region58: #{basic_layer_forward.1} parent=5 // pred_check_branch
      %352 = sbr.rel (%p350) target = $region60
    $region59: #{basic_layer_forward.1} parent=5 // pred_region
      // Predicated region
      $region61: #{basic_layer_forward.1} parent=59 // pred_check
        %p353 = pneg %p38
      $region62: #{basic_layer_forward.1} parent=59 // pred_check_branch
        %355 = sbr.rel (%p353) target = $region64
      $region63: #{basic_layer_forward.1} parent=59 // pred_region
        %p356 = scmp.lt.s32.totalorder %s18, 1
        %s357 = scalar_select %p356, %s18, 1
        %s358 = smul.addr %s357, 52
        %s359 = smul.addr %s358, 4
        %s360 = scalar_lea.vmem %s0, %s359
      $region64: #{basic_layer_forward.1} parent=59 // pred_fallthru
        _
    $region60: #{basic_layer_forward.1} parent=5 // pred_fallthru
      _
    %p361 = scmp.le.s32.totalorder 1, %s18
    %p362 = scmp.lt.s32.totalorder %s18, 3
    %p363 = pnand %p361, %p362
    %p364 = pneg %p363
    // Predicated region
    $region65: #{basic_layer_forward.1} parent=5 // pred_check
      _
    $region66: #{basic_layer_forward.1} parent=5 // pred_check_branch
      %366 = sbr.rel (%p363) target = $region68
    $region67: #{basic_layer_forward.1} parent=5 // pred_region
      %s367 = ssub.s32 %s18, 1
      %p368 = scmp.lt.s32.totalorder %s23, 1
      %s369 = scalar_select %p368, %s23, 1
      %s370 = smul.addr %s369, 52
      %s371 = smul.addr %s370, 4
      %s372 = scalar_lea.vmem %s0, %s371
      %p373 = pneg %p44
      %p374 = pneg %p41
      %p375 = pneg %p65
      %p376 = pneg %p62
      %p377 = pneg %p86
      %p378 = pneg %p83
      %p379 = pneg %p107
      %p380 = pneg %p104
      %p381 = pneg %p128
      %p382 = pneg %p125
      %p383 = pneg %p149
      %p384 = pneg %p146
      %p385 = pneg %p170
      %p386 = pneg %p167
      %p387 = pneg %p191
      %p388 = pneg %p188
      %p389 = pneg %p212
      %p390 = pneg %p209
      %p391 = pneg %p233
      %p392 = pneg %p230
      %p393 = pneg %p254
      %p394 = pneg %p251
      %p395 = pneg %p275
      %p396 = pneg %p272
      %p397 = pneg %p301
      %p398 = pneg %p298
      %p399 = scmp.lt.s32.totalorder %s23, 1
      %s400 = scalar_select %p399, %s23, 1
      %s401 = smul.addr %s400, 10
      %s402 = smul.addr %s401, 8
      %s403 = scalar_lea.vmem %s12, %s402
      %p404 = scmp.lt.s32.totalorder %s23, 1
      %s405 = scalar_select %p404, %s23, 1
      %s406 = smul.addr %s405, 52
      %s407 = smul.addr %s406, 4
      %s408 = scalar_lea.vmem %s0, %s407
      %p409 = scmp.lt.s32.totalorder %s23, 1
      %s410 = scalar_select %p409, %s23, 1
      %s411 = smul.addr %s410, 10
      %s412 = smul.addr %s411, 8
      %s413 = scalar_lea.vmem %s12, %s412
      %v415 = vld [vmem:[%s1] sm:$0xff]
      %v416 = vld [vmem:[%s1 + $0x8] sm:$0xff]
      %v417 = vld [vmem:[%s1 + $0x10] sm:$0xff]
      %v418 = vld [vmem:[%s1 + $0x18] sm:$0xff]
      %v419 = vld [vmem:[%s1 + $0x20] sm:$0xff]
      %v420 = vld [vmem:[%s1 + $0x28] sm:$0xff]
      %v421 = vld [vmem:[%s1 + $0x30] sm:$0xff]
      %v422 = vld [vmem:[%s1 + $0x38] sm:$0xff]
      %v423 = vld [vmem:[%s1 + $0x40] sm:$0xff]
      %v424 = vld [vmem:[%s1 + $0x48] sm:$0xff]
      %425 = vst [vmem:[#allocation2] sm:$0xff] 0
      %426 = vst [vmem:[#allocation2 + $0x30] sm:$0xff] 0
      %v427 = vld [vmem:[%s408] sm:$0xf]
      %v428 = vld [vmem:[%s408 + $0x4] sm:$0xf]
      %v429 = vld [vmem:[%s408 + $0x8] sm:$0xf]
      %v430 = vld [vmem:[%s408 + $0xc] sm:$0xf]
      %v431 = vld [vmem:[%s408 + $0x10] sm:$0xf]
      %v432 = vld [vmem:[%s408 + $0x14] sm:$0xf]
      %v433 = vld [vmem:[%s408 + $0x18] sm:$0xf]
      %v434 = vld [vmem:[%s408 + $0x1c] sm:$0xf]
      %v435 = vld [vmem:[%s408 + $0x20] sm:$0xf]
      %v436 = vld [vmem:[%s408 + $0x24] sm:$0xf]
      %v447 = vunpack.c.l.b16 %v427
      %v448 = vunpack.c.l.b16 %v428
      %v449 = vunpack.c.l.b16 %v429
      %v450 = vunpack.c.l.b16 %v430
      %v451 = vunpack.c.l.b16 %v431
      %v452 = vunpack.c.l.b16 %v432
      %v453 = vunpack.c.l.b16 %v433
      %v454 = vunpack.c.l.b16 %v434
      %v455 = vunpack.c.l.b16 %v435
      %v456 = vunpack.c.l.b16 %v436
      %v457 = vpack.c.b16 %v448, %v447
      %v458 = vpack.c.b16 %v450, %v449
      %v459 = vpack.c.b16 %v452, %v451
      %v460 = vpack.c.b16 %v454, %v453
      %v461 = vpack.c.b16 %v456, %v455
      %467 = vst [vmem:[#allocation3] sm:$0xff] %v457
      %468 = vst [vmem:[#allocation3 + $0x48] sm:$0xff] %v458
      %469 = vst [vmem:[#allocation3 + $0x90] sm:$0xff] %v459
      %470 = vst [vmem:[#allocation3 + $0xd8] sm:$0xff] %v460
      %471 = vst [vmem:[#allocation3 + $0x120] sm:$0xff] %v461
      %s472 = scalar_lea.vmem %s408, 52
      %v473 = vld [vmem:[%s472] sm:$0xf]
      %v474 = vld [vmem:[%s472 + $0x4] sm:$0xf]
      %v475 = vld [vmem:[%s472 + $0x8] sm:$0xf]
      %v476 = vld [vmem:[%s472 + $0xc] sm:$0xf]
      %v477 = vld [vmem:[%s472 + $0x10] sm:$0xf]
      %v478 = vld [vmem:[%s472 + $0x14] sm:$0xf]
      %v479 = vld [vmem:[%s472 + $0x18] sm:$0xf]
      %v480 = vld [vmem:[%s472 + $0x1c] sm:$0xf]
      %v481 = vld [vmem:[%s472 + $0x20] sm:$0xf]
      %v482 = vld [vmem:[%s472 + $0x24] sm:$0xf]
      %v493 = vunpack.c.l.b16 %v473
      %v494 = vunpack.c.l.b16 %v474
      %v495 = vunpack.c.l.b16 %v475
      %v496 = vunpack.c.l.b16 %v476
      %v497 = vunpack.c.l.b16 %v477
      %v498 = vunpack.c.l.b16 %v478
      %v499 = vunpack.c.l.b16 %v479
      %v500 = vunpack.c.l.b16 %v480
      %v501 = vunpack.c.l.b16 %v481
      %v502 = vunpack.c.l.b16 %v482
      %v503 = vpack.c.b16 %v494, %v493
      %v504 = vpack.c.b16 %v496, %v495
      %v505 = vpack.c.b16 %v498, %v497
      %v506 = vpack.c.b16 %v500, %v499
      %v507 = vpack.c.b16 %v502, %v501
      %513 = vst [vmem:[#allocation3 + $0x8] sm:$0xff] %v503
      %514 = vst [vmem:[#allocation3 + $0x50] sm:$0xff] %v504
      %515 = vst [vmem:[#allocation3 + $0x98] sm:$0xff] %v505
      %516 = vst [vmem:[#allocation3 + $0xe0] sm:$0xff] %v506
      %517 = vst [vmem:[#allocation3 + $0x128] sm:$0xff] %v507
      %v518 = vld [vmem:[%s408] sm:$0xf]
      %v519 = vld [vmem:[%s408 + $0x4] sm:$0xf]
      %v520 = vld [vmem:[%s408 + $0x8] sm:$0xf]
      %v521 = vld [vmem:[%s408 + $0xc] sm:$0xf]
      %v522 = vld [vmem:[%s408 + $0x10] sm:$0xf]
      %v523 = vld [vmem:[%s408 + $0x14] sm:$0xf]
      %v524 = vld [vmem:[%s408 + $0x18] sm:$0xf]
      %v525 = vld [vmem:[%s408 + $0x1c] sm:$0xf]
      %v526 = vld [vmem:[%s408 + $0x20] sm:$0xf]
      %v527 = vld [vmem:[%s408 + $0x24] sm:$0xf]
      %v528 = vld [vmem:[%s408 + $0x28] sm:$0x1]
      %v540 = vunpack.c.l.b16 %v518
      %v541 = vunpack.c.l.b16 %v519
      %v542 = vunpack.c.l.b16 %v520
      %v543 = vunpack.c.l.b16 %v521
      %v544 = vunpack.c.l.b16 %v522
      %v545 = vunpack.c.l.b16 %v523
      %v546 = vunpack.c.l.b16 %v524
      %v547 = vunpack.c.l.b16 %v525
      %v548 = vunpack.c.l.b16 %v526
      %v549 = vunpack.c.l.b16 %v527
      %v550 = vunpack.c.l.b16 %v528
      %v551 = vpack.c.b16 %v541, %v540
      %v552 = vpack.c.b16 %v543, %v542
      %v553 = vpack.c.b16 %v545, %v544
      %v554 = vpack.c.b16 %v547, %v546
      %v555 = vpack.c.b16 %v549, %v548
      %v556 = vpack.c.b16 %v550, %v550
      %vm557 = vsmask.f32 7424
      %v559 = vshrl.u32 %v551, 16
      %v561 = vshll.u32 %v551, 16
      %v563 = vrot.slane %v561, 1
      %v564 = vor.u32 %v559, %v563
      %v566 = vshll.u32 %v552, 16
      %v568 = vrot.slane %v566, 1
      %v569 = vsel %vm557, %v564, %v568
      %v570 = vshrl.u32 %v552, 16
      %v572 = vor.u32 %v570, %v568
      %v574 = vshll.u32 %v553, 16
      %v576 = vrot.slane %v574, 1
      %v577 = vsel %vm557, %v572, %v576
      %v578 = vshrl.u32 %v553, 16
      %v580 = vor.u32 %v578, %v576
      %v582 = vshll.u32 %v554, 16
      %v584 = vrot.slane %v582, 1
      %v585 = vsel %vm557, %v580, %v584
      %v586 = vshrl.u32 %v554, 16
      %v588 = vor.u32 %v586, %v584
      %v590 = vshll.u32 %v555, 16
      %v592 = vrot.slane %v590, 1
      %v593 = vsel %vm557, %v588, %v592
      %v594 = vshrl.u32 %v555, 16
      %v596 = vor.u32 %v594, %v592
      %v598 = vshll.u32 %v556, 16
      %v600 = vrot.slane %v598, 1
      %v601 = vsel %vm557, %v596, %v600
      %607 = vst [vmem:[#allocation3 + $0x10] sm:$0xff] %v569
      %608 = vst [vmem:[#allocation3 + $0x58] sm:$0xff] %v577
      %609 = vst [vmem:[#allocation3 + $0xa0] sm:$0xff] %v585
      %610 = vst [vmem:[#allocation3 + $0xe8] sm:$0xff] %v593
      %611 = vst [vmem:[#allocation3 + $0x130] sm:$0xff] %v601
      %s612 = scalar_lea.vmem %s408, 104
      %v613 = vld [vmem:[%s612] sm:$0xf]
      %v614 = vld [vmem:[%s612 + $0x4] sm:$0xf]
      %v615 = vld [vmem:[%s612 + $0x8] sm:$0xf]
      %v616 = vld [vmem:[%s612 + $0xc] sm:$0xf]
      %v617 = vld [vmem:[%s612 + $0x10] sm:$0xf]
      %v618 = vld [vmem:[%s612 + $0x14] sm:$0xf]
      %v619 = vld [vmem:[%s612 + $0x18] sm:$0xf]
      %v620 = vld [vmem:[%s612 + $0x1c] sm:$0xf]
      %v621 = vld [vmem:[%s612 + $0x20] sm:$0xf]
      %v622 = vld [vmem:[%s612 + $0x24] sm:$0xf]
      %v633 = vunpack.c.l.b16 %v613
      %v634 = vunpack.c.l.b16 %v614
      %v635 = vunpack.c.l.b16 %v615
      %v636 = vunpack.c.l.b16 %v616
      %v637 = vunpack.c.l.b16 %v617
      %v638 = vunpack.c.l.b16 %v618
      %v639 = vunpack.c.l.b16 %v619
      %v640 = vunpack.c.l.b16 %v620
      %v641 = vunpack.c.l.b16 %v621
      %v642 = vunpack.c.l.b16 %v622
      %v643 = vpack.c.b16 %v634, %v633
      %v644 = vpack.c.b16 %v636, %v635
      %v645 = vpack.c.b16 %v638, %v637
      %v646 = vpack.c.b16 %v640, %v639
      %v647 = vpack.c.b16 %v642, %v641
      %653 = vst [vmem:[#allocation3 + $0x18] sm:$0xff] %v643
      %654 = vst [vmem:[#allocation3 + $0x60] sm:$0xff] %v644
      %655 = vst [vmem:[#allocation3 + $0xa8] sm:$0xff] %v645
      %656 = vst [vmem:[#allocation3 + $0xf0] sm:$0xff] %v646
      %657 = vst [vmem:[#allocation3 + $0x138] sm:$0xff] %v647
      %s658 = scalar_lea.vmem %s408, 156
      %v659 = vld [vmem:[%s658] sm:$0xf]
      %v660 = vld [vmem:[%s658 + $0x4] sm:$0xf]
      %v661 = vld [vmem:[%s658 + $0x8] sm:$0xf]
      %v662 = vld [vmem:[%s658 + $0xc] sm:$0xf]
      %v663 = vld [vmem:[%s658 + $0x10] sm:$0xf]
      %v664 = vld [vmem:[%s658 + $0x14] sm:$0xf]
      %v665 = vld [vmem:[%s658 + $0x18] sm:$0xf]
      %v666 = vld [vmem:[%s658 + $0x1c] sm:$0xf]
      %v667 = vld [vmem:[%s658 + $0x20] sm:$0xf]
      %v668 = vld [vmem:[%s658 + $0x24] sm:$0xf]
      %v679 = vunpack.c.l.b16 %v659
      %v680 = vunpack.c.l.b16 %v660
      %v681 = vunpack.c.l.b16 %v661
      %v682 = vunpack.c.l.b16 %v662
      %v683 = vunpack.c.l.b16 %v663
      %v684 = vunpack.c.l.b16 %v664
      %v685 = vunpack.c.l.b16 %v665
      %v686 = vunpack.c.l.b16 %v666
      %v687 = vunpack.c.l.b16 %v667
      %v688 = vunpack.c.l.b16 %v668
      %v689 = vpack.c.b16 %v680, %v679
      %v690 = vpack.c.b16 %v682, %v681
      %v691 = vpack.c.b16 %v684, %v683
      %v692 = vpack.c.b16 %v686, %v685
      %v693 = vpack.c.b16 %v688, %v687
      %699 = vst [vmem:[#allocation3 + $0x20] sm:$0xff] %v689
      %700 = vst [vmem:[#allocation3 + $0x68] sm:$0xff] %v690
      %701 = vst [vmem:[#allocation3 + $0xb0] sm:$0xff] %v691
      %702 = vst [vmem:[#allocation3 + $0xf8] sm:$0xff] %v692
      %703 = vst [vmem:[#allocation3 + $0x140] sm:$0xff] %v693
      %v704 = vld [vmem:[%s612] sm:$0xf]
      %v705 = vld [vmem:[%s612 + $0x4] sm:$0xf]
      %v706 = vld [vmem:[%s612 + $0x8] sm:$0xf]
      %v707 = vld [vmem:[%s612 + $0xc] sm:$0xf]
      %v708 = vld [vmem:[%s612 + $0x10] sm:$0xf]
      %v709 = vld [vmem:[%s612 + $0x14] sm:$0xf]
      %v710 = vld [vmem:[%s612 + $0x18] sm:$0xf]
      %v711 = vld [vmem:[%s612 + $0x1c] sm:$0xf]
      %v712 = vld [vmem:[%s612 + $0x20] sm:$0xf]
      %v713 = vld [vmem:[%s612 + $0x24] sm:$0xf]
      %v714 = vld [vmem:[%s612 + $0x28] sm:$0x1]
      %v726 = vunpack.c.l.b16 %v704
      %v727 = vunpack.c.l.b16 %v705
      %v728 = vunpack.c.l.b16 %v706
      %v729 = vunpack.c.l.b16 %v707
      %v730 = vunpack.c.l.b16 %v708
      %v731 = vunpack.c.l.b16 %v709
      %v732 = vunpack.c.l.b16 %v710
      %v733 = vunpack.c.l.b16 %v711
      %v734 = vunpack.c.l.b16 %v712
      %v735 = vunpack.c.l.b16 %v713
      %v736 = vunpack.c.l.b16 %v714
      %v737 = vpack.c.b16 %v727, %v726
      %v738 = vpack.c.b16 %v729, %v728
      %v739 = vpack.c.b16 %v731, %v730
      %v740 = vpack.c.b16 %v733, %v732
      %v741 = vpack.c.b16 %v735, %v734
      %v742 = vpack.c.b16 %v736, %v736
      %v744 = vshrl.u32 %v737, 16
      %v746 = vshll.u32 %v737, 16
      %v748 = vrot.slane %v746, 1
      %v749 = vor.u32 %v744, %v748
      %v751 = vshll.u32 %v738, 16
      %v753 = vrot.slane %v751, 1
      %v754 = vsel %vm557, %v749, %v753
      %v755 = vshrl.u32 %v738, 16
      %v757 = vor.u32 %v755, %v753
      %v759 = vshll.u32 %v739, 16
      %v761 = vrot.slane %v759, 1
      %v762 = vsel %vm557, %v757, %v761
      %v763 = vshrl.u32 %v739, 16
      %v765 = vor.u32 %v763, %v761
      %v767 = vshll.u32 %v740, 16
      %v769 = vrot.slane %v767, 1
      %v770 = vsel %vm557, %v765, %v769
      %v771 = vshrl.u32 %v740, 16
      %v773 = vor.u32 %v771, %v769
      %v775 = vshll.u32 %v741, 16
      %v777 = vrot.slane %v775, 1
      %v778 = vsel %vm557, %v773, %v777
      %v779 = vshrl.u32 %v741, 16
      %v781 = vor.u32 %v779, %v777
      %v783 = vshll.u32 %v742, 16
      %v785 = vrot.slane %v783, 1
      %v786 = vsel %vm557, %v781, %v785
      %792 = vst [vmem:[#allocation3 + $0x28] sm:$0xff] %v754
      %793 = vst [vmem:[#allocation3 + $0x70] sm:$0xff] %v762
      %794 = vst [vmem:[#allocation3 + $0xb8] sm:$0xff] %v770
      %795 = vst [vmem:[#allocation3 + $0x100] sm:$0xff] %v778
      %796 = vst [vmem:[#allocation3 + $0x148] sm:$0xff] %v786
      %v797 = vld [vmem:[%s408 + $0x4] sm:$0xe]
      %v798 = vld [vmem:[%s408 + $0x8] sm:$0xf]
      %v799 = vld [vmem:[%s408 + $0xc] sm:$0xf]
      %v800 = vld [vmem:[%s408 + $0x10] sm:$0xf]
      %v801 = vld [vmem:[%s408 + $0x14] sm:$0xf]
      %v802 = vld [vmem:[%s408 + $0x18] sm:$0xf]
      %v803 = vld [vmem:[%s408 + $0x1c] sm:$0xf]
      %v804 = vld [vmem:[%s408 + $0x20] sm:$0xf]
      %v805 = vld [vmem:[%s408 + $0x24] sm:$0xf]
      %v806 = vld [vmem:[%s408 + $0x28] sm:$0xf]
      %v807 = vld [vmem:[%s408 + $0x2c] sm:$0x1]
      %v819 = vunpack.c.l.b16 %v797
      %v820 = vunpack.c.l.b16 %v798
      %v821 = vunpack.c.l.b16 %v799
      %v822 = vunpack.c.l.b16 %v800
      %v823 = vunpack.c.l.b16 %v801
      %v824 = vunpack.c.l.b16 %v802
      %v825 = vunpack.c.l.b16 %v803
      %v826 = vunpack.c.l.b16 %v804
      %v827 = vunpack.c.l.b16 %v805
      %v828 = vunpack.c.l.b16 %v806
      %v829 = vunpack.c.l.b16 %v807
      %v830 = vpack.c.b16 %v820, %v819
      %v831 = vpack.c.b16 %v822, %v821
      %v832 = vpack.c.b16 %v824, %v823
      %v833 = vpack.c.b16 %v826, %v825
      %v834 = vpack.c.b16 %v828, %v827
      %v835 = vpack.c.b16 %v829, %v829
      %vm836 = vcmask 1046528
      %v837 = vrot.slane %v830, 1
      %v838 = vrot.slane %v831, 1
      %v839 = vsel %vm836, %v837, %v838
      %v840 = vrot.slane %v832, 1
      %v841 = vsel %vm836, %v838, %v840
      %v842 = vrot.slane %v833, 1
      %v843 = vsel %vm836, %v840, %v842
      %v844 = vrot.slane %v834, 1
      %v845 = vsel %vm836, %v842, %v844
      %v846 = vrot.slane %v835, 1
      %v847 = vsel %vm836, %v844, %v846
      %853 = vst [vmem:[#allocation3 + $0x30] sm:$0xff] %v839
      %854 = vst [vmem:[#allocation3 + $0x78] sm:$0xff] %v841
      %855 = vst [vmem:[#allocation3 + $0xc0] sm:$0xff] %v843
      %856 = vst [vmem:[#allocation3 + $0x108] sm:$0xff] %v845
      %857 = vst [vmem:[#allocation3 + $0x150] sm:$0xff] %v847
      %v858 = vld [vmem:[%s472 + $0x4] sm:$0xe]
      %v859 = vld [vmem:[%s472 + $0x8] sm:$0xf]
      %v860 = vld [vmem:[%s472 + $0xc] sm:$0xf]
      %v861 = vld [vmem:[%s472 + $0x10] sm:$0xf]
      %v862 = vld [vmem:[%s472 + $0x14] sm:$0xf]
      %v863 = vld [vmem:[%s472 + $0x18] sm:$0xf]
      %v864 = vld [vmem:[%s472 + $0x1c] sm:$0xf]
      %v865 = vld [vmem:[%s472 + $0x20] sm:$0xf]
      %v866 = vld [vmem:[%s472 + $0x24] sm:$0xf]
      %v867 = vld [vmem:[%s472 + $0x28] sm:$0xf]
      %v868 = vld [vmem:[%s472 + $0x2c] sm:$0x1]
      %v880 = vunpack.c.l.b16 %v858
      %v881 = vunpack.c.l.b16 %v859
      %v882 = vunpack.c.l.b16 %v860
      %v883 = vunpack.c.l.b16 %v861
      %v884 = vunpack.c.l.b16 %v862
      %v885 = vunpack.c.l.b16 %v863
      %v886 = vunpack.c.l.b16 %v864
      %v887 = vunpack.c.l.b16 %v865
      %v888 = vunpack.c.l.b16 %v866
      %v889 = vunpack.c.l.b16 %v867
      %v890 = vunpack.c.l.b16 %v868
      %v891 = vpack.c.b16 %v881, %v880
      %v892 = vpack.c.b16 %v883, %v882
      %v893 = vpack.c.b16 %v885, %v884
      %v894 = vpack.c.b16 %v887, %v886
      %v895 = vpack.c.b16 %v889, %v888
      %v896 = vpack.c.b16 %v890, %v890
      %v897 = vrot.slane %v891, 1
      %v898 = vrot.slane %v892, 1
      %v899 = vsel %vm836, %v897, %v898
      %v900 = vrot.slane %v893, 1
      %v901 = vsel %vm836, %v898, %v900
      %v902 = vrot.slane %v894, 1
      %v903 = vsel %vm836, %v900, %v902
      %v904 = vrot.slane %v895, 1
      %v905 = vsel %vm836, %v902, %v904
      %v906 = vrot.slane %v896, 1
      %v907 = vsel %vm836, %v904, %v906
      %913 = vst [vmem:[#allocation3 + $0x38] sm:$0xff] %v899
      %914 = vst [vmem:[#allocation3 + $0x80] sm:$0xff] %v901
      %915 = vst [vmem:[#allocation3 + $0xc8] sm:$0xff] %v903
      %916 = vst [vmem:[#allocation3 + $0x110] sm:$0xff] %v905
      %917 = vst [vmem:[#allocation3 + $0x158] sm:$0xff] %v907
      %v918 = vld [vmem:[%s408 + $0x4] sm:$0xe]
      %v919 = vld [vmem:[%s408 + $0x8] sm:$0xf]
      %v920 = vld [vmem:[%s408 + $0xc] sm:$0xf]
      %v921 = vld [vmem:[%s408 + $0x10] sm:$0xf]
      %v922 = vld [vmem:[%s408 + $0x14] sm:$0xf]
      %v923 = vld [vmem:[%s408 + $0x18] sm:$0xf]
      %v924 = vld [vmem:[%s408 + $0x1c] sm:$0xf]
      %v925 = vld [vmem:[%s408 + $0x20] sm:$0xf]
      %v926 = vld [vmem:[%s408 + $0x24] sm:$0xf]
      %v927 = vld [vmem:[%s408 + $0x28] sm:$0xf]
      %v928 = vld [vmem:[%s408 + $0x2c] sm:$0x3]
      %v940 = vunpack.c.l.b16 %v918
      %v941 = vunpack.c.l.b16 %v919
      %v942 = vunpack.c.l.b16 %v920
      %v943 = vunpack.c.l.b16 %v921
      %v944 = vunpack.c.l.b16 %v922
      %v945 = vunpack.c.l.b16 %v923
      %v946 = vunpack.c.l.b16 %v924
      %v947 = vunpack.c.l.b16 %v925
      %v948 = vunpack.c.l.b16 %v926
      %v949 = vunpack.c.l.b16 %v927
      %v950 = vunpack.c.l.b16 %v928
      %v951 = vpack.c.b16 %v941, %v940
      %v952 = vpack.c.b16 %v943, %v942
      %v953 = vpack.c.b16 %v945, %v944
      %v954 = vpack.c.b16 %v947, %v946
      %v955 = vpack.c.b16 %v949, %v948
      %v956 = vpack.c.b16 %v950, %v950
      %vm957 = vsmask.f32 6400
      %v959 = vshrl.u32 %v951, 16
      %v961 = vrot.slane %v959, 1
      %v962 = vshll.u32 %v951, 16
      %v964 = vrot.slane %v962, 2
      %v965 = vor.u32 %v961, %v964
      %v967 = vshrl.u32 %v952, 16
      %v969 = vrot.slane %v967, 1
      %v970 = vshll.u32 %v952, 16
      %v972 = vrot.slane %v970, 2
      %v973 = vor.u32 %v969, %v972
      %v974 = vsel %vm957, %v965, %v973
      %v976 = vshrl.u32 %v953, 16
      %v978 = vrot.slane %v976, 1
      %v979 = vshll.u32 %v953, 16
      %v981 = vrot.slane %v979, 2
      %v982 = vor.u32 %v978, %v981
      %v983 = vsel %vm957, %v973, %v982
      %v985 = vshrl.u32 %v954, 16
      %v987 = vrot.slane %v985, 1
      %v988 = vshll.u32 %v954, 16
      %v990 = vrot.slane %v988, 2
      %v991 = vor.u32 %v987, %v990
      %v992 = vsel %vm957, %v982, %v991
      %v994 = vshrl.u32 %v955, 16
      %v996 = vrot.slane %v994, 1
      %v997 = vshll.u32 %v955, 16
      %v999 = vrot.slane %v997, 2
      %v1000 = vor.u32 %v996, %v999
      %v1001 = vsel %vm957, %v991, %v1000
      %v1003 = vshrl.u32 %v956, 16
      %v1005 = vrot.slane %v1003, 1
      %v1006 = vshll.u32 %v956, 16
      %v1008 = vrot.slane %v1006, 2
      %v1009 = vor.u32 %v1005, %v1008
      %v1010 = vsel %vm957, %v1000, %v1009
      %1016 = vst [vmem:[#allocation3 + $0x40] sm:$0xff] %v974
      %1017 = vst [vmem:[#allocation3 + $0x88] sm:$0xff] %v983
      %1018 = vst [vmem:[#allocation3 + $0xd0] sm:$0xff] %v992
      %1019 = vst [vmem:[#allocation3 + $0x118] sm:$0xff] %v1001
      %1020 = vst [vmem:[#allocation3 + $0x160] sm:$0xff] %v1010
      %v1021 = vld [vmem:[#allocation3 + $0x20] sm:$0xff]
      %v1022 = vld [vmem:[#allocation3 + $0x68] sm:$0xff]
      %v1023 = vld [vmem:[#allocation3 + $0xb0] sm:$0xff]
      %v1024 = vld [vmem:[#allocation3 + $0xf8] sm:$0xff]
      %v1025 = vld [vmem:[#allocation3 + $0x140] sm:$0xff]
      %v1026 = vld [vmem:[%s6] sm:$0xf]
      %v1027 = vld [vmem:[%s6 + $0x4] sm:$0xf]
      %v1028 = vld [vmem:[%s6 + $0x8] sm:$0xf]
      %v1029 = vld [vmem:[%s6 + $0xc] sm:$0xf]
      %v1030 = vld [vmem:[%s6 + $0x10] sm:$0xf]
      %v1031 = vld [vmem:[%s6 + $0x14] sm:$0xf]
      %v1032 = vld [vmem:[%s6 + $0x18] sm:$0xf]
      %v1033 = vld [vmem:[%s6 + $0x1c] sm:$0xf]
      %v1034 = vld [vmem:[%s6 + $0x20] sm:$0xf]
      %v1035 = vld [vmem:[%s6 + $0x24] sm:$0xf]
      %v1036 = vld [vmem:[%s6 + $0x28] sm:$0xf]
      %v1037 = vld [vmem:[%s6 + $0x2c] sm:$0xf]
      %v1038 = vld [vmem:[%s6 + $0x30] sm:$0xf]
      %v1039 = vld [vmem:[%s6 + $0x34] sm:$0xf]
      %v1040 = vld [vmem:[%s6 + $0x38] sm:$0xf]
      %v1041 = vld [vmem:[%s6 + $0x3c] sm:$0xf]
      %v1042 = vld [vmem:[%s7] sm:$0x1]
      %v1044 = vlaneseq
      %v1045 = vshrl.u32 %v1044, 7
      %v1046 = vsub.s32 0, %v1045
      %v1047 = vrot.slane %v1042, %v1046
      %v1065 = vunpack.c.l.b16 %v1026
      %v1066 = vunpack.c.l.b16 %v1027
      %v1067 = vunpack.c.l.b16 %v1028
      %v1068 = vunpack.c.l.b16 %v1029
      %v1069 = vunpack.c.l.b16 %v1030
      %v1070 = vunpack.c.l.b16 %v1031
      %v1071 = vunpack.c.l.b16 %v1032
      %v1072 = vunpack.c.l.b16 %v1033
      %v1073 = vunpack.c.l.b16 %v1034
      %v1074 = vunpack.c.l.b16 %v1035
      %v1075 = vunpack.c.l.b16 %v1036
      %v1076 = vunpack.c.l.b16 %v1037
      %v1077 = vunpack.c.l.b16 %v1038
      %v1078 = vunpack.c.l.b16 %v1039
      %v1079 = vunpack.c.l.b16 %v1040
      %v1080 = vunpack.c.l.b16 %v1041
      %v1081 = vpack.c.b16 %v1066, %v1065
      %v1082 = vpack.c.b16 %v1068, %v1067
      %v1083 = vpack.c.b16 %v1070, %v1069
      %v1084 = vpack.c.b16 %v1072, %v1071
      %v1085 = vpack.c.b16 %v1074, %v1073
      %v1086 = vpack.c.b16 %v1076, %v1075
      %v1087 = vpack.c.b16 %v1078, %v1077
      %v1088 = vpack.c.b16 %v1080, %v1079
      %1097 = vmatprep.subr.bf16.mxu0 0
      %1098 = vmatpush1.bf16.msra.mxu0 %v1081
      %1099 = vmatprep.subr.bf16.mxu0 0
      %1100 = vmatpush1.bf16.msra.mxu0 %v1082
      %1101 = vmatprep.subr.bf16.mxu0 0
      %1102 = vmatpush1.bf16.msra.mxu0 %v1083
      %1103 = vmatprep.subr.bf16.mxu0 0
      %1104 = vmatpush1.bf16.msra.mxu0 %v1084
      %1105 = vmatprep.subr.bf16.mxu0 0
      %1106 = vmatpush1.bf16.msra.mxu0 %v1085
      %1107 = vmatprep.subr.bf16.mxu0 0
      %1108 = vmatpush1.bf16.msra.mxu0 %v1086
      %1109 = vmatprep.subr.bf16.mxu0 0
      %1110 = vmatpush1.bf16.msra.mxu0 %v1087
      %1111 = vmatprep.subr.bf16.mxu0 0
      %1112 = vmatpush1.bf16.msra.mxu0 %v1088
      %1113 = vmatprep.subr.bf16.mxu0 0
      %1114 = vmatpush1.bf16.msra.mxu0 0
      %1115 = vmatprep.subr.bf16.mxu0 0
      %1116 = vmatpush1.bf16.msra.mxu0 0
      %1117 = vmatprep.subr.bf16.mxu0 0
      %1118 = vmatpush1.bf16.msra.mxu0 0
      %1119 = vmatprep.subr.bf16.mxu0 0
      %1120 = vmatpush1.bf16.msra.mxu0 0
      %1121 = vmatprep.subr.bf16.mxu0 0
      %1122 = vmatpush1.bf16.msra.mxu0 0
      %1123 = vmatprep.subr.bf16.mxu0 0
      %1124 = vmatpush1.bf16.msra.mxu0 0
      %1125 = vmatprep.subr.bf16.mxu0 0
      %1126 = vmatpush1.bf16.msra.mxu0 0
      %1127 = vmatprep.subr.bf16.mxu0 0
      %1128 = vmatpush1.bf16.msra.mxu0 0
      %1129 = vmatprep.mubr.bf16.mxu0 0
      %1130 = vmatmul.mubr.bf16.gmra.mrb[0].mxu0 %v1021
      %v1131 = vpop.f32.mrb[0].mxu0
      %v1132 = vadd.f32 %v1047, %v1131
      %v1133 = vpop.f32.mrb[0].mxu0
      %v1134 = vpop.f32.mrb[0].mxu0
      %v1135 = vadd.f32 %v1047, %v1134
      %v1136 = vpop.f32.mrb[0].mxu0
      %1137 = vmatprep.mubr.bf16.mxu0 0
      %1138 = vmatmul.mubr.bf16.gmra.mrb[0].mxu0 %v1022
      %v1139 = vpop.f32.mrb[0].mxu0
      %v1140 = vadd.f32 %v1047, %v1139
      %v1141 = vpop.f32.mrb[0].mxu0
      %v1142 = vpop.f32.mrb[0].mxu0
      %v1143 = vadd.f32 %v1047, %v1142
      %v1144 = vpop.f32.mrb[0].mxu0
      %1145 = vmatprep.mubr.bf16.mxu0 0
      %1146 = vmatmul.mubr.bf16.gmra.mrb[0].mxu0 %v1023
      %v1147 = vpop.f32.mrb[0].mxu0
      %v1148 = vadd.f32 %v1047, %v1147
      %v1149 = vpop.f32.mrb[0].mxu0
      %v1150 = vpop.f32.mrb[0].mxu0
      %v1151 = vadd.f32 %v1047, %v1150
      %v1152 = vpop.f32.mrb[0].mxu0
      %1153 = vmatprep.mubr.bf16.mxu0 0
      %1154 = vmatmul.mubr.bf16.gmra.mrb[0].mxu0 %v1024
      %v1155 = vpop.f32.mrb[0].mxu0
      %v1156 = vadd.f32 %v1047, %v1155
      %v1157 = vpop.f32.mrb[0].mxu0
      %v1158 = vpop.f32.mrb[0].mxu0
      %v1159 = vadd.f32 %v1047, %v1158
      %v1160 = vpop.f32.mrb[0].mxu0
      %1161 = vmatprep.mubr.bf16.mxu0 0
      %1162 = vmatmul.mubr.bf16.gmra.mrb[0].mxu0 %v1025
      %v1163 = vpop.f32.mrb[0].mxu0
      %v1164 = vadd.f32 %v1047, %v1163
      %v1165 = vpop.f32.mrb[0].mxu0
      %v1166 = vpop.f32.mrb[0].mxu0
      %v1167 = vadd.f32 %v1047, %v1166
      %v1168 = vpop.f32.mrb[0].mxu0
      %1169 = vdwg.mxu0
      %v1170 = vld [vmem:[#allocation3] sm:$0xff]
      %v1171 = vld [vmem:[#allocation3 + $0x8] sm:$0xff]
      %v1172 = vld [vmem:[#allocation3 + $0x10] sm:$0xff]
      %v1173 = vld [vmem:[#allocation3 + $0x18] sm:$0xff]
      %v1174 = vld [vmem:[#allocation3 + $0x20] sm:$0xff]
      %v1175 = vld [vmem:[#allocation3 + $0x28] sm:$0xff]
      %v1176 = vld [vmem:[#allocation3 + $0x30] sm:$0xff]
      %v1177 = vld [vmem:[#allocation3 + $0x38] sm:$0xff]
      %v1178 = vld [vmem:[#allocation3 + $0x40] sm:$0xff]
      %v1179 = vld [vmem:[#allocation3 + $0x48] sm:$0xff]
      %v1180 = vld [vmem:[#allocation3 + $0x50] sm:$0xff]
      %v1181 = vld [vmem:[#allocation3 + $0x58] sm:$0xff]
      %v1182 = vld [vmem:[#allocation3 + $0x60] sm:$0xff]
      %v1183 = vld [vmem:[#allocation3 + $0x68] sm:$0xff]
      %v1184 = vld [vmem:[#allocation3 + $0x70] sm:$0xff]
      %v1185 = vld [vmem:[#allocation3 + $0x78] sm:$0xff]
      %v1186 = vld [vmem:[#allocation3 + $0x80] sm:$0xff]
      %v1187 = vld [vmem:[#allocation3 + $0x88] sm:$0xff]
      %v1188 = vld [vmem:[#allocation3 + $0x90] sm:$0xff]
      %v1189 = vld [vmem:[#allocation3 + $0x98] sm:$0xff]
      %v1190 = vld [vmem:[#allocation3 + $0xa0] sm:$0xff]
      %v1191 = vld [vmem:[#allocation3 + $0xa8] sm:$0xff]
      %v1192 = vld [vmem:[#allocation3 + $0xb0] sm:$0xff]
      %v1193 = vld [vmem:[#allocation3 + $0xb8] sm:$0xff]
      %v1194 = vld [vmem:[#allocation3 + $0xc0] sm:$0xff]
      %v1195 = vld [vmem:[#allocation3 + $0xc8] sm:$0xff]
      %v1196 = vld [vmem:[#allocation3 + $0xd0] sm:$0xff]
      %v1197 = vld [vmem:[#allocation3 + $0xd8] sm:$0xff]
      %v1198 = vld [vmem:[#allocation3 + $0xe0] sm:$0xff]
      %v1199 = vld [vmem:[#allocation3 + $0xe8] sm:$0xff]
      %v1200 = vld [vmem:[#allocation3 + $0xf0] sm:$0xff]
      %v1201 = vld [vmem:[#allocation3 + $0xf8] sm:$0xff]
      %v1202 = vld [vmem:[#allocation3 + $0x100] sm:$0xff]
      %v1203 = vld [vmem:[#allocation3 + $0x108] sm:$0xff]
      %v1204 = vld [vmem:[#allocation3 + $0x110] sm:$0xff]
      %v1205 = vld [vmem:[#allocation3 + $0x118] sm:$0xff]
      %v1206 = vld [vmem:[#allocation3 + $0x120] sm:$0xff]
      %v1207 = vld [vmem:[#allocation3 + $0x128] sm:$0xff]
      %v1208 = vld [vmem:[#allocation3 + $0x130] sm:$0xff]
      %v1209 = vld [vmem:[#allocation3 + $0x138] sm:$0xff]
      %v1210 = vld [vmem:[#allocation3 + $0x140] sm:$0xff]
      %v1211 = vld [vmem:[#allocation3 + $0x148] sm:$0xff]
      %v1212 = vld [vmem:[#allocation3 + $0x150] sm:$0xff]
      %v1213 = vld [vmem:[#allocation3 + $0x158] sm:$0xff]
      %v1214 = vld [vmem:[#allocation3 + $0x160] sm:$0xff]
      %v1215 = vld [vmem:[%s2] sm:$0xf]
      %v1216 = vld [vmem:[%s2 + $0x4] sm:$0xf]
      %v1217 = vld [vmem:[%s2 + $0x8] sm:$0xf]
      %v1218 = vld [vmem:[%s2 + $0xc] sm:$0xf]
      %v1219 = vld [vmem:[%s2 + $0x10] sm:$0xf]
      %v1220 = vld [vmem:[%s2 + $0x14] sm:$0xf]
      %v1221 = vld [vmem:[%s2 + $0x18] sm:$0xf]
      %v1222 = vld [vmem:[%s2 + $0x1c] sm:$0xf]
      %v1223 = vld [vmem:[%s2 + $0x20] sm:$0xf]
      %v1224 = vld [vmem:[%s2 + $0x24] sm:$0xf]
      %v1225 = vld [vmem:[%s2 + $0x28] sm:$0xf]
      %v1226 = vld [vmem:[%s2 + $0x2c] sm:$0xf]
      %v1227 = vld [vmem:[%s2 + $0x30] sm:$0xf]
      %v1228 = vld [vmem:[%s2 + $0x34] sm:$0xf]
      %v1229 = vld [vmem:[%s2 + $0x38] sm:$0xf]
      %v1230 = vld [vmem:[%s2 + $0x3c] sm:$0xf]
      %v1231 = vld [vmem:[%s2 + $0x40] sm:$0xf]
      %v1232 = vld [vmem:[%s2 + $0x44] sm:$0xf]
      %v1233 = vld [vmem:[%s2 + $0x48] sm:$0xf]
      %v1234 = vld [vmem:[%s2 + $0x4c] sm:$0xf]
      %v1235 = vld [vmem:[%s2 + $0x50] sm:$0xf]
      %v1236 = vld [vmem:[%s2 + $0x54] sm:$0xf]
      %v1237 = vld [vmem:[%s2 + $0x58] sm:$0xf]
      %v1238 = vld [vmem:[%s2 + $0x5c] sm:$0xf]
      %v1239 = vld [vmem:[%s2 + $0x60] sm:$0xf]
      %v1240 = vld [vmem:[%s2 + $0x64] sm:$0xf]
      %v1241 = vld [vmem:[%s2 + $0x68] sm:$0xf]
      %v1242 = vld [vmem:[%s2 + $0x6c] sm:$0xf]
      %v1243 = vld [vmem:[%s2 + $0x70] sm:$0xf]
      %v1244 = vld [vmem:[%s2 + $0x74] sm:$0xf]
      %v1245 = vld [vmem:[%s2 + $0x78] sm:$0xf]
      %v1246 = vld [vmem:[%s2 + $0x7c] sm:$0xf]
      %v1247 = vld [vmem:[%s2 + $0x80] sm:$0xf]
      %v1248 = vld [vmem:[%s2 + $0x84] sm:$0xf]
      %v1249 = vld [vmem:[%s2 + $0x88] sm:$0xf]
      %v1250 = vld [vmem:[%s2 + $0x8c] sm:$0xf]
      %v1251 = vld [vmem:[%s2 + $0x90] sm:$0xf]
      %v1252 = vld [vmem:[%s2 + $0x94] sm:$0xf]
      %v1253 = vld [vmem:[%s2 + $0x98] sm:$0xf]
      %v1254 = vld [vmem:[%s2 + $0x9c] sm:$0xf]
      %v1255 = vld [vmem:[%s2 + $0xa0] sm:$0xf]
      %v1256 = vld [vmem:[%s2 + $0xa4] sm:$0xf]
      %v1257 = vld [vmem:[%s2 + $0xa8] sm:$0xf]
      %v1258 = vld [vmem:[%s2 + $0xac] sm:$0xf]
      %v1259 = vld [vmem:[%s2 + $0xb0] sm:$0xf]
      %v1260 = vld [vmem:[%s2 + $0xb4] sm:$0xf]
      %v1261 = vld [vmem:[%s2 + $0xb8] sm:$0xf]
      %v1262 = vld [vmem:[%s2 + $0xbc] sm:$0xf]
      %v1263 = vld [vmem:[%s2 + $0xc0] sm:$0xf]
      %v1264 = vld [vmem:[%s2 + $0xc4] sm:$0xf]
      %v1265 = vld [vmem:[%s2 + $0xc8] sm:$0xf]
      %v1266 = vld [vmem:[%s2 + $0xcc] sm:$0xf]
      %v1267 = vld [vmem:[%s2 + $0xd0] sm:$0xf]
      %v1268 = vld [vmem:[%s2 + $0xd4] sm:$0xf]
      %v1269 = vld [vmem:[%s2 + $0xd8] sm:$0xf]
      %v1270 = vld [vmem:[%s2 + $0xdc] sm:$0xf]
      %v1271 = vld [vmem:[%s2 + $0xe0] sm:$0xf]
      %v1272 = vld [vmem:[%s2 + $0xe4] sm:$0xf]
      %v1273 = vld [vmem:[%s2 + $0xe8] sm:$0xf]
      %v1274 = vld [vmem:[%s2 + $0xec] sm:$0xf]
      %v1275 = vld [vmem:[%s2 + $0xf0] sm:$0xf]
      %v1276 = vld [vmem:[%s2 + $0xf4] sm:$0xf]
      %v1277 = vld [vmem:[%s2 + $0xf8] sm:$0xf]
      %v1278 = vld [vmem:[%s2 + $0xfc] sm:$0xf]
      %v1279 = vld [vmem:[%s2 + $0x100] sm:$0xf]
      %v1280 = vld [vmem:[%s2 + $0x104] sm:$0xf]
      %v1281 = vld [vmem:[%s2 + $0x108] sm:$0xf]
      %v1282 = vld [vmem:[%s2 + $0x10c] sm:$0xf]
      %v1283 = vld [vmem:[%s2 + $0x110] sm:$0xf]
      %v1284 = vld [vmem:[%s2 + $0x114] sm:$0xf]
      %v1285 = vld [vmem:[%s2 + $0x118] sm:$0xf]
      %v1286 = vld [vmem:[%s2 + $0x11c] sm:$0xf]
      %v1287 = vld [vmem:[%s2 + $0x120] sm:$0xf]
      %v1288 = vld [vmem:[%s2 + $0x124] sm:$0xf]
      %v1289 = vld [vmem:[%s2 + $0x128] sm:$0xf]
      %v1290 = vld [vmem:[%s2 + $0x12c] sm:$0xf]
      %v1291 = vld [vmem:[%s2 + $0x130] sm:$0xf]
      %v1292 = vld [vmem:[%s2 + $0x134] sm:$0xf]
      %v1293 = vld [vmem:[%s2 + $0x138] sm:$0xf]
      %v1294 = vld [vmem:[%s2 + $0x13c] sm:$0xf]
      %v1295 = vld [vmem:[%s2 + $0x140] sm:$0xf]
      %v1296 = vld [vmem:[%s2 + $0x144] sm:$0xf]
      %v1297 = vld [vmem:[%s2 + $0x148] sm:$0xf]
      %v1298 = vld [vmem:[%s2 + $0x14c] sm:$0xf]
      %v1299 = vld [vmem:[%s2 + $0x150] sm:$0xf]
      %v1300 = vld [vmem:[%s2 + $0x154] sm:$0xf]
      %v1301 = vld [vmem:[%s2 + $0x158] sm:$0xf]
      %v1302 = vld [vmem:[%s2 + $0x15c] sm:$0xf]
      %v1303 = vld [vmem:[%s2 + $0x160] sm:$0xf]
      %v1304 = vld [vmem:[%s2 + $0x164] sm:$0xf]
      %v1305 = vld [vmem:[%s2 + $0x168] sm:$0xf]
      %v1306 = vld [vmem:[%s2 + $0x16c] sm:$0xf]
      %v1307 = vld [vmem:[%s2 + $0x170] sm:$0xf]
      %v1308 = vld [vmem:[%s2 + $0x174] sm:$0xf]
      %v1309 = vld [vmem:[%s2 + $0x178] sm:$0xf]
      %v1310 = vld [vmem:[%s2 + $0x17c] sm:$0xf]
      %v1311 = vld [vmem:[%s2 + $0x180] sm:$0xf]
      %v1312 = vld [vmem:[%s2 + $0x184] sm:$0xf]
      %v1313 = vld [vmem:[%s2 + $0x188] sm:$0xf]
      %v1314 = vld [vmem:[%s2 + $0x18c] sm:$0xf]
      %v1315 = vld [vmem:[%s2 + $0x190] sm:$0xf]
      %v1316 = vld [vmem:[%s2 + $0x194] sm:$0xf]
      %v1317 = vld [vmem:[%s2 + $0x198] sm:$0xf]
      %v1318 = vld [vmem:[%s2 + $0x19c] sm:$0xf]
      %v1319 = vld [vmem:[%s2 + $0x1a0] sm:$0xf]
      %v1320 = vld [vmem:[%s2 + $0x1a4] sm:$0xf]
      %v1321 = vld [vmem:[%s2 + $0x1a8] sm:$0xf]
      %v1322 = vld [vmem:[%s2 + $0x1ac] sm:$0xf]
      %v1323 = vld [vmem:[%s2 + $0x1b0] sm:$0xf]
      %v1324 = vld [vmem:[%s2 + $0x1b4] sm:$0xf]
      %v1325 = vld [vmem:[%s2 + $0x1b8] sm:$0xf]
      %v1326 = vld [vmem:[%s2 + $0x1bc] sm:$0xf]
      %v1327 = vld [vmem:[%s2 + $0x1c0] sm:$0xf]
      %v1328 = vld [vmem:[%s2 + $0x1c4] sm:$0xf]
      %v1329 = vld [vmem:[%s2 + $0x1c8] sm:$0xf]
      %v1330 = vld [vmem:[%s2 + $0x1cc] sm:$0xf]
      %v1331 = vld [vmem:[%s2 + $0x1d0] sm:$0xf]
      %v1332 = vld [vmem:[%s2 + $0x1d4] sm:$0xf]
      %v1333 = vld [vmem:[%s2 + $0x1d8] sm:$0xf]
      %v1334 = vld [vmem:[%s2 + $0x1dc] sm:$0xf]
      %v1335 = vld [vmem:[%s2 + $0x1e0] sm:$0xf]
      %v1336 = vld [vmem:[%s2 + $0x1e4] sm:$0xf]
      %v1337 = vld [vmem:[%s2 + $0x1e8] sm:$0xf]
      %v1338 = vld [vmem:[%s2 + $0x1ec] sm:$0xf]
      %v1339 = vld [vmem:[%s2 + $0x1f0] sm:$0xf]
      %v1340 = vld [vmem:[%s2 + $0x1f4] sm:$0xf]
      %v1341 = vld [vmem:[%s2 + $0x1f8] sm:$0xf]
      %v1342 = vld [vmem:[%s2 + $0x1fc] sm:$0xf]
      %v1343 = vld [vmem:[%s2 + $0x200] sm:$0xf]
      %v1344 = vld [vmem:[%s2 + $0x204] sm:$0xf]
      %v1345 = vld [vmem:[%s2 + $0x208] sm:$0xf]
      %v1346 = vld [vmem:[%s2 + $0x20c] sm:$0xf]
      %v1347 = vld [vmem:[%s2 + $0x210] sm:$0xf]
      %v1348 = vld [vmem:[%s2 + $0x214] sm:$0xf]
      %v1349 = vld [vmem:[%s2 + $0x218] sm:$0xf]
      %v1350 = vld [vmem:[%s2 + $0x21c] sm:$0xf]
      %v1351 = vld [vmem:[%s2 + $0x220] sm:$0xf]
      %v1352 = vld [vmem:[%s2 + $0x224] sm:$0xf]
      %v1353 = vld [vmem:[%s2 + $0x228] sm:$0xf]
      %v1354 = vld [vmem:[%s2 + $0x22c] sm:$0xf]
      %v1355 = vld [vmem:[%s2 + $0x230] sm:$0xf]
      %v1356 = vld [vmem:[%s2 + $0x234] sm:$0xf]
      %v1357 = vld [vmem:[%s2 + $0x238] sm:$0xf]
      %v1358 = vld [vmem:[%s2 + $0x23c] sm:$0xf]
      %v1359 = vld [vmem:[%s3] sm:$0x1]
      %v1361 = vlaneseq
      %v1362 = vshrl.u32 %v1361, 7
      %v1363 = vsub.s32 0, %v1362
      %v1364 = vrot.slane %v1359, %v1363
      %v1510 = vunpack.c.l.b16 %v1215
      %v1511 = vunpack.c.l.b16 %v1216
      %v1512 = vunpack.c.l.b16 %v1217
      %v1513 = vunpack.c.l.b16 %v1218
      %v1514 = vunpack.c.l.b16 %v1219
      %v1515 = vunpack.c.l.b16 %v1220
      %v1516 = vunpack.c.l.b16 %v1221
      %v1517 = vunpack.c.l.b16 %v1222
      %v1518 = vunpack.c.l.b16 %v1223
      %v1519 = vunpack.c.l.b16 %v1224
      %v1520 = vunpack.c.l.b16 %v1225
      %v1521 = vunpack.c.l.b16 %v1226
      %v1522 = vunpack.c.l.b16 %v1227
      %v1523 = vunpack.c.l.b16 %v1228
      %v1524 = vunpack.c.l.b16 %v1229
      %v1525 = vunpack.c.l.b16 %v1230
      %v1526 = vunpack.c.l.b16 %v1231
      %v1527 = vunpack.c.l.b16 %v1232
      %v1528 = vunpack.c.l.b16 %v1233
      %v1529 = vunpack.c.l.b16 %v1234
      %v1530 = vunpack.c.l.b16 %v1235
      %v1531 = vunpack.c.l.b16 %v1236
      %v1532 = vunpack.c.l.b16 %v1237
      %v1533 = vunpack.c.l.b16 %v1238
      %v1534 = vunpack.c.l.b16 %v1239
      %v1535 = vunpack.c.l.b16 %v1240
      %v1536 = vunpack.c.l.b16 %v1241
      %v1537 = vunpack.c.l.b16 %v1242
      %v1538 = vunpack.c.l.b16 %v1243
      %v1539 = vunpack.c.l.b16 %v1244
      %v1540 = vunpack.c.l.b16 %v1245
      %v1541 = vunpack.c.l.b16 %v1246
      %v1542 = vunpack.c.l.b16 %v1247
      %v1543 = vunpack.c.l.b16 %v1248
      %v1544 = vunpack.c.l.b16 %v1249
      %v1545 = vunpack.c.l.b16 %v1250
      %v1546 = vunpack.c.l.b16 %v1251
      %v1547 = vunpack.c.l.b16 %v1252
      %v1548 = vunpack.c.l.b16 %v1253
      %v1549 = vunpack.c.l.b16 %v1254
      %v1550 = vunpack.c.l.b16 %v1255
      %v1551 = vunpack.c.l.b16 %v1256
      %v1552 = vunpack.c.l.b16 %v1257
      %v1553 = vunpack.c.l.b16 %v1258
      %v1554 = vunpack.c.l.b16 %v1259
      %v1555 = vunpack.c.l.b16 %v1260
      %v1556 = vunpack.c.l.b16 %v1261
      %v1557 = vunpack.c.l.b16 %v1262
      %v1558 = vunpack.c.l.b16 %v1263
      %v1559 = vunpack.c.l.b16 %v1264
      %v1560 = vunpack.c.l.b16 %v1265
      %v1561 = vunpack.c.l.b16 %v1266
      %v1562 = vunpack.c.l.b16 %v1267
      %v1563 = vunpack.c.l.b16 %v1268
      %v1564 = vunpack.c.l.b16 %v1269
      %v1565 = vunpack.c.l.b16 %v1270
      %v1566 = vunpack.c.l.b16 %v1271
      %v1567 = vunpack.c.l.b16 %v1272
      %v1568 = vunpack.c.l.b16 %v1273
      %v1569 = vunpack.c.l.b16 %v1274
      %v1570 = vunpack.c.l.b16 %v1275
      %v1571 = vunpack.c.l.b16 %v1276
      %v1572 = vunpack.c.l.b16 %v1277
      %v1573 = vunpack.c.l.b16 %v1278
      %v1574 = vunpack.c.l.b16 %v1279
      %v1575 = vunpack.c.l.b16 %v1280
      %v1576 = vunpack.c.l.b16 %v1281
      %v1577 = vunpack.c.l.b16 %v1282
      %v1578 = vunpack.c.l.b16 %v1283
      %v1579 = vunpack.c.l.b16 %v1284
      %v1580 = vunpack.c.l.b16 %v1285
      %v1581 = vunpack.c.l.b16 %v1286
      %v1582 = vunpack.c.l.b16 %v1287
      %v1583 = vunpack.c.l.b16 %v1288
      %v1584 = vunpack.c.l.b16 %v1289
      %v1585 = vunpack.c.l.b16 %v1290
      %v1586 = vunpack.c.l.b16 %v1291
      %v1587 = vunpack.c.l.b16 %v1292
      %v1588 = vunpack.c.l.b16 %v1293
      %v1589 = vunpack.c.l.b16 %v1294
      %v1590 = vunpack.c.l.b16 %v1295
      %v1591 = vunpack.c.l.b16 %v1296
      %v1592 = vunpack.c.l.b16 %v1297
      %v1593 = vunpack.c.l.b16 %v1298
      %v1594 = vunpack.c.l.b16 %v1299
      %v1595 = vunpack.c.l.b16 %v1300
      %v1596 = vunpack.c.l.b16 %v1301
      %v1597 = vunpack.c.l.b16 %v1302
      %v1598 = vunpack.c.l.b16 %v1303
      %v1599 = vunpack.c.l.b16 %v1304
      %v1600 = vunpack.c.l.b16 %v1305
      %v1601 = vunpack.c.l.b16 %v1306
      %v1602 = vunpack.c.l.b16 %v1307
      %v1603 = vunpack.c.l.b16 %v1308
      %v1604 = vunpack.c.l.b16 %v1309
      %v1605 = vunpack.c.l.b16 %v1310
      %v1606 = vunpack.c.l.b16 %v1311
      %v1607 = vunpack.c.l.b16 %v1312
      %v1608 = vunpack.c.l.b16 %v1313
      %v1609 = vunpack.c.l.b16 %v1314
      %v1610 = vunpack.c.l.b16 %v1315
      %v1611 = vunpack.c.l.b16 %v1316
      %v1612 = vunpack.c.l.b16 %v1317
      %v1613 = vunpack.c.l.b16 %v1318
      %v1614 = vunpack.c.l.b16 %v1319
      %v1615 = vunpack.c.l.b16 %v1320
      %v1616 = vunpack.c.l.b16 %v1321
      %v1617 = vunpack.c.l.b16 %v1322
      %v1618 = vunpack.c.l.b16 %v1323
      %v1619 = vunpack.c.l.b16 %v1324
      %v1620 = vunpack.c.l.b16 %v1325
      %v1621 = vunpack.c.l.b16 %v1326
      %v1622 = vunpack.c.l.b16 %v1327
      %v1623 = vunpack.c.l.b16 %v1328
      %v1624 = vunpack.c.l.b16 %v1329
      %v1625 = vunpack.c.l.b16 %v1330
      %v1626 = vunpack.c.l.b16 %v1331
      %v1627 = vunpack.c.l.b16 %v1332
      %v1628 = vunpack.c.l.b16 %v1333
      %v1629 = vunpack.c.l.b16 %v1334
      %v1630 = vunpack.c.l.b16 %v1335
      %v1631 = vunpack.c.l.b16 %v1336
      %v1632 = vunpack.c.l.b16 %v1337
      %v1633 = vunpack.c.l.b16 %v1338
      %v1634 = vunpack.c.l.b16 %v1339
      %v1635 = vunpack.c.l.b16 %v1340
      %v1636 = vunpack.c.l.b16 %v1341
      %v1637 = vunpack.c.l.b16 %v1342
      %v1638 = vunpack.c.l.b16 %v1343
      %v1639 = vunpack.c.l.b16 %v1344
      %v1640 = vunpack.c.l.b16 %v1345
      %v1641 = vunpack.c.l.b16 %v1346
      %v1642 = vunpack.c.l.b16 %v1347
      %v1643 = vunpack.c.l.b16 %v1348
      %v1644 = vunpack.c.l.b16 %v1349
      %v1645 = vunpack.c.l.b16 %v1350
      %v1646 = vunpack.c.l.b16 %v1351
      %v1647 = vunpack.c.l.b16 %v1352
      %v1648 = vunpack.c.l.b16 %v1353
      %v1649 = vunpack.c.l.b16 %v1354
      %v1650 = vunpack.c.l.b16 %v1355
      %v1651 = vunpack.c.l.b16 %v1356
      %v1652 = vunpack.c.l.b16 %v1357
      %v1653 = vunpack.c.l.b16 %v1358
      %v1654 = vpack.c.b16 %v1511, %v1510
      %v1655 = vpack.c.b16 %v1513, %v1512
      %v1656 = vpack.c.b16 %v1515, %v1514
      %v1657 = vpack.c.b16 %v1517, %v1516
      %v1658 = vpack.c.b16 %v1519, %v1518
      %v1659 = vpack.c.b16 %v1521, %v1520
      %v1660 = vpack.c.b16 %v1523, %v1522
      %v1661 = vpack.c.b16 %v1525, %v1524
      %v1662 = vpack.c.b16 %v1527, %v1526
      %v1663 = vpack.c.b16 %v1529, %v1528
      %v1664 = vpack.c.b16 %v1531, %v1530
      %v1665 = vpack.c.b16 %v1533, %v1532
      %v1666 = vpack.c.b16 %v1535, %v1534
      %v1667 = vpack.c.b16 %v1537, %v1536
      %v1668 = vpack.c.b16 %v1539, %v1538
      %v1669 = vpack.c.b16 %v1541, %v1540
      %v1670 = vpack.c.b16 %v1543, %v1542
      %v1671 = vpack.c.b16 %v1545, %v1544
      %v1672 = vpack.c.b16 %v1547, %v1546
      %v1673 = vpack.c.b16 %v1549, %v1548
      %v1674 = vpack.c.b16 %v1551, %v1550
      %v1675 = vpack.c.b16 %v1553, %v1552
      %v1676 = vpack.c.b16 %v1555, %v1554
      %v1677 = vpack.c.b16 %v1557, %v1556
      %v1678 = vpack.c.b16 %v1559, %v1558
      %v1679 = vpack.c.b16 %v1561, %v1560
      %v1680 = vpack.c.b16 %v1563, %v1562
      %v1681 = vpack.c.b16 %v1565, %v1564
      %v1682 = vpack.c.b16 %v1567, %v1566
      %v1683 = vpack.c.b16 %v1569, %v1568
      %v1684 = vpack.c.b16 %v1571, %v1570
      %v1685 = vpack.c.b16 %v1573, %v1572
      %v1686 = vpack.c.b16 %v1575, %v1574
      %v1687 = vpack.c.b16 %v1577, %v1576
      %v1688 = vpack.c.b16 %v1579, %v1578
      %v1689 = vpack.c.b16 %v1581, %v1580
      %v1690 = vpack.c.b16 %v1583, %v1582
      %v1691 = vpack.c.b16 %v1585, %v1584
      %v1692 = vpack.c.b16 %v1587, %v1586
      %v1693 = vpack.c.b16 %v1589, %v1588
      %v1694 = vpack.c.b16 %v1591, %v1590
      %v1695 = vpack.c.b16 %v1593, %v1592
      %v1696 = vpack.c.b16 %v1595, %v1594
      %v1697 = vpack.c.b16 %v1597, %v1596
      %v1698 = vpack.c.b16 %v1599, %v1598
      %v1699 = vpack.c.b16 %v1601, %v1600
      %v1700 = vpack.c.b16 %v1603, %v1602
      %v1701 = vpack.c.b16 %v1605, %v1604
      %v1702 = vpack.c.b16 %v1607, %v1606
      %v1703 = vpack.c.b16 %v1609, %v1608
      %v1704 = vpack.c.b16 %v1611, %v1610
      %v1705 = vpack.c.b16 %v1613, %v1612
      %v1706 = vpack.c.b16 %v1615, %v1614
      %v1707 = vpack.c.b16 %v1617, %v1616
      %v1708 = vpack.c.b16 %v1619, %v1618
      %v1709 = vpack.c.b16 %v1621, %v1620
      %v1710 = vpack.c.b16 %v1623, %v1622
      %v1711 = vpack.c.b16 %v1625, %v1624
      %v1712 = vpack.c.b16 %v1627, %v1626
      %v1713 = vpack.c.b16 %v1629, %v1628
      %v1714 = vpack.c.b16 %v1631, %v1630
      %v1715 = vpack.c.b16 %v1633, %v1632
      %v1716 = vpack.c.b16 %v1635, %v1634
      %v1717 = vpack.c.b16 %v1637, %v1636
      %v1718 = vpack.c.b16 %v1639, %v1638
      %v1719 = vpack.c.b16 %v1641, %v1640
      %v1720 = vpack.c.b16 %v1643, %v1642
      %v1721 = vpack.c.b16 %v1645, %v1644
      %v1722 = vpack.c.b16 %v1647, %v1646
      %v1723 = vpack.c.b16 %v1649, %v1648
      %v1724 = vpack.c.b16 %v1651, %v1650
      %v1725 = vpack.c.b16 %v1653, %v1652
      %1798 = vmatprep.subr.bf16.mxu0 0
      %1799 = vmatpush1.bf16.msra.mxu0 %v1654
      %1800 = vmatprep.subr.bf16.mxu0 0
      %1801 = vmatpush1.bf16.msra.mxu0 %v1655
      %1802 = vmatprep.subr.bf16.mxu0 0
      %1803 = vmatpush1.bf16.msra.mxu0 %v1656
      %1804 = vmatprep.subr.bf16.mxu0 0
      %1805 = vmatpush1.bf16.msra.mxu0 %v1657
      %1806 = vmatprep.subr.bf16.mxu0 0
      %1807 = vmatpush1.bf16.msra.mxu0 %v1658
      %1808 = vmatprep.subr.bf16.mxu0 0
      %1809 = vmatpush1.bf16.msra.mxu0 %v1659
      %1810 = vmatprep.subr.bf16.mxu0 0
      %1811 = vmatpush1.bf16.msra.mxu0 %v1660
      %1812 = vmatprep.subr.bf16.mxu0 0
      %1813 = vmatpush1.bf16.msra.mxu0 %v1661
      %1814 = vmatprep.subr.bf16.mxu0 0
      %1815 = vmatpush1.bf16.msra.mxu0 %v1662
      %1816 = vmatprep.subr.bf16.mxu0 0
      %1817 = vmatpush1.bf16.msra.mxu0 %v1663
      %1818 = vmatprep.subr.bf16.mxu0 0
      %1819 = vmatpush1.bf16.msra.mxu0 %v1664
      %1820 = vmatprep.subr.bf16.mxu0 0
      %1821 = vmatpush1.bf16.msra.mxu0 %v1665
      %1822 = vmatprep.subr.bf16.mxu0 0
      %1823 = vmatpush1.bf16.msra.mxu0 %v1666
      %1824 = vmatprep.subr.bf16.mxu0 0
      %1825 = vmatpush1.bf16.msra.mxu0 %v1667
      %1826 = vmatprep.subr.bf16.mxu0 0
      %1827 = vmatpush1.bf16.msra.mxu0 %v1668
      %1828 = vmatprep.subr.bf16.mxu0 0
      %1829 = vmatpush1.bf16.msra.mxu0 %v1669
      %1830 = vmatprep.mubr.bf16.mxu0 %v1171
      %1831 = vmatmul.mubr.bf16.gmra.mrb[0].mxu0 %v1170
      %v1832 = vpop.f32.mrb[0].mxu0
      %v1833 = vadd.f32 %v1364, %v1832
      %v1834 = vpop.f32.mrb[0].mxu0
      %v1835 = vpop.f32.mrb[0].mxu0
      %v1836 = vadd.f32 %v1364, %v1835
      %v1837 = vpop.f32.mrb[0].mxu0
      %1838 = vmatprep.mubr.bf16.mxu0 %v1180
      %1839 = vmatmul.mubr.bf16.gmra.mrb[0].mxu0 %v1179
      %v1840 = vpop.f32.mrb[0].mxu0
      %v1841 = vadd.f32 %v1364, %v1840
      %v1842 = vpop.f32.mrb[0].mxu0
      %v1843 = vpop.f32.mrb[0].mxu0
      %v1844 = vadd.f32 %v1364, %v1843
      %v1845 = vpop.f32.mrb[0].mxu0
      %1846 = vmatprep.mubr.bf16.mxu0 %v1189
      %1847 = vmatmul.mubr.bf16.gmra.mrb[0].mxu0 %v1188
      %v1848 = vpop.f32.mrb[0].mxu0
      %v1849 = vadd.f32 %v1364, %v1848
      %v1850 = vpop.f32.mrb[0].mxu0
      %v1851 = vpop.f32.mrb[0].mxu0
      %v1852 = vadd.f32 %v1364, %v1851
      %v1853 = vpop.f32.mrb[0].mxu0
      %1854 = vmatprep.mubr.bf16.mxu0 %v1198
      %1855 = vmatmul.mubr.bf16.gmra.mrb[0].mxu0 %v1197
      %v1856 = vpop.f32.mrb[0].mxu0
      %v1857 = vadd.f32 %v1364, %v1856
      %v1858 = vpop.f32.mrb[0].mxu0
      %v1859 = vpop.f32.mrb[0].mxu0
      %v1860 = vadd.f32 %v1364, %v1859
      %v1861 = vpop.f32.mrb[0].mxu0
      %1862 = vmatprep.mubr.bf16.mxu0 %v1207
      %1863 = vmatmul.mubr.bf16.gmra.mrb[0].mxu0 %v1206
      %v1864 = vpop.f32.mrb[0].mxu0
      %v1865 = vadd.f32 %v1364, %v1864
      %v1866 = vpop.f32.mrb[0].mxu0
      %v1867 = vpop.f32.mrb[0].mxu0
      %v1868 = vadd.f32 %v1364, %v1867
      %v1869 = vpop.f32.mrb[0].mxu0
      %1870 = vdwg.mxu0
      %1871 = vmatprep.subr.bf16.mxu0 0
      %1872 = vmatpush1.bf16.msra.mxu0 %v1670
      %1873 = vmatprep.subr.bf16.mxu0 0
      %1874 = vmatpush1.bf16.msra.mxu0 %v1671
      %1875 = vmatprep.subr.bf16.mxu0 0
      %1876 = vmatpush1.bf16.msra.mxu0 %v1672
      %1877 = vmatprep.subr.bf16.mxu0 0
      %1878 = vmatpush1.bf16.msra.mxu0 %v1673
      %1879 = vmatprep.subr.bf16.mxu0 0
      %1880 = vmatpush1.bf16.msra.mxu0 %v1674
      %1881 = vmatprep.subr.bf16.mxu0 0
      %1882 = vmatpush1.bf16.msra.mxu0 %v1675
      %1883 = vmatprep.subr.bf16.mxu0 0
      %1884 = vmatpush1.bf16.msra.mxu0 %v1676
      %1885 = vmatprep.subr.bf16.mxu0 0
      %1886 = vmatpush1.bf16.msra.mxu0 %v1677
      %1887 = vmatprep.subr.bf16.mxu0 0
      %1888 = vmatpush1.bf16.msra.mxu0 %v1678
      %1889 = vmatprep.subr.bf16.mxu0 0
      %1890 = vmatpush1.bf16.msra.mxu0 %v1679
      %1891 = vmatprep.subr.bf16.mxu0 0
      %1892 = vmatpush1.bf16.msra.mxu0 %v1680
      %1893 = vmatprep.subr.bf16.mxu0 0
      %1894 = vmatpush1.bf16.msra.mxu0 %v1681
      %1895 = vmatprep.subr.bf16.mxu0 0
      %1896 = vmatpush1.bf16.msra.mxu0 %v1682
      %1897 = vmatprep.subr.bf16.mxu0 0
      %1898 = vmatpush1.bf16.msra.mxu0 %v1683
      %1899 = vmatprep.subr.bf16.mxu0 0
      %1900 = vmatpush1.bf16.msra.mxu0 %v1684
      %1901 = vmatprep.subr.bf16.mxu0 0
      %1902 = vmatpush1.bf16.msra.mxu0 %v1685
      %1903 = vmatprep.mubr.bf16.mxu0 %v1173
      %1904 = vmatmul.mubr.bf16.gmra.mrb[0].mxu0 %v1172
      %v1905 = vpop.f32.mrb[0].mxu0
      %v1906 = vadd.f32 %v1833, %v1905
      %v1907 = vpop.f32.mrb[0].mxu0
      %v1908 = vpop.f32.mrb[0].mxu0
      %v1909 = vadd.f32 %v1836, %v1908
      %v1910 = vpop.f32.mrb[0].mxu0
      %1911 = vmatprep.mubr.bf16.mxu0 %v1182
      %1912 = vmatmul.mubr.bf16.gmra.mrb[0].mxu0 %v1181
      %v1913 = vpop.f32.mrb[0].mxu0
      %v1914 = vadd.f32 %v1841, %v1913
      %v1915 = vpop.f32.mrb[0].mxu0
      %v1916 = vpop.f32.mrb[0].mxu0
      %v1917 = vadd.f32 %v1844, %v1916
      %v1918 = vpop.f32.mrb[0].mxu0
      %1919 = vmatprep.mubr.bf16.mxu0 %v1191
      %1920 = vmatmul.mubr.bf16.gmra.mrb[0].mxu0 %v1190
      %v1921 = vpop.f32.mrb[0].mxu0
      %v1922 = vadd.f32 %v1849, %v1921
      %v1923 = vpop.f32.mrb[0].mxu0
      %v1924 = vpop.f32.mrb[0].mxu0
      %v1925 = vadd.f32 %v1852, %v1924
      %v1926 = vpop.f32.mrb[0].mxu0
      %1927 = vmatprep.mubr.bf16.mxu0 %v1200
      %1928 = vmatmul.mubr.bf16.gmra.mrb[0].mxu0 %v1199
      %v1929 = vpop.f32.mrb[0].mxu0
      %v1930 = vadd.f32 %v1857, %v1929
      %v1931 = vpop.f32.mrb[0].mxu0
      %v1932 = vpop.f32.mrb[0].mxu0
      %v1933 = vadd.f32 %v1860, %v1932
      %v1934 = vpop.f32.mrb[0].mxu0
      %1935 = vmatprep.mubr.bf16.mxu0 %v1209
      %1936 = vmatmul.mubr.bf16.gmra.mrb[0].mxu0 %v1208
      %v1937 = vpop.f32.mrb[0].mxu0
      %v1938 = vadd.f32 %v1865, %v1937
      %v1939 = vpop.f32.mrb[0].mxu0
      %v1940 = vpop.f32.mrb[0].mxu0
      %v1941 = vadd.f32 %v1868, %v1940
      %v1942 = vpop.f32.mrb[0].mxu0
      %1943 = vdwg.mxu0
      %1944 = vmatprep.subr.bf16.mxu0 0
      %1945 = vmatpush1.bf16.msra.mxu0 %v1686
      %1946 = vmatprep.subr.bf16.mxu0 0
      %1947 = vmatpush1.bf16.msra.mxu0 %v1687
      %1948 = vmatprep.subr.bf16.mxu0 0
      %1949 = vmatpush1.bf16.msra.mxu0 %v1688
      %1950 = vmatprep.subr.bf16.mxu0 0
      %1951 = vmatpush1.bf16.msra.mxu0 %v1689
      %1952 = vmatprep.subr.bf16.mxu0 0
      %1953 = vmatpush1.bf16.msra.mxu0 %v1690
      %1954 = vmatprep.subr.bf16.mxu0 0
      %1955 = vmatpush1.bf16.msra.mxu0 %v1691
      %1956 = vmatprep.subr.bf16.mxu0 0
      %1957 = vmatpush1.bf16.msra.mxu0 %v1692
      %1958 = vmatprep.subr.bf16.mxu0 0
      %1959 = vmatpush1.bf16.msra.mxu0 %v1693
      %1960 = vmatprep.subr.bf16.mxu0 0
      %1961 = vmatpush1.bf16.msra.mxu0 %v1694
      %1962 = vmatprep.subr.bf16.mxu0 0
      %1963 = vmatpush1.bf16.msra.mxu0 %v1695
      %1964 = vmatprep.subr.bf16.mxu0 0
      %1965 = vmatpush1.bf16.msra.mxu0 %v1696
      %1966 = vmatprep.subr.bf16.mxu0 0
      %1967 = vmatpush1.bf16.msra.mxu0 %v1697
      %1968 = vmatprep.subr.bf16.mxu0 0
      %1969 = vmatpush1.bf16.msra.mxu0 %v1698
      %1970 = vmatprep.subr.bf16.mxu0 0
      %1971 = vmatpush1.bf16.msra.mxu0 %v1699
      %1972 = vmatprep.subr.bf16.mxu0 0
      %1973 = vmatpush1.bf16.msra.mxu0 %v1700
      %1974 = vmatprep.subr.bf16.mxu0 0
      %1975 = vmatpush1.bf16.msra.mxu0 %v1701
      %1976 = vmatprep.mubr.bf16.mxu0 %v1175
      %1977 = vmatmul.mubr.bf16.gmra.mrb[0].mxu0 %v1174
      %v1978 = vpop.f32.mrb[0].mxu0
      %v1979 = vadd.f32 %v1906, %v1978
      %v1980 = vpop.f32.mrb[0].mxu0
      %v1981 = vpop.f32.mrb[0].mxu0
      %v1982 = vadd.f32 %v1909, %v1981
      %v1983 = vpop.f32.mrb[0].mxu0
      %1984 = vmatprep.mubr.bf16.mxu0 %v1184
      %1985 = vmatmul.mubr.bf16.gmra.mrb[0].mxu0 %v1183
      %v1986 = vpop.f32.mrb[0].mxu0
      %v1987 = vadd.f32 %v1914, %v1986
      %v1988 = vpop.f32.mrb[0].mxu0
      %v1989 = vpop.f32.mrb[0].mxu0
      %v1990 = vadd.f32 %v1917, %v1989
      %v1991 = vpop.f32.mrb[0].mxu0
      %1992 = vmatprep.mubr.bf16.mxu0 %v1193
      %1993 = vmatmul.mubr.bf16.gmra.mrb[0].mxu0 %v1192
      %v1994 = vpop.f32.mrb[0].mxu0
      %v1995 = vadd.f32 %v1922, %v1994
      %v1996 = vpop.f32.mrb[0].mxu0
      %v1997 = vpop.f32.mrb[0].mxu0
      %v1998 = vadd.f32 %v1925, %v1997
      %v1999 = vpop.f32.mrb[0].mxu0
      %2000 = vmatprep.mubr.bf16.mxu0 %v1202
      %2001 = vmatmul.mubr.bf16.gmra.mrb[0].mxu0 %v1201
      %v2002 = vpop.f32.mrb[0].mxu0
      %v2003 = vadd.f32 %v1930, %v2002
      %v2004 = vpop.f32.mrb[0].mxu0
      %v2005 = vpop.f32.mrb[0].mxu0
      %v2006 = vadd.f32 %v1933, %v2005
      %v2007 = vpop.f32.mrb[0].mxu0
      %2008 = vmatprep.mubr.bf16.mxu0 %v1211
      %2009 = vmatmul.mubr.bf16.gmra.mrb[0].mxu0 %v1210
      %v2010 = vpop.f32.mrb[0].mxu0
      %v2011 = vadd.f32 %v1938, %v2010
      %v2012 = vpop.f32.mrb[0].mxu0
      %v2013 = vpop.f32.mrb[0].mxu0
      %v2014 = vadd.f32 %v1941, %v2013
      %v2015 = vpop.f32.mrb[0].mxu0
      %2016 = vdwg.mxu0
      %2017 = vmatprep.subr.bf16.mxu0 0
      %2018 = vmatpush1.bf16.msra.mxu0 %v1702
      %2019 = vmatprep.subr.bf16.mxu0 0
      %2020 = vmatpush1.bf16.msra.mxu0 %v1703
      %2021 = vmatprep.subr.bf16.mxu0 0
      %2022 = vmatpush1.bf16.msra.mxu0 %v1704
      %2023 = vmatprep.subr.bf16.mxu0 0
      %2024 = vmatpush1.bf16.msra.mxu0 %v1705
      %2025 = vmatprep.subr.bf16.mxu0 0
      %2026 = vmatpush1.bf16.msra.mxu0 %v1706
      %2027 = vmatprep.subr.bf16.mxu0 0
      %2028 = vmatpush1.bf16.msra.mxu0 %v1707
      %2029 = vmatprep.subr.bf16.mxu0 0
      %2030 = vmatpush1.bf16.msra.mxu0 %v1708
      %2031 = vmatprep.subr.bf16.mxu0 0
      %2032 = vmatpush1.bf16.msra.mxu0 %v1709
      %2033 = vmatprep.subr.bf16.mxu0 0
      %2034 = vmatpush1.bf16.msra.mxu0 %v1710
      %2035 = vmatprep.subr.bf16.mxu0 0
      %2036 = vmatpush1.bf16.msra.mxu0 %v1711
      %2037 = vmatprep.subr.bf16.mxu0 0
      %2038 = vmatpush1.bf16.msra.mxu0 %v1712
      %2039 = vmatprep.subr.bf16.mxu0 0
      %2040 = vmatpush1.bf16.msra.mxu0 %v1713
      %2041 = vmatprep.subr.bf16.mxu0 0
      %2042 = vmatpush1.bf16.msra.mxu0 %v1714
      %2043 = vmatprep.subr.bf16.mxu0 0
      %2044 = vmatpush1.bf16.msra.mxu0 %v1715
      %2045 = vmatprep.subr.bf16.mxu0 0
      %2046 = vmatpush1.bf16.msra.mxu0 %v1716
      %2047 = vmatprep.subr.bf16.mxu0 0
      %2048 = vmatpush1.bf16.msra.mxu0 %v1717
      %2049 = vmatprep.mubr.bf16.mxu0 %v1177
      %2050 = vmatmul.mubr.bf16.gmra.mrb[0].mxu0 %v1176
      %v2051 = vpop.f32.mrb[0].mxu0
      %v2052 = vadd.f32 %v1979, %v2051
      %v2053 = vpop.f32.mrb[0].mxu0
      %v2054 = vpop.f32.mrb[0].mxu0
      %v2055 = vadd.f32 %v1982, %v2054
      %v2056 = vpop.f32.mrb[0].mxu0
      %2057 = vmatprep.mubr.bf16.mxu0 %v1186
      %2058 = vmatmul.mubr.bf16.gmra.mrb[0].mxu0 %v1185
      %v2059 = vpop.f32.mrb[0].mxu0
      %v2060 = vadd.f32 %v1987, %v2059
      %v2061 = vpop.f32.mrb[0].mxu0
      %v2062 = vpop.f32.mrb[0].mxu0
      %v2063 = vadd.f32 %v1990, %v2062
      %v2064 = vpop.f32.mrb[0].mxu0
      %2065 = vmatprep.mubr.bf16.mxu0 %v1195
      %2066 = vmatmul.mubr.bf16.gmra.mrb[0].mxu0 %v1194
      %v2067 = vpop.f32.mrb[0].mxu0
      %v2068 = vadd.f32 %v1995, %v2067
      %v2069 = vpop.f32.mrb[0].mxu0
      %v2070 = vpop.f32.mrb[0].mxu0
      %v2071 = vadd.f32 %v1998, %v2070
      %v2072 = vpop.f32.mrb[0].mxu0
      %2073 = vmatprep.mubr.bf16.mxu0 %v1204
      %2074 = vmatmul.mubr.bf16.gmra.mrb[0].mxu0 %v1203
      %v2075 = vpop.f32.mrb[0].mxu0
      %v2076 = vadd.f32 %v2003, %v2075
      %v2077 = vpop.f32.mrb[0].mxu0
      %v2078 = vpop.f32.mrb[0].mxu0
      %v2079 = vadd.f32 %v2006, %v2078
      %v2080 = vpop.f32.mrb[0].mxu0
      %2081 = vmatprep.mubr.bf16.mxu0 %v1213
      %2082 = vmatmul.mubr.bf16.gmra.mrb[0].mxu0 %v1212
      %v2083 = vpop.f32.mrb[0].mxu0
      %v2084 = vadd.f32 %v2011, %v2083
      %v2085 = vpop.f32.mrb[0].mxu0
      %v2086 = vpop.f32.mrb[0].mxu0
      %v2087 = vadd.f32 %v2014, %v2086
      %v2088 = vpop.f32.mrb[0].mxu0
      %2089 = vdwg.mxu0
      %2090 = vmatprep.subr.bf16.mxu0 0
      %2091 = vmatpush1.bf16.msra.mxu0 %v1718
      %2092 = vmatprep.subr.bf16.mxu0 0
      %2093 = vmatpush1.bf16.msra.mxu0 %v1719
      %2094 = vmatprep.subr.bf16.mxu0 0
      %2095 = vmatpush1.bf16.msra.mxu0 %v1720
      %2096 = vmatprep.subr.bf16.mxu0 0
      %2097 = vmatpush1.bf16.msra.mxu0 %v1721
      %2098 = vmatprep.subr.bf16.mxu0 0
      %2099 = vmatpush1.bf16.msra.mxu0 %v1722
      %2100 = vmatprep.subr.bf16.mxu0 0
      %2101 = vmatpush1.bf16.msra.mxu0 %v1723
      %2102 = vmatprep.subr.bf16.mxu0 0
      %2103 = vmatpush1.bf16.msra.mxu0 %v1724
      %2104 = vmatprep.subr.bf16.mxu0 0
      %2105 = vmatpush1.bf16.msra.mxu0 %v1725
      %2106 = vmatprep.subr.bf16.mxu0 0
      %2107 = vmatpush1.bf16.msra.mxu0 0
      %2108 = vmatprep.subr.bf16.mxu0 0
      %2109 = vmatpush1.bf16.msra.mxu0 0
      %2110 = vmatprep.subr.bf16.mxu0 0
      %2111 = vmatpush1.bf16.msra.mxu0 0
      %2112 = vmatprep.subr.bf16.mxu0 0
      %2113 = vmatpush1.bf16.msra.mxu0 0
      %2114 = vmatprep.subr.bf16.mxu0 0
      %2115 = vmatpush1.bf16.msra.mxu0 0
      %2116 = vmatprep.subr.bf16.mxu0 0
      %2117 = vmatpush1.bf16.msra.mxu0 0
      %2118 = vmatprep.subr.bf16.mxu0 0
      %2119 = vmatpush1.bf16.msra.mxu0 0
      %2120 = vmatprep.subr.bf16.mxu0 0
      %2121 = vmatpush1.bf16.msra.mxu0 0
      %2122 = vmatprep.mubr.bf16.mxu0 0
      %2123 = vmatmul.mubr.bf16.gmra.mrb[0].mxu0 %v1178
      %v2124 = vpop.f32.mrb[0].mxu0
      %v2125 = vadd.f32 %v2052, %v2124
      %v2126 = vpop.f32.mrb[0].mxu0
      %v2127 = vpop.f32.mrb[0].mxu0
      %v2128 = vadd.f32 %v2055, %v2127
      %v2129 = vpop.f32.mrb[0].mxu0
      %2130 = vmatprep.mubr.bf16.mxu0 0
      %2131 = vmatmul.mubr.bf16.gmra.mrb[0].mxu0 %v1187
      %v2132 = vpop.f32.mrb[0].mxu0
      %v2133 = vadd.f32 %v2060, %v2132
      %v2134 = vpop.f32.mrb[0].mxu0
      %v2135 = vpop.f32.mrb[0].mxu0
      %v2136 = vadd.f32 %v2063, %v2135
      %v2137 = vpop.f32.mrb[0].mxu0
      %2138 = vmatprep.mubr.bf16.mxu0 0
      %2139 = vmatmul.mubr.bf16.gmra.mrb[0].mxu0 %v1196
      %v2140 = vpop.f32.mrb[0].mxu0
      %v2141 = vadd.f32 %v2068, %v2140
      %v2142 = vpop.f32.mrb[0].mxu0
      %v2143 = vpop.f32.mrb[0].mxu0
      %v2144 = vadd.f32 %v2071, %v2143
      %v2145 = vpop.f32.mrb[0].mxu0
      %2146 = vmatprep.mubr.bf16.mxu0 0
      %2147 = vmatmul.mubr.bf16.gmra.mrb[0].mxu0 %v1205
      %v2148 = vpop.f32.mrb[0].mxu0
      %v2149 = vadd.f32 %v2076, %v2148
      %v2150 = vpop.f32.mrb[0].mxu0
      %v2151 = vpop.f32.mrb[0].mxu0
      %v2152 = vadd.f32 %v2079, %v2151
      %v2153 = vpop.f32.mrb[0].mxu0
      %2154 = vmatprep.mubr.bf16.mxu0 0
      %2155 = vmatmul.mubr.bf16.gmra.mrb[0].mxu0 %v1214
      %v2156 = vpop.f32.mrb[0].mxu0
      %v2157 = vadd.f32 %v2084, %v2156
      %v2158 = vpop.f32.mrb[0].mxu0
      %v2159 = vpop.f32.mrb[0].mxu0
      %v2160 = vadd.f32 %v2087, %v2159
      %v2161 = vpop.f32.mrb[0].mxu0
      %2162 = vdwg.mxu0
      %v2163 = vmax.f32 %v2125, 0.0
      %v2164 = vmax.f32 %v2128, 0.0
      %v2165 = vmax.f32 %v2133, 0.0
      %v2166 = vmax.f32 %v2136, 0.0
      %v2167 = vmax.f32 %v2141, 0.0
      %v2168 = vmax.f32 %v2144, 0.0
      %v2169 = vmax.f32 %v2149, 0.0
      %v2170 = vmax.f32 %v2152, 0.0
      %v2171 = vmax.f32 %v2157, 0.0
      %v2172 = vmax.f32 %v2160, 0.0
      %2174 = vset.pattern.permute.xlu0 0
      %2175 = vperm.xlu0 %2174, %v415
      %v2176 = vpop.permute.xlu0 %2175
      %2179 = vset.pattern.permute.xlu0 0
      %2180 = vperm.xlu0 %2179, %v416
      %v2181 = vpop.permute.xlu0 %2180
      %2184 = vset.pattern.permute.xlu0 0
      %2185 = vperm.xlu0 %2184, %v417
      %v2186 = vpop.permute.xlu0 %2185
      %2189 = vset.pattern.permute.xlu0 0
      %2190 = vperm.xlu0 %2189, %v418
      %v2191 = vpop.permute.xlu0 %2190
      %2194 = vset.pattern.permute.xlu0 0
      %2195 = vperm.xlu0 %2194, %v419
      %v2196 = vpop.permute.xlu0 %2195
      %2199 = vset.pattern.permute.xlu0 0
      %2200 = vperm.xlu0 %2199, %v420
      %v2201 = vpop.permute.xlu0 %2200
      %2204 = vset.pattern.permute.xlu0 0
      %2205 = vperm.xlu0 %2204, %v421
      %v2206 = vpop.permute.xlu0 %2205
      %2209 = vset.pattern.permute.xlu0 0
      %2210 = vperm.xlu0 %2209, %v422
      %v2211 = vpop.permute.xlu0 %2210
      %2214 = vset.pattern.permute.xlu0 0
      %2215 = vperm.xlu0 %2214, %v423
      %v2216 = vpop.permute.xlu0 %2215
      %2219 = vset.pattern.permute.xlu0 0
      %2220 = vperm.xlu0 %2219, %v424
      %v2221 = vpop.permute.xlu0 %2220
      %v2223 = vmul.f32 %v2163, %v2176
      %v2224 = vmul.f32 %v2164, %v2181
      %v2225 = vmul.f32 %v2165, %v2186
      %v2226 = vmul.f32 %v2166, %v2191
      %v2227 = vmul.f32 %v2167, %v2196
      %v2228 = vmul.f32 %v2168, %v2201
      %v2229 = vmul.f32 %v2169, %v2206
      %v2230 = vmul.f32 %v2170, %v2211
      %v2231 = vmul.f32 %v2171, %v2216
      %v2232 = vmul.f32 %v2172, %v2221
      %v2233 = vpack.c.bf16 %v2224, %v2223
      %v2234 = vpack.c.bf16 %v2226, %v2225
      %v2235 = vpack.c.bf16 %v2228, %v2227
      %v2236 = vpack.c.bf16 %v2230, %v2229
      %v2237 = vpack.c.bf16 %v2232, %v2231
      %2238 = vst [vmem:[#allocation2 + $0x8] sm:$0xff] %v2233
      %2239 = vst [vmem:[#allocation2 + $0x10] sm:$0xff] %v2234
      %2240 = vst [vmem:[#allocation2 + $0x18] sm:$0xff] %v2235
      %2241 = vst [vmem:[#allocation2 + $0x20] sm:$0xff] %v2236
      %2242 = vst [vmem:[#allocation2 + $0x28] sm:$0xff] %v2237
      %v2243 = vld [vmem:[#allocation2] sm:$0xfc]
      %v2244 = vld [vmem:[#allocation2 + $0x8] sm:$0xff]
      %v2245 = vld [vmem:[#allocation2 + $0x10] sm:$0xff]
      %v2246 = vld [vmem:[#allocation2 + $0x18] sm:$0xff]
      %v2247 = vld [vmem:[#allocation2 + $0x20] sm:$0xff]
      %v2248 = vld [vmem:[#allocation2 + $0x28] sm:$0x7]
      %vm2249 = vsmask.f32 5376
      %v2251 = vshrl.u32 %v2243, 16
      %v2253 = vrot.slane %v2251, 2
      %v2254 = vshll.u32 %v2243, 16
      %v2256 = vrot.slane %v2254, 3
      %v2257 = vor.u32 %v2253, %v2256
      %v2259 = vshrl.u32 %v2244, 16
      %v2261 = vrot.slane %v2259, 2
      %v2262 = vshll.u32 %v2244, 16
      %v2264 = vrot.slane %v2262, 3
      %v2265 = vor.u32 %v2261, %v2264
      %v2266 = vsel %vm2249, %v2257, %v2265
      %v2268 = vshrl.u32 %v2245, 16
      %v2270 = vrot.slane %v2268, 2
      %v2271 = vshll.u32 %v2245, 16
      %v2273 = vrot.slane %v2271, 3
      %v2274 = vor.u32 %v2270, %v2273
      %v2275 = vsel %vm2249, %v2265, %v2274
      %v2277 = vshrl.u32 %v2246, 16
      %v2279 = vrot.slane %v2277, 2
      %v2280 = vshll.u32 %v2246, 16
      %v2282 = vrot.slane %v2280, 3
      %v2283 = vor.u32 %v2279, %v2282
      %v2284 = vsel %vm2249, %v2274, %v2283
      %v2286 = vshrl.u32 %v2247, 16
      %v2288 = vrot.slane %v2286, 2
      %v2289 = vshll.u32 %v2247, 16
      %v2291 = vrot.slane %v2289, 3
      %v2292 = vor.u32 %v2288, %v2291
      %v2293 = vsel %vm2249, %v2283, %v2292
      %v2295 = vshrl.u32 %v2248, 16
      %v2297 = vrot.slane %v2295, 2
      %v2298 = vshll.u32 %v2248, 16
      %v2300 = vrot.slane %v2298, 3
      %v2301 = vor.u32 %v2297, %v2300
      %v2302 = vsel %vm2249, %v2292, %v2301
      %2308 = vst [vmem:[#allocation3] sm:$0xff] %v2266
      %2309 = vst [vmem:[#allocation3 + $0x48] sm:$0xff] %v2275
      %2310 = vst [vmem:[#allocation3 + $0x90] sm:$0xff] %v2284
      %2311 = vst [vmem:[#allocation3 + $0xd8] sm:$0xff] %v2293
      %2312 = vst [vmem:[#allocation3 + $0x120] sm:$0xff] %v2302
      %v2313 = vld [vmem:[#allocation2] sm:$0xf8]
      %v2314 = vld [vmem:[#allocation2 + $0x8] sm:$0xff]
      %v2315 = vld [vmem:[#allocation2 + $0x10] sm:$0xff]
      %v2316 = vld [vmem:[#allocation2 + $0x18] sm:$0xff]
      %v2317 = vld [vmem:[#allocation2 + $0x20] sm:$0xff]
      %v2318 = vld [vmem:[#allocation2 + $0x28] sm:$0x7]
      %vm2325 = vcmask 1044480
      %v2326 = vrot.slane %v2313, 3
      %v2327 = vrot.slane %v2314, 3
      %v2328 = vsel %vm2325, %v2326, %v2327
      %v2329 = vrot.slane %v2315, 3
      %v2330 = vsel %vm2325, %v2327, %v2329
      %v2331 = vrot.slane %v2316, 3
      %v2332 = vsel %vm2325, %v2329, %v2331
      %v2333 = vrot.slane %v2317, 3
      %v2334 = vsel %vm2325, %v2331, %v2333
      %v2335 = vrot.slane %v2318, 3
      %v2336 = vsel %vm2325, %v2333, %v2335
      %2342 = vst [vmem:[#allocation3 + $0x8] sm:$0xff] %v2328
      %2343 = vst [vmem:[#allocation3 + $0x50] sm:$0xff] %v2330
      %2344 = vst [vmem:[#allocation3 + $0x98] sm:$0xff] %v2332
      %2345 = vst [vmem:[#allocation3 + $0xe0] sm:$0xff] %v2334
      %2346 = vst [vmem:[#allocation3 + $0x128] sm:$0xff] %v2336
      %v2347 = vld [vmem:[#allocation2] sm:$0xf8]
      %v2348 = vld [vmem:[#allocation2 + $0x8] sm:$0xff]
      %v2349 = vld [vmem:[#allocation2 + $0x10] sm:$0xff]
      %v2350 = vld [vmem:[#allocation2 + $0x18] sm:$0xff]
      %v2351 = vld [vmem:[#allocation2 + $0x20] sm:$0xff]
      %v2352 = vld [vmem:[#allocation2 + $0x28] sm:$0xf]
      %vm2353 = vsmask.f32 4352
      %v2355 = vshrl.u32 %v2347, 16
      %v2357 = vrot.slane %v2355, 3
      %v2358 = vshll.u32 %v2347, 16
      %v2360 = vrot.slane %v2358, 4
      %v2361 = vor.u32 %v2357, %v2360
      %v2363 = vshrl.u32 %v2348, 16
      %v2365 = vrot.slane %v2363, 3
      %v2366 = vshll.u32 %v2348, 16
      %v2368 = vrot.slane %v2366, 4
      %v2369 = vor.u32 %v2365, %v2368
      %v2370 = vsel %vm2353, %v2361, %v2369
      %v2372 = vshrl.u32 %v2349, 16
      %v2374 = vrot.slane %v2372, 3
      %v2375 = vshll.u32 %v2349, 16
      %v2377 = vrot.slane %v2375, 4
      %v2378 = vor.u32 %v2374, %v2377
      %v2379 = vsel %vm2353, %v2369, %v2378
      %v2381 = vshrl.u32 %v2350, 16
      %v2383 = vrot.slane %v2381, 3
      %v2384 = vshll.u32 %v2350, 16
      %v2386 = vrot.slane %v2384, 4
      %v2387 = vor.u32 %v2383, %v2386
      %v2388 = vsel %vm2353, %v2378, %v2387
      %v2390 = vshrl.u32 %v2351, 16
      %v2392 = vrot.slane %v2390, 3
      %v2393 = vshll.u32 %v2351, 16
      %v2395 = vrot.slane %v2393, 4
      %v2396 = vor.u32 %v2392, %v2395
      %v2397 = vsel %vm2353, %v2387, %v2396
      %v2399 = vshrl.u32 %v2352, 16
      %v2401 = vrot.slane %v2399, 3
      %v2402 = vshll.u32 %v2352, 16
      %v2404 = vrot.slane %v2402, 4
      %v2405 = vor.u32 %v2401, %v2404
      %v2406 = vsel %vm2353, %v2396, %v2405
      %2412 = vst [vmem:[#allocation3 + $0x10] sm:$0xff] %v2370
      %2413 = vst [vmem:[#allocation3 + $0x58] sm:$0xff] %v2379
      %2414 = vst [vmem:[#allocation3 + $0xa0] sm:$0xff] %v2388
      %2415 = vst [vmem:[#allocation3 + $0xe8] sm:$0xff] %v2397
      %2416 = vst [vmem:[#allocation3 + $0x130] sm:$0xff] %v2406
      %v2417 = vld [vmem:[#allocation2] sm:$0x80]
      %v2418 = vld [vmem:[#allocation2 + $0x8] sm:$0xff]
      %v2419 = vld [vmem:[#allocation2 + $0x10] sm:$0xff]
      %v2420 = vld [vmem:[#allocation2 + $0x18] sm:$0xff]
      %v2421 = vld [vmem:[#allocation2 + $0x20] sm:$0xff]
      %v2422 = vld [vmem:[#allocation2 + $0x28] sm:$0xff]
      %vm2423 = vsmask.f32 256
      %v2425 = vshrl.u32 %v2417, 16
      %v2427 = vrot.slane %v2425, 7
      %v2429 = vshrl.u32 %v2418, 16
      %v2431 = vrot.slane %v2429, 7
      %v2432 = vshll.u32 %v2418, 16
      %v2434 = vor.u32 %v2431, %v2432
      %v2435 = vsel %vm2423, %v2427, %v2434
      %v2437 = vshrl.u32 %v2419, 16
      %v2439 = vrot.slane %v2437, 7
      %v2440 = vshll.u32 %v2419, 16
      %v2442 = vor.u32 %v2439, %v2440
      %v2443 = vsel %vm2423, %v2431, %v2442
      %v2445 = vshrl.u32 %v2420, 16
      %v2447 = vrot.slane %v2445, 7
      %v2448 = vshll.u32 %v2420, 16
      %v2450 = vor.u32 %v2447, %v2448
      %v2451 = vsel %vm2423, %v2439, %v2450
      %v2453 = vshrl.u32 %v2421, 16
      %v2455 = vrot.slane %v2453, 7
      %v2456 = vshll.u32 %v2421, 16
      %v2458 = vor.u32 %v2455, %v2456
      %v2459 = vsel %vm2423, %v2447, %v2458
      %v2461 = vshrl.u32 %v2422, 16
      %v2463 = vrot.slane %v2461, 7
      %v2464 = vshll.u32 %v2422, 16
      %v2466 = vor.u32 %v2463, %v2464
      %v2467 = vsel %vm2423, %v2455, %v2466
      %2473 = vst [vmem:[#allocation3 + $0x18] sm:$0xff] %v2435
      %2474 = vst [vmem:[#allocation3 + $0x60] sm:$0xff] %v2443
      %2475 = vst [vmem:[#allocation3 + $0xa8] sm:$0xff] %v2451
      %2476 = vst [vmem:[#allocation3 + $0xf0] sm:$0xff] %v2459
      %2477 = vst [vmem:[#allocation3 + $0x138] sm:$0xff] %v2467
      %v2478 = vld [vmem:[#allocation2 + $0x8] sm:$0xff]
      %v2479 = vld [vmem:[#allocation2 + $0x10] sm:$0xff]
      %v2480 = vld [vmem:[#allocation2 + $0x18] sm:$0xff]
      %v2481 = vld [vmem:[#allocation2 + $0x20] sm:$0xff]
      %v2482 = vld [vmem:[#allocation2 + $0x28] sm:$0xff]
      %2483 = vst [vmem:[#allocation3 + $0x20] sm:$0xff] %v2478
      %2484 = vst [vmem:[#allocation3 + $0x68] sm:$0xff] %v2479
      %2485 = vst [vmem:[#allocation3 + $0xb0] sm:$0xff] %v2480
      %2486 = vst [vmem:[#allocation3 + $0xf8] sm:$0xff] %v2481
      %2487 = vst [vmem:[#allocation3 + $0x140] sm:$0xff] %v2482
      %v2488 = vld [vmem:[#allocation2 + $0x8] sm:$0xff]
      %v2489 = vld [vmem:[#allocation2 + $0x10] sm:$0xff]
      %v2490 = vld [vmem:[#allocation2 + $0x18] sm:$0xff]
      %v2491 = vld [vmem:[#allocation2 + $0x20] sm:$0xff]
      %v2492 = vld [vmem:[#allocation2 + $0x28] sm:$0xff]
      %v2493 = vld [vmem:[#allocation2 + $0x30] sm:$0x1]
      %v2495 = vshrl.u32 %v2488, 16
      %v2497 = vshll.u32 %v2488, 16
      %v2499 = vrot.slane %v2497, 1
      %v2500 = vor.u32 %v2495, %v2499
      %v2502 = vshll.u32 %v2489, 16
      %v2504 = vrot.slane %v2502, 1
      %v2505 = vsel %vm557, %v2500, %v2504
      %v2506 = vshrl.u32 %v2489, 16
      %v2508 = vor.u32 %v2506, %v2504
      %v2510 = vshll.u32 %v2490, 16
      %v2512 = vrot.slane %v2510, 1
      %v2513 = vsel %vm557, %v2508, %v2512
      %v2514 = vshrl.u32 %v2490, 16
      %v2516 = vor.u32 %v2514, %v2512
      %v2518 = vshll.u32 %v2491, 16
      %v2520 = vrot.slane %v2518, 1
      %v2521 = vsel %vm557, %v2516, %v2520
      %v2522 = vshrl.u32 %v2491, 16
      %v2524 = vor.u32 %v2522, %v2520
      %v2526 = vshll.u32 %v2492, 16
      %v2528 = vrot.slane %v2526, 1
      %v2529 = vsel %vm557, %v2524, %v2528
      %v2530 = vshrl.u32 %v2492, 16
      %v2532 = vor.u32 %v2530, %v2528
      %v2534 = vshll.u32 %v2493, 16
      %v2536 = vrot.slane %v2534, 1
      %v2537 = vsel %vm557, %v2532, %v2536
      %2543 = vst [vmem:[#allocation3 + $0x28] sm:$0xff] %v2505
      %2544 = vst [vmem:[#allocation3 + $0x70] sm:$0xff] %v2513
      %2545 = vst [vmem:[#allocation3 + $0xb8] sm:$0xff] %v2521
      %2546 = vst [vmem:[#allocation3 + $0x100] sm:$0xff] %v2529
      %2547 = vst [vmem:[#allocation3 + $0x148] sm:$0xff] %v2537
      %v2548 = vld [vmem:[#allocation2 + $0x8] sm:$0xf0]
      %v2549 = vld [vmem:[#allocation2 + $0x10] sm:$0xff]
      %v2550 = vld [vmem:[#allocation2 + $0x18] sm:$0xff]
      %v2551 = vld [vmem:[#allocation2 + $0x20] sm:$0xff]
      %v2552 = vld [vmem:[#allocation2 + $0x28] sm:$0xff]
      %v2553 = vld [vmem:[#allocation2 + $0x30] sm:$0x1f]
      %vm2554 = vsmask.f32 3328
      %v2556 = vshrl.u32 %v2548, 16
      %v2558 = vrot.slane %v2556, 4
      %v2559 = vshll.u32 %v2548, 16
      %v2561 = vrot.slane %v2559, 5
      %v2562 = vor.u32 %v2558, %v2561
      %v2564 = vshrl.u32 %v2549, 16
      %v2566 = vrot.slane %v2564, 4
      %v2567 = vshll.u32 %v2549, 16
      %v2569 = vrot.slane %v2567, 5
      %v2570 = vor.u32 %v2566, %v2569
      %v2571 = vsel %vm2554, %v2562, %v2570
      %v2573 = vshrl.u32 %v2550, 16
      %v2575 = vrot.slane %v2573, 4
      %v2576 = vshll.u32 %v2550, 16
      %v2578 = vrot.slane %v2576, 5
      %v2579 = vor.u32 %v2575, %v2578
      %v2580 = vsel %vm2554, %v2570, %v2579
      %v2582 = vshrl.u32 %v2551, 16
      %v2584 = vrot.slane %v2582, 4
      %v2585 = vshll.u32 %v2551, 16
      %v2587 = vrot.slane %v2585, 5
      %v2588 = vor.u32 %v2584, %v2587
      %v2589 = vsel %vm2554, %v2579, %v2588
      %v2591 = vshrl.u32 %v2552, 16
      %v2593 = vrot.slane %v2591, 4
      %v2594 = vshll.u32 %v2552, 16
      %v2596 = vrot.slane %v2594, 5
      %v2597 = vor.u32 %v2593, %v2596
      %v2598 = vsel %vm2554, %v2588, %v2597
      %v2600 = vshrl.u32 %v2553, 16
      %v2602 = vrot.slane %v2600, 4
      %v2603 = vshll.u32 %v2553, 16
      %v2605 = vrot.slane %v2603, 5
      %v2606 = vor.u32 %v2602, %v2605
      %v2607 = vsel %vm2554, %v2597, %v2606
      %2613 = vst [vmem:[#allocation3 + $0x30] sm:$0xff] %v2571
      %2614 = vst [vmem:[#allocation3 + $0x78] sm:$0xff] %v2580
      %2615 = vst [vmem:[#allocation3 + $0xc0] sm:$0xff] %v2589
      %2616 = vst [vmem:[#allocation3 + $0x108] sm:$0xff] %v2598
      %2617 = vst [vmem:[#allocation3 + $0x150] sm:$0xff] %v2607
      %v2618 = vld [vmem:[#allocation2 + $0x8] sm:$0xe0]
      %v2619 = vld [vmem:[#allocation2 + $0x10] sm:$0xff]
      %v2620 = vld [vmem:[#allocation2 + $0x18] sm:$0xff]
      %v2621 = vld [vmem:[#allocation2 + $0x20] sm:$0xff]
      %v2622 = vld [vmem:[#allocation2 + $0x28] sm:$0xff]
      %v2623 = vld [vmem:[#allocation2 + $0x30] sm:$0x1f]
      %vm2630 = vcmask 1042432
      %v2631 = vrot.slane %v2618, 5
      %v2632 = vrot.slane %v2619, 5
      %v2633 = vsel %vm2630, %v2631, %v2632
      %v2634 = vrot.slane %v2620, 5
      %v2635 = vsel %vm2630, %v2632, %v2634
      %v2636 = vrot.slane %v2621, 5
      %v2637 = vsel %vm2630, %v2634, %v2636
      %v2638 = vrot.slane %v2622, 5
      %v2639 = vsel %vm2630, %v2636, %v2638
      %v2640 = vrot.slane %v2623, 5
      %v2641 = vsel %vm2630, %v2638, %v2640
      %2647 = vst [vmem:[#allocation3 + $0x38] sm:$0xff] %v2633
      %2648 = vst [vmem:[#allocation3 + $0x80] sm:$0xff] %v2635
      %2649 = vst [vmem:[#allocation3 + $0xc8] sm:$0xff] %v2637
      %2650 = vst [vmem:[#allocation3 + $0x110] sm:$0xff] %v2639
      %2651 = vst [vmem:[#allocation3 + $0x158] sm:$0xff] %v2641
      %v2652 = vld [vmem:[#allocation2 + $0x8] sm:$0xe0]
      %v2653 = vld [vmem:[#allocation2 + $0x10] sm:$0xff]
      %v2654 = vld [vmem:[#allocation2 + $0x18] sm:$0xff]
      %v2655 = vld [vmem:[#allocation2 + $0x20] sm:$0xff]
      %v2656 = vld [vmem:[#allocation2 + $0x28] sm:$0xff]
      %v2657 = vld [vmem:[#allocation2 + $0x30] sm:$0x3f]
      %vm2658 = vsmask.f32 2304
      %v2660 = vshrl.u32 %v2652, 16
      %v2662 = vrot.slane %v2660, 5
      %v2663 = vshll.u32 %v2652, 16
      %v2665 = vrot.slane %v2663, 6
      %v2666 = vor.u32 %v2662, %v2665
      %v2668 = vshrl.u32 %v2653, 16
      %v2670 = vrot.slane %v2668, 5
      %v2671 = vshll.u32 %v2653, 16
      %v2673 = vrot.slane %v2671, 6
      %v2674 = vor.u32 %v2670, %v2673
      %v2675 = vsel %vm2658, %v2666, %v2674
      %v2677 = vshrl.u32 %v2654, 16
      %v2679 = vrot.slane %v2677, 5
      %v2680 = vshll.u32 %v2654, 16
      %v2682 = vrot.slane %v2680, 6
      %v2683 = vor.u32 %v2679, %v2682
      %v2684 = vsel %vm2658, %v2674, %v2683
      %v2686 = vshrl.u32 %v2655, 16
      %v2688 = vrot.slane %v2686, 5
      %v2689 = vshll.u32 %v2655, 16
      %v2691 = vrot.slane %v2689, 6
      %v2692 = vor.u32 %v2688, %v2691
      %v2693 = vsel %vm2658, %v2683, %v2692
      %v2695 = vshrl.u32 %v2656, 16
      %v2697 = vrot.slane %v2695, 5
      %v2698 = vshll.u32 %v2656, 16
      %v2700 = vrot.slane %v2698, 6
      %v2701 = vor.u32 %v2697, %v2700
      %v2702 = vsel %vm2658, %v2692, %v2701
      %v2704 = vshrl.u32 %v2657, 16
      %v2706 = vrot.slane %v2704, 5
      %v2707 = vshll.u32 %v2657, 16
      %v2709 = vrot.slane %v2707, 6
      %v2710 = vor.u32 %v2706, %v2709
      %v2711 = vsel %vm2658, %v2701, %v2710
      %2717 = vst [vmem:[#allocation3 + $0x40] sm:$0xff] %v2675
      %2718 = vst [vmem:[#allocation3 + $0x88] sm:$0xff] %v2684
      %2719 = vst [vmem:[#allocation3 + $0xd0] sm:$0xff] %v2693
      %2720 = vst [vmem:[#allocation3 + $0x118] sm:$0xff] %v2702
      %2721 = vst [vmem:[#allocation3 + $0x160] sm:$0xff] %v2711
      %v2722 = vld [vmem:[#allocation3] sm:$0xff]
      %v2723 = vld [vmem:[#allocation3 + $0x8] sm:$0xff]
      %v2724 = vld [vmem:[#allocation3 + $0x10] sm:$0xff]
      %v2725 = vld [vmem:[#allocation3 + $0x18] sm:$0xff]
      %v2726 = vld [vmem:[#allocation3 + $0x20] sm:$0xff]
      %v2727 = vld [vmem:[#allocation3 + $0x28] sm:$0xff]
      %v2728 = vld [vmem:[#allocation3 + $0x30] sm:$0xff]
      %v2729 = vld [vmem:[#allocation3 + $0x38] sm:$0xff]
      %v2730 = vld [vmem:[#allocation3 + $0x40] sm:$0xff]
      %v2731 = vld [vmem:[#allocation3 + $0x48] sm:$0xff]
      %v2732 = vld [vmem:[#allocation3 + $0x50] sm:$0xff]
      %v2733 = vld [vmem:[#allocation3 + $0x58] sm:$0xff]
      %v2734 = vld [vmem:[#allocation3 + $0x60] sm:$0xff]
      %v2735 = vld [vmem:[#allocation3 + $0x68] sm:$0xff]
      %v2736 = vld [vmem:[#allocation3 + $0x70] sm:$0xff]
      %v2737 = vld [vmem:[#allocation3 + $0x78] sm:$0xff]
      %v2738 = vld [vmem:[#allocation3 + $0x80] sm:$0xff]
      %v2739 = vld [vmem:[#allocation3 + $0x88] sm:$0xff]
      %v2740 = vld [vmem:[#allocation3 + $0x90] sm:$0xff]
      %v2741 = vld [vmem:[#allocation3 + $0x98] sm:$0xff]
      %v2742 = vld [vmem:[#allocation3 + $0xa0] sm:$0xff]
      %v2743 = vld [vmem:[#allocation3 + $0xa8] sm:$0xff]
      %v2744 = vld [vmem:[#allocation3 + $0xb0] sm:$0xff]
      %v2745 = vld [vmem:[#allocation3 + $0xb8] sm:$0xff]
      %v2746 = vld [vmem:[#allocation3 + $0xc0] sm:$0xff]
      %v2747 = vld [vmem:[#allocation3 + $0xc8] sm:$0xff]
      %v2748 = vld [vmem:[#allocation3 + $0xd0] sm:$0xff]
      %v2749 = vld [vmem:[#allocation3 + $0xd8] sm:$0xff]
      %v2750 = vld [vmem:[#allocation3 + $0xe0] sm:$0xff]
      %v2751 = vld [vmem:[#allocation3 + $0xe8] sm:$0xff]
      %v2752 = vld [vmem:[#allocation3 + $0xf0] sm:$0xff]
      %v2753 = vld [vmem:[#allocation3 + $0xf8] sm:$0xff]
      %v2754 = vld [vmem:[#allocation3 + $0x100] sm:$0xff]
      %v2755 = vld [vmem:[#allocation3 + $0x108] sm:$0xff]
      %v2756 = vld [vmem:[#allocation3 + $0x110] sm:$0xff]
      %v2757 = vld [vmem:[#allocation3 + $0x118] sm:$0xff]
      %v2758 = vld [vmem:[#allocation3 + $0x120] sm:$0xff]
      %v2759 = vld [vmem:[#allocation3 + $0x128] sm:$0xff]
      %v2760 = vld [vmem:[#allocation3 + $0x130] sm:$0xff]
      %v2761 = vld [vmem:[#allocation3 + $0x138] sm:$0xff]
      %v2762 = vld [vmem:[#allocation3 + $0x140] sm:$0xff]
      %v2763 = vld [vmem:[#allocation3 + $0x148] sm:$0xff]
      %v2764 = vld [vmem:[#allocation3 + $0x150] sm:$0xff]
      %v2765 = vld [vmem:[#allocation3 + $0x158] sm:$0xff]
      %v2766 = vld [vmem:[#allocation3 + $0x160] sm:$0xff]
      %v2767 = vld [vmem:[%s4] sm:$0xf]
      %v2768 = vld [vmem:[%s4 + $0x4] sm:$0xf]
      %v2769 = vld [vmem:[%s4 + $0x8] sm:$0xf]
      %v2770 = vld [vmem:[%s4 + $0xc] sm:$0xf]
      %v2771 = vld [vmem:[%s4 + $0x10] sm:$0xf]
      %v2772 = vld [vmem:[%s4 + $0x14] sm:$0xf]
      %v2773 = vld [vmem:[%s4 + $0x18] sm:$0xf]
      %v2774 = vld [vmem:[%s4 + $0x1c] sm:$0xf]
      %v2775 = vld [vmem:[%s4 + $0x20] sm:$0xf]
      %v2776 = vld [vmem:[%s4 + $0x24] sm:$0xf]
      %v2777 = vld [vmem:[%s4 + $0x28] sm:$0xf]
      %v2778 = vld [vmem:[%s4 + $0x2c] sm:$0xf]
      %v2779 = vld [vmem:[%s4 + $0x30] sm:$0xf]
      %v2780 = vld [vmem:[%s4 + $0x34] sm:$0xf]
      %v2781 = vld [vmem:[%s4 + $0x38] sm:$0xf]
      %v2782 = vld [vmem:[%s4 + $0x3c] sm:$0xf]
      %v2783 = vld [vmem:[%s4 + $0x40] sm:$0xf]
      %v2784 = vld [vmem:[%s4 + $0x44] sm:$0xf]
      %v2785 = vld [vmem:[%s4 + $0x48] sm:$0xf]
      %v2786 = vld [vmem:[%s4 + $0x4c] sm:$0xf]
      %v2787 = vld [vmem:[%s4 + $0x50] sm:$0xf]
      %v2788 = vld [vmem:[%s4 + $0x54] sm:$0xf]
      %v2789 = vld [vmem:[%s4 + $0x58] sm:$0xf]
      %v2790 = vld [vmem:[%s4 + $0x5c] sm:$0xf]
      %v2791 = vld [vmem:[%s4 + $0x60] sm:$0xf]
      %v2792 = vld [vmem:[%s4 + $0x64] sm:$0xf]
      %v2793 = vld [vmem:[%s4 + $0x68] sm:$0xf]
      %v2794 = vld [vmem:[%s4 + $0x6c] sm:$0xf]
      %v2795 = vld [vmem:[%s4 + $0x70] sm:$0xf]
      %v2796 = vld [vmem:[%s4 + $0x74] sm:$0xf]
      %v2797 = vld [vmem:[%s4 + $0x78] sm:$0xf]
      %v2798 = vld [vmem:[%s4 + $0x7c] sm:$0xf]
      %v2799 = vld [vmem:[%s4 + $0x80] sm:$0xf]
      %v2800 = vld [vmem:[%s4 + $0x84] sm:$0xf]
      %v2801 = vld [vmem:[%s4 + $0x88] sm:$0xf]
      %v2802 = vld [vmem:[%s4 + $0x8c] sm:$0xf]
      %v2803 = vld [vmem:[%s4 + $0x90] sm:$0xf]
      %v2804 = vld [vmem:[%s4 + $0x94] sm:$0xf]
      %v2805 = vld [vmem:[%s4 + $0x98] sm:$0xf]
      %v2806 = vld [vmem:[%s4 + $0x9c] sm:$0xf]
      %v2807 = vld [vmem:[%s4 + $0xa0] sm:$0xf]
      %v2808 = vld [vmem:[%s4 + $0xa4] sm:$0xf]
      %v2809 = vld [vmem:[%s4 + $0xa8] sm:$0xf]
      %v2810 = vld [vmem:[%s4 + $0xac] sm:$0xf]
      %v2811 = vld [vmem:[%s4 + $0xb0] sm:$0xf]
      %v2812 = vld [vmem:[%s4 + $0xb4] sm:$0xf]
      %v2813 = vld [vmem:[%s4 + $0xb8] sm:$0xf]
      %v2814 = vld [vmem:[%s4 + $0xbc] sm:$0xf]
      %v2815 = vld [vmem:[%s4 + $0xc0] sm:$0xf]
      %v2816 = vld [vmem:[%s4 + $0xc4] sm:$0xf]
      %v2817 = vld [vmem:[%s4 + $0xc8] sm:$0xf]
      %v2818 = vld [vmem:[%s4 + $0xcc] sm:$0xf]
      %v2819 = vld [vmem:[%s4 + $0xd0] sm:$0xf]
      %v2820 = vld [vmem:[%s4 + $0xd4] sm:$0xf]
      %v2821 = vld [vmem:[%s4 + $0xd8] sm:$0xf]
      %v2822 = vld [vmem:[%s4 + $0xdc] sm:$0xf]
      %v2823 = vld [vmem:[%s4 + $0xe0] sm:$0xf]
      %v2824 = vld [vmem:[%s4 + $0xe4] sm:$0xf]
      %v2825 = vld [vmem:[%s4 + $0xe8] sm:$0xf]
      %v2826 = vld [vmem:[%s4 + $0xec] sm:$0xf]
      %v2827 = vld [vmem:[%s4 + $0xf0] sm:$0xf]
      %v2828 = vld [vmem:[%s4 + $0xf4] sm:$0xf]
      %v2829 = vld [vmem:[%s4 + $0xf8] sm:$0xf]
      %v2830 = vld [vmem:[%s4 + $0xfc] sm:$0xf]
      %v2831 = vld [vmem:[%s4 + $0x100] sm:$0xf]
      %v2832 = vld [vmem:[%s4 + $0x104] sm:$0xf]
      %v2833 = vld [vmem:[%s4 + $0x108] sm:$0xf]
      %v2834 = vld [vmem:[%s4 + $0x10c] sm:$0xf]
      %v2835 = vld [vmem:[%s4 + $0x110] sm:$0xf]
      %v2836 = vld [vmem:[%s4 + $0x114] sm:$0xf]
      %v2837 = vld [vmem:[%s4 + $0x118] sm:$0xf]
      %v2838 = vld [vmem:[%s4 + $0x11c] sm:$0xf]
      %v2839 = vld [vmem:[%s4 + $0x120] sm:$0xf]
      %v2840 = vld [vmem:[%s4 + $0x124] sm:$0xf]
      %v2841 = vld [vmem:[%s4 + $0x128] sm:$0xf]
      %v2842 = vld [vmem:[%s4 + $0x12c] sm:$0xf]
      %v2843 = vld [vmem:[%s4 + $0x130] sm:$0xf]
      %v2844 = vld [vmem:[%s4 + $0x134] sm:$0xf]
      %v2845 = vld [vmem:[%s4 + $0x138] sm:$0xf]
      %v2846 = vld [vmem:[%s4 + $0x13c] sm:$0xf]
      %v2847 = vld [vmem:[%s4 + $0x140] sm:$0xf]
      %v2848 = vld [vmem:[%s4 + $0x144] sm:$0xf]
      %v2849 = vld [vmem:[%s4 + $0x148] sm:$0xf]
      %v2850 = vld [vmem:[%s4 + $0x14c] sm:$0xf]
      %v2851 = vld [vmem:[%s4 + $0x150] sm:$0xf]
      %v2852 = vld [vmem:[%s4 + $0x154] sm:$0xf]
      %v2853 = vld [vmem:[%s4 + $0x158] sm:$0xf]
      %v2854 = vld [vmem:[%s4 + $0x15c] sm:$0xf]
      %v2855 = vld [vmem:[%s4 + $0x160] sm:$0xf]
      %v2856 = vld [vmem:[%s4 + $0x164] sm:$0xf]
      %v2857 = vld [vmem:[%s4 + $0x168] sm:$0xf]
      %v2858 = vld [vmem:[%s4 + $0x16c] sm:$0xf]
      %v2859 = vld [vmem:[%s4 + $0x170] sm:$0xf]
      %v2860 = vld [vmem:[%s4 + $0x174] sm:$0xf]
      %v2861 = vld [vmem:[%s4 + $0x178] sm:$0xf]
      %v2862 = vld [vmem:[%s4 + $0x17c] sm:$0xf]
      %v2863 = vld [vmem:[%s4 + $0x180] sm:$0xf]
      %v2864 = vld [vmem:[%s4 + $0x184] sm:$0xf]
      %v2865 = vld [vmem:[%s4 + $0x188] sm:$0xf]
      %v2866 = vld [vmem:[%s4 + $0x18c] sm:$0xf]
      %v2867 = vld [vmem:[%s4 + $0x190] sm:$0xf]
      %v2868 = vld [vmem:[%s4 + $0x194] sm:$0xf]
      %v2869 = vld [vmem:[%s4 + $0x198] sm:$0xf]
      %v2870 = vld [vmem:[%s4 + $0x19c] sm:$0xf]
      %v2871 = vld [vmem:[%s4 + $0x1a0] sm:$0xf]
      %v2872 = vld [vmem:[%s4 + $0x1a4] sm:$0xf]
      %v2873 = vld [vmem:[%s4 + $0x1a8] sm:$0xf]
      %v2874 = vld [vmem:[%s4 + $0x1ac] sm:$0xf]
      %v2875 = vld [vmem:[%s4 + $0x1b0] sm:$0xf]
      %v2876 = vld [vmem:[%s4 + $0x1b4] sm:$0xf]
      %v2877 = vld [vmem:[%s4 + $0x1b8] sm:$0xf]
      %v2878 = vld [vmem:[%s4 + $0x1bc] sm:$0xf]
      %v2879 = vld [vmem:[%s4 + $0x1c0] sm:$0xf]
      %v2880 = vld [vmem:[%s4 + $0x1c4] sm:$0xf]
      %v2881 = vld [vmem:[%s4 + $0x1c8] sm:$0xf]
      %v2882 = vld [vmem:[%s4 + $0x1cc] sm:$0xf]
      %v2883 = vld [vmem:[%s4 + $0x1d0] sm:$0xf]
      %v2884 = vld [vmem:[%s4 + $0x1d4] sm:$0xf]
      %v2885 = vld [vmem:[%s4 + $0x1d8] sm:$0xf]
      %v2886 = vld [vmem:[%s4 + $0x1dc] sm:$0xf]
      %v2887 = vld [vmem:[%s4 + $0x1e0] sm:$0xf]
      %v2888 = vld [vmem:[%s4 + $0x1e4] sm:$0xf]
      %v2889 = vld [vmem:[%s4 + $0x1e8] sm:$0xf]
      %v2890 = vld [vmem:[%s4 + $0x1ec] sm:$0xf]
      %v2891 = vld [vmem:[%s4 + $0x1f0] sm:$0xf]
      %v2892 = vld [vmem:[%s4 + $0x1f4] sm:$0xf]
      %v2893 = vld [vmem:[%s4 + $0x1f8] sm:$0xf]
      %v2894 = vld [vmem:[%s4 + $0x1fc] sm:$0xf]
      %v2895 = vld [vmem:[%s4 + $0x200] sm:$0xf]
      %v2896 = vld [vmem:[%s4 + $0x204] sm:$0xf]
      %v2897 = vld [vmem:[%s4 + $0x208] sm:$0xf]
      %v2898 = vld [vmem:[%s4 + $0x20c] sm:$0xf]
      %v2899 = vld [vmem:[%s4 + $0x210] sm:$0xf]
      %v2900 = vld [vmem:[%s4 + $0x214] sm:$0xf]
      %v2901 = vld [vmem:[%s4 + $0x218] sm:$0xf]
      %v2902 = vld [vmem:[%s4 + $0x21c] sm:$0xf]
      %v2903 = vld [vmem:[%s4 + $0x220] sm:$0xf]
      %v2904 = vld [vmem:[%s4 + $0x224] sm:$0xf]
      %v2905 = vld [vmem:[%s4 + $0x228] sm:$0xf]
      %v2906 = vld [vmem:[%s4 + $0x22c] sm:$0xf]
      %v2907 = vld [vmem:[%s4 + $0x230] sm:$0xf]
      %v2908 = vld [vmem:[%s4 + $0x234] sm:$0xf]
      %v2909 = vld [vmem:[%s4 + $0x238] sm:$0xf]
      %v2910 = vld [vmem:[%s4 + $0x23c] sm:$0xf]
      %v2911 = vld [vmem:[%s5] sm:$0x1]
      %v2913 = vlaneseq
      %v2914 = vshrl.u32 %v2913, 7
      %v2915 = vsub.s32 0, %v2914
      %v2916 = vrot.slane %v2911, %v2915
      %v3062 = vunpack.c.l.b16 %v2767
      %v3063 = vunpack.c.l.b16 %v2768
      %v3064 = vunpack.c.l.b16 %v2769
      %v3065 = vunpack.c.l.b16 %v2770
      %v3066 = vunpack.c.l.b16 %v2771
      %v3067 = vunpack.c.l.b16 %v2772
      %v3068 = vunpack.c.l.b16 %v2773
      %v3069 = vunpack.c.l.b16 %v2774
      %v3070 = vunpack.c.l.b16 %v2775
      %v3071 = vunpack.c.l.b16 %v2776
      %v3072 = vunpack.c.l.b16 %v2777
      %v3073 = vunpack.c.l.b16 %v2778
      %v3074 = vunpack.c.l.b16 %v2779
      %v3075 = vunpack.c.l.b16 %v2780
      %v3076 = vunpack.c.l.b16 %v2781
      %v3077 = vunpack.c.l.b16 %v2782
      %v3078 = vunpack.c.l.b16 %v2783
      %v3079 = vunpack.c.l.b16 %v2784
      %v3080 = vunpack.c.l.b16 %v2785
      %v3081 = vunpack.c.l.b16 %v2786
      %v3082 = vunpack.c.l.b16 %v2787
      %v3083 = vunpack.c.l.b16 %v2788
      %v3084 = vunpack.c.l.b16 %v2789
      %v3085 = vunpack.c.l.b16 %v2790
      %v3086 = vunpack.c.l.b16 %v2791
      %v3087 = vunpack.c.l.b16 %v2792
      %v3088 = vunpack.c.l.b16 %v2793
      %v3089 = vunpack.c.l.b16 %v2794
      %v3090 = vunpack.c.l.b16 %v2795
      %v3091 = vunpack.c.l.b16 %v2796
      %v3092 = vunpack.c.l.b16 %v2797
      %v3093 = vunpack.c.l.b16 %v2798
      %v3094 = vunpack.c.l.b16 %v2799
      %v3095 = vunpack.c.l.b16 %v2800
      %v3096 = vunpack.c.l.b16 %v2801
      %v3097 = vunpack.c.l.b16 %v2802
      %v3098 = vunpack.c.l.b16 %v2803
      %v3099 = vunpack.c.l.b16 %v2804
      %v3100 = vunpack.c.l.b16 %v2805
      %v3101 = vunpack.c.l.b16 %v2806
      %v3102 = vunpack.c.l.b16 %v2807
      %v3103 = vunpack.c.l.b16 %v2808
      %v3104 = vunpack.c.l.b16 %v2809
      %v3105 = vunpack.c.l.b16 %v2810
      %v3106 = vunpack.c.l.b16 %v2811
      %v3107 = vunpack.c.l.b16 %v2812
      %v3108 = vunpack.c.l.b16 %v2813
      %v3109 = vunpack.c.l.b16 %v2814
      %v3110 = vunpack.c.l.b16 %v2815
      %v3111 = vunpack.c.l.b16 %v2816
      %v3112 = vunpack.c.l.b16 %v2817
      %v3113 = vunpack.c.l.b16 %v2818
      %v3114 = vunpack.c.l.b16 %v2819
      %v3115 = vunpack.c.l.b16 %v2820
      %v3116 = vunpack.c.l.b16 %v2821
      %v3117 = vunpack.c.l.b16 %v2822
      %v3118 = vunpack.c.l.b16 %v2823
      %v3119 = vunpack.c.l.b16 %v2824
      %v3120 = vunpack.c.l.b16 %v2825
      %v3121 = vunpack.c.l.b16 %v2826
      %v3122 = vunpack.c.l.b16 %v2827
      %v3123 = vunpack.c.l.b16 %v2828
      %v3124 = vunpack.c.l.b16 %v2829
      %v3125 = vunpack.c.l.b16 %v2830
      %v3126 = vunpack.c.l.b16 %v2831
      %v3127 = vunpack.c.l.b16 %v2832
      %v3128 = vunpack.c.l.b16 %v2833
      %v3129 = vunpack.c.l.b16 %v2834
      %v3130 = vunpack.c.l.b16 %v2835
      %v3131 = vunpack.c.l.b16 %v2836
      %v3132 = vunpack.c.l.b16 %v2837
      %v3133 = vunpack.c.l.b16 %v2838
      %v3134 = vunpack.c.l.b16 %v2839
      %v3135 = vunpack.c.l.b16 %v2840
      %v3136 = vunpack.c.l.b16 %v2841
      %v3137 = vunpack.c.l.b16 %v2842
      %v3138 = vunpack.c.l.b16 %v2843
      %v3139 = vunpack.c.l.b16 %v2844
      %v3140 = vunpack.c.l.b16 %v2845
      %v3141 = vunpack.c.l.b16 %v2846
      %v3142 = vunpack.c.l.b16 %v2847
      %v3143 = vunpack.c.l.b16 %v2848
      %v3144 = vunpack.c.l.b16 %v2849
      %v3145 = vunpack.c.l.b16 %v2850
      %v3146 = vunpack.c.l.b16 %v2851
      %v3147 = vunpack.c.l.b16 %v2852
      %v3148 = vunpack.c.l.b16 %v2853
      %v3149 = vunpack.c.l.b16 %v2854
      %v3150 = vunpack.c.l.b16 %v2855
      %v3151 = vunpack.c.l.b16 %v2856
      %v3152 = vunpack.c.l.b16 %v2857
      %v3153 = vunpack.c.l.b16 %v2858
      %v3154 = vunpack.c.l.b16 %v2859
      %v3155 = vunpack.c.l.b16 %v2860
      %v3156 = vunpack.c.l.b16 %v2861
      %v3157 = vunpack.c.l.b16 %v2862
      %v3158 = vunpack.c.l.b16 %v2863
      %v3159 = vunpack.c.l.b16 %v2864
      %v3160 = vunpack.c.l.b16 %v2865
      %v3161 = vunpack.c.l.b16 %v2866
      %v3162 = vunpack.c.l.b16 %v2867
      %v3163 = vunpack.c.l.b16 %v2868
      %v3164 = vunpack.c.l.b16 %v2869
      %v3165 = vunpack.c.l.b16 %v2870
      %v3166 = vunpack.c.l.b16 %v2871
      %v3167 = vunpack.c.l.b16 %v2872
      %v3168 = vunpack.c.l.b16 %v2873
      %v3169 = vunpack.c.l.b16 %v2874
      %v3170 = vunpack.c.l.b16 %v2875
      %v3171 = vunpack.c.l.b16 %v2876
      %v3172 = vunpack.c.l.b16 %v2877
      %v3173 = vunpack.c.l.b16 %v2878
      %v3174 = vunpack.c.l.b16 %v2879
      %v3175 = vunpack.c.l.b16 %v2880
      %v3176 = vunpack.c.l.b16 %v2881
      %v3177 = vunpack.c.l.b16 %v2882
      %v3178 = vunpack.c.l.b16 %v2883
      %v3179 = vunpack.c.l.b16 %v2884
      %v3180 = vunpack.c.l.b16 %v2885
      %v3181 = vunpack.c.l.b16 %v2886
      %v3182 = vunpack.c.l.b16 %v2887
      %v3183 = vunpack.c.l.b16 %v2888
      %v3184 = vunpack.c.l.b16 %v2889
      %v3185 = vunpack.c.l.b16 %v2890
      %v3186 = vunpack.c.l.b16 %v2891
      %v3187 = vunpack.c.l.b16 %v2892
      %v3188 = vunpack.c.l.b16 %v2893
      %v3189 = vunpack.c.l.b16 %v2894
      %v3190 = vunpack.c.l.b16 %v2895
      %v3191 = vunpack.c.l.b16 %v2896
      %v3192 = vunpack.c.l.b16 %v2897
      %v3193 = vunpack.c.l.b16 %v2898
      %v3194 = vunpack.c.l.b16 %v2899
      %v3195 = vunpack.c.l.b16 %v2900
      %v3196 = vunpack.c.l.b16 %v2901
      %v3197 = vunpack.c.l.b16 %v2902
      %v3198 = vunpack.c.l.b16 %v2903
      %v3199 = vunpack.c.l.b16 %v2904
      %v3200 = vunpack.c.l.b16 %v2905
      %v3201 = vunpack.c.l.b16 %v2906
      %v3202 = vunpack.c.l.b16 %v2907
      %v3203 = vunpack.c.l.b16 %v2908
      %v3204 = vunpack.c.l.b16 %v2909
      %v3205 = vunpack.c.l.b16 %v2910
      %v3206 = vpack.c.b16 %v3063, %v3062
      %v3207 = vpack.c.b16 %v3065, %v3064
      %v3208 = vpack.c.b16 %v3067, %v3066
      %v3209 = vpack.c.b16 %v3069, %v3068
      %v3210 = vpack.c.b16 %v3071, %v3070
      %v3211 = vpack.c.b16 %v3073, %v3072
      %v3212 = vpack.c.b16 %v3075, %v3074
      %v3213 = vpack.c.b16 %v3077, %v3076
      %v3214 = vpack.c.b16 %v3079, %v3078
      %v3215 = vpack.c.b16 %v3081, %v3080
      %v3216 = vpack.c.b16 %v3083, %v3082
      %v3217 = vpack.c.b16 %v3085, %v3084
      %v3218 = vpack.c.b16 %v3087, %v3086
      %v3219 = vpack.c.b16 %v3089, %v3088
      %v3220 = vpack.c.b16 %v3091, %v3090
      %v3221 = vpack.c.b16 %v3093, %v3092
      %v3222 = vpack.c.b16 %v3095, %v3094
      %v3223 = vpack.c.b16 %v3097, %v3096
      %v3224 = vpack.c.b16 %v3099, %v3098
      %v3225 = vpack.c.b16 %v3101, %v3100
      %v3226 = vpack.c.b16 %v3103, %v3102
      %v3227 = vpack.c.b16 %v3105, %v3104
      %v3228 = vpack.c.b16 %v3107, %v3106
      %v3229 = vpack.c.b16 %v3109, %v3108
      %v3230 = vpack.c.b16 %v3111, %v3110
      %v3231 = vpack.c.b16 %v3113, %v3112
      %v3232 = vpack.c.b16 %v3115, %v3114
      %v3233 = vpack.c.b16 %v3117, %v3116
      %v3234 = vpack.c.b16 %v3119, %v3118
      %v3235 = vpack.c.b16 %v3121, %v3120
      %v3236 = vpack.c.b16 %v3123, %v3122
      %v3237 = vpack.c.b16 %v3125, %v3124
      %v3238 = vpack.c.b16 %v3127, %v3126
      %v3239 = vpack.c.b16 %v3129, %v3128
      %v3240 = vpack.c.b16 %v3131, %v3130
      %v3241 = vpack.c.b16 %v3133, %v3132
      %v3242 = vpack.c.b16 %v3135, %v3134
      %v3243 = vpack.c.b16 %v3137, %v3136
      %v3244 = vpack.c.b16 %v3139, %v3138
      %v3245 = vpack.c.b16 %v3141, %v3140
      %v3246 = vpack.c.b16 %v3143, %v3142
      %v3247 = vpack.c.b16 %v3145, %v3144
      %v3248 = vpack.c.b16 %v3147, %v3146
      %v3249 = vpack.c.b16 %v3149, %v3148
      %v3250 = vpack.c.b16 %v3151, %v3150
      %v3251 = vpack.c.b16 %v3153, %v3152
      %v3252 = vpack.c.b16 %v3155, %v3154
      %v3253 = vpack.c.b16 %v3157, %v3156
      %v3254 = vpack.c.b16 %v3159, %v3158
      %v3255 = vpack.c.b16 %v3161, %v3160
      %v3256 = vpack.c.b16 %v3163, %v3162
      %v3257 = vpack.c.b16 %v3165, %v3164
      %v3258 = vpack.c.b16 %v3167, %v3166
      %v3259 = vpack.c.b16 %v3169, %v3168
      %v3260 = vpack.c.b16 %v3171, %v3170
      %v3261 = vpack.c.b16 %v3173, %v3172
      %v3262 = vpack.c.b16 %v3175, %v3174
      %v3263 = vpack.c.b16 %v3177, %v3176
      %v3264 = vpack.c.b16 %v3179, %v3178
      %v3265 = vpack.c.b16 %v3181, %v3180
      %v3266 = vpack.c.b16 %v3183, %v3182
      %v3267 = vpack.c.b16 %v3185, %v3184
      %v3268 = vpack.c.b16 %v3187, %v3186
      %v3269 = vpack.c.b16 %v3189, %v3188
      %v3270 = vpack.c.b16 %v3191, %v3190
      %v3271 = vpack.c.b16 %v3193, %v3192
      %v3272 = vpack.c.b16 %v3195, %v3194
      %v3273 = vpack.c.b16 %v3197, %v3196
      %v3274 = vpack.c.b16 %v3199, %v3198
      %v3275 = vpack.c.b16 %v3201, %v3200
      %v3276 = vpack.c.b16 %v3203, %v3202
      %v3277 = vpack.c.b16 %v3205, %v3204
      %3350 = vmatprep.subr.bf16.mxu0 0
      %3351 = vmatpush1.bf16.msra.mxu0 %v3206
      %3352 = vmatprep.subr.bf16.mxu0 0
      %3353 = vmatpush1.bf16.msra.mxu0 %v3207
      %3354 = vmatprep.subr.bf16.mxu0 0
      %3355 = vmatpush1.bf16.msra.mxu0 %v3208
      %3356 = vmatprep.subr.bf16.mxu0 0
      %3357 = vmatpush1.bf16.msra.mxu0 %v3209
      %3358 = vmatprep.subr.bf16.mxu0 0
      %3359 = vmatpush1.bf16.msra.mxu0 %v3210
      %3360 = vmatprep.subr.bf16.mxu0 0
      %3361 = vmatpush1.bf16.msra.mxu0 %v3211
      %3362 = vmatprep.subr.bf16.mxu0 0
      %3363 = vmatpush1.bf16.msra.mxu0 %v3212
      %3364 = vmatprep.subr.bf16.mxu0 0
      %3365 = vmatpush1.bf16.msra.mxu0 %v3213
      %3366 = vmatprep.subr.bf16.mxu0 0
      %3367 = vmatpush1.bf16.msra.mxu0 %v3214
      %3368 = vmatprep.subr.bf16.mxu0 0
      %3369 = vmatpush1.bf16.msra.mxu0 %v3215
      %3370 = vmatprep.subr.bf16.mxu0 0
      %3371 = vmatpush1.bf16.msra.mxu0 %v3216
      %3372 = vmatprep.subr.bf16.mxu0 0
      %3373 = vmatpush1.bf16.msra.mxu0 %v3217
      %3374 = vmatprep.subr.bf16.mxu0 0
      %3375 = vmatpush1.bf16.msra.mxu0 %v3218
      %3376 = vmatprep.subr.bf16.mxu0 0
      %3377 = vmatpush1.bf16.msra.mxu0 %v3219
      %3378 = vmatprep.subr.bf16.mxu0 0
      %3379 = vmatpush1.bf16.msra.mxu0 %v3220
      %3380 = vmatprep.subr.bf16.mxu0 0
      %3381 = vmatpush1.bf16.msra.mxu0 %v3221
      %3382 = vmatprep.mubr.bf16.mxu0 %v2723
      %3383 = vmatmul.mubr.bf16.gmra.mrb[0].mxu0 %v2722
      %v3384 = vpop.f32.mrb[0].mxu0
      %v3385 = vadd.f32 %v2916, %v3384
      %v3386 = vpop.f32.mrb[0].mxu0
      %v3387 = vpop.f32.mrb[0].mxu0
      %v3388 = vadd.f32 %v2916, %v3387
      %v3389 = vpop.f32.mrb[0].mxu0
      %3390 = vmatprep.mubr.bf16.mxu0 %v2732
      %3391 = vmatmul.mubr.bf16.gmra.mrb[0].mxu0 %v2731
      %v3392 = vpop.f32.mrb[0].mxu0
      %v3393 = vadd.f32 %v2916, %v3392
      %v3394 = vpop.f32.mrb[0].mxu0
      %v3395 = vpop.f32.mrb[0].mxu0
      %v3396 = vadd.f32 %v2916, %v3395
      %v3397 = vpop.f32.mrb[0].mxu0
      %3398 = vmatprep.mubr.bf16.mxu0 %v2741
      %3399 = vmatmul.mubr.bf16.gmra.mrb[0].mxu0 %v2740
      %v3400 = vpop.f32.mrb[0].mxu0
      %v3401 = vadd.f32 %v2916, %v3400
      %v3402 = vpop.f32.mrb[0].mxu0
      %v3403 = vpop.f32.mrb[0].mxu0
      %v3404 = vadd.f32 %v2916, %v3403
      %v3405 = vpop.f32.mrb[0].mxu0
      %3406 = vmatprep.mubr.bf16.mxu0 %v2750
      %3407 = vmatmul.mubr.bf16.gmra.mrb[0].mxu0 %v2749
      %v3408 = vpop.f32.mrb[0].mxu0
      %v3409 = vadd.f32 %v2916, %v3408
      %v3410 = vpop.f32.mrb[0].mxu0
      %v3411 = vpop.f32.mrb[0].mxu0
      %v3412 = vadd.f32 %v2916, %v3411
      %v3413 = vpop.f32.mrb[0].mxu0
      %3414 = vmatprep.mubr.bf16.mxu0 %v2759
      %3415 = vmatmul.mubr.bf16.gmra.mrb[0].mxu0 %v2758
      %v3416 = vpop.f32.mrb[0].mxu0
      %v3417 = vadd.f32 %v2916, %v3416
      %v3418 = vpop.f32.mrb[0].mxu0
      %v3419 = vpop.f32.mrb[0].mxu0
      %v3420 = vadd.f32 %v2916, %v3419
      %v3421 = vpop.f32.mrb[0].mxu0
      %3422 = vdwg.mxu0
      %3423 = vmatprep.subr.bf16.mxu0 0
      %3424 = vmatpush1.bf16.msra.mxu0 %v3222
      %3425 = vmatprep.subr.bf16.mxu0 0
      %3426 = vmatpush1.bf16.msra.mxu0 %v3223
      %3427 = vmatprep.subr.bf16.mxu0 0
      %3428 = vmatpush1.bf16.msra.mxu0 %v3224
      %3429 = vmatprep.subr.bf16.mxu0 0
      %3430 = vmatpush1.bf16.msra.mxu0 %v3225
      %3431 = vmatprep.subr.bf16.mxu0 0
      %3432 = vmatpush1.bf16.msra.mxu0 %v3226
      %3433 = vmatprep.subr.bf16.mxu0 0
      %3434 = vmatpush1.bf16.msra.mxu0 %v3227
      %3435 = vmatprep.subr.bf16.mxu0 0
      %3436 = vmatpush1.bf16.msra.mxu0 %v3228
      %3437 = vmatprep.subr.bf16.mxu0 0
      %3438 = vmatpush1.bf16.msra.mxu0 %v3229
      %3439 = vmatprep.subr.bf16.mxu0 0
      %3440 = vmatpush1.bf16.msra.mxu0 %v3230
      %3441 = vmatprep.subr.bf16.mxu0 0
      %3442 = vmatpush1.bf16.msra.mxu0 %v3231
      %3443 = vmatprep.subr.bf16.mxu0 0
      %3444 = vmatpush1.bf16.msra.mxu0 %v3232
      %3445 = vmatprep.subr.bf16.mxu0 0
      %3446 = vmatpush1.bf16.msra.mxu0 %v3233
      %3447 = vmatprep.subr.bf16.mxu0 0
      %3448 = vmatpush1.bf16.msra.mxu0 %v3234
      %3449 = vmatprep.subr.bf16.mxu0 0
      %3450 = vmatpush1.bf16.msra.mxu0 %v3235
      %3451 = vmatprep.subr.bf16.mxu0 0
      %3452 = vmatpush1.bf16.msra.mxu0 %v3236
      %3453 = vmatprep.subr.bf16.mxu0 0
      %3454 = vmatpush1.bf16.msra.mxu0 %v3237
      %3455 = vmatprep.mubr.bf16.mxu0 %v2725
      %3456 = vmatmul.mubr.bf16.gmra.mrb[0].mxu0 %v2724
      %v3457 = vpop.f32.mrb[0].mxu0
      %v3458 = vadd.f32 %v3385, %v3457
      %v3459 = vpop.f32.mrb[0].mxu0
      %v3460 = vpop.f32.mrb[0].mxu0
      %v3461 = vadd.f32 %v3388, %v3460
      %v3462 = vpop.f32.mrb[0].mxu0
      %3463 = vmatprep.mubr.bf16.mxu0 %v2734
      %3464 = vmatmul.mubr.bf16.gmra.mrb[0].mxu0 %v2733
      %v3465 = vpop.f32.mrb[0].mxu0
      %v3466 = vadd.f32 %v3393, %v3465
      %v3467 = vpop.f32.mrb[0].mxu0
      %v3468 = vpop.f32.mrb[0].mxu0
      %v3469 = vadd.f32 %v3396, %v3468
      %v3470 = vpop.f32.mrb[0].mxu0
      %3471 = vmatprep.mubr.bf16.mxu0 %v2743
      %3472 = vmatmul.mubr.bf16.gmra.mrb[0].mxu0 %v2742
      %v3473 = vpop.f32.mrb[0].mxu0
      %v3474 = vadd.f32 %v3401, %v3473
      %v3475 = vpop.f32.mrb[0].mxu0
      %v3476 = vpop.f32.mrb[0].mxu0
      %v3477 = vadd.f32 %v3404, %v3476
      %v3478 = vpop.f32.mrb[0].mxu0
      %3479 = vmatprep.mubr.bf16.mxu0 %v2752
      %3480 = vmatmul.mubr.bf16.gmra.mrb[0].mxu0 %v2751
      %v3481 = vpop.f32.mrb[0].mxu0
      %v3482 = vadd.f32 %v3409, %v3481
      %v3483 = vpop.f32.mrb[0].mxu0
      %v3484 = vpop.f32.mrb[0].mxu0
      %v3485 = vadd.f32 %v3412, %v3484
      %v3486 = vpop.f32.mrb[0].mxu0
      %3487 = vmatprep.mubr.bf16.mxu0 %v2761
      %3488 = vmatmul.mubr.bf16.gmra.mrb[0].mxu0 %v2760
      %v3489 = vpop.f32.mrb[0].mxu0
      %v3490 = vadd.f32 %v3417, %v3489
      %v3491 = vpop.f32.mrb[0].mxu0
      %v3492 = vpop.f32.mrb[0].mxu0
      %v3493 = vadd.f32 %v3420, %v3492
      %v3494 = vpop.f32.mrb[0].mxu0
      %3495 = vdwg.mxu0
      %3496 = vmatprep.subr.bf16.mxu0 0
      %3497 = vmatpush1.bf16.msra.mxu0 %v3238
      %3498 = vmatprep.subr.bf16.mxu0 0
      %3499 = vmatpush1.bf16.msra.mxu0 %v3239
      %3500 = vmatprep.subr.bf16.mxu0 0
      %3501 = vmatpush1.bf16.msra.mxu0 %v3240
      %3502 = vmatprep.subr.bf16.mxu0 0
      %3503 = vmatpush1.bf16.msra.mxu0 %v3241
      %3504 = vmatprep.subr.bf16.mxu0 0
      %3505 = vmatpush1.bf16.msra.mxu0 %v3242
      %3506 = vmatprep.subr.bf16.mxu0 0
      %3507 = vmatpush1.bf16.msra.mxu0 %v3243
      %3508 = vmatprep.subr.bf16.mxu0 0
      %3509 = vmatpush1.bf16.msra.mxu0 %v3244
      %3510 = vmatprep.subr.bf16.mxu0 0
      %3511 = vmatpush1.bf16.msra.mxu0 %v3245
      %3512 = vmatprep.subr.bf16.mxu0 0
      %3513 = vmatpush1.bf16.msra.mxu0 %v3246
      %3514 = vmatprep.subr.bf16.mxu0 0
      %3515 = vmatpush1.bf16.msra.mxu0 %v3247
      %3516 = vmatprep.subr.bf16.mxu0 0
      %3517 = vmatpush1.bf16.msra.mxu0 %v3248
      %3518 = vmatprep.subr.bf16.mxu0 0
      %3519 = vmatpush1.bf16.msra.mxu0 %v3249
      %3520 = vmatprep.subr.bf16.mxu0 0
      %3521 = vmatpush1.bf16.msra.mxu0 %v3250
      %3522 = vmatprep.subr.bf16.mxu0 0
      %3523 = vmatpush1.bf16.msra.mxu0 %v3251
      %3524 = vmatprep.subr.bf16.mxu0 0
      %3525 = vmatpush1.bf16.msra.mxu0 %v3252
      %3526 = vmatprep.subr.bf16.mxu0 0
      %3527 = vmatpush1.bf16.msra.mxu0 %v3253
      %3528 = vmatprep.mubr.bf16.mxu0 %v2727
      %3529 = vmatmul.mubr.bf16.gmra.mrb[0].mxu0 %v2726
      %v3530 = vpop.f32.mrb[0].mxu0
      %v3531 = vadd.f32 %v3458, %v3530
      %v3532 = vpop.f32.mrb[0].mxu0
      %v3533 = vpop.f32.mrb[0].mxu0
      %v3534 = vadd.f32 %v3461, %v3533
      %v3535 = vpop.f32.mrb[0].mxu0
      %3536 = vmatprep.mubr.bf16.mxu0 %v2736
      %3537 = vmatmul.mubr.bf16.gmra.mrb[0].mxu0 %v2735
      %v3538 = vpop.f32.mrb[0].mxu0
      %v3539 = vadd.f32 %v3466, %v3538
      %v3540 = vpop.f32.mrb[0].mxu0
      %v3541 = vpop.f32.mrb[0].mxu0
      %v3542 = vadd.f32 %v3469, %v3541
      %v3543 = vpop.f32.mrb[0].mxu0
      %3544 = vmatprep.mubr.bf16.mxu0 %v2745
      %3545 = vmatmul.mubr.bf16.gmra.mrb[0].mxu0 %v2744
      %v3546 = vpop.f32.mrb[0].mxu0
      %v3547 = vadd.f32 %v3474, %v3546
      %v3548 = vpop.f32.mrb[0].mxu0
      %v3549 = vpop.f32.mrb[0].mxu0
      %v3550 = vadd.f32 %v3477, %v3549
      %v3551 = vpop.f32.mrb[0].mxu0
      %3552 = vmatprep.mubr.bf16.mxu0 %v2754
      %3553 = vmatmul.mubr.bf16.gmra.mrb[0].mxu0 %v2753
      %v3554 = vpop.f32.mrb[0].mxu0
      %v3555 = vadd.f32 %v3482, %v3554
      %v3556 = vpop.f32.mrb[0].mxu0
      %v3557 = vpop.f32.mrb[0].mxu0
      %v3558 = vadd.f32 %v3485, %v3557
      %v3559 = vpop.f32.mrb[0].mxu0
      %3560 = vmatprep.mubr.bf16.mxu0 %v2763
      %3561 = vmatmul.mubr.bf16.gmra.mrb[0].mxu0 %v2762
      %v3562 = vpop.f32.mrb[0].mxu0
      %v3563 = vadd.f32 %v3490, %v3562
      %v3564 = vpop.f32.mrb[0].mxu0
      %v3565 = vpop.f32.mrb[0].mxu0
      %v3566 = vadd.f32 %v3493, %v3565
      %v3567 = vpop.f32.mrb[0].mxu0
      %3568 = vdwg.mxu0
      %3569 = vmatprep.subr.bf16.mxu0 0
      %3570 = vmatpush1.bf16.msra.mxu0 %v3254
      %3571 = vmatprep.subr.bf16.mxu0 0
      %3572 = vmatpush1.bf16.msra.mxu0 %v3255
      %3573 = vmatprep.subr.bf16.mxu0 0
      %3574 = vmatpush1.bf16.msra.mxu0 %v3256
      %3575 = vmatprep.subr.bf16.mxu0 0
      %3576 = vmatpush1.bf16.msra.mxu0 %v3257
      %3577 = vmatprep.subr.bf16.mxu0 0
      %3578 = vmatpush1.bf16.msra.mxu0 %v3258
      %3579 = vmatprep.subr.bf16.mxu0 0
      %3580 = vmatpush1.bf16.msra.mxu0 %v3259
      %3581 = vmatprep.subr.bf16.mxu0 0
      %3582 = vmatpush1.bf16.msra.mxu0 %v3260
      %3583 = vmatprep.subr.bf16.mxu0 0
      %3584 = vmatpush1.bf16.msra.mxu0 %v3261
      %3585 = vmatprep.subr.bf16.mxu0 0
      %3586 = vmatpush1.bf16.msra.mxu0 %v3262
      %3587 = vmatprep.subr.bf16.mxu0 0
      %3588 = vmatpush1.bf16.msra.mxu0 %v3263
      %3589 = vmatprep.subr.bf16.mxu0 0
      %3590 = vmatpush1.bf16.msra.mxu0 %v3264
      %3591 = vmatprep.subr.bf16.mxu0 0
      %3592 = vmatpush1.bf16.msra.mxu0 %v3265
      %3593 = vmatprep.subr.bf16.mxu0 0
      %3594 = vmatpush1.bf16.msra.mxu0 %v3266
      %3595 = vmatprep.subr.bf16.mxu0 0
      %3596 = vmatpush1.bf16.msra.mxu0 %v3267
      %3597 = vmatprep.subr.bf16.mxu0 0
      %3598 = vmatpush1.bf16.msra.mxu0 %v3268
      %3599 = vmatprep.subr.bf16.mxu0 0
      %3600 = vmatpush1.bf16.msra.mxu0 %v3269
      %3601 = vmatprep.mubr.bf16.mxu0 %v2729
      %3602 = vmatmul.mubr.bf16.gmra.mrb[0].mxu0 %v2728
      %v3603 = vpop.f32.mrb[0].mxu0
      %v3604 = vadd.f32 %v3531, %v3603
      %v3605 = vpop.f32.mrb[0].mxu0
      %v3606 = vpop.f32.mrb[0].mxu0
      %v3607 = vadd.f32 %v3534, %v3606
      %v3608 = vpop.f32.mrb[0].mxu0
      %3609 = vmatprep.mubr.bf16.mxu0 %v2738
      %3610 = vmatmul.mubr.bf16.gmra.mrb[0].mxu0 %v2737
      %v3611 = vpop.f32.mrb[0].mxu0
      %v3612 = vadd.f32 %v3539, %v3611
      %v3613 = vpop.f32.mrb[0].mxu0
      %v3614 = vpop.f32.mrb[0].mxu0
      %v3615 = vadd.f32 %v3542, %v3614
      %v3616 = vpop.f32.mrb[0].mxu0
      %3617 = vmatprep.mubr.bf16.mxu0 %v2747
      %3618 = vmatmul.mubr.bf16.gmra.mrb[0].mxu0 %v2746
      %v3619 = vpop.f32.mrb[0].mxu0
      %v3620 = vadd.f32 %v3547, %v3619
      %v3621 = vpop.f32.mrb[0].mxu0
      %v3622 = vpop.f32.mrb[0].mxu0
      %v3623 = vadd.f32 %v3550, %v3622
      %v3624 = vpop.f32.mrb[0].mxu0
      %3625 = vmatprep.mubr.bf16.mxu0 %v2756
      %3626 = vmatmul.mubr.bf16.gmra.mrb[0].mxu0 %v2755
      %v3627 = vpop.f32.mrb[0].mxu0
      %v3628 = vadd.f32 %v3555, %v3627
      %v3629 = vpop.f32.mrb[0].mxu0
      %v3630 = vpop.f32.mrb[0].mxu0
      %v3631 = vadd.f32 %v3558, %v3630
      %v3632 = vpop.f32.mrb[0].mxu0
      %3633 = vmatprep.mubr.bf16.mxu0 %v2765
      %3634 = vmatmul.mubr.bf16.gmra.mrb[0].mxu0 %v2764
      %v3635 = vpop.f32.mrb[0].mxu0
      %v3636 = vadd.f32 %v3563, %v3635
      %v3637 = vpop.f32.mrb[0].mxu0
      %v3638 = vpop.f32.mrb[0].mxu0
      %v3639 = vadd.f32 %v3566, %v3638
      %v3640 = vpop.f32.mrb[0].mxu0
      %3641 = vdwg.mxu0
      %3642 = vmatprep.subr.bf16.mxu0 0
      %3643 = vmatpush1.bf16.msra.mxu0 %v3270
      %3644 = vmatprep.subr.bf16.mxu0 0
      %3645 = vmatpush1.bf16.msra.mxu0 %v3271
      %3646 = vmatprep.subr.bf16.mxu0 0
      %3647 = vmatpush1.bf16.msra.mxu0 %v3272
      %3648 = vmatprep.subr.bf16.mxu0 0
      %3649 = vmatpush1.bf16.msra.mxu0 %v3273
      %3650 = vmatprep.subr.bf16.mxu0 0
      %3651 = vmatpush1.bf16.msra.mxu0 %v3274
      %3652 = vmatprep.subr.bf16.mxu0 0
      %3653 = vmatpush1.bf16.msra.mxu0 %v3275
      %3654 = vmatprep.subr.bf16.mxu0 0
      %3655 = vmatpush1.bf16.msra.mxu0 %v3276
      %3656 = vmatprep.subr.bf16.mxu0 0
      %3657 = vmatpush1.bf16.msra.mxu0 %v3277
      %3658 = vmatprep.subr.bf16.mxu0 0
      %3659 = vmatpush1.bf16.msra.mxu0 0
      %3660 = vmatprep.subr.bf16.mxu0 0
      %3661 = vmatpush1.bf16.msra.mxu0 0
      %3662 = vmatprep.subr.bf16.mxu0 0
      %3663 = vmatpush1.bf16.msra.mxu0 0
      %3664 = vmatprep.subr.bf16.mxu0 0
      %3665 = vmatpush1.bf16.msra.mxu0 0
      %3666 = vmatprep.subr.bf16.mxu0 0
      %3667 = vmatpush1.bf16.msra.mxu0 0
      %3668 = vmatprep.subr.bf16.mxu0 0
      %3669 = vmatpush1.bf16.msra.mxu0 0
      %3670 = vmatprep.subr.bf16.mxu0 0
      %3671 = vmatpush1.bf16.msra.mxu0 0
      %3672 = vmatprep.subr.bf16.mxu0 0
      %3673 = vmatpush1.bf16.msra.mxu0 0
      %3674 = vmatprep.mubr.bf16.mxu0 0
      %3675 = vmatmul.mubr.bf16.gmra.mrb[0].mxu0 %v2730
      %v3676 = vpop.f32.mrb[0].mxu0
      %v3677 = vadd.f32 %v3604, %v3676
      %v3678 = vpop.f32.mrb[0].mxu0
      %v3679 = vpop.f32.mrb[0].mxu0
      %v3680 = vadd.f32 %v3607, %v3679
      %v3681 = vpop.f32.mrb[0].mxu0
      %3682 = vmatprep.mubr.bf16.mxu0 0
      %3683 = vmatmul.mubr.bf16.gmra.mrb[0].mxu0 %v2739
      %v3684 = vpop.f32.mrb[0].mxu0
      %v3685 = vadd.f32 %v3612, %v3684
      %v3686 = vpop.f32.mrb[0].mxu0
      %v3687 = vpop.f32.mrb[0].mxu0
      %v3688 = vadd.f32 %v3615, %v3687
      %v3689 = vpop.f32.mrb[0].mxu0
      %3690 = vmatprep.mubr.bf16.mxu0 0
      %3691 = vmatmul.mubr.bf16.gmra.mrb[0].mxu0 %v2748
      %v3692 = vpop.f32.mrb[0].mxu0
      %v3693 = vadd.f32 %v3620, %v3692
      %v3694 = vpop.f32.mrb[0].mxu0
      %v3695 = vpop.f32.mrb[0].mxu0
      %v3696 = vadd.f32 %v3623, %v3695
      %v3697 = vpop.f32.mrb[0].mxu0
      %3698 = vmatprep.mubr.bf16.mxu0 0
      %3699 = vmatmul.mubr.bf16.gmra.mrb[0].mxu0 %v2757
      %v3700 = vpop.f32.mrb[0].mxu0
      %v3701 = vadd.f32 %v3628, %v3700
      %v3702 = vpop.f32.mrb[0].mxu0
      %v3703 = vpop.f32.mrb[0].mxu0
      %v3704 = vadd.f32 %v3631, %v3703
      %v3705 = vpop.f32.mrb[0].mxu0
      %3706 = vmatprep.mubr.bf16.mxu0 0
      %3707 = vmatmul.mubr.bf16.gmra.mrb[0].mxu0 %v2766
      %v3708 = vpop.f32.mrb[0].mxu0
      %v3709 = vadd.f32 %v3636, %v3708
      %v3710 = vpop.f32.mrb[0].mxu0
      %v3711 = vpop.f32.mrb[0].mxu0
      %v3712 = vadd.f32 %v3639, %v3711
      %v3713 = vpop.f32.mrb[0].mxu0
      %3714 = vdwg.mxu0
      %v3715 = vadd.f32 %v3677, %v1132
      %v3716 = vadd.f32 %v3680, %v1135
      %v3717 = vadd.f32 %v3685, %v1140
      %v3718 = vadd.f32 %v3688, %v1143
      %v3719 = vadd.f32 %v3693, %v1148
      %v3720 = vadd.f32 %v3696, %v1151
      %v3721 = vadd.f32 %v3701, %v1156
      %v3722 = vadd.f32 %v3704, %v1159
      %v3723 = vadd.f32 %v3709, %v1164
      %v3724 = vadd.f32 %v3712, %v1167
      %v3725 = vmax.f32 %v3715, 0.0
      %v3726 = vmax.f32 %v3716, 0.0
      %v3727 = vmax.f32 %v3717, 0.0
      %v3728 = vmax.f32 %v3718, 0.0
      %v3729 = vmax.f32 %v3719, 0.0
      %v3730 = vmax.f32 %v3720, 0.0
      %v3731 = vmax.f32 %v3721, 0.0
      %v3732 = vmax.f32 %v3722, 0.0
      %v3733 = vmax.f32 %v3723, 0.0
      %v3734 = vmax.f32 %v3724, 0.0
      %v3735 = vmul.f32 %v3725, %v2176
      %v3736 = vmul.f32 %v3726, %v2181
      %v3737 = vmul.f32 %v3727, %v2186
      %v3738 = vmul.f32 %v3728, %v2191
      %v3739 = vmul.f32 %v3729, %v2196
      %v3740 = vmul.f32 %v3730, %v2201
      %v3741 = vmul.f32 %v3731, %v2206
      %v3742 = vmul.f32 %v3732, %v2211
      %v3743 = vmul.f32 %v3733, %v2216
      %v3744 = vmul.f32 %v3734, %v2221
      %v3745 = vpack.c.bf16 %v3736, %v3735
      %v3746 = vpack.c.bf16 %v3738, %v3737
      %v3747 = vpack.c.bf16 %v3740, %v3739
      %v3748 = vpack.c.bf16 %v3742, %v3741
      %v3749 = vpack.c.bf16 %v3744, %v3743
      %3750 = vst [vmem:[#allocation2 + $0x8] sm:$0xff] %v3745
      %3751 = vst [vmem:[#allocation2 + $0x10] sm:$0xff] %v3746
      %3752 = vst [vmem:[#allocation2 + $0x18] sm:$0xff] %v3747
      %3753 = vst [vmem:[#allocation2 + $0x20] sm:$0xff] %v3748
      %3754 = vst [vmem:[#allocation2 + $0x28] sm:$0xff] %v3749
      %v3755 = vld [vmem:[#allocation2] sm:$0xfc]
      %v3756 = vld [vmem:[#allocation2 + $0x8] sm:$0xff]
      %v3757 = vld [vmem:[#allocation2 + $0x10] sm:$0xff]
      %v3758 = vld [vmem:[#allocation2 + $0x18] sm:$0xff]
      %v3759 = vld [vmem:[#allocation2 + $0x20] sm:$0xff]
      %v3760 = vld [vmem:[#allocation2 + $0x28] sm:$0x7]
      %v3762 = vshrl.u32 %v3755, 16
      %v3764 = vrot.slane %v3762, 2
      %v3765 = vshll.u32 %v3755, 16
      %v3767 = vrot.slane %v3765, 3
      %v3768 = vor.u32 %v3764, %v3767
      %v3770 = vshrl.u32 %v3756, 16
      %v3772 = vrot.slane %v3770, 2
      %v3773 = vshll.u32 %v3756, 16
      %v3775 = vrot.slane %v3773, 3
      %v3776 = vor.u32 %v3772, %v3775
      %v3777 = vsel %vm2249, %v3768, %v3776
      %v3779 = vshrl.u32 %v3757, 16
      %v3781 = vrot.slane %v3779, 2
      %v3782 = vshll.u32 %v3757, 16
      %v3784 = vrot.slane %v3782, 3
      %v3785 = vor.u32 %v3781, %v3784
      %v3786 = vsel %vm2249, %v3776, %v3785
      %v3788 = vshrl.u32 %v3758, 16
      %v3790 = vrot.slane %v3788, 2
      %v3791 = vshll.u32 %v3758, 16
      %v3793 = vrot.slane %v3791, 3
      %v3794 = vor.u32 %v3790, %v3793
      %v3795 = vsel %vm2249, %v3785, %v3794
      %v3797 = vshrl.u32 %v3759, 16
      %v3799 = vrot.slane %v3797, 2
      %v3800 = vshll.u32 %v3759, 16
      %v3802 = vrot.slane %v3800, 3
      %v3803 = vor.u32 %v3799, %v3802
      %v3804 = vsel %vm2249, %v3794, %v3803
      %v3806 = vshrl.u32 %v3760, 16
      %v3808 = vrot.slane %v3806, 2
      %v3809 = vshll.u32 %v3760, 16
      %v3811 = vrot.slane %v3809, 3
      %v3812 = vor.u32 %v3808, %v3811
      %v3813 = vsel %vm2249, %v3803, %v3812
      %3819 = vst [vmem:[#allocation3] sm:$0xff] %v3777
      %3820 = vst [vmem:[#allocation3 + $0x48] sm:$0xff] %v3786
      %3821 = vst [vmem:[#allocation3 + $0x90] sm:$0xff] %v3795
      %3822 = vst [vmem:[#allocation3 + $0xd8] sm:$0xff] %v3804
      %3823 = vst [vmem:[#allocation3 + $0x120] sm:$0xff] %v3813
      %v3824 = vld [vmem:[#allocation2] sm:$0xf8]
      %v3825 = vld [vmem:[#allocation2 + $0x8] sm:$0xff]
      %v3826 = vld [vmem:[#allocation2 + $0x10] sm:$0xff]
      %v3827 = vld [vmem:[#allocation2 + $0x18] sm:$0xff]
      %v3828 = vld [vmem:[#allocation2 + $0x20] sm:$0xff]
      %v3829 = vld [vmem:[#allocation2 + $0x28] sm:$0x7]
      %v3836 = vrot.slane %v3824, 3
      %v3837 = vrot.slane %v3825, 3
      %v3838 = vsel %vm2325, %v3836, %v3837
      %v3839 = vrot.slane %v3826, 3
      %v3840 = vsel %vm2325, %v3837, %v3839
      %v3841 = vrot.slane %v3827, 3
      %v3842 = vsel %vm2325, %v3839, %v3841
      %v3843 = vrot.slane %v3828, 3
      %v3844 = vsel %vm2325, %v3841, %v3843
      %v3845 = vrot.slane %v3829, 3
      %v3846 = vsel %vm2325, %v3843, %v3845
      %3852 = vst [vmem:[#allocation3 + $0x8] sm:$0xff] %v3838
      %3853 = vst [vmem:[#allocation3 + $0x50] sm:$0xff] %v3840
      %3854 = vst [vmem:[#allocation3 + $0x98] sm:$0xff] %v3842
      %3855 = vst [vmem:[#allocation3 + $0xe0] sm:$0xff] %v3844
      %3856 = vst [vmem:[#allocation3 + $0x128] sm:$0xff] %v3846
      %v3857 = vld [vmem:[#allocation2] sm:$0xf8]
      %v3858 = vld [vmem:[#allocation2 + $0x8] sm:$0xff]
      %v3859 = vld [vmem:[#allocation2 + $0x10] sm:$0xff]
      %v3860 = vld [vmem:[#allocation2 + $0x18] sm:$0xff]
      %v3861 = vld [vmem:[#allocation2 + $0x20] sm:$0xff]
      %v3862 = vld [vmem:[#allocation2 + $0x28] sm:$0xf]
      %v3864 = vshrl.u32 %v3857, 16
      %v3866 = vrot.slane %v3864, 3
      %v3867 = vshll.u32 %v3857, 16
      %v3869 = vrot.slane %v3867, 4
      %v3870 = vor.u32 %v3866, %v3869
      %v3872 = vshrl.u32 %v3858, 16
      %v3874 = vrot.slane %v3872, 3
      %v3875 = vshll.u32 %v3858, 16
      %v3877 = vrot.slane %v3875, 4
      %v3878 = vor.u32 %v3874, %v3877
      %v3879 = vsel %vm2353, %v3870, %v3878
      %v3881 = vshrl.u32 %v3859, 16
      %v3883 = vrot.slane %v3881, 3
      %v3884 = vshll.u32 %v3859, 16
      %v3886 = vrot.slane %v3884, 4
      %v3887 = vor.u32 %v3883, %v3886
      %v3888 = vsel %vm2353, %v3878, %v3887
      %v3890 = vshrl.u32 %v3860, 16
      %v3892 = vrot.slane %v3890, 3
      %v3893 = vshll.u32 %v3860, 16
      %v3895 = vrot.slane %v3893, 4
      %v3896 = vor.u32 %v3892, %v3895
      %v3897 = vsel %vm2353, %v3887, %v3896
      %v3899 = vshrl.u32 %v3861, 16
      %v3901 = vrot.slane %v3899, 3
      %v3902 = vshll.u32 %v3861, 16
      %v3904 = vrot.slane %v3902, 4
      %v3905 = vor.u32 %v3901, %v3904
      %v3906 = vsel %vm2353, %v3896, %v3905
      %v3908 = vshrl.u32 %v3862, 16
      %v3910 = vrot.slane %v3908, 3
      %v3911 = vshll.u32 %v3862, 16
      %v3913 = vrot.slane %v3911, 4
      %v3914 = vor.u32 %v3910, %v3913
      %v3915 = vsel %vm2353, %v3905, %v3914
      %3921 = vst [vmem:[#allocation3 + $0x10] sm:$0xff] %v3879
      %3922 = vst [vmem:[#allocation3 + $0x58] sm:$0xff] %v3888
      %3923 = vst [vmem:[#allocation3 + $0xa0] sm:$0xff] %v3897
      %3924 = vst [vmem:[#allocation3 + $0xe8] sm:$0xff] %v3906
      %3925 = vst [vmem:[#allocation3 + $0x130] sm:$0xff] %v3915
      %v3926 = vld [vmem:[#allocation2] sm:$0x80]
      %v3927 = vld [vmem:[#allocation2 + $0x8] sm:$0xff]
      %v3928 = vld [vmem:[#allocation2 + $0x10] sm:$0xff]
      %v3929 = vld [vmem:[#allocation2 + $0x18] sm:$0xff]
      %v3930 = vld [vmem:[#allocation2 + $0x20] sm:$0xff]
      %v3931 = vld [vmem:[#allocation2 + $0x28] sm:$0xff]
      %v3933 = vshrl.u32 %v3926, 16
      %v3935 = vrot.slane %v3933, 7
      %v3937 = vshrl.u32 %v3927, 16
      %v3939 = vrot.slane %v3937, 7
      %v3940 = vshll.u32 %v3927, 16
      %v3942 = vor.u32 %v3939, %v3940
      %v3943 = vsel %vm2423, %v3935, %v3942
      %v3945 = vshrl.u32 %v3928, 16
      %v3947 = vrot.slane %v3945, 7
      %v3948 = vshll.u32 %v3928, 16
      %v3950 = vor.u32 %v3947, %v3948
      %v3951 = vsel %vm2423, %v3939, %v3950
      %v3953 = vshrl.u32 %v3929, 16
      %v3955 = vrot.slane %v3953, 7
      %v3956 = vshll.u32 %v3929, 16
      %v3958 = vor.u32 %v3955, %v3956
      %v3959 = vsel %vm2423, %v3947, %v3958
      %v3961 = vshrl.u32 %v3930, 16
      %v3963 = vrot.slane %v3961, 7
      %v3964 = vshll.u32 %v3930, 16
      %v3966 = vor.u32 %v3963, %v3964
      %v3967 = vsel %vm2423, %v3955, %v3966
      %v3969 = vshrl.u32 %v3931, 16
      %v3971 = vrot.slane %v3969, 7
      %v3972 = vshll.u32 %v3931, 16
      %v3974 = vor.u32 %v3971, %v3972
      %v3975 = vsel %vm2423, %v3963, %v3974
      %3981 = vst [vmem:[#allocation3 + $0x18] sm:$0xff] %v3943
      %3982 = vst [vmem:[#allocation3 + $0x60] sm:$0xff] %v3951
      %3983 = vst [vmem:[#allocation3 + $0xa8] sm:$0xff] %v3959
      %3984 = vst [vmem:[#allocation3 + $0xf0] sm:$0xff] %v3967
      %3985 = vst [vmem:[#allocation3 + $0x138] sm:$0xff] %v3975
      %v3986 = vld [vmem:[#allocation2 + $0x8] sm:$0xff]
      %v3987 = vld [vmem:[#allocation2 + $0x10] sm:$0xff]
      %v3988 = vld [vmem:[#allocation2 + $0x18] sm:$0xff]
      %v3989 = vld [vmem:[#allocation2 + $0x20] sm:$0xff]
      %v3990 = vld [vmem:[#allocation2 + $0x28] sm:$0xff]
      %3991 = vst [vmem:[#allocation3 + $0x20] sm:$0xff] %v3986
      %3992 = vst [vmem:[#allocation3 + $0x68] sm:$0xff] %v3987
      %3993 = vst [vmem:[#allocation3 + $0xb0] sm:$0xff] %v3988
      %3994 = vst [vmem:[#allocation3 + $0xf8] sm:$0xff] %v3989
      %3995 = vst [vmem:[#allocation3 + $0x140] sm:$0xff] %v3990
      %v3996 = vld [vmem:[#allocation2 + $0x8] sm:$0xff]
      %v3997 = vld [vmem:[#allocation2 + $0x10] sm:$0xff]
      %v3998 = vld [vmem:[#allocation2 + $0x18] sm:$0xff]
      %v3999 = vld [vmem:[#allocation2 + $0x20] sm:$0xff]
      %v4000 = vld [vmem:[#allocation2 + $0x28] sm:$0xff]
      %v4001 = vld [vmem:[#allocation2 + $0x30] sm:$0x1]
      %v4003 = vshrl.u32 %v3996, 16
      %v4005 = vshll.u32 %v3996, 16
      %v4007 = vrot.slane %v4005, 1
      %v4008 = vor.u32 %v4003, %v4007
      %v4010 = vshll.u32 %v3997, 16
      %v4012 = vrot.slane %v4010, 1
      %v4013 = vsel %vm557, %v4008, %v4012
      %v4014 = vshrl.u32 %v3997, 16
      %v4016 = vor.u32 %v4014, %v4012
      %v4018 = vshll.u32 %v3998, 16
      %v4020 = vrot.slane %v4018, 1
      %v4021 = vsel %vm557, %v4016, %v4020
      %v4022 = vshrl.u32 %v3998, 16
      %v4024 = vor.u32 %v4022, %v4020
      %v4026 = vshll.u32 %v3999, 16
      %v4028 = vrot.slane %v4026, 1
      %v4029 = vsel %vm557, %v4024, %v4028
      %v4030 = vshrl.u32 %v3999, 16
      %v4032 = vor.u32 %v4030, %v4028
      %v4034 = vshll.u32 %v4000, 16
      %v4036 = vrot.slane %v4034, 1
      %v4037 = vsel %vm557, %v4032, %v4036
      %v4038 = vshrl.u32 %v4000, 16
      %v4040 = vor.u32 %v4038, %v4036
      %v4042 = vshll.u32 %v4001, 16
      %v4044 = vrot.slane %v4042, 1
      %v4045 = vsel %vm557, %v4040, %v4044
      %4051 = vst [vmem:[#allocation3 + $0x28] sm:$0xff] %v4013
      %4052 = vst [vmem:[#allocation3 + $0x70] sm:$0xff] %v4021
      %4053 = vst [vmem:[#allocation3 + $0xb8] sm:$0xff] %v4029
      %4054 = vst [vmem:[#allocation3 + $0x100] sm:$0xff] %v4037
      %4055 = vst [vmem:[#allocation3 + $0x148] sm:$0xff] %v4045
      %v4056 = vld [vmem:[#allocation2 + $0x8] sm:$0xf0]
      %v4057 = vld [vmem:[#allocation2 + $0x10] sm:$0xff]
      %v4058 = vld [vmem:[#allocation2 + $0x18] sm:$0xff]
      %v4059 = vld [vmem:[#allocation2 + $0x20] sm:$0xff]
      %v4060 = vld [vmem:[#allocation2 + $0x28] sm:$0xff]
      %v4061 = vld [vmem:[#allocation2 + $0x30] sm:$0x1f]
      %v4063 = vshrl.u32 %v4056, 16
      %v4065 = vrot.slane %v4063, 4
      %v4066 = vshll.u32 %v4056, 16
      %v4068 = vrot.slane %v4066, 5
      %v4069 = vor.u32 %v4065, %v4068
      %v4071 = vshrl.u32 %v4057, 16
      %v4073 = vrot.slane %v4071, 4
      %v4074 = vshll.u32 %v4057, 16
      %v4076 = vrot.slane %v4074, 5
      %v4077 = vor.u32 %v4073, %v4076
      %v4078 = vsel %vm2554, %v4069, %v4077
      %v4080 = vshrl.u32 %v4058, 16
      %v4082 = vrot.slane %v4080, 4
      %v4083 = vshll.u32 %v4058, 16
      %v4085 = vrot.slane %v4083, 5
      %v4086 = vor.u32 %v4082, %v4085
      %v4087 = vsel %vm2554, %v4077, %v4086
      %v4089 = vshrl.u32 %v4059, 16
      %v4091 = vrot.slane %v4089, 4
      %v4092 = vshll.u32 %v4059, 16
      %v4094 = vrot.slane %v4092, 5
      %v4095 = vor.u32 %v4091, %v4094
      %v4096 = vsel %vm2554, %v4086, %v4095
      %v4098 = vshrl.u32 %v4060, 16
      %v4100 = vrot.slane %v4098, 4
      %v4101 = vshll.u32 %v4060, 16
      %v4103 = vrot.slane %v4101, 5
      %v4104 = vor.u32 %v4100, %v4103
      %v4105 = vsel %vm2554, %v4095, %v4104
      %v4107 = vshrl.u32 %v4061, 16
      %v4109 = vrot.slane %v4107, 4
      %v4110 = vshll.u32 %v4061, 16
      %v4112 = vrot.slane %v4110, 5
      %v4113 = vor.u32 %v4109, %v4112
      %v4114 = vsel %vm2554, %v4104, %v4113
      %4120 = vst [vmem:[#allocation3 + $0x30] sm:$0xff] %v4078
      %4121 = vst [vmem:[#allocation3 + $0x78] sm:$0xff] %v4087
      %4122 = vst [vmem:[#allocation3 + $0xc0] sm:$0xff] %v4096
      %4123 = vst [vmem:[#allocation3 + $0x108] sm:$0xff] %v4105
      %4124 = vst [vmem:[#allocation3 + $0x150] sm:$0xff] %v4114
      %v4125 = vld [vmem:[#allocation2 + $0x8] sm:$0xe0]
      %v4126 = vld [vmem:[#allocation2 + $0x10] sm:$0xff]
      %v4127 = vld [vmem:[#allocation2 + $0x18] sm:$0xff]
      %v4128 = vld [vmem:[#allocation2 + $0x20] sm:$0xff]
      %v4129 = vld [vmem:[#allocation2 + $0x28] sm:$0xff]
      %v4130 = vld [vmem:[#allocation2 + $0x30] sm:$0x1f]
      %v4137 = vrot.slane %v4125, 5
      %v4138 = vrot.slane %v4126, 5
      %v4139 = vsel %vm2630, %v4137, %v4138
      %v4140 = vrot.slane %v4127, 5
      %v4141 = vsel %vm2630, %v4138, %v4140
      %v4142 = vrot.slane %v4128, 5
      %v4143 = vsel %vm2630, %v4140, %v4142
      %v4144 = vrot.slane %v4129, 5
      %v4145 = vsel %vm2630, %v4142, %v4144
      %v4146 = vrot.slane %v4130, 5
      %v4147 = vsel %vm2630, %v4144, %v4146
      %4153 = vst [vmem:[#allocation3 + $0x38] sm:$0xff] %v4139
      %4154 = vst [vmem:[#allocation3 + $0x80] sm:$0xff] %v4141
      %4155 = vst [vmem:[#allocation3 + $0xc8] sm:$0xff] %v4143
      %4156 = vst [vmem:[#allocation3 + $0x110] sm:$0xff] %v4145
      %4157 = vst [vmem:[#allocation3 + $0x158] sm:$0xff] %v4147
      %v4158 = vld [vmem:[#allocation2 + $0x8] sm:$0xe0]
      %v4159 = vld [vmem:[#allocation2 + $0x10] sm:$0xff]
      %v4160 = vld [vmem:[#allocation2 + $0x18] sm:$0xff]
      %v4161 = vld [vmem:[#allocation2 + $0x20] sm:$0xff]
      %v4162 = vld [vmem:[#allocation2 + $0x28] sm:$0xff]
      %v4163 = vld [vmem:[#allocation2 + $0x30] sm:$0x3f]
      %v4165 = vshrl.u32 %v4158, 16
      %v4167 = vrot.slane %v4165, 5
      %v4168 = vshll.u32 %v4158, 16
      %v4170 = vrot.slane %v4168, 6
      %v4171 = vor.u32 %v4167, %v4170
      %v4173 = vshrl.u32 %v4159, 16
      %v4175 = vrot.slane %v4173, 5
      %v4176 = vshll.u32 %v4159, 16
      %v4178 = vrot.slane %v4176, 6
      %v4179 = vor.u32 %v4175, %v4178
      %v4180 = vsel %vm2658, %v4171, %v4179
      %v4182 = vshrl.u32 %v4160, 16
      %v4184 = vrot.slane %v4182, 5
      %v4185 = vshll.u32 %v4160, 16
      %v4187 = vrot.slane %v4185, 6
      %v4188 = vor.u32 %v4184, %v4187
      %v4189 = vsel %vm2658, %v4179, %v4188
      %v4191 = vshrl.u32 %v4161, 16
      %v4193 = vrot.slane %v4191, 5
      %v4194 = vshll.u32 %v4161, 16
      %v4196 = vrot.slane %v4194, 6
      %v4197 = vor.u32 %v4193, %v4196
      %v4198 = vsel %vm2658, %v4188, %v4197
      %v4200 = vshrl.u32 %v4162, 16
      %v4202 = vrot.slane %v4200, 5
      %v4203 = vshll.u32 %v4162, 16
      %v4205 = vrot.slane %v4203, 6
      %v4206 = vor.u32 %v4202, %v4205
      %v4207 = vsel %vm2658, %v4197, %v4206
      %v4209 = vshrl.u32 %v4163, 16
      %v4211 = vrot.slane %v4209, 5
      %v4212 = vshll.u32 %v4163, 16
      %v4214 = vrot.slane %v4212, 6
      %v4215 = vor.u32 %v4211, %v4214
      %v4216 = vsel %vm2658, %v4206, %v4215
      %4222 = vst [vmem:[#allocation3 + $0x40] sm:$0xff] %v4180
      %4223 = vst [vmem:[#allocation3 + $0x88] sm:$0xff] %v4189
      %4224 = vst [vmem:[#allocation3 + $0xd0] sm:$0xff] %v4198
      %4225 = vst [vmem:[#allocation3 + $0x118] sm:$0xff] %v4207
      %4226 = vst [vmem:[#allocation3 + $0x160] sm:$0xff] %v4216
      %v4227 = vld [vmem:[#allocation3 + $0x20] sm:$0xff]
      %v4228 = vld [vmem:[#allocation3 + $0x68] sm:$0xff]
      %v4229 = vld [vmem:[#allocation3 + $0xb0] sm:$0xff]
      %v4230 = vld [vmem:[#allocation3 + $0xf8] sm:$0xff]
      %v4231 = vld [vmem:[#allocation3 + $0x140] sm:$0xff]
      %v4232 = vunpack.c.l.bf16 %v4227
      %v4233 = vunpack.c.h.bf16 %v4227
      %v4234 = vunpack.c.l.bf16 %v4228
      %v4235 = vunpack.c.h.bf16 %v4228
      %v4236 = vunpack.c.l.bf16 %v4229
      %v4237 = vunpack.c.h.bf16 %v4229
      %v4238 = vunpack.c.l.bf16 %v4230
      %v4239 = vunpack.c.h.bf16 %v4230
      %v4240 = vunpack.c.l.bf16 %v4231
      %v4241 = vunpack.c.h.bf16 %v4231
      %v4242 = vld [vmem:[#allocation3] sm:$0xff]
      %v4243 = vld [vmem:[#allocation3 + $0x8] sm:$0xff]
      %v4244 = vld [vmem:[#allocation3 + $0x10] sm:$0xff]
      %v4245 = vld [vmem:[#allocation3 + $0x18] sm:$0xff]
      %v4246 = vld [vmem:[#allocation3 + $0x20] sm:$0xff]
      %v4247 = vld [vmem:[#allocation3 + $0x28] sm:$0xff]
      %v4248 = vld [vmem:[#allocation3 + $0x30] sm:$0xff]
      %v4249 = vld [vmem:[#allocation3 + $0x38] sm:$0xff]
      %v4250 = vld [vmem:[#allocation3 + $0x40] sm:$0xff]
      %v4251 = vld [vmem:[#allocation3 + $0x48] sm:$0xff]
      %v4252 = vld [vmem:[#allocation3 + $0x50] sm:$0xff]
      %v4253 = vld [vmem:[#allocation3 + $0x58] sm:$0xff]
      %v4254 = vld [vmem:[#allocation3 + $0x60] sm:$0xff]
      %v4255 = vld [vmem:[#allocation3 + $0x68] sm:$0xff]
      %v4256 = vld [vmem:[#allocation3 + $0x70] sm:$0xff]
      %v4257 = vld [vmem:[#allocation3 + $0x78] sm:$0xff]
      %v4258 = vld [vmem:[#allocation3 + $0x80] sm:$0xff]
      %v4259 = vld [vmem:[#allocation3 + $0x88] sm:$0xff]
      %v4260 = vld [vmem:[#allocation3 + $0x90] sm:$0xff]
      %v4261 = vld [vmem:[#allocation3 + $0x98] sm:$0xff]
      %v4262 = vld [vmem:[#allocation3 + $0xa0] sm:$0xff]
      %v4263 = vld [vmem:[#allocation3 + $0xa8] sm:$0xff]
      %v4264 = vld [vmem:[#allocation3 + $0xb0] sm:$0xff]
      %v4265 = vld [vmem:[#allocation3 + $0xb8] sm:$0xff]
      %v4266 = vld [vmem:[#allocation3 + $0xc0] sm:$0xff]
      %v4267 = vld [vmem:[#allocation3 + $0xc8] sm:$0xff]
      %v4268 = vld [vmem:[#allocation3 + $0xd0] sm:$0xff]
      %v4269 = vld [vmem:[#allocation3 + $0xd8] sm:$0xff]
      %v4270 = vld [vmem:[#allocation3 + $0xe0] sm:$0xff]
      %v4271 = vld [vmem:[#allocation3 + $0xe8] sm:$0xff]
      %v4272 = vld [vmem:[#allocation3 + $0xf0] sm:$0xff]
      %v4273 = vld [vmem:[#allocation3 + $0xf8] sm:$0xff]
      %v4274 = vld [vmem:[#allocation3 + $0x100] sm:$0xff]
      %v4275 = vld [vmem:[#allocation3 + $0x108] sm:$0xff]
      %v4276 = vld [vmem:[#allocation3 + $0x110] sm:$0xff]
      %v4277 = vld [vmem:[#allocation3 + $0x118] sm:$0xff]
      %v4278 = vld [vmem:[#allocation3 + $0x120] sm:$0xff]
      %v4279 = vld [vmem:[#allocation3 + $0x128] sm:$0xff]
      %v4280 = vld [vmem:[#allocation3 + $0x130] sm:$0xff]
      %v4281 = vld [vmem:[#allocation3 + $0x138] sm:$0xff]
      %v4282 = vld [vmem:[#allocation3 + $0x140] sm:$0xff]
      %v4283 = vld [vmem:[#allocation3 + $0x148] sm:$0xff]
      %v4284 = vld [vmem:[#allocation3 + $0x150] sm:$0xff]
      %v4285 = vld [vmem:[#allocation3 + $0x158] sm:$0xff]
      %v4286 = vld [vmem:[#allocation3 + $0x160] sm:$0xff]
      %v4287 = vld [vmem:[%s8] sm:$0xf]
      %v4288 = vld [vmem:[%s8 + $0x4] sm:$0xf]
      %v4289 = vld [vmem:[%s8 + $0x8] sm:$0xf]
      %v4290 = vld [vmem:[%s8 + $0xc] sm:$0xf]
      %v4291 = vld [vmem:[%s8 + $0x10] sm:$0xf]
      %v4292 = vld [vmem:[%s8 + $0x14] sm:$0xf]
      %v4293 = vld [vmem:[%s8 + $0x18] sm:$0xf]
      %v4294 = vld [vmem:[%s8 + $0x1c] sm:$0xf]
      %v4295 = vld [vmem:[%s8 + $0x20] sm:$0xf]
      %v4296 = vld [vmem:[%s8 + $0x24] sm:$0xf]
      %v4297 = vld [vmem:[%s8 + $0x28] sm:$0xf]
      %v4298 = vld [vmem:[%s8 + $0x2c] sm:$0xf]
      %v4299 = vld [vmem:[%s8 + $0x30] sm:$0xf]
      %v4300 = vld [vmem:[%s8 + $0x34] sm:$0xf]
      %v4301 = vld [vmem:[%s8 + $0x38] sm:$0xf]
      %v4302 = vld [vmem:[%s8 + $0x3c] sm:$0xf]
      %v4303 = vld [vmem:[%s8 + $0x40] sm:$0xf]
      %v4304 = vld [vmem:[%s8 + $0x44] sm:$0xf]
      %v4305 = vld [vmem:[%s8 + $0x48] sm:$0xf]
      %v4306 = vld [vmem:[%s8 + $0x4c] sm:$0xf]
      %v4307 = vld [vmem:[%s8 + $0x50] sm:$0xf]
      %v4308 = vld [vmem:[%s8 + $0x54] sm:$0xf]
      %v4309 = vld [vmem:[%s8 + $0x58] sm:$0xf]
      %v4310 = vld [vmem:[%s8 + $0x5c] sm:$0xf]
      %v4311 = vld [vmem:[%s8 + $0x60] sm:$0xf]
      %v4312 = vld [vmem:[%s8 + $0x64] sm:$0xf]
      %v4313 = vld [vmem:[%s8 + $0x68] sm:$0xf]
      %v4314 = vld [vmem:[%s8 + $0x6c] sm:$0xf]
      %v4315 = vld [vmem:[%s8 + $0x70] sm:$0xf]
      %v4316 = vld [vmem:[%s8 + $0x74] sm:$0xf]
      %v4317 = vld [vmem:[%s8 + $0x78] sm:$0xf]
      %v4318 = vld [vmem:[%s8 + $0x7c] sm:$0xf]
      %v4319 = vld [vmem:[%s8 + $0x80] sm:$0xf]
      %v4320 = vld [vmem:[%s8 + $0x84] sm:$0xf]
      %v4321 = vld [vmem:[%s8 + $0x88] sm:$0xf]
      %v4322 = vld [vmem:[%s8 + $0x8c] sm:$0xf]
      %v4323 = vld [vmem:[%s8 + $0x90] sm:$0xf]
      %v4324 = vld [vmem:[%s8 + $0x94] sm:$0xf]
      %v4325 = vld [vmem:[%s8 + $0x98] sm:$0xf]
      %v4326 = vld [vmem:[%s8 + $0x9c] sm:$0xf]
      %v4327 = vld [vmem:[%s8 + $0xa0] sm:$0xf]
      %v4328 = vld [vmem:[%s8 + $0xa4] sm:$0xf]
      %v4329 = vld [vmem:[%s8 + $0xa8] sm:$0xf]
      %v4330 = vld [vmem:[%s8 + $0xac] sm:$0xf]
      %v4331 = vld [vmem:[%s8 + $0xb0] sm:$0xf]
      %v4332 = vld [vmem:[%s8 + $0xb4] sm:$0xf]
      %v4333 = vld [vmem:[%s8 + $0xb8] sm:$0xf]
      %v4334 = vld [vmem:[%s8 + $0xbc] sm:$0xf]
      %v4335 = vld [vmem:[%s8 + $0xc0] sm:$0xf]
      %v4336 = vld [vmem:[%s8 + $0xc4] sm:$0xf]
      %v4337 = vld [vmem:[%s8 + $0xc8] sm:$0xf]
      %v4338 = vld [vmem:[%s8 + $0xcc] sm:$0xf]
      %v4339 = vld [vmem:[%s8 + $0xd0] sm:$0xf]
      %v4340 = vld [vmem:[%s8 + $0xd4] sm:$0xf]
      %v4341 = vld [vmem:[%s8 + $0xd8] sm:$0xf]
      %v4342 = vld [vmem:[%s8 + $0xdc] sm:$0xf]
      %v4343 = vld [vmem:[%s8 + $0xe0] sm:$0xf]
      %v4344 = vld [vmem:[%s8 + $0xe4] sm:$0xf]
      %v4345 = vld [vmem:[%s8 + $0xe8] sm:$0xf]
      %v4346 = vld [vmem:[%s8 + $0xec] sm:$0xf]
      %v4347 = vld [vmem:[%s8 + $0xf0] sm:$0xf]
      %v4348 = vld [vmem:[%s8 + $0xf4] sm:$0xf]
      %v4349 = vld [vmem:[%s8 + $0xf8] sm:$0xf]
      %v4350 = vld [vmem:[%s8 + $0xfc] sm:$0xf]
      %v4351 = vld [vmem:[%s8 + $0x100] sm:$0xf]
      %v4352 = vld [vmem:[%s8 + $0x104] sm:$0xf]
      %v4353 = vld [vmem:[%s8 + $0x108] sm:$0xf]
      %v4354 = vld [vmem:[%s8 + $0x10c] sm:$0xf]
      %v4355 = vld [vmem:[%s8 + $0x110] sm:$0xf]
      %v4356 = vld [vmem:[%s8 + $0x114] sm:$0xf]
      %v4357 = vld [vmem:[%s8 + $0x118] sm:$0xf]
      %v4358 = vld [vmem:[%s8 + $0x11c] sm:$0xf]
      %v4359 = vld [vmem:[%s8 + $0x120] sm:$0xf]
      %v4360 = vld [vmem:[%s8 + $0x124] sm:$0xf]
      %v4361 = vld [vmem:[%s8 + $0x128] sm:$0xf]
      %v4362 = vld [vmem:[%s8 + $0x12c] sm:$0xf]
      %v4363 = vld [vmem:[%s8 + $0x130] sm:$0xf]
      %v4364 = vld [vmem:[%s8 + $0x134] sm:$0xf]
      %v4365 = vld [vmem:[%s8 + $0x138] sm:$0xf]
      %v4366 = vld [vmem:[%s8 + $0x13c] sm:$0xf]
      %v4367 = vld [vmem:[%s8 + $0x140] sm:$0xf]
      %v4368 = vld [vmem:[%s8 + $0x144] sm:$0xf]
      %v4369 = vld [vmem:[%s8 + $0x148] sm:$0xf]
      %v4370 = vld [vmem:[%s8 + $0x14c] sm:$0xf]
      %v4371 = vld [vmem:[%s8 + $0x150] sm:$0xf]
      %v4372 = vld [vmem:[%s8 + $0x154] sm:$0xf]
      %v4373 = vld [vmem:[%s8 + $0x158] sm:$0xf]
      %v4374 = vld [vmem:[%s8 + $0x15c] sm:$0xf]
      %v4375 = vld [vmem:[%s8 + $0x160] sm:$0xf]
      %v4376 = vld [vmem:[%s8 + $0x164] sm:$0xf]
      %v4377 = vld [vmem:[%s8 + $0x168] sm:$0xf]
      %v4378 = vld [vmem:[%s8 + $0x16c] sm:$0xf]
      %v4379 = vld [vmem:[%s8 + $0x170] sm:$0xf]
      %v4380 = vld [vmem:[%s8 + $0x174] sm:$0xf]
      %v4381 = vld [vmem:[%s8 + $0x178] sm:$0xf]
      %v4382 = vld [vmem:[%s8 + $0x17c] sm:$0xf]
      %v4383 = vld [vmem:[%s8 + $0x180] sm:$0xf]
      %v4384 = vld [vmem:[%s8 + $0x184] sm:$0xf]
      %v4385 = vld [vmem:[%s8 + $0x188] sm:$0xf]
      %v4386 = vld [vmem:[%s8 + $0x18c] sm:$0xf]
      %v4387 = vld [vmem:[%s8 + $0x190] sm:$0xf]
      %v4388 = vld [vmem:[%s8 + $0x194] sm:$0xf]
      %v4389 = vld [vmem:[%s8 + $0x198] sm:$0xf]
      %v4390 = vld [vmem:[%s8 + $0x19c] sm:$0xf]
      %v4391 = vld [vmem:[%s8 + $0x1a0] sm:$0xf]
      %v4392 = vld [vmem:[%s8 + $0x1a4] sm:$0xf]
      %v4393 = vld [vmem:[%s8 + $0x1a8] sm:$0xf]
      %v4394 = vld [vmem:[%s8 + $0x1ac] sm:$0xf]
      %v4395 = vld [vmem:[%s8 + $0x1b0] sm:$0xf]
      %v4396 = vld [vmem:[%s8 + $0x1b4] sm:$0xf]
      %v4397 = vld [vmem:[%s8 + $0x1b8] sm:$0xf]
      %v4398 = vld [vmem:[%s8 + $0x1bc] sm:$0xf]
      %v4399 = vld [vmem:[%s8 + $0x1c0] sm:$0xf]
      %v4400 = vld [vmem:[%s8 + $0x1c4] sm:$0xf]
      %v4401 = vld [vmem:[%s8 + $0x1c8] sm:$0xf]
      %v4402 = vld [vmem:[%s8 + $0x1cc] sm:$0xf]
      %v4403 = vld [vmem:[%s8 + $0x1d0] sm:$0xf]
      %v4404 = vld [vmem:[%s8 + $0x1d4] sm:$0xf]
      %v4405 = vld [vmem:[%s8 + $0x1d8] sm:$0xf]
      %v4406 = vld [vmem:[%s8 + $0x1dc] sm:$0xf]
      %v4407 = vld [vmem:[%s8 + $0x1e0] sm:$0xf]
      %v4408 = vld [vmem:[%s8 + $0x1e4] sm:$0xf]
      %v4409 = vld [vmem:[%s8 + $0x1e8] sm:$0xf]
      %v4410 = vld [vmem:[%s8 + $0x1ec] sm:$0xf]
      %v4411 = vld [vmem:[%s8 + $0x1f0] sm:$0xf]
      %v4412 = vld [vmem:[%s8 + $0x1f4] sm:$0xf]
      %v4413 = vld [vmem:[%s8 + $0x1f8] sm:$0xf]
      %v4414 = vld [vmem:[%s8 + $0x1fc] sm:$0xf]
      %v4415 = vld [vmem:[%s8 + $0x200] sm:$0xf]
      %v4416 = vld [vmem:[%s8 + $0x204] sm:$0xf]
      %v4417 = vld [vmem:[%s8 + $0x208] sm:$0xf]
      %v4418 = vld [vmem:[%s8 + $0x20c] sm:$0xf]
      %v4419 = vld [vmem:[%s8 + $0x210] sm:$0xf]
      %v4420 = vld [vmem:[%s8 + $0x214] sm:$0xf]
      %v4421 = vld [vmem:[%s8 + $0x218] sm:$0xf]
      %v4422 = vld [vmem:[%s8 + $0x21c] sm:$0xf]
      %v4423 = vld [vmem:[%s8 + $0x220] sm:$0xf]
      %v4424 = vld [vmem:[%s8 + $0x224] sm:$0xf]
      %v4425 = vld [vmem:[%s8 + $0x228] sm:$0xf]
      %v4426 = vld [vmem:[%s8 + $0x22c] sm:$0xf]
      %v4427 = vld [vmem:[%s8 + $0x230] sm:$0xf]
      %v4428 = vld [vmem:[%s8 + $0x234] sm:$0xf]
      %v4429 = vld [vmem:[%s8 + $0x238] sm:$0xf]
      %v4430 = vld [vmem:[%s8 + $0x23c] sm:$0xf]
      %v4431 = vld [vmem:[%s9] sm:$0x1]
      %v4433 = vlaneseq
      %v4434 = vshrl.u32 %v4433, 7
      %v4435 = vsub.s32 0, %v4434
      %v4436 = vrot.slane %v4431, %v4435
      %v4582 = vunpack.c.l.b16 %v4287
      %v4583 = vunpack.c.l.b16 %v4288
      %v4584 = vunpack.c.l.b16 %v4289
      %v4585 = vunpack.c.l.b16 %v4290
      %v4586 = vunpack.c.l.b16 %v4291
      %v4587 = vunpack.c.l.b16 %v4292
      %v4588 = vunpack.c.l.b16 %v4293
      %v4589 = vunpack.c.l.b16 %v4294
      %v4590 = vunpack.c.l.b16 %v4295
      %v4591 = vunpack.c.l.b16 %v4296
      %v4592 = vunpack.c.l.b16 %v4297
      %v4593 = vunpack.c.l.b16 %v4298
      %v4594 = vunpack.c.l.b16 %v4299
      %v4595 = vunpack.c.l.b16 %v4300
      %v4596 = vunpack.c.l.b16 %v4301
      %v4597 = vunpack.c.l.b16 %v4302
      %v4598 = vunpack.c.l.b16 %v4303
      %v4599 = vunpack.c.l.b16 %v4304
      %v4600 = vunpack.c.l.b16 %v4305
      %v4601 = vunpack.c.l.b16 %v4306
      %v4602 = vunpack.c.l.b16 %v4307
      %v4603 = vunpack.c.l.b16 %v4308
      %v4604 = vunpack.c.l.b16 %v4309
      %v4605 = vunpack.c.l.b16 %v4310
      %v4606 = vunpack.c.l.b16 %v4311
      %v4607 = vunpack.c.l.b16 %v4312
      %v4608 = vunpack.c.l.b16 %v4313
      %v4609 = vunpack.c.l.b16 %v4314
      %v4610 = vunpack.c.l.b16 %v4315
      %v4611 = vunpack.c.l.b16 %v4316
      %v4612 = vunpack.c.l.b16 %v4317
      %v4613 = vunpack.c.l.b16 %v4318
      %v4614 = vunpack.c.l.b16 %v4319
      %v4615 = vunpack.c.l.b16 %v4320
      %v4616 = vunpack.c.l.b16 %v4321
      %v4617 = vunpack.c.l.b16 %v4322
      %v4618 = vunpack.c.l.b16 %v4323
      %v4619 = vunpack.c.l.b16 %v4324
      %v4620 = vunpack.c.l.b16 %v4325
      %v4621 = vunpack.c.l.b16 %v4326
      %v4622 = vunpack.c.l.b16 %v4327
      %v4623 = vunpack.c.l.b16 %v4328
      %v4624 = vunpack.c.l.b16 %v4329
      %v4625 = vunpack.c.l.b16 %v4330
      %v4626 = vunpack.c.l.b16 %v4331
      %v4627 = vunpack.c.l.b16 %v4332
      %v4628 = vunpack.c.l.b16 %v4333
      %v4629 = vunpack.c.l.b16 %v4334
      %v4630 = vunpack.c.l.b16 %v4335
      %v4631 = vunpack.c.l.b16 %v4336
      %v4632 = vunpack.c.l.b16 %v4337
      %v4633 = vunpack.c.l.b16 %v4338
      %v4634 = vunpack.c.l.b16 %v4339
      %v4635 = vunpack.c.l.b16 %v4340
      %v4636 = vunpack.c.l.b16 %v4341
      %v4637 = vunpack.c.l.b16 %v4342
      %v4638 = vunpack.c.l.b16 %v4343
      %v4639 = vunpack.c.l.b16 %v4344
      %v4640 = vunpack.c.l.b16 %v4345
      %v4641 = vunpack.c.l.b16 %v4346
      %v4642 = vunpack.c.l.b16 %v4347
      %v4643 = vunpack.c.l.b16 %v4348
      %v4644 = vunpack.c.l.b16 %v4349
      %v4645 = vunpack.c.l.b16 %v4350
      %v4646 = vunpack.c.l.b16 %v4351
      %v4647 = vunpack.c.l.b16 %v4352
      %v4648 = vunpack.c.l.b16 %v4353
      %v4649 = vunpack.c.l.b16 %v4354
      %v4650 = vunpack.c.l.b16 %v4355
      %v4651 = vunpack.c.l.b16 %v4356
      %v4652 = vunpack.c.l.b16 %v4357
      %v4653 = vunpack.c.l.b16 %v4358
      %v4654 = vunpack.c.l.b16 %v4359
      %v4655 = vunpack.c.l.b16 %v4360
      %v4656 = vunpack.c.l.b16 %v4361
      %v4657 = vunpack.c.l.b16 %v4362
      %v4658 = vunpack.c.l.b16 %v4363
      %v4659 = vunpack.c.l.b16 %v4364
      %v4660 = vunpack.c.l.b16 %v4365
      %v4661 = vunpack.c.l.b16 %v4366
      %v4662 = vunpack.c.l.b16 %v4367
      %v4663 = vunpack.c.l.b16 %v4368
      %v4664 = vunpack.c.l.b16 %v4369
      %v4665 = vunpack.c.l.b16 %v4370
      %v4666 = vunpack.c.l.b16 %v4371
      %v4667 = vunpack.c.l.b16 %v4372
      %v4668 = vunpack.c.l.b16 %v4373
      %v4669 = vunpack.c.l.b16 %v4374
      %v4670 = vunpack.c.l.b16 %v4375
      %v4671 = vunpack.c.l.b16 %v4376
      %v4672 = vunpack.c.l.b16 %v4377
      %v4673 = vunpack.c.l.b16 %v4378
      %v4674 = vunpack.c.l.b16 %v4379
      %v4675 = vunpack.c.l.b16 %v4380
      %v4676 = vunpack.c.l.b16 %v4381
      %v4677 = vunpack.c.l.b16 %v4382
      %v4678 = vunpack.c.l.b16 %v4383
      %v4679 = vunpack.c.l.b16 %v4384
      %v4680 = vunpack.c.l.b16 %v4385
      %v4681 = vunpack.c.l.b16 %v4386
      %v4682 = vunpack.c.l.b16 %v4387
      %v4683 = vunpack.c.l.b16 %v4388
      %v4684 = vunpack.c.l.b16 %v4389
      %v4685 = vunpack.c.l.b16 %v4390
      %v4686 = vunpack.c.l.b16 %v4391
      %v4687 = vunpack.c.l.b16 %v4392
      %v4688 = vunpack.c.l.b16 %v4393
      %v4689 = vunpack.c.l.b16 %v4394
      %v4690 = vunpack.c.l.b16 %v4395
      %v4691 = vunpack.c.l.b16 %v4396
      %v4692 = vunpack.c.l.b16 %v4397
      %v4693 = vunpack.c.l.b16 %v4398
      %v4694 = vunpack.c.l.b16 %v4399
      %v4695 = vunpack.c.l.b16 %v4400
      %v4696 = vunpack.c.l.b16 %v4401
      %v4697 = vunpack.c.l.b16 %v4402
      %v4698 = vunpack.c.l.b16 %v4403
      %v4699 = vunpack.c.l.b16 %v4404
      %v4700 = vunpack.c.l.b16 %v4405
      %v4701 = vunpack.c.l.b16 %v4406
      %v4702 = vunpack.c.l.b16 %v4407
      %v4703 = vunpack.c.l.b16 %v4408
      %v4704 = vunpack.c.l.b16 %v4409
      %v4705 = vunpack.c.l.b16 %v4410
      %v4706 = vunpack.c.l.b16 %v4411
      %v4707 = vunpack.c.l.b16 %v4412
      %v4708 = vunpack.c.l.b16 %v4413
      %v4709 = vunpack.c.l.b16 %v4414
      %v4710 = vunpack.c.l.b16 %v4415
      %v4711 = vunpack.c.l.b16 %v4416
      %v4712 = vunpack.c.l.b16 %v4417
      %v4713 = vunpack.c.l.b16 %v4418
      %v4714 = vunpack.c.l.b16 %v4419
      %v4715 = vunpack.c.l.b16 %v4420
      %v4716 = vunpack.c.l.b16 %v4421
      %v4717 = vunpack.c.l.b16 %v4422
      %v4718 = vunpack.c.l.b16 %v4423
      %v4719 = vunpack.c.l.b16 %v4424
      %v4720 = vunpack.c.l.b16 %v4425
      %v4721 = vunpack.c.l.b16 %v4426
      %v4722 = vunpack.c.l.b16 %v4427
      %v4723 = vunpack.c.l.b16 %v4428
      %v4724 = vunpack.c.l.b16 %v4429
      %v4725 = vunpack.c.l.b16 %v4430
      %v4726 = vpack.c.b16 %v4583, %v4582
      %v4727 = vpack.c.b16 %v4585, %v4584
      %v4728 = vpack.c.b16 %v4587, %v4586
      %v4729 = vpack.c.b16 %v4589, %v4588
      %v4730 = vpack.c.b16 %v4591, %v4590
      %v4731 = vpack.c.b16 %v4593, %v4592
      %v4732 = vpack.c.b16 %v4595, %v4594
      %v4733 = vpack.c.b16 %v4597, %v4596
      %v4734 = vpack.c.b16 %v4599, %v4598
      %v4735 = vpack.c.b16 %v4601, %v4600
      %v4736 = vpack.c.b16 %v4603, %v4602
      %v4737 = vpack.c.b16 %v4605, %v4604
      %v4738 = vpack.c.b16 %v4607, %v4606
      %v4739 = vpack.c.b16 %v4609, %v4608
      %v4740 = vpack.c.b16 %v4611, %v4610
      %v4741 = vpack.c.b16 %v4613, %v4612
      %v4742 = vpack.c.b16 %v4615, %v4614
      %v4743 = vpack.c.b16 %v4617, %v4616
      %v4744 = vpack.c.b16 %v4619, %v4618
      %v4745 = vpack.c.b16 %v4621, %v4620
      %v4746 = vpack.c.b16 %v4623, %v4622
      %v4747 = vpack.c.b16 %v4625, %v4624
      %v4748 = vpack.c.b16 %v4627, %v4626
      %v4749 = vpack.c.b16 %v4629, %v4628
      %v4750 = vpack.c.b16 %v4631, %v4630
      %v4751 = vpack.c.b16 %v4633, %v4632
      %v4752 = vpack.c.b16 %v4635, %v4634
      %v4753 = vpack.c.b16 %v4637, %v4636
      %v4754 = vpack.c.b16 %v4639, %v4638
      %v4755 = vpack.c.b16 %v4641, %v4640
      %v4756 = vpack.c.b16 %v4643, %v4642
      %v4757 = vpack.c.b16 %v4645, %v4644
      %v4758 = vpack.c.b16 %v4647, %v4646
      %v4759 = vpack.c.b16 %v4649, %v4648
      %v4760 = vpack.c.b16 %v4651, %v4650
      %v4761 = vpack.c.b16 %v4653, %v4652
      %v4762 = vpack.c.b16 %v4655, %v4654
      %v4763 = vpack.c.b16 %v4657, %v4656
      %v4764 = vpack.c.b16 %v4659, %v4658
      %v4765 = vpack.c.b16 %v4661, %v4660
      %v4766 = vpack.c.b16 %v4663, %v4662
      %v4767 = vpack.c.b16 %v4665, %v4664
      %v4768 = vpack.c.b16 %v4667, %v4666
      %v4769 = vpack.c.b16 %v4669, %v4668
      %v4770 = vpack.c.b16 %v4671, %v4670
      %v4771 = vpack.c.b16 %v4673, %v4672
      %v4772 = vpack.c.b16 %v4675, %v4674
      %v4773 = vpack.c.b16 %v4677, %v4676
      %v4774 = vpack.c.b16 %v4679, %v4678
      %v4775 = vpack.c.b16 %v4681, %v4680
      %v4776 = vpack.c.b16 %v4683, %v4682
      %v4777 = vpack.c.b16 %v4685, %v4684
      %v4778 = vpack.c.b16 %v4687, %v4686
      %v4779 = vpack.c.b16 %v4689, %v4688
      %v4780 = vpack.c.b16 %v4691, %v4690
      %v4781 = vpack.c.b16 %v4693, %v4692
      %v4782 = vpack.c.b16 %v4695, %v4694
      %v4783 = vpack.c.b16 %v4697, %v4696
      %v4784 = vpack.c.b16 %v4699, %v4698
      %v4785 = vpack.c.b16 %v4701, %v4700
      %v4786 = vpack.c.b16 %v4703, %v4702
      %v4787 = vpack.c.b16 %v4705, %v4704
      %v4788 = vpack.c.b16 %v4707, %v4706
      %v4789 = vpack.c.b16 %v4709, %v4708
      %v4790 = vpack.c.b16 %v4711, %v4710
      %v4791 = vpack.c.b16 %v4713, %v4712
      %v4792 = vpack.c.b16 %v4715, %v4714
      %v4793 = vpack.c.b16 %v4717, %v4716
      %v4794 = vpack.c.b16 %v4719, %v4718
      %v4795 = vpack.c.b16 %v4721, %v4720
      %v4796 = vpack.c.b16 %v4723, %v4722
      %v4797 = vpack.c.b16 %v4725, %v4724
      %4870 = vmatprep.subr.bf16.mxu0 0
      %4871 = vmatpush1.bf16.msra.mxu0 %v4726
      %4872 = vmatprep.subr.bf16.mxu0 0
      %4873 = vmatpush1.bf16.msra.mxu0 %v4727
      %4874 = vmatprep.subr.bf16.mxu0 0
      %4875 = vmatpush1.bf16.msra.mxu0 %v4728
      %4876 = vmatprep.subr.bf16.mxu0 0
      %4877 = vmatpush1.bf16.msra.mxu0 %v4729
      %4878 = vmatprep.subr.bf16.mxu0 0
      %4879 = vmatpush1.bf16.msra.mxu0 %v4730
      %4880 = vmatprep.subr.bf16.mxu0 0
      %4881 = vmatpush1.bf16.msra.mxu0 %v4731
      %4882 = vmatprep.subr.bf16.mxu0 0
      %4883 = vmatpush1.bf16.msra.mxu0 %v4732
      %4884 = vmatprep.subr.bf16.mxu0 0
      %4885 = vmatpush1.bf16.msra.mxu0 %v4733
      %4886 = vmatprep.subr.bf16.mxu0 0
      %4887 = vmatpush1.bf16.msra.mxu0 %v4734
      %4888 = vmatprep.subr.bf16.mxu0 0
      %4889 = vmatpush1.bf16.msra.mxu0 %v4735
      %4890 = vmatprep.subr.bf16.mxu0 0
      %4891 = vmatpush1.bf16.msra.mxu0 %v4736
      %4892 = vmatprep.subr.bf16.mxu0 0
      %4893 = vmatpush1.bf16.msra.mxu0 %v4737
      %4894 = vmatprep.subr.bf16.mxu0 0
      %4895 = vmatpush1.bf16.msra.mxu0 %v4738
      %4896 = vmatprep.subr.bf16.mxu0 0
      %4897 = vmatpush1.bf16.msra.mxu0 %v4739
      %4898 = vmatprep.subr.bf16.mxu0 0
      %4899 = vmatpush1.bf16.msra.mxu0 %v4740
      %4900 = vmatprep.subr.bf16.mxu0 0
      %4901 = vmatpush1.bf16.msra.mxu0 %v4741
      %4902 = vmatprep.mubr.bf16.mxu0 %v4243
      %4903 = vmatmul.mubr.bf16.gmra.mrb[0].mxu0 %v4242
      %v4904 = vpop.f32.mrb[0].mxu0
      %v4905 = vadd.f32 %v4436, %v4904
      %v4906 = vpop.f32.mrb[0].mxu0
      %v4907 = vpop.f32.mrb[0].mxu0
      %v4908 = vadd.f32 %v4436, %v4907
      %v4909 = vpop.f32.mrb[0].mxu0
      %4910 = vmatprep.mubr.bf16.mxu0 %v4252
      %4911 = vmatmul.mubr.bf16.gmra.mrb[0].mxu0 %v4251
      %v4912 = vpop.f32.mrb[0].mxu0
      %v4913 = vadd.f32 %v4436, %v4912
      %v4914 = vpop.f32.mrb[0].mxu0
      %v4915 = vpop.f32.mrb[0].mxu0
      %v4916 = vadd.f32 %v4436, %v4915
      %v4917 = vpop.f32.mrb[0].mxu0
      %4918 = vmatprep.mubr.bf16.mxu0 %v4261
      %4919 = vmatmul.mubr.bf16.gmra.mrb[0].mxu0 %v4260
      %v4920 = vpop.f32.mrb[0].mxu0
      %v4921 = vadd.f32 %v4436, %v4920
      %v4922 = vpop.f32.mrb[0].mxu0
      %v4923 = vpop.f32.mrb[0].mxu0
      %v4924 = vadd.f32 %v4436, %v4923
      %v4925 = vpop.f32.mrb[0].mxu0
      %4926 = vmatprep.mubr.bf16.mxu0 %v4270
      %4927 = vmatmul.mubr.bf16.gmra.mrb[0].mxu0 %v4269
      %v4928 = vpop.f32.mrb[0].mxu0
      %v4929 = vadd.f32 %v4436, %v4928
      %v4930 = vpop.f32.mrb[0].mxu0
      %v4931 = vpop.f32.mrb[0].mxu0
      %v4932 = vadd.f32 %v4436, %v4931
      %v4933 = vpop.f32.mrb[0].mxu0
      %4934 = vmatprep.mubr.bf16.mxu0 %v4279
      %4935 = vmatmul.mubr.bf16.gmra.mrb[0].mxu0 %v4278
      %v4936 = vpop.f32.mrb[0].mxu0
      %v4937 = vadd.f32 %v4436, %v4936
      %v4938 = vpop.f32.mrb[0].mxu0
      %v4939 = vpop.f32.mrb[0].mxu0
      %v4940 = vadd.f32 %v4436, %v4939
      %v4941 = vpop.f32.mrb[0].mxu0
      %4942 = vdwg.mxu0
      %4943 = vmatprep.subr.bf16.mxu0 0
      %4944 = vmatpush1.bf16.msra.mxu0 %v4742
      %4945 = vmatprep.subr.bf16.mxu0 0
      %4946 = vmatpush1.bf16.msra.mxu0 %v4743
      %4947 = vmatprep.subr.bf16.mxu0 0
      %4948 = vmatpush1.bf16.msra.mxu0 %v4744
      %4949 = vmatprep.subr.bf16.mxu0 0
      %4950 = vmatpush1.bf16.msra.mxu0 %v4745
      %4951 = vmatprep.subr.bf16.mxu0 0
      %4952 = vmatpush1.bf16.msra.mxu0 %v4746
      %4953 = vmatprep.subr.bf16.mxu0 0
      %4954 = vmatpush1.bf16.msra.mxu0 %v4747
      %4955 = vmatprep.subr.bf16.mxu0 0
      %4956 = vmatpush1.bf16.msra.mxu0 %v4748
      %4957 = vmatprep.subr.bf16.mxu0 0
      %4958 = vmatpush1.bf16.msra.mxu0 %v4749
      %4959 = vmatprep.subr.bf16.mxu0 0
      %4960 = vmatpush1.bf16.msra.mxu0 %v4750
      %4961 = vmatprep.subr.bf16.mxu0 0
      %4962 = vmatpush1.bf16.msra.mxu0 %v4751
      %4963 = vmatprep.subr.bf16.mxu0 0
      %4964 = vmatpush1.bf16.msra.mxu0 %v4752
      %4965 = vmatprep.subr.bf16.mxu0 0
      %4966 = vmatpush1.bf16.msra.mxu0 %v4753
      %4967 = vmatprep.subr.bf16.mxu0 0
      %4968 = vmatpush1.bf16.msra.mxu0 %v4754
      %4969 = vmatprep.subr.bf16.mxu0 0
      %4970 = vmatpush1.bf16.msra.mxu0 %v4755
      %4971 = vmatprep.subr.bf16.mxu0 0
      %4972 = vmatpush1.bf16.msra.mxu0 %v4756
      %4973 = vmatprep.subr.bf16.mxu0 0
      %4974 = vmatpush1.bf16.msra.mxu0 %v4757
      %4975 = vmatprep.mubr.bf16.mxu0 %v4245
      %4976 = vmatmul.mubr.bf16.gmra.mrb[0].mxu0 %v4244
      %v4977 = vpop.f32.mrb[0].mxu0
      %v4978 = vadd.f32 %v4905, %v4977
      %v4979 = vpop.f32.mrb[0].mxu0
      %v4980 = vpop.f32.mrb[0].mxu0
      %v4981 = vadd.f32 %v4908, %v4980
      %v4982 = vpop.f32.mrb[0].mxu0
      %4983 = vmatprep.mubr.bf16.mxu0 %v4254
      %4984 = vmatmul.mubr.bf16.gmra.mrb[0].mxu0 %v4253
      %v4985 = vpop.f32.mrb[0].mxu0
      %v4986 = vadd.f32 %v4913, %v4985
      %v4987 = vpop.f32.mrb[0].mxu0
      %v4988 = vpop.f32.mrb[0].mxu0
      %v4989 = vadd.f32 %v4916, %v4988
      %v4990 = vpop.f32.mrb[0].mxu0
      %4991 = vmatprep.mubr.bf16.mxu0 %v4263
      %4992 = vmatmul.mubr.bf16.gmra.mrb[0].mxu0 %v4262
      %v4993 = vpop.f32.mrb[0].mxu0
      %v4994 = vadd.f32 %v4921, %v4993
      %v4995 = vpop.f32.mrb[0].mxu0
      %v4996 = vpop.f32.mrb[0].mxu0
      %v4997 = vadd.f32 %v4924, %v4996
      %v4998 = vpop.f32.mrb[0].mxu0
      %4999 = vmatprep.mubr.bf16.mxu0 %v4272
      %5000 = vmatmul.mubr.bf16.gmra.mrb[0].mxu0 %v4271
      %v5001 = vpop.f32.mrb[0].mxu0
      %v5002 = vadd.f32 %v4929, %v5001
      %v5003 = vpop.f32.mrb[0].mxu0
      %v5004 = vpop.f32.mrb[0].mxu0
      %v5005 = vadd.f32 %v4932, %v5004
      %v5006 = vpop.f32.mrb[0].mxu0
      %5007 = vmatprep.mubr.bf16.mxu0 %v4281
      %5008 = vmatmul.mubr.bf16.gmra.mrb[0].mxu0 %v4280
      %v5009 = vpop.f32.mrb[0].mxu0
      %v5010 = vadd.f32 %v4937, %v5009
      %v5011 = vpop.f32.mrb[0].mxu0
      %v5012 = vpop.f32.mrb[0].mxu0
      %v5013 = vadd.f32 %v4940, %v5012
      %v5014 = vpop.f32.mrb[0].mxu0
      %5015 = vdwg.mxu0
      %5016 = vmatprep.subr.bf16.mxu0 0
      %5017 = vmatpush1.bf16.msra.mxu0 %v4758
      %5018 = vmatprep.subr.bf16.mxu0 0
      %5019 = vmatpush1.bf16.msra.mxu0 %v4759
      %5020 = vmatprep.subr.bf16.mxu0 0
      %5021 = vmatpush1.bf16.msra.mxu0 %v4760
      %5022 = vmatprep.subr.bf16.mxu0 0
      %5023 = vmatpush1.bf16.msra.mxu0 %v4761
      %5024 = vmatprep.subr.bf16.mxu0 0
      %5025 = vmatpush1.bf16.msra.mxu0 %v4762
      %5026 = vmatprep.subr.bf16.mxu0 0
      %5027 = vmatpush1.bf16.msra.mxu0 %v4763
      %5028 = vmatprep.subr.bf16.mxu0 0
      %5029 = vmatpush1.bf16.msra.mxu0 %v4764
      %5030 = vmatprep.subr.bf16.mxu0 0
      %5031 = vmatpush1.bf16.msra.mxu0 %v4765
      %5032 = vmatprep.subr.bf16.mxu0 0
      %5033 = vmatpush1.bf16.msra.mxu0 %v4766
      %5034 = vmatprep.subr.bf16.mxu0 0
      %5035 = vmatpush1.bf16.msra.mxu0 %v4767
      %5036 = vmatprep.subr.bf16.mxu0 0
      %5037 = vmatpush1.bf16.msra.mxu0 %v4768
      %5038 = vmatprep.subr.bf16.mxu0 0
      %5039 = vmatpush1.bf16.msra.mxu0 %v4769
      %5040 = vmatprep.subr.bf16.mxu0 0
      %5041 = vmatpush1.bf16.msra.mxu0 %v4770
      %5042 = vmatprep.subr.bf16.mxu0 0
      %5043 = vmatpush1.bf16.msra.mxu0 %v4771
      %5044 = vmatprep.subr.bf16.mxu0 0
      %5045 = vmatpush1.bf16.msra.mxu0 %v4772
      %5046 = vmatprep.subr.bf16.mxu0 0
      %5047 = vmatpush1.bf16.msra.mxu0 %v4773
      %5048 = vmatprep.mubr.bf16.mxu0 %v4247
      %5049 = vmatmul.mubr.bf16.gmra.mrb[0].mxu0 %v4246
      %v5050 = vpop.f32.mrb[0].mxu0
      %v5051 = vadd.f32 %v4978, %v5050
      %v5052 = vpop.f32.mrb[0].mxu0
      %v5053 = vpop.f32.mrb[0].mxu0
      %v5054 = vadd.f32 %v4981, %v5053
      %v5055 = vpop.f32.mrb[0].mxu0
      %5056 = vmatprep.mubr.bf16.mxu0 %v4256
      %5057 = vmatmul.mubr.bf16.gmra.mrb[0].mxu0 %v4255
      %v5058 = vpop.f32.mrb[0].mxu0
      %v5059 = vadd.f32 %v4986, %v5058
      %v5060 = vpop.f32.mrb[0].mxu0
      %v5061 = vpop.f32.mrb[0].mxu0
      %v5062 = vadd.f32 %v4989, %v5061
      %v5063 = vpop.f32.mrb[0].mxu0
      %5064 = vmatprep.mubr.bf16.mxu0 %v4265
      %5065 = vmatmul.mubr.bf16.gmra.mrb[0].mxu0 %v4264
      %v5066 = vpop.f32.mrb[0].mxu0
      %v5067 = vadd.f32 %v4994, %v5066
      %v5068 = vpop.f32.mrb[0].mxu0
      %v5069 = vpop.f32.mrb[0].mxu0
      %v5070 = vadd.f32 %v4997, %v5069
      %v5071 = vpop.f32.mrb[0].mxu0
      %5072 = vmatprep.mubr.bf16.mxu0 %v4274
      %5073 = vmatmul.mubr.bf16.gmra.mrb[0].mxu0 %v4273
      %v5074 = vpop.f32.mrb[0].mxu0
      %v5075 = vadd.f32 %v5002, %v5074
      %v5076 = vpop.f32.mrb[0].mxu0
      %v5077 = vpop.f32.mrb[0].mxu0
      %v5078 = vadd.f32 %v5005, %v5077
      %v5079 = vpop.f32.mrb[0].mxu0
      %5080 = vmatprep.mubr.bf16.mxu0 %v4283
      %5081 = vmatmul.mubr.bf16.gmra.mrb[0].mxu0 %v4282
      %v5082 = vpop.f32.mrb[0].mxu0
      %v5083 = vadd.f32 %v5010, %v5082
      %v5084 = vpop.f32.mrb[0].mxu0
      %v5085 = vpop.f32.mrb[0].mxu0
      %v5086 = vadd.f32 %v5013, %v5085
      %v5087 = vpop.f32.mrb[0].mxu0
      %5088 = vdwg.mxu0
      %5089 = vmatprep.subr.bf16.mxu0 0
      %5090 = vmatpush1.bf16.msra.mxu0 %v4774
      %5091 = vmatprep.subr.bf16.mxu0 0
      %5092 = vmatpush1.bf16.msra.mxu0 %v4775
      %5093 = vmatprep.subr.bf16.mxu0 0
      %5094 = vmatpush1.bf16.msra.mxu0 %v4776
      %5095 = vmatprep.subr.bf16.mxu0 0
      %5096 = vmatpush1.bf16.msra.mxu0 %v4777
      %5097 = vmatprep.subr.bf16.mxu0 0
      %5098 = vmatpush1.bf16.msra.mxu0 %v4778
      %5099 = vmatprep.subr.bf16.mxu0 0
      %5100 = vmatpush1.bf16.msra.mxu0 %v4779
      %5101 = vmatprep.subr.bf16.mxu0 0
      %5102 = vmatpush1.bf16.msra.mxu0 %v4780
      %5103 = vmatprep.subr.bf16.mxu0 0
      %5104 = vmatpush1.bf16.msra.mxu0 %v4781
      %5105 = vmatprep.subr.bf16.mxu0 0
      %5106 = vmatpush1.bf16.msra.mxu0 %v4782
      %5107 = vmatprep.subr.bf16.mxu0 0
      %5108 = vmatpush1.bf16.msra.mxu0 %v4783
      %5109 = vmatprep.subr.bf16.mxu0 0
      %5110 = vmatpush1.bf16.msra.mxu0 %v4784
      %5111 = vmatprep.subr.bf16.mxu0 0
      %5112 = vmatpush1.bf16.msra.mxu0 %v4785
      %5113 = vmatprep.subr.bf16.mxu0 0
      %5114 = vmatpush1.bf16.msra.mxu0 %v4786
      %5115 = vmatprep.subr.bf16.mxu0 0
      %5116 = vmatpush1.bf16.msra.mxu0 %v4787
      %5117 = vmatprep.subr.bf16.mxu0 0
      %5118 = vmatpush1.bf16.msra.mxu0 %v4788
      %5119 = vmatprep.subr.bf16.mxu0 0
      %5120 = vmatpush1.bf16.msra.mxu0 %v4789
      %5121 = vmatprep.mubr.bf16.mxu0 %v4249
      %5122 = vmatmul.mubr.bf16.gmra.mrb[0].mxu0 %v4248
      %v5123 = vpop.f32.mrb[0].mxu0
      %v5124 = vadd.f32 %v5051, %v5123
      %v5125 = vpop.f32.mrb[0].mxu0
      %v5126 = vpop.f32.mrb[0].mxu0
      %v5127 = vadd.f32 %v5054, %v5126
      %v5128 = vpop.f32.mrb[0].mxu0
      %5129 = vmatprep.mubr.bf16.mxu0 %v4258
      %5130 = vmatmul.mubr.bf16.gmra.mrb[0].mxu0 %v4257
      %v5131 = vpop.f32.mrb[0].mxu0
      %v5132 = vadd.f32 %v5059, %v5131
      %v5133 = vpop.f32.mrb[0].mxu0
      %v5134 = vpop.f32.mrb[0].mxu0
      %v5135 = vadd.f32 %v5062, %v5134
      %v5136 = vpop.f32.mrb[0].mxu0
      %5137 = vmatprep.mubr.bf16.mxu0 %v4267
      %5138 = vmatmul.mubr.bf16.gmra.mrb[0].mxu0 %v4266
      %v5139 = vpop.f32.mrb[0].mxu0
      %v5140 = vadd.f32 %v5067, %v5139
      %v5141 = vpop.f32.mrb[0].mxu0
      %v5142 = vpop.f32.mrb[0].mxu0
      %v5143 = vadd.f32 %v5070, %v5142
      %v5144 = vpop.f32.mrb[0].mxu0
      %5145 = vmatprep.mubr.bf16.mxu0 %v4276
      %5146 = vmatmul.mubr.bf16.gmra.mrb[0].mxu0 %v4275
      %v5147 = vpop.f32.mrb[0].mxu0
      %v5148 = vadd.f32 %v5075, %v5147
      %v5149 = vpop.f32.mrb[0].mxu0
      %v5150 = vpop.f32.mrb[0].mxu0
      %v5151 = vadd.f32 %v5078, %v5150
      %v5152 = vpop.f32.mrb[0].mxu0
      %5153 = vmatprep.mubr.bf16.mxu0 %v4285
      %5154 = vmatmul.mubr.bf16.gmra.mrb[0].mxu0 %v4284
      %v5155 = vpop.f32.mrb[0].mxu0
      %v5156 = vadd.f32 %v5083, %v5155
      %v5157 = vpop.f32.mrb[0].mxu0
      %v5158 = vpop.f32.mrb[0].mxu0
      %v5159 = vadd.f32 %v5086, %v5158
      %v5160 = vpop.f32.mrb[0].mxu0
      %5161 = vdwg.mxu0
      %5162 = vmatprep.subr.bf16.mxu0 0
      %5163 = vmatpush1.bf16.msra.mxu0 %v4790
      %5164 = vmatprep.subr.bf16.mxu0 0
      %5165 = vmatpush1.bf16.msra.mxu0 %v4791
      %5166 = vmatprep.subr.bf16.mxu0 0
      %5167 = vmatpush1.bf16.msra.mxu0 %v4792
      %5168 = vmatprep.subr.bf16.mxu0 0
      %5169 = vmatpush1.bf16.msra.mxu0 %v4793
      %5170 = vmatprep.subr.bf16.mxu0 0
      %5171 = vmatpush1.bf16.msra.mxu0 %v4794
      %5172 = vmatprep.subr.bf16.mxu0 0
      %5173 = vmatpush1.bf16.msra.mxu0 %v4795
      %5174 = vmatprep.subr.bf16.mxu0 0
      %5175 = vmatpush1.bf16.msra.mxu0 %v4796
      %5176 = vmatprep.subr.bf16.mxu0 0
      %5177 = vmatpush1.bf16.msra.mxu0 %v4797
      %5178 = vmatprep.subr.bf16.mxu0 0
      %5179 = vmatpush1.bf16.msra.mxu0 0
      %5180 = vmatprep.subr.bf16.mxu0 0
      %5181 = vmatpush1.bf16.msra.mxu0 0
      %5182 = vmatprep.subr.bf16.mxu0 0
      %5183 = vmatpush1.bf16.msra.mxu0 0
      %5184 = vmatprep.subr.bf16.mxu0 0
      %5185 = vmatpush1.bf16.msra.mxu0 0
      %5186 = vmatprep.subr.bf16.mxu0 0
      %5187 = vmatpush1.bf16.msra.mxu0 0
      %5188 = vmatprep.subr.bf16.mxu0 0
      %5189 = vmatpush1.bf16.msra.mxu0 0
      %5190 = vmatprep.subr.bf16.mxu0 0
      %5191 = vmatpush1.bf16.msra.mxu0 0
      %5192 = vmatprep.subr.bf16.mxu0 0
      %5193 = vmatpush1.bf16.msra.mxu0 0
      %5194 = vmatprep.mubr.bf16.mxu0 0
      %5195 = vmatmul.mubr.bf16.gmra.mrb[0].mxu0 %v4250
      %v5196 = vpop.f32.mrb[0].mxu0
      %v5197 = vadd.f32 %v5124, %v5196
      %v5198 = vpop.f32.mrb[0].mxu0
      %v5199 = vpop.f32.mrb[0].mxu0
      %v5200 = vadd.f32 %v5127, %v5199
      %v5201 = vpop.f32.mrb[0].mxu0
      %5202 = vmatprep.mubr.bf16.mxu0 0
      %5203 = vmatmul.mubr.bf16.gmra.mrb[0].mxu0 %v4259
      %v5204 = vpop.f32.mrb[0].mxu0
      %v5205 = vadd.f32 %v5132, %v5204
      %v5206 = vpop.f32.mrb[0].mxu0
      %v5207 = vpop.f32.mrb[0].mxu0
      %v5208 = vadd.f32 %v5135, %v5207
      %v5209 = vpop.f32.mrb[0].mxu0
      %5210 = vmatprep.mubr.bf16.mxu0 0
      %5211 = vmatmul.mubr.bf16.gmra.mrb[0].mxu0 %v4268
      %v5212 = vpop.f32.mrb[0].mxu0
      %v5213 = vadd.f32 %v5140, %v5212
      %v5214 = vpop.f32.mrb[0].mxu0
      %v5215 = vpop.f32.mrb[0].mxu0
      %v5216 = vadd.f32 %v5143, %v5215
      %v5217 = vpop.f32.mrb[0].mxu0
      %5218 = vmatprep.mubr.bf16.mxu0 0
      %5219 = vmatmul.mubr.bf16.gmra.mrb[0].mxu0 %v4277
      %v5220 = vpop.f32.mrb[0].mxu0
      %v5221 = vadd.f32 %v5148, %v5220
      %v5222 = vpop.f32.mrb[0].mxu0
      %v5223 = vpop.f32.mrb[0].mxu0
      %v5224 = vadd.f32 %v5151, %v5223
      %v5225 = vpop.f32.mrb[0].mxu0
      %5226 = vmatprep.mubr.bf16.mxu0 0
      %5227 = vmatmul.mubr.bf16.gmra.mrb[0].mxu0 %v4286
      %v5228 = vpop.f32.mrb[0].mxu0
      %v5229 = vadd.f32 %v5156, %v5228
      %v5230 = vpop.f32.mrb[0].mxu0
      %v5231 = vpop.f32.mrb[0].mxu0
      %v5232 = vadd.f32 %v5159, %v5231
      %v5233 = vpop.f32.mrb[0].mxu0
      %5234 = vdwg.mxu0
      %v5235 = vmax.f32 %v5197, 0.0
      %v5236 = vmax.f32 %v5200, 0.0
      %v5237 = vmax.f32 %v5205, 0.0
      %v5238 = vmax.f32 %v5208, 0.0
      %v5239 = vmax.f32 %v5213, 0.0
      %v5240 = vmax.f32 %v5216, 0.0
      %v5241 = vmax.f32 %v5221, 0.0
      %v5242 = vmax.f32 %v5224, 0.0
      %v5243 = vmax.f32 %v5229, 0.0
      %v5244 = vmax.f32 %v5232, 0.0
      %v5245 = vmul.f32 %v5235, %v2176
      %v5246 = vmul.f32 %v5236, %v2181
      %v5247 = vmul.f32 %v5237, %v2186
      %v5248 = vmul.f32 %v5238, %v2191
      %v5249 = vmul.f32 %v5239, %v2196
      %v5250 = vmul.f32 %v5240, %v2201
      %v5251 = vmul.f32 %v5241, %v2206
      %v5252 = vmul.f32 %v5242, %v2211
      %v5253 = vmul.f32 %v5243, %v2216
      %v5254 = vmul.f32 %v5244, %v2221
      %v5255 = vpack.c.bf16 %v5246, %v5245
      %v5256 = vpack.c.bf16 %v5248, %v5247
      %v5257 = vpack.c.bf16 %v5250, %v5249
      %v5258 = vpack.c.bf16 %v5252, %v5251
      %v5259 = vpack.c.bf16 %v5254, %v5253
      %5260 = vst [vmem:[#allocation2 + $0x8] sm:$0xff] %v5255
      %5261 = vst [vmem:[#allocation2 + $0x10] sm:$0xff] %v5256
      %5262 = vst [vmem:[#allocation2 + $0x18] sm:$0xff] %v5257
      %5263 = vst [vmem:[#allocation2 + $0x20] sm:$0xff] %v5258
      %5264 = vst [vmem:[#allocation2 + $0x28] sm:$0xff] %v5259
      %v5265 = vld [vmem:[#allocation2] sm:$0xfc]
      %v5266 = vld [vmem:[#allocation2 + $0x8] sm:$0xff]
      %v5267 = vld [vmem:[#allocation2 + $0x10] sm:$0xff]
      %v5268 = vld [vmem:[#allocation2 + $0x18] sm:$0xff]
      %v5269 = vld [vmem:[#allocation2 + $0x20] sm:$0xff]
      %v5270 = vld [vmem:[#allocation2 + $0x28] sm:$0x7]
      %v5272 = vshrl.u32 %v5265, 16
      %v5274 = vrot.slane %v5272, 2
      %v5275 = vshll.u32 %v5265, 16
      %v5277 = vrot.slane %v5275, 3
      %v5278 = vor.u32 %v5274, %v5277
      %v5280 = vshrl.u32 %v5266, 16
      %v5282 = vrot.slane %v5280, 2
      %v5283 = vshll.u32 %v5266, 16
      %v5285 = vrot.slane %v5283, 3
      %v5286 = vor.u32 %v5282, %v5285
      %v5287 = vsel %vm2249, %v5278, %v5286
      %v5289 = vshrl.u32 %v5267, 16
      %v5291 = vrot.slane %v5289, 2
      %v5292 = vshll.u32 %v5267, 16
      %v5294 = vrot.slane %v5292, 3
      %v5295 = vor.u32 %v5291, %v5294
      %v5296 = vsel %vm2249, %v5286, %v5295
      %v5298 = vshrl.u32 %v5268, 16
      %v5300 = vrot.slane %v5298, 2
      %v5301 = vshll.u32 %v5268, 16
      %v5303 = vrot.slane %v5301, 3
      %v5304 = vor.u32 %v5300, %v5303
      %v5305 = vsel %vm2249, %v5295, %v5304
      %v5307 = vshrl.u32 %v5269, 16
      %v5309 = vrot.slane %v5307, 2
      %v5310 = vshll.u32 %v5269, 16
      %v5312 = vrot.slane %v5310, 3
      %v5313 = vor.u32 %v5309, %v5312
      %v5314 = vsel %vm2249, %v5304, %v5313
      %v5316 = vshrl.u32 %v5270, 16
      %v5318 = vrot.slane %v5316, 2
      %v5319 = vshll.u32 %v5270, 16
      %v5321 = vrot.slane %v5319, 3
      %v5322 = vor.u32 %v5318, %v5321
      %v5323 = vsel %vm2249, %v5313, %v5322
      %5329 = vst [vmem:[#allocation3] sm:$0xff] %v5287
      %5330 = vst [vmem:[#allocation3 + $0x48] sm:$0xff] %v5296
      %5331 = vst [vmem:[#allocation3 + $0x90] sm:$0xff] %v5305
      %5332 = vst [vmem:[#allocation3 + $0xd8] sm:$0xff] %v5314
      %5333 = vst [vmem:[#allocation3 + $0x120] sm:$0xff] %v5323
      %v5334 = vld [vmem:[#allocation2] sm:$0xf8]
      %v5335 = vld [vmem:[#allocation2 + $0x8] sm:$0xff]
      %v5336 = vld [vmem:[#allocation2 + $0x10] sm:$0xff]
      %v5337 = vld [vmem:[#allocation2 + $0x18] sm:$0xff]
      %v5338 = vld [vmem:[#allocation2 + $0x20] sm:$0xff]
      %v5339 = vld [vmem:[#allocation2 + $0x28] sm:$0x7]
      %v5346 = vrot.slane %v5334, 3
      %v5347 = vrot.slane %v5335, 3
      %v5348 = vsel %vm2325, %v5346, %v5347
      %v5349 = vrot.slane %v5336, 3
      %v5350 = vsel %vm2325, %v5347, %v5349
      %v5351 = vrot.slane %v5337, 3
      %v5352 = vsel %vm2325, %v5349, %v5351
      %v5353 = vrot.slane %v5338, 3
      %v5354 = vsel %vm2325, %v5351, %v5353
      %v5355 = vrot.slane %v5339, 3
      %v5356 = vsel %vm2325, %v5353, %v5355
      %5362 = vst [vmem:[#allocation3 + $0x8] sm:$0xff] %v5348
      %5363 = vst [vmem:[#allocation3 + $0x50] sm:$0xff] %v5350
      %5364 = vst [vmem:[#allocation3 + $0x98] sm:$0xff] %v5352
      %5365 = vst [vmem:[#allocation3 + $0xe0] sm:$0xff] %v5354
      %5366 = vst [vmem:[#allocation3 + $0x128] sm:$0xff] %v5356
      %v5367 = vld [vmem:[#allocation2] sm:$0xf8]
      %v5368 = vld [vmem:[#allocation2 + $0x8] sm:$0xff]
      %v5369 = vld [vmem:[#allocation2 + $0x10] sm:$0xff]
      %v5370 = vld [vmem:[#allocation2 + $0x18] sm:$0xff]
      %v5371 = vld [vmem:[#allocation2 + $0x20] sm:$0xff]
      %v5372 = vld [vmem:[#allocation2 + $0x28] sm:$0xf]
      %v5374 = vshrl.u32 %v5367, 16
      %v5376 = vrot.slane %v5374, 3
      %v5377 = vshll.u32 %v5367, 16
      %v5379 = vrot.slane %v5377, 4
      %v5380 = vor.u32 %v5376, %v5379
      %v5382 = vshrl.u32 %v5368, 16
      %v5384 = vrot.slane %v5382, 3
      %v5385 = vshll.u32 %v5368, 16
      %v5387 = vrot.slane %v5385, 4
      %v5388 = vor.u32 %v5384, %v5387
      %v5389 = vsel %vm2353, %v5380, %v5388
      %v5391 = vshrl.u32 %v5369, 16
      %v5393 = vrot.slane %v5391, 3
      %v5394 = vshll.u32 %v5369, 16
      %v5396 = vrot.slane %v5394, 4
      %v5397 = vor.u32 %v5393, %v5396
      %v5398 = vsel %vm2353, %v5388, %v5397
      %v5400 = vshrl.u32 %v5370, 16
      %v5402 = vrot.slane %v5400, 3
      %v5403 = vshll.u32 %v5370, 16
      %v5405 = vrot.slane %v5403, 4
      %v5406 = vor.u32 %v5402, %v5405
      %v5407 = vsel %vm2353, %v5397, %v5406
      %v5409 = vshrl.u32 %v5371, 16
      %v5411 = vrot.slane %v5409, 3
      %v5412 = vshll.u32 %v5371, 16
      %v5414 = vrot.slane %v5412, 4
      %v5415 = vor.u32 %v5411, %v5414
      %v5416 = vsel %vm2353, %v5406, %v5415
      %v5418 = vshrl.u32 %v5372, 16
      %v5420 = vrot.slane %v5418, 3
      %v5421 = vshll.u32 %v5372, 16
      %v5423 = vrot.slane %v5421, 4
      %v5424 = vor.u32 %v5420, %v5423
      %v5425 = vsel %vm2353, %v5415, %v5424
      %5431 = vst [vmem:[#allocation3 + $0x10] sm:$0xff] %v5389
      %5432 = vst [vmem:[#allocation3 + $0x58] sm:$0xff] %v5398
      %5433 = vst [vmem:[#allocation3 + $0xa0] sm:$0xff] %v5407
      %5434 = vst [vmem:[#allocation3 + $0xe8] sm:$0xff] %v5416
      %5435 = vst [vmem:[#allocation3 + $0x130] sm:$0xff] %v5425
      %v5436 = vld [vmem:[#allocation2] sm:$0x80]
      %v5437 = vld [vmem:[#allocation2 + $0x8] sm:$0xff]
      %v5438 = vld [vmem:[#allocation2 + $0x10] sm:$0xff]
      %v5439 = vld [vmem:[#allocation2 + $0x18] sm:$0xff]
      %v5440 = vld [vmem:[#allocation2 + $0x20] sm:$0xff]
      %v5441 = vld [vmem:[#allocation2 + $0x28] sm:$0xff]
      %v5443 = vshrl.u32 %v5436, 16
      %v5445 = vrot.slane %v5443, 7
      %v5447 = vshrl.u32 %v5437, 16
      %v5449 = vrot.slane %v5447, 7
      %v5450 = vshll.u32 %v5437, 16
      %v5452 = vor.u32 %v5449, %v5450
      %v5453 = vsel %vm2423, %v5445, %v5452
      %v5455 = vshrl.u32 %v5438, 16
      %v5457 = vrot.slane %v5455, 7
      %v5458 = vshll.u32 %v5438, 16
      %v5460 = vor.u32 %v5457, %v5458
      %v5461 = vsel %vm2423, %v5449, %v5460
      %v5463 = vshrl.u32 %v5439, 16
      %v5465 = vrot.slane %v5463, 7
      %v5466 = vshll.u32 %v5439, 16
      %v5468 = vor.u32 %v5465, %v5466
      %v5469 = vsel %vm2423, %v5457, %v5468
      %v5471 = vshrl.u32 %v5440, 16
      %v5473 = vrot.slane %v5471, 7
      %v5474 = vshll.u32 %v5440, 16
      %v5476 = vor.u32 %v5473, %v5474
      %v5477 = vsel %vm2423, %v5465, %v5476
      %v5479 = vshrl.u32 %v5441, 16
      %v5481 = vrot.slane %v5479, 7
      %v5482 = vshll.u32 %v5441, 16
      %v5484 = vor.u32 %v5481, %v5482
      %v5485 = vsel %vm2423, %v5473, %v5484
      %5491 = vst [vmem:[#allocation3 + $0x18] sm:$0xff] %v5453
      %5492 = vst [vmem:[#allocation3 + $0x60] sm:$0xff] %v5461
      %5493 = vst [vmem:[#allocation3 + $0xa8] sm:$0xff] %v5469
      %5494 = vst [vmem:[#allocation3 + $0xf0] sm:$0xff] %v5477
      %5495 = vst [vmem:[#allocation3 + $0x138] sm:$0xff] %v5485
      %v5496 = vld [vmem:[#allocation2 + $0x8] sm:$0xff]
      %v5497 = vld [vmem:[#allocation2 + $0x10] sm:$0xff]
      %v5498 = vld [vmem:[#allocation2 + $0x18] sm:$0xff]
      %v5499 = vld [vmem:[#allocation2 + $0x20] sm:$0xff]
      %v5500 = vld [vmem:[#allocation2 + $0x28] sm:$0xff]
      %5501 = vst [vmem:[#allocation3 + $0x20] sm:$0xff] %v5496
      %5502 = vst [vmem:[#allocation3 + $0x68] sm:$0xff] %v5497
      %5503 = vst [vmem:[#allocation3 + $0xb0] sm:$0xff] %v5498
      %5504 = vst [vmem:[#allocation3 + $0xf8] sm:$0xff] %v5499
      %5505 = vst [vmem:[#allocation3 + $0x140] sm:$0xff] %v5500
      %v5506 = vld [vmem:[#allocation2 + $0x8] sm:$0xff]
      %v5507 = vld [vmem:[#allocation2 + $0x10] sm:$0xff]
      %v5508 = vld [vmem:[#allocation2 + $0x18] sm:$0xff]
      %v5509 = vld [vmem:[#allocation2 + $0x20] sm:$0xff]
      %v5510 = vld [vmem:[#allocation2 + $0x28] sm:$0xff]
      %v5511 = vld [vmem:[#allocation2 + $0x30] sm:$0x1]
      %v5513 = vshrl.u32 %v5506, 16
      %v5515 = vshll.u32 %v5506, 16
      %v5517 = vrot.slane %v5515, 1
      %v5518 = vor.u32 %v5513, %v5517
      %v5520 = vshll.u32 %v5507, 16
      %v5522 = vrot.slane %v5520, 1
      %v5523 = vsel %vm557, %v5518, %v5522
      %v5524 = vshrl.u32 %v5507, 16
      %v5526 = vor.u32 %v5524, %v5522
      %v5528 = vshll.u32 %v5508, 16
      %v5530 = vrot.slane %v5528, 1
      %v5531 = vsel %vm557, %v5526, %v5530
      %v5532 = vshrl.u32 %v5508, 16
      %v5534 = vor.u32 %v5532, %v5530
      %v5536 = vshll.u32 %v5509, 16
      %v5538 = vrot.slane %v5536, 1
      %v5539 = vsel %vm557, %v5534, %v5538
      %v5540 = vshrl.u32 %v5509, 16
      %v5542 = vor.u32 %v5540, %v5538
      %v5544 = vshll.u32 %v5510, 16
      %v5546 = vrot.slane %v5544, 1
      %v5547 = vsel %vm557, %v5542, %v5546
      %v5548 = vshrl.u32 %v5510, 16
      %v5550 = vor.u32 %v5548, %v5546
      %v5552 = vshll.u32 %v5511, 16
      %v5554 = vrot.slane %v5552, 1
      %v5555 = vsel %vm557, %v5550, %v5554
      %5561 = vst [vmem:[#allocation3 + $0x28] sm:$0xff] %v5523
      %5562 = vst [vmem:[#allocation3 + $0x70] sm:$0xff] %v5531
      %5563 = vst [vmem:[#allocation3 + $0xb8] sm:$0xff] %v5539
      %5564 = vst [vmem:[#allocation3 + $0x100] sm:$0xff] %v5547
      %5565 = vst [vmem:[#allocation3 + $0x148] sm:$0xff] %v5555
      %v5566 = vld [vmem:[#allocation2 + $0x8] sm:$0xf0]
      %v5567 = vld [vmem:[#allocation2 + $0x10] sm:$0xff]
      %v5568 = vld [vmem:[#allocation2 + $0x18] sm:$0xff]
      %v5569 = vld [vmem:[#allocation2 + $0x20] sm:$0xff]
      %v5570 = vld [vmem:[#allocation2 + $0x28] sm:$0xff]
      %v5571 = vld [vmem:[#allocation2 + $0x30] sm:$0x1f]
      %v5573 = vshrl.u32 %v5566, 16
      %v5575 = vrot.slane %v5573, 4
      %v5576 = vshll.u32 %v5566, 16
      %v5578 = vrot.slane %v5576, 5
      %v5579 = vor.u32 %v5575, %v5578
      %v5581 = vshrl.u32 %v5567, 16
      %v5583 = vrot.slane %v5581, 4
      %v5584 = vshll.u32 %v5567, 16
      %v5586 = vrot.slane %v5584, 5
      %v5587 = vor.u32 %v5583, %v5586
      %v5588 = vsel %vm2554, %v5579, %v5587
      %v5590 = vshrl.u32 %v5568, 16
      %v5592 = vrot.slane %v5590, 4
      %v5593 = vshll.u32 %v5568, 16
      %v5595 = vrot.slane %v5593, 5
      %v5596 = vor.u32 %v5592, %v5595
      %v5597 = vsel %vm2554, %v5587, %v5596
      %v5599 = vshrl.u32 %v5569, 16
      %v5601 = vrot.slane %v5599, 4
      %v5602 = vshll.u32 %v5569, 16
      %v5604 = vrot.slane %v5602, 5
      %v5605 = vor.u32 %v5601, %v5604
      %v5606 = vsel %vm2554, %v5596, %v5605
      %v5608 = vshrl.u32 %v5570, 16
      %v5610 = vrot.slane %v5608, 4
      %v5611 = vshll.u32 %v5570, 16
      %v5613 = vrot.slane %v5611, 5
      %v5614 = vor.u32 %v5610, %v5613
      %v5615 = vsel %vm2554, %v5605, %v5614
      %v5617 = vshrl.u32 %v5571, 16
      %v5619 = vrot.slane %v5617, 4
      %v5620 = vshll.u32 %v5571, 16
      %v5622 = vrot.slane %v5620, 5
      %v5623 = vor.u32 %v5619, %v5622
      %v5624 = vsel %vm2554, %v5614, %v5623
      %5630 = vst [vmem:[#allocation3 + $0x30] sm:$0xff] %v5588
      %5631 = vst [vmem:[#allocation3 + $0x78] sm:$0xff] %v5597
      %5632 = vst [vmem:[#allocation3 + $0xc0] sm:$0xff] %v5606
      %5633 = vst [vmem:[#allocation3 + $0x108] sm:$0xff] %v5615
      %5634 = vst [vmem:[#allocation3 + $0x150] sm:$0xff] %v5624
      %v5635 = vld [vmem:[#allocation2 + $0x8] sm:$0xe0]
      %v5636 = vld [vmem:[#allocation2 + $0x10] sm:$0xff]
      %v5637 = vld [vmem:[#allocation2 + $0x18] sm:$0xff]
      %v5638 = vld [vmem:[#allocation2 + $0x20] sm:$0xff]
      %v5639 = vld [vmem:[#allocation2 + $0x28] sm:$0xff]
      %v5640 = vld [vmem:[#allocation2 + $0x30] sm:$0x1f]
      %v5647 = vrot.slane %v5635, 5
      %v5648 = vrot.slane %v5636, 5
      %v5649 = vsel %vm2630, %v5647, %v5648
      %v5650 = vrot.slane %v5637, 5
      %v5651 = vsel %vm2630, %v5648, %v5650
      %v5652 = vrot.slane %v5638, 5
      %v5653 = vsel %vm2630, %v5650, %v5652
      %v5654 = vrot.slane %v5639, 5
      %v5655 = vsel %vm2630, %v5652, %v5654
      %v5656 = vrot.slane %v5640, 5
      %v5657 = vsel %vm2630, %v5654, %v5656
      %5663 = vst [vmem:[#allocation3 + $0x38] sm:$0xff] %v5649
      %5664 = vst [vmem:[#allocation3 + $0x80] sm:$0xff] %v5651
      %5665 = vst [vmem:[#allocation3 + $0xc8] sm:$0xff] %v5653
      %5666 = vst [vmem:[#allocation3 + $0x110] sm:$0xff] %v5655
      %5667 = vst [vmem:[#allocation3 + $0x158] sm:$0xff] %v5657
      %v5668 = vld [vmem:[#allocation2 + $0x8] sm:$0xe0]
      %v5669 = vld [vmem:[#allocation2 + $0x10] sm:$0xff]
      %v5670 = vld [vmem:[#allocation2 + $0x18] sm:$0xff]
      %v5671 = vld [vmem:[#allocation2 + $0x20] sm:$0xff]
      %v5672 = vld [vmem:[#allocation2 + $0x28] sm:$0xff]
      %v5673 = vld [vmem:[#allocation2 + $0x30] sm:$0x3f]
      %v5675 = vshrl.u32 %v5668, 16
      %v5677 = vrot.slane %v5675, 5
      %v5678 = vshll.u32 %v5668, 16
      %v5680 = vrot.slane %v5678, 6
      %v5681 = vor.u32 %v5677, %v5680
      %v5683 = vshrl.u32 %v5669, 16
      %v5685 = vrot.slane %v5683, 5
      %v5686 = vshll.u32 %v5669, 16
      %v5688 = vrot.slane %v5686, 6
      %v5689 = vor.u32 %v5685, %v5688
      %v5690 = vsel %vm2658, %v5681, %v5689
      %v5692 = vshrl.u32 %v5670, 16
      %v5694 = vrot.slane %v5692, 5
      %v5695 = vshll.u32 %v5670, 16
      %v5697 = vrot.slane %v5695, 6
      %v5698 = vor.u32 %v5694, %v5697
      %v5699 = vsel %vm2658, %v5689, %v5698
      %v5701 = vshrl.u32 %v5671, 16
      %v5703 = vrot.slane %v5701, 5
      %v5704 = vshll.u32 %v5671, 16
      %v5706 = vrot.slane %v5704, 6
      %v5707 = vor.u32 %v5703, %v5706
      %v5708 = vsel %vm2658, %v5698, %v5707
      %v5710 = vshrl.u32 %v5672, 16
      %v5712 = vrot.slane %v5710, 5
      %v5713 = vshll.u32 %v5672, 16
      %v5715 = vrot.slane %v5713, 6
      %v5716 = vor.u32 %v5712, %v5715
      %v5717 = vsel %vm2658, %v5707, %v5716
      %v5719 = vshrl.u32 %v5673, 16
      %v5721 = vrot.slane %v5719, 5
      %v5722 = vshll.u32 %v5673, 16
      %v5724 = vrot.slane %v5722, 6
      %v5725 = vor.u32 %v5721, %v5724
      %v5726 = vsel %vm2658, %v5716, %v5725
      %5732 = vst [vmem:[#allocation3 + $0x40] sm:$0xff] %v5690
      %5733 = vst [vmem:[#allocation3 + $0x88] sm:$0xff] %v5699
      %5734 = vst [vmem:[#allocation3 + $0xd0] sm:$0xff] %v5708
      %5735 = vst [vmem:[#allocation3 + $0x118] sm:$0xff] %v5717
      %5736 = vst [vmem:[#allocation3 + $0x160] sm:$0xff] %v5726
      %v5737 = vld [vmem:[#allocation3] sm:$0xff]
      %v5738 = vld [vmem:[#allocation3 + $0x8] sm:$0xff]
      %v5739 = vld [vmem:[#allocation3 + $0x10] sm:$0xff]
      %v5740 = vld [vmem:[#allocation3 + $0x18] sm:$0xff]
      %v5741 = vld [vmem:[#allocation3 + $0x20] sm:$0xff]
      %v5742 = vld [vmem:[#allocation3 + $0x28] sm:$0xff]
      %v5743 = vld [vmem:[#allocation3 + $0x30] sm:$0xff]
      %v5744 = vld [vmem:[#allocation3 + $0x38] sm:$0xff]
      %v5745 = vld [vmem:[#allocation3 + $0x40] sm:$0xff]
      %v5746 = vld [vmem:[#allocation3 + $0x48] sm:$0xff]
      %v5747 = vld [vmem:[#allocation3 + $0x50] sm:$0xff]
      %v5748 = vld [vmem:[#allocation3 + $0x58] sm:$0xff]
      %v5749 = vld [vmem:[#allocation3 + $0x60] sm:$0xff]
      %v5750 = vld [vmem:[#allocation3 + $0x68] sm:$0xff]
      %v5751 = vld [vmem:[#allocation3 + $0x70] sm:$0xff]
      %v5752 = vld [vmem:[#allocation3 + $0x78] sm:$0xff]
      %v5753 = vld [vmem:[#allocation3 + $0x80] sm:$0xff]
      %v5754 = vld [vmem:[#allocation3 + $0x88] sm:$0xff]
      %v5755 = vld [vmem:[#allocation3 + $0x90] sm:$0xff]
      %v5756 = vld [vmem:[#allocation3 + $0x98] sm:$0xff]
      %v5757 = vld [vmem:[#allocation3 + $0xa0] sm:$0xff]
      %v5758 = vld [vmem:[#allocation3 + $0xa8] sm:$0xff]
      %v5759 = vld [vmem:[#allocation3 + $0xb0] sm:$0xff]
      %v5760 = vld [vmem:[#allocation3 + $0xb8] sm:$0xff]
      %v5761 = vld [vmem:[#allocation3 + $0xc0] sm:$0xff]
      %v5762 = vld [vmem:[#allocation3 + $0xc8] sm:$0xff]
      %v5763 = vld [vmem:[#allocation3 + $0xd0] sm:$0xff]
      %v5764 = vld [vmem:[#allocation3 + $0xd8] sm:$0xff]
      %v5765 = vld [vmem:[#allocation3 + $0xe0] sm:$0xff]
      %v5766 = vld [vmem:[#allocation3 + $0xe8] sm:$0xff]
      %v5767 = vld [vmem:[#allocation3 + $0xf0] sm:$0xff]
      %v5768 = vld [vmem:[#allocation3 + $0xf8] sm:$0xff]
      %v5769 = vld [vmem:[#allocation3 + $0x100] sm:$0xff]
      %v5770 = vld [vmem:[#allocation3 + $0x108] sm:$0xff]
      %v5771 = vld [vmem:[#allocation3 + $0x110] sm:$0xff]
      %v5772 = vld [vmem:[#allocation3 + $0x118] sm:$0xff]
      %v5773 = vld [vmem:[#allocation3 + $0x120] sm:$0xff]
      %v5774 = vld [vmem:[#allocation3 + $0x128] sm:$0xff]
      %v5775 = vld [vmem:[#allocation3 + $0x130] sm:$0xff]
      %v5776 = vld [vmem:[#allocation3 + $0x138] sm:$0xff]
      %v5777 = vld [vmem:[#allocation3 + $0x140] sm:$0xff]
      %v5778 = vld [vmem:[#allocation3 + $0x148] sm:$0xff]
      %v5779 = vld [vmem:[#allocation3 + $0x150] sm:$0xff]
      %v5780 = vld [vmem:[#allocation3 + $0x158] sm:$0xff]
      %v5781 = vld [vmem:[#allocation3 + $0x160] sm:$0xff]
      %v5782 = vld [vmem:[%s10] sm:$0xf]
      %v5783 = vld [vmem:[%s10 + $0x4] sm:$0xf]
      %v5784 = vld [vmem:[%s10 + $0x8] sm:$0xf]
      %v5785 = vld [vmem:[%s10 + $0xc] sm:$0xf]
      %v5786 = vld [vmem:[%s10 + $0x10] sm:$0xf]
      %v5787 = vld [vmem:[%s10 + $0x14] sm:$0xf]
      %v5788 = vld [vmem:[%s10 + $0x18] sm:$0xf]
      %v5789 = vld [vmem:[%s10 + $0x1c] sm:$0xf]
      %v5790 = vld [vmem:[%s10 + $0x20] sm:$0xf]
      %v5791 = vld [vmem:[%s10 + $0x24] sm:$0xf]
      %v5792 = vld [vmem:[%s10 + $0x28] sm:$0xf]
      %v5793 = vld [vmem:[%s10 + $0x2c] sm:$0xf]
      %v5794 = vld [vmem:[%s10 + $0x30] sm:$0xf]
      %v5795 = vld [vmem:[%s10 + $0x34] sm:$0xf]
      %v5796 = vld [vmem:[%s10 + $0x38] sm:$0xf]
      %v5797 = vld [vmem:[%s10 + $0x3c] sm:$0xf]
      %v5798 = vld [vmem:[%s10 + $0x40] sm:$0xf]
      %v5799 = vld [vmem:[%s10 + $0x44] sm:$0xf]
      %v5800 = vld [vmem:[%s10 + $0x48] sm:$0xf]
      %v5801 = vld [vmem:[%s10 + $0x4c] sm:$0xf]
      %v5802 = vld [vmem:[%s10 + $0x50] sm:$0xf]
      %v5803 = vld [vmem:[%s10 + $0x54] sm:$0xf]
      %v5804 = vld [vmem:[%s10 + $0x58] sm:$0xf]
      %v5805 = vld [vmem:[%s10 + $0x5c] sm:$0xf]
      %v5806 = vld [vmem:[%s10 + $0x60] sm:$0xf]
      %v5807 = vld [vmem:[%s10 + $0x64] sm:$0xf]
      %v5808 = vld [vmem:[%s10 + $0x68] sm:$0xf]
      %v5809 = vld [vmem:[%s10 + $0x6c] sm:$0xf]
      %v5810 = vld [vmem:[%s10 + $0x70] sm:$0xf]
      %v5811 = vld [vmem:[%s10 + $0x74] sm:$0xf]
      %v5812 = vld [vmem:[%s10 + $0x78] sm:$0xf]
      %v5813 = vld [vmem:[%s10 + $0x7c] sm:$0xf]
      %v5814 = vld [vmem:[%s10 + $0x80] sm:$0xf]
      %v5815 = vld [vmem:[%s10 + $0x84] sm:$0xf]
      %v5816 = vld [vmem:[%s10 + $0x88] sm:$0xf]
      %v5817 = vld [vmem:[%s10 + $0x8c] sm:$0xf]
      %v5818 = vld [vmem:[%s10 + $0x90] sm:$0xf]
      %v5819 = vld [vmem:[%s10 + $0x94] sm:$0xf]
      %v5820 = vld [vmem:[%s10 + $0x98] sm:$0xf]
      %v5821 = vld [vmem:[%s10 + $0x9c] sm:$0xf]
      %v5822 = vld [vmem:[%s10 + $0xa0] sm:$0xf]
      %v5823 = vld [vmem:[%s10 + $0xa4] sm:$0xf]
      %v5824 = vld [vmem:[%s10 + $0xa8] sm:$0xf]
      %v5825 = vld [vmem:[%s10 + $0xac] sm:$0xf]
      %v5826 = vld [vmem:[%s10 + $0xb0] sm:$0xf]
      %v5827 = vld [vmem:[%s10 + $0xb4] sm:$0xf]
      %v5828 = vld [vmem:[%s10 + $0xb8] sm:$0xf]
      %v5829 = vld [vmem:[%s10 + $0xbc] sm:$0xf]
      %v5830 = vld [vmem:[%s10 + $0xc0] sm:$0xf]
      %v5831 = vld [vmem:[%s10 + $0xc4] sm:$0xf]
      %v5832 = vld [vmem:[%s10 + $0xc8] sm:$0xf]
      %v5833 = vld [vmem:[%s10 + $0xcc] sm:$0xf]
      %v5834 = vld [vmem:[%s10 + $0xd0] sm:$0xf]
      %v5835 = vld [vmem:[%s10 + $0xd4] sm:$0xf]
      %v5836 = vld [vmem:[%s10 + $0xd8] sm:$0xf]
      %v5837 = vld [vmem:[%s10 + $0xdc] sm:$0xf]
      %v5838 = vld [vmem:[%s10 + $0xe0] sm:$0xf]
      %v5839 = vld [vmem:[%s10 + $0xe4] sm:$0xf]
      %v5840 = vld [vmem:[%s10 + $0xe8] sm:$0xf]
      %v5841 = vld [vmem:[%s10 + $0xec] sm:$0xf]
      %v5842 = vld [vmem:[%s10 + $0xf0] sm:$0xf]
      %v5843 = vld [vmem:[%s10 + $0xf4] sm:$0xf]
      %v5844 = vld [vmem:[%s10 + $0xf8] sm:$0xf]
      %v5845 = vld [vmem:[%s10 + $0xfc] sm:$0xf]
      %v5846 = vld [vmem:[%s10 + $0x100] sm:$0xf]
      %v5847 = vld [vmem:[%s10 + $0x104] sm:$0xf]
      %v5848 = vld [vmem:[%s10 + $0x108] sm:$0xf]
      %v5849 = vld [vmem:[%s10 + $0x10c] sm:$0xf]
      %v5850 = vld [vmem:[%s10 + $0x110] sm:$0xf]
      %v5851 = vld [vmem:[%s10 + $0x114] sm:$0xf]
      %v5852 = vld [vmem:[%s10 + $0x118] sm:$0xf]
      %v5853 = vld [vmem:[%s10 + $0x11c] sm:$0xf]
      %v5854 = vld [vmem:[%s10 + $0x120] sm:$0xf]
      %v5855 = vld [vmem:[%s10 + $0x124] sm:$0xf]
      %v5856 = vld [vmem:[%s10 + $0x128] sm:$0xf]
      %v5857 = vld [vmem:[%s10 + $0x12c] sm:$0xf]
      %v5858 = vld [vmem:[%s10 + $0x130] sm:$0xf]
      %v5859 = vld [vmem:[%s10 + $0x134] sm:$0xf]
      %v5860 = vld [vmem:[%s10 + $0x138] sm:$0xf]
      %v5861 = vld [vmem:[%s10 + $0x13c] sm:$0xf]
      %v5862 = vld [vmem:[%s10 + $0x140] sm:$0xf]
      %v5863 = vld [vmem:[%s10 + $0x144] sm:$0xf]
      %v5864 = vld [vmem:[%s10 + $0x148] sm:$0xf]
      %v5865 = vld [vmem:[%s10 + $0x14c] sm:$0xf]
      %v5866 = vld [vmem:[%s10 + $0x150] sm:$0xf]
      %v5867 = vld [vmem:[%s10 + $0x154] sm:$0xf]
      %v5868 = vld [vmem:[%s10 + $0x158] sm:$0xf]
      %v5869 = vld [vmem:[%s10 + $0x15c] sm:$0xf]
      %v5870 = vld [vmem:[%s10 + $0x160] sm:$0xf]
      %v5871 = vld [vmem:[%s10 + $0x164] sm:$0xf]
      %v5872 = vld [vmem:[%s10 + $0x168] sm:$0xf]
      %v5873 = vld [vmem:[%s10 + $0x16c] sm:$0xf]
      %v5874 = vld [vmem:[%s10 + $0x170] sm:$0xf]
      %v5875 = vld [vmem:[%s10 + $0x174] sm:$0xf]
      %v5876 = vld [vmem:[%s10 + $0x178] sm:$0xf]
      %v5877 = vld [vmem:[%s10 + $0x17c] sm:$0xf]
      %v5878 = vld [vmem:[%s10 + $0x180] sm:$0xf]
      %v5879 = vld [vmem:[%s10 + $0x184] sm:$0xf]
      %v5880 = vld [vmem:[%s10 + $0x188] sm:$0xf]
      %v5881 = vld [vmem:[%s10 + $0x18c] sm:$0xf]
      %v5882 = vld [vmem:[%s10 + $0x190] sm:$0xf]
      %v5883 = vld [vmem:[%s10 + $0x194] sm:$0xf]
      %v5884 = vld [vmem:[%s10 + $0x198] sm:$0xf]
      %v5885 = vld [vmem:[%s10 + $0x19c] sm:$0xf]
      %v5886 = vld [vmem:[%s10 + $0x1a0] sm:$0xf]
      %v5887 = vld [vmem:[%s10 + $0x1a4] sm:$0xf]
      %v5888 = vld [vmem:[%s10 + $0x1a8] sm:$0xf]
      %v5889 = vld [vmem:[%s10 + $0x1ac] sm:$0xf]
      %v5890 = vld [vmem:[%s10 + $0x1b0] sm:$0xf]
      %v5891 = vld [vmem:[%s10 + $0x1b4] sm:$0xf]
      %v5892 = vld [vmem:[%s10 + $0x1b8] sm:$0xf]
      %v5893 = vld [vmem:[%s10 + $0x1bc] sm:$0xf]
      %v5894 = vld [vmem:[%s10 + $0x1c0] sm:$0xf]
      %v5895 = vld [vmem:[%s10 + $0x1c4] sm:$0xf]
      %v5896 = vld [vmem:[%s10 + $0x1c8] sm:$0xf]
      %v5897 = vld [vmem:[%s10 + $0x1cc] sm:$0xf]
      %v5898 = vld [vmem:[%s10 + $0x1d0] sm:$0xf]
      %v5899 = vld [vmem:[%s10 + $0x1d4] sm:$0xf]
      %v5900 = vld [vmem:[%s10 + $0x1d8] sm:$0xf]
      %v5901 = vld [vmem:[%s10 + $0x1dc] sm:$0xf]
      %v5902 = vld [vmem:[%s10 + $0x1e0] sm:$0xf]
      %v5903 = vld [vmem:[%s10 + $0x1e4] sm:$0xf]
      %v5904 = vld [vmem:[%s10 + $0x1e8] sm:$0xf]
      %v5905 = vld [vmem:[%s10 + $0x1ec] sm:$0xf]
      %v5906 = vld [vmem:[%s10 + $0x1f0] sm:$0xf]
      %v5907 = vld [vmem:[%s10 + $0x1f4] sm:$0xf]
      %v5908 = vld [vmem:[%s10 + $0x1f8] sm:$0xf]
      %v5909 = vld [vmem:[%s10 + $0x1fc] sm:$0xf]
      %v5910 = vld [vmem:[%s10 + $0x200] sm:$0xf]
      %v5911 = vld [vmem:[%s10 + $0x204] sm:$0xf]
      %v5912 = vld [vmem:[%s10 + $0x208] sm:$0xf]
      %v5913 = vld [vmem:[%s10 + $0x20c] sm:$0xf]
      %v5914 = vld [vmem:[%s10 + $0x210] sm:$0xf]
      %v5915 = vld [vmem:[%s10 + $0x214] sm:$0xf]
      %v5916 = vld [vmem:[%s10 + $0x218] sm:$0xf]
      %v5917 = vld [vmem:[%s10 + $0x21c] sm:$0xf]
      %v5918 = vld [vmem:[%s10 + $0x220] sm:$0xf]
      %v5919 = vld [vmem:[%s10 + $0x224] sm:$0xf]
      %v5920 = vld [vmem:[%s10 + $0x228] sm:$0xf]
      %v5921 = vld [vmem:[%s10 + $0x22c] sm:$0xf]
      %v5922 = vld [vmem:[%s10 + $0x230] sm:$0xf]
      %v5923 = vld [vmem:[%s10 + $0x234] sm:$0xf]
      %v5924 = vld [vmem:[%s10 + $0x238] sm:$0xf]
      %v5925 = vld [vmem:[%s10 + $0x23c] sm:$0xf]
      %v5926 = vld [vmem:[%s11] sm:$0x1]
      %v5928 = vlaneseq
      %v5929 = vshrl.u32 %v5928, 7
      %v5930 = vsub.s32 0, %v5929
      %v5931 = vrot.slane %v5926, %v5930
      %v6077 = vunpack.c.l.b16 %v5782
      %v6078 = vunpack.c.l.b16 %v5783
      %v6079 = vunpack.c.l.b16 %v5784
      %v6080 = vunpack.c.l.b16 %v5785
      %v6081 = vunpack.c.l.b16 %v5786
      %v6082 = vunpack.c.l.b16 %v5787
      %v6083 = vunpack.c.l.b16 %v5788
      %v6084 = vunpack.c.l.b16 %v5789
      %v6085 = vunpack.c.l.b16 %v5790
      %v6086 = vunpack.c.l.b16 %v5791
      %v6087 = vunpack.c.l.b16 %v5792
      %v6088 = vunpack.c.l.b16 %v5793
      %v6089 = vunpack.c.l.b16 %v5794
      %v6090 = vunpack.c.l.b16 %v5795
      %v6091 = vunpack.c.l.b16 %v5796
      %v6092 = vunpack.c.l.b16 %v5797
      %v6093 = vunpack.c.l.b16 %v5798
      %v6094 = vunpack.c.l.b16 %v5799
      %v6095 = vunpack.c.l.b16 %v5800
      %v6096 = vunpack.c.l.b16 %v5801
      %v6097 = vunpack.c.l.b16 %v5802
      %v6098 = vunpack.c.l.b16 %v5803
      %v6099 = vunpack.c.l.b16 %v5804
      %v6100 = vunpack.c.l.b16 %v5805
      %v6101 = vunpack.c.l.b16 %v5806
      %v6102 = vunpack.c.l.b16 %v5807
      %v6103 = vunpack.c.l.b16 %v5808
      %v6104 = vunpack.c.l.b16 %v5809
      %v6105 = vunpack.c.l.b16 %v5810
      %v6106 = vunpack.c.l.b16 %v5811
      %v6107 = vunpack.c.l.b16 %v5812
      %v6108 = vunpack.c.l.b16 %v5813
      %v6109 = vunpack.c.l.b16 %v5814
      %v6110 = vunpack.c.l.b16 %v5815
      %v6111 = vunpack.c.l.b16 %v5816
      %v6112 = vunpack.c.l.b16 %v5817
      %v6113 = vunpack.c.l.b16 %v5818
      %v6114 = vunpack.c.l.b16 %v5819
      %v6115 = vunpack.c.l.b16 %v5820
      %v6116 = vunpack.c.l.b16 %v5821
      %v6117 = vunpack.c.l.b16 %v5822
      %v6118 = vunpack.c.l.b16 %v5823
      %v6119 = vunpack.c.l.b16 %v5824
      %v6120 = vunpack.c.l.b16 %v5825
      %v6121 = vunpack.c.l.b16 %v5826
      %v6122 = vunpack.c.l.b16 %v5827
      %v6123 = vunpack.c.l.b16 %v5828
      %v6124 = vunpack.c.l.b16 %v5829
      %v6125 = vunpack.c.l.b16 %v5830
      %v6126 = vunpack.c.l.b16 %v5831
      %v6127 = vunpack.c.l.b16 %v5832
      %v6128 = vunpack.c.l.b16 %v5833
      %v6129 = vunpack.c.l.b16 %v5834
      %v6130 = vunpack.c.l.b16 %v5835
      %v6131 = vunpack.c.l.b16 %v5836
      %v6132 = vunpack.c.l.b16 %v5837
      %v6133 = vunpack.c.l.b16 %v5838
      %v6134 = vunpack.c.l.b16 %v5839
      %v6135 = vunpack.c.l.b16 %v5840
      %v6136 = vunpack.c.l.b16 %v5841
      %v6137 = vunpack.c.l.b16 %v5842
      %v6138 = vunpack.c.l.b16 %v5843
      %v6139 = vunpack.c.l.b16 %v5844
      %v6140 = vunpack.c.l.b16 %v5845
      %v6141 = vunpack.c.l.b16 %v5846
      %v6142 = vunpack.c.l.b16 %v5847
      %v6143 = vunpack.c.l.b16 %v5848
      %v6144 = vunpack.c.l.b16 %v5849
      %v6145 = vunpack.c.l.b16 %v5850
      %v6146 = vunpack.c.l.b16 %v5851
      %v6147 = vunpack.c.l.b16 %v5852
      %v6148 = vunpack.c.l.b16 %v5853
      %v6149 = vunpack.c.l.b16 %v5854
      %v6150 = vunpack.c.l.b16 %v5855
      %v6151 = vunpack.c.l.b16 %v5856
      %v6152 = vunpack.c.l.b16 %v5857
      %v6153 = vunpack.c.l.b16 %v5858
      %v6154 = vunpack.c.l.b16 %v5859
      %v6155 = vunpack.c.l.b16 %v5860
      %v6156 = vunpack.c.l.b16 %v5861
      %v6157 = vunpack.c.l.b16 %v5862
      %v6158 = vunpack.c.l.b16 %v5863
      %v6159 = vunpack.c.l.b16 %v5864
      %v6160 = vunpack.c.l.b16 %v5865
      %v6161 = vunpack.c.l.b16 %v5866
      %v6162 = vunpack.c.l.b16 %v5867
      %v6163 = vunpack.c.l.b16 %v5868
      %v6164 = vunpack.c.l.b16 %v5869
      %v6165 = vunpack.c.l.b16 %v5870
      %v6166 = vunpack.c.l.b16 %v5871
      %v6167 = vunpack.c.l.b16 %v5872
      %v6168 = vunpack.c.l.b16 %v5873
      %v6169 = vunpack.c.l.b16 %v5874
      %v6170 = vunpack.c.l.b16 %v5875
      %v6171 = vunpack.c.l.b16 %v5876
      %v6172 = vunpack.c.l.b16 %v5877
      %v6173 = vunpack.c.l.b16 %v5878
      %v6174 = vunpack.c.l.b16 %v5879
      %v6175 = vunpack.c.l.b16 %v5880
      %v6176 = vunpack.c.l.b16 %v5881
      %v6177 = vunpack.c.l.b16 %v5882
      %v6178 = vunpack.c.l.b16 %v5883
      %v6179 = vunpack.c.l.b16 %v5884
      %v6180 = vunpack.c.l.b16 %v5885
      %v6181 = vunpack.c.l.b16 %v5886
      %v6182 = vunpack.c.l.b16 %v5887
      %v6183 = vunpack.c.l.b16 %v5888
      %v6184 = vunpack.c.l.b16 %v5889
      %v6185 = vunpack.c.l.b16 %v5890
      %v6186 = vunpack.c.l.b16 %v5891
      %v6187 = vunpack.c.l.b16 %v5892
      %v6188 = vunpack.c.l.b16 %v5893
      %v6189 = vunpack.c.l.b16 %v5894
      %v6190 = vunpack.c.l.b16 %v5895
      %v6191 = vunpack.c.l.b16 %v5896
      %v6192 = vunpack.c.l.b16 %v5897
      %v6193 = vunpack.c.l.b16 %v5898
      %v6194 = vunpack.c.l.b16 %v5899
      %v6195 = vunpack.c.l.b16 %v5900
      %v6196 = vunpack.c.l.b16 %v5901
      %v6197 = vunpack.c.l.b16 %v5902
      %v6198 = vunpack.c.l.b16 %v5903
      %v6199 = vunpack.c.l.b16 %v5904
      %v6200 = vunpack.c.l.b16 %v5905
      %v6201 = vunpack.c.l.b16 %v5906
      %v6202 = vunpack.c.l.b16 %v5907
      %v6203 = vunpack.c.l.b16 %v5908
      %v6204 = vunpack.c.l.b16 %v5909
      %v6205 = vunpack.c.l.b16 %v5910
      %v6206 = vunpack.c.l.b16 %v5911
      %v6207 = vunpack.c.l.b16 %v5912
      %v6208 = vunpack.c.l.b16 %v5913
      %v6209 = vunpack.c.l.b16 %v5914
      %v6210 = vunpack.c.l.b16 %v5915
      %v6211 = vunpack.c.l.b16 %v5916
      %v6212 = vunpack.c.l.b16 %v5917
      %v6213 = vunpack.c.l.b16 %v5918
      %v6214 = vunpack.c.l.b16 %v5919
      %v6215 = vunpack.c.l.b16 %v5920
      %v6216 = vunpack.c.l.b16 %v5921
      %v6217 = vunpack.c.l.b16 %v5922
      %v6218 = vunpack.c.l.b16 %v5923
      %v6219 = vunpack.c.l.b16 %v5924
      %v6220 = vunpack.c.l.b16 %v5925
      %v6221 = vpack.c.b16 %v6078, %v6077
      %v6222 = vpack.c.b16 %v6080, %v6079
      %v6223 = vpack.c.b16 %v6082, %v6081
      %v6224 = vpack.c.b16 %v6084, %v6083
      %v6225 = vpack.c.b16 %v6086, %v6085
      %v6226 = vpack.c.b16 %v6088, %v6087
      %v6227 = vpack.c.b16 %v6090, %v6089
      %v6228 = vpack.c.b16 %v6092, %v6091
      %v6229 = vpack.c.b16 %v6094, %v6093
      %v6230 = vpack.c.b16 %v6096, %v6095
      %v6231 = vpack.c.b16 %v6098, %v6097
      %v6232 = vpack.c.b16 %v6100, %v6099
      %v6233 = vpack.c.b16 %v6102, %v6101
      %v6234 = vpack.c.b16 %v6104, %v6103
      %v6235 = vpack.c.b16 %v6106, %v6105
      %v6236 = vpack.c.b16 %v6108, %v6107
      %v6237 = vpack.c.b16 %v6110, %v6109
      %v6238 = vpack.c.b16 %v6112, %v6111
      %v6239 = vpack.c.b16 %v6114, %v6113
      %v6240 = vpack.c.b16 %v6116, %v6115
      %v6241 = vpack.c.b16 %v6118, %v6117
      %v6242 = vpack.c.b16 %v6120, %v6119
      %v6243 = vpack.c.b16 %v6122, %v6121
      %v6244 = vpack.c.b16 %v6124, %v6123
      %v6245 = vpack.c.b16 %v6126, %v6125
      %v6246 = vpack.c.b16 %v6128, %v6127
      %v6247 = vpack.c.b16 %v6130, %v6129
      %v6248 = vpack.c.b16 %v6132, %v6131
      %v6249 = vpack.c.b16 %v6134, %v6133
      %v6250 = vpack.c.b16 %v6136, %v6135
      %v6251 = vpack.c.b16 %v6138, %v6137
      %v6252 = vpack.c.b16 %v6140, %v6139
      %v6253 = vpack.c.b16 %v6142, %v6141
      %v6254 = vpack.c.b16 %v6144, %v6143
      %v6255 = vpack.c.b16 %v6146, %v6145
      %v6256 = vpack.c.b16 %v6148, %v6147
      %v6257 = vpack.c.b16 %v6150, %v6149
      %v6258 = vpack.c.b16 %v6152, %v6151
      %v6259 = vpack.c.b16 %v6154, %v6153
      %v6260 = vpack.c.b16 %v6156, %v6155
      %v6261 = vpack.c.b16 %v6158, %v6157
      %v6262 = vpack.c.b16 %v6160, %v6159
      %v6263 = vpack.c.b16 %v6162, %v6161
      %v6264 = vpack.c.b16 %v6164, %v6163
      %v6265 = vpack.c.b16 %v6166, %v6165
      %v6266 = vpack.c.b16 %v6168, %v6167
      %v6267 = vpack.c.b16 %v6170, %v6169
      %v6268 = vpack.c.b16 %v6172, %v6171
      %v6269 = vpack.c.b16 %v6174, %v6173
      %v6270 = vpack.c.b16 %v6176, %v6175
      %v6271 = vpack.c.b16 %v6178, %v6177
      %v6272 = vpack.c.b16 %v6180, %v6179
      %v6273 = vpack.c.b16 %v6182, %v6181
      %v6274 = vpack.c.b16 %v6184, %v6183
      %v6275 = vpack.c.b16 %v6186, %v6185
      %v6276 = vpack.c.b16 %v6188, %v6187
      %v6277 = vpack.c.b16 %v6190, %v6189
      %v6278 = vpack.c.b16 %v6192, %v6191
      %v6279 = vpack.c.b16 %v6194, %v6193
      %v6280 = vpack.c.b16 %v6196, %v6195
      %v6281 = vpack.c.b16 %v6198, %v6197
      %v6282 = vpack.c.b16 %v6200, %v6199
      %v6283 = vpack.c.b16 %v6202, %v6201
      %v6284 = vpack.c.b16 %v6204, %v6203
      %v6285 = vpack.c.b16 %v6206, %v6205
      %v6286 = vpack.c.b16 %v6208, %v6207
      %v6287 = vpack.c.b16 %v6210, %v6209
      %v6288 = vpack.c.b16 %v6212, %v6211
      %v6289 = vpack.c.b16 %v6214, %v6213
      %v6290 = vpack.c.b16 %v6216, %v6215
      %v6291 = vpack.c.b16 %v6218, %v6217
      %v6292 = vpack.c.b16 %v6220, %v6219
      %6365 = vmatprep.subr.bf16.mxu0 0
      %6366 = vmatpush1.bf16.msra.mxu0 %v6221
      %6367 = vmatprep.subr.bf16.mxu0 0
      %6368 = vmatpush1.bf16.msra.mxu0 %v6222
      %6369 = vmatprep.subr.bf16.mxu0 0
      %6370 = vmatpush1.bf16.msra.mxu0 %v6223
      %6371 = vmatprep.subr.bf16.mxu0 0
      %6372 = vmatpush1.bf16.msra.mxu0 %v6224
      %6373 = vmatprep.subr.bf16.mxu0 0
      %6374 = vmatpush1.bf16.msra.mxu0 %v6225
      %6375 = vmatprep.subr.bf16.mxu0 0
      %6376 = vmatpush1.bf16.msra.mxu0 %v6226
      %6377 = vmatprep.subr.bf16.mxu0 0
      %6378 = vmatpush1.bf16.msra.mxu0 %v6227
      %6379 = vmatprep.subr.bf16.mxu0 0
      %6380 = vmatpush1.bf16.msra.mxu0 %v6228
      %6381 = vmatprep.subr.bf16.mxu0 0
      %6382 = vmatpush1.bf16.msra.mxu0 %v6229
      %6383 = vmatprep.subr.bf16.mxu0 0
      %6384 = vmatpush1.bf16.msra.mxu0 %v6230
      %6385 = vmatprep.subr.bf16.mxu0 0
      %6386 = vmatpush1.bf16.msra.mxu0 %v6231
      %6387 = vmatprep.subr.bf16.mxu0 0
      %6388 = vmatpush1.bf16.msra.mxu0 %v6232
      %6389 = vmatprep.subr.bf16.mxu0 0
      %6390 = vmatpush1.bf16.msra.mxu0 %v6233
      %6391 = vmatprep.subr.bf16.mxu0 0
      %6392 = vmatpush1.bf16.msra.mxu0 %v6234
      %6393 = vmatprep.subr.bf16.mxu0 0
      %6394 = vmatpush1.bf16.msra.mxu0 %v6235
      %6395 = vmatprep.subr.bf16.mxu0 0
      %6396 = vmatpush1.bf16.msra.mxu0 %v6236
      %6397 = vmatprep.mubr.bf16.mxu0 %v5738
      %6398 = vmatmul.mubr.bf16.gmra.mrb[0].mxu0 %v5737
      %v6399 = vpop.f32.mrb[0].mxu0
      %v6400 = vadd.f32 %v5931, %v6399
      %v6401 = vpop.f32.mrb[0].mxu0
      %v6402 = vpop.f32.mrb[0].mxu0
      %v6403 = vadd.f32 %v5931, %v6402
      %v6404 = vpop.f32.mrb[0].mxu0
      %6405 = vmatprep.mubr.bf16.mxu0 %v5747
      %6406 = vmatmul.mubr.bf16.gmra.mrb[0].mxu0 %v5746
      %v6407 = vpop.f32.mrb[0].mxu0
      %v6408 = vadd.f32 %v5931, %v6407
      %v6409 = vpop.f32.mrb[0].mxu0
      %v6410 = vpop.f32.mrb[0].mxu0
      %v6411 = vadd.f32 %v5931, %v6410
      %v6412 = vpop.f32.mrb[0].mxu0
      %6413 = vmatprep.mubr.bf16.mxu0 %v5756
      %6414 = vmatmul.mubr.bf16.gmra.mrb[0].mxu0 %v5755
      %v6415 = vpop.f32.mrb[0].mxu0
      %v6416 = vadd.f32 %v5931, %v6415
      %v6417 = vpop.f32.mrb[0].mxu0
      %v6418 = vpop.f32.mrb[0].mxu0
      %v6419 = vadd.f32 %v5931, %v6418
      %v6420 = vpop.f32.mrb[0].mxu0
      %6421 = vmatprep.mubr.bf16.mxu0 %v5765
      %6422 = vmatmul.mubr.bf16.gmra.mrb[0].mxu0 %v5764
      %v6423 = vpop.f32.mrb[0].mxu0
      %v6424 = vadd.f32 %v5931, %v6423
      %v6425 = vpop.f32.mrb[0].mxu0
      %v6426 = vpop.f32.mrb[0].mxu0
      %v6427 = vadd.f32 %v5931, %v6426
      %v6428 = vpop.f32.mrb[0].mxu0
      %6429 = vmatprep.mubr.bf16.mxu0 %v5774
      %6430 = vmatmul.mubr.bf16.gmra.mrb[0].mxu0 %v5773
      %v6431 = vpop.f32.mrb[0].mxu0
      %v6432 = vadd.f32 %v5931, %v6431
      %v6433 = vpop.f32.mrb[0].mxu0
      %v6434 = vpop.f32.mrb[0].mxu0
      %v6435 = vadd.f32 %v5931, %v6434
      %v6436 = vpop.f32.mrb[0].mxu0
      %6437 = vdwg.mxu0
      %6438 = vmatprep.subr.bf16.mxu0 0
      %6439 = vmatpush1.bf16.msra.mxu0 %v6237
      %6440 = vmatprep.subr.bf16.mxu0 0
      %6441 = vmatpush1.bf16.msra.mxu0 %v6238
      %6442 = vmatprep.subr.bf16.mxu0 0
      %6443 = vmatpush1.bf16.msra.mxu0 %v6239
      %6444 = vmatprep.subr.bf16.mxu0 0
      %6445 = vmatpush1.bf16.msra.mxu0 %v6240
      %6446 = vmatprep.subr.bf16.mxu0 0
      %6447 = vmatpush1.bf16.msra.mxu0 %v6241
      %6448 = vmatprep.subr.bf16.mxu0 0
      %6449 = vmatpush1.bf16.msra.mxu0 %v6242
      %6450 = vmatprep.subr.bf16.mxu0 0
      %6451 = vmatpush1.bf16.msra.mxu0 %v6243
      %6452 = vmatprep.subr.bf16.mxu0 0
      %6453 = vmatpush1.bf16.msra.mxu0 %v6244
      %6454 = vmatprep.subr.bf16.mxu0 0
      %6455 = vmatpush1.bf16.msra.mxu0 %v6245
      %6456 = vmatprep.subr.bf16.mxu0 0
      %6457 = vmatpush1.bf16.msra.mxu0 %v6246
      %6458 = vmatprep.subr.bf16.mxu0 0
      %6459 = vmatpush1.bf16.msra.mxu0 %v6247
      %6460 = vmatprep.subr.bf16.mxu0 0
      %6461 = vmatpush1.bf16.msra.mxu0 %v6248
      %6462 = vmatprep.subr.bf16.mxu0 0
      %6463 = vmatpush1.bf16.msra.mxu0 %v6249
      %6464 = vmatprep.subr.bf16.mxu0 0
      %6465 = vmatpush1.bf16.msra.mxu0 %v6250
      %6466 = vmatprep.subr.bf16.mxu0 0
      %6467 = vmatpush1.bf16.msra.mxu0 %v6251
      %6468 = vmatprep.subr.bf16.mxu0 0
      %6469 = vmatpush1.bf16.msra.mxu0 %v6252
      %6470 = vmatprep.mubr.bf16.mxu0 %v5740
      %6471 = vmatmul.mubr.bf16.gmra.mrb[0].mxu0 %v5739
      %v6472 = vpop.f32.mrb[0].mxu0
      %v6473 = vadd.f32 %v6400, %v6472
      %v6474 = vpop.f32.mrb[0].mxu0
      %v6475 = vpop.f32.mrb[0].mxu0
      %v6476 = vadd.f32 %v6403, %v6475
      %v6477 = vpop.f32.mrb[0].mxu0
      %6478 = vmatprep.mubr.bf16.mxu0 %v5749
      %6479 = vmatmul.mubr.bf16.gmra.mrb[0].mxu0 %v5748
      %v6480 = vpop.f32.mrb[0].mxu0
      %v6481 = vadd.f32 %v6408, %v6480
      %v6482 = vpop.f32.mrb[0].mxu0
      %v6483 = vpop.f32.mrb[0].mxu0
      %v6484 = vadd.f32 %v6411, %v6483
      %v6485 = vpop.f32.mrb[0].mxu0
      %6486 = vmatprep.mubr.bf16.mxu0 %v5758
      %6487 = vmatmul.mubr.bf16.gmra.mrb[0].mxu0 %v5757
      %v6488 = vpop.f32.mrb[0].mxu0
      %v6489 = vadd.f32 %v6416, %v6488
      %v6490 = vpop.f32.mrb[0].mxu0
      %v6491 = vpop.f32.mrb[0].mxu0
      %v6492 = vadd.f32 %v6419, %v6491
      %v6493 = vpop.f32.mrb[0].mxu0
      %6494 = vmatprep.mubr.bf16.mxu0 %v5767
      %6495 = vmatmul.mubr.bf16.gmra.mrb[0].mxu0 %v5766
      %v6496 = vpop.f32.mrb[0].mxu0
      %v6497 = vadd.f32 %v6424, %v6496
      %v6498 = vpop.f32.mrb[0].mxu0
      %v6499 = vpop.f32.mrb[0].mxu0
      %v6500 = vadd.f32 %v6427, %v6499
      %v6501 = vpop.f32.mrb[0].mxu0
      %6502 = vmatprep.mubr.bf16.mxu0 %v5776
      %6503 = vmatmul.mubr.bf16.gmra.mrb[0].mxu0 %v5775
      %v6504 = vpop.f32.mrb[0].mxu0
      %v6505 = vadd.f32 %v6432, %v6504
      %v6506 = vpop.f32.mrb[0].mxu0
      %v6507 = vpop.f32.mrb[0].mxu0
      %v6508 = vadd.f32 %v6435, %v6507
      %v6509 = vpop.f32.mrb[0].mxu0
      %6510 = vdwg.mxu0
      %6511 = vmatprep.subr.bf16.mxu0 0
      %6512 = vmatpush1.bf16.msra.mxu0 %v6253
      %6513 = vmatprep.subr.bf16.mxu0 0
      %6514 = vmatpush1.bf16.msra.mxu0 %v6254
      %6515 = vmatprep.subr.bf16.mxu0 0
      %6516 = vmatpush1.bf16.msra.mxu0 %v6255
      %6517 = vmatprep.subr.bf16.mxu0 0
      %6518 = vmatpush1.bf16.msra.mxu0 %v6256
      %6519 = vmatprep.subr.bf16.mxu0 0
      %6520 = vmatpush1.bf16.msra.mxu0 %v6257
      %6521 = vmatprep.subr.bf16.mxu0 0
      %6522 = vmatpush1.bf16.msra.mxu0 %v6258
      %6523 = vmatprep.subr.bf16.mxu0 0
      %6524 = vmatpush1.bf16.msra.mxu0 %v6259
      %6525 = vmatprep.subr.bf16.mxu0 0
      %6526 = vmatpush1.bf16.msra.mxu0 %v6260
      %6527 = vmatprep.subr.bf16.mxu0 0
      %6528 = vmatpush1.bf16.msra.mxu0 %v6261
      %6529 = vmatprep.subr.bf16.mxu0 0
      %6530 = vmatpush1.bf16.msra.mxu0 %v6262
      %6531 = vmatprep.subr.bf16.mxu0 0
      %6532 = vmatpush1.bf16.msra.mxu0 %v6263
      %6533 = vmatprep.subr.bf16.mxu0 0
      %6534 = vmatpush1.bf16.msra.mxu0 %v6264
      %6535 = vmatprep.subr.bf16.mxu0 0
      %6536 = vmatpush1.bf16.msra.mxu0 %v6265
      %6537 = vmatprep.subr.bf16.mxu0 0
      %6538 = vmatpush1.bf16.msra.mxu0 %v6266
      %6539 = vmatprep.subr.bf16.mxu0 0
      %6540 = vmatpush1.bf16.msra.mxu0 %v6267
      %6541 = vmatprep.subr.bf16.mxu0 0
      %6542 = vmatpush1.bf16.msra.mxu0 %v6268
      %6543 = vmatprep.mubr.bf16.mxu0 %v5742
      %6544 = vmatmul.mubr.bf16.gmra.mrb[0].mxu0 %v5741
      %v6545 = vpop.f32.mrb[0].mxu0
      %v6546 = vadd.f32 %v6473, %v6545
      %v6547 = vpop.f32.mrb[0].mxu0
      %v6548 = vpop.f32.mrb[0].mxu0
      %v6549 = vadd.f32 %v6476, %v6548
      %v6550 = vpop.f32.mrb[0].mxu0
      %6551 = vmatprep.mubr.bf16.mxu0 %v5751
      %6552 = vmatmul.mubr.bf16.gmra.mrb[0].mxu0 %v5750
      %v6553 = vpop.f32.mrb[0].mxu0
      %v6554 = vadd.f32 %v6481, %v6553
      %v6555 = vpop.f32.mrb[0].mxu0
      %v6556 = vpop.f32.mrb[0].mxu0
      %v6557 = vadd.f32 %v6484, %v6556
      %v6558 = vpop.f32.mrb[0].mxu0
      %6559 = vmatprep.mubr.bf16.mxu0 %v5760
      %6560 = vmatmul.mubr.bf16.gmra.mrb[0].mxu0 %v5759
      %v6561 = vpop.f32.mrb[0].mxu0
      %v6562 = vadd.f32 %v6489, %v6561
      %v6563 = vpop.f32.mrb[0].mxu0
      %v6564 = vpop.f32.mrb[0].mxu0
      %v6565 = vadd.f32 %v6492, %v6564
      %v6566 = vpop.f32.mrb[0].mxu0
      %6567 = vmatprep.mubr.bf16.mxu0 %v5769
      %6568 = vmatmul.mubr.bf16.gmra.mrb[0].mxu0 %v5768
      %v6569 = vpop.f32.mrb[0].mxu0
      %v6570 = vadd.f32 %v6497, %v6569
      %v6571 = vpop.f32.mrb[0].mxu0
      %v6572 = vpop.f32.mrb[0].mxu0
      %v6573 = vadd.f32 %v6500, %v6572
      %v6574 = vpop.f32.mrb[0].mxu0
      %6575 = vmatprep.mubr.bf16.mxu0 %v5778
      %6576 = vmatmul.mubr.bf16.gmra.mrb[0].mxu0 %v5777
      %v6577 = vpop.f32.mrb[0].mxu0
      %v6578 = vadd.f32 %v6505, %v6577
      %v6579 = vpop.f32.mrb[0].mxu0
      %v6580 = vpop.f32.mrb[0].mxu0
      %v6581 = vadd.f32 %v6508, %v6580
      %v6582 = vpop.f32.mrb[0].mxu0
      %6583 = vdwg.mxu0
      %6584 = vmatprep.subr.bf16.mxu0 0
      %6585 = vmatpush1.bf16.msra.mxu0 %v6269
      %6586 = vmatprep.subr.bf16.mxu0 0
      %6587 = vmatpush1.bf16.msra.mxu0 %v6270
      %6588 = vmatprep.subr.bf16.mxu0 0
      %6589 = vmatpush1.bf16.msra.mxu0 %v6271
      %6590 = vmatprep.subr.bf16.mxu0 0
      %6591 = vmatpush1.bf16.msra.mxu0 %v6272
      %6592 = vmatprep.subr.bf16.mxu0 0
      %6593 = vmatpush1.bf16.msra.mxu0 %v6273
      %6594 = vmatprep.subr.bf16.mxu0 0
      %6595 = vmatpush1.bf16.msra.mxu0 %v6274
      %6596 = vmatprep.subr.bf16.mxu0 0
      %6597 = vmatpush1.bf16.msra.mxu0 %v6275
      %6598 = vmatprep.subr.bf16.mxu0 0
      %6599 = vmatpush1.bf16.msra.mxu0 %v6276
      %6600 = vmatprep.subr.bf16.mxu0 0
      %6601 = vmatpush1.bf16.msra.mxu0 %v6277
      %6602 = vmatprep.subr.bf16.mxu0 0
      %6603 = vmatpush1.bf16.msra.mxu0 %v6278
      %6604 = vmatprep.subr.bf16.mxu0 0
      %6605 = vmatpush1.bf16.msra.mxu0 %v6279
      %6606 = vmatprep.subr.bf16.mxu0 0
      %6607 = vmatpush1.bf16.msra.mxu0 %v6280
      %6608 = vmatprep.subr.bf16.mxu0 0
      %6609 = vmatpush1.bf16.msra.mxu0 %v6281
      %6610 = vmatprep.subr.bf16.mxu0 0
      %6611 = vmatpush1.bf16.msra.mxu0 %v6282
      %6612 = vmatprep.subr.bf16.mxu0 0
      %6613 = vmatpush1.bf16.msra.mxu0 %v6283
      %6614 = vmatprep.subr.bf16.mxu0 0
      %6615 = vmatpush1.bf16.msra.mxu0 %v6284
      %6616 = vmatprep.mubr.bf16.mxu0 %v5744
      %6617 = vmatmul.mubr.bf16.gmra.mrb[0].mxu0 %v5743
      %v6618 = vpop.f32.mrb[0].mxu0
      %v6619 = vadd.f32 %v6546, %v6618
      %v6620 = vpop.f32.mrb[0].mxu0
      %v6621 = vpop.f32.mrb[0].mxu0
      %v6622 = vadd.f32 %v6549, %v6621
      %v6623 = vpop.f32.mrb[0].mxu0
      %6624 = vmatprep.mubr.bf16.mxu0 %v5753
      %6625 = vmatmul.mubr.bf16.gmra.mrb[0].mxu0 %v5752
      %v6626 = vpop.f32.mrb[0].mxu0
      %v6627 = vadd.f32 %v6554, %v6626
      %v6628 = vpop.f32.mrb[0].mxu0
      %v6629 = vpop.f32.mrb[0].mxu0
      %v6630 = vadd.f32 %v6557, %v6629
      %v6631 = vpop.f32.mrb[0].mxu0
      %6632 = vmatprep.mubr.bf16.mxu0 %v5762
      %6633 = vmatmul.mubr.bf16.gmra.mrb[0].mxu0 %v5761
      %v6634 = vpop.f32.mrb[0].mxu0
      %v6635 = vadd.f32 %v6562, %v6634
      %v6636 = vpop.f32.mrb[0].mxu0
      %v6637 = vpop.f32.mrb[0].mxu0
      %v6638 = vadd.f32 %v6565, %v6637
      %v6639 = vpop.f32.mrb[0].mxu0
      %6640 = vmatprep.mubr.bf16.mxu0 %v5771
      %6641 = vmatmul.mubr.bf16.gmra.mrb[0].mxu0 %v5770
      %v6642 = vpop.f32.mrb[0].mxu0
      %v6643 = vadd.f32 %v6570, %v6642
      %v6644 = vpop.f32.mrb[0].mxu0
      %v6645 = vpop.f32.mrb[0].mxu0
      %v6646 = vadd.f32 %v6573, %v6645
      %v6647 = vpop.f32.mrb[0].mxu0
      %6648 = vmatprep.mubr.bf16.mxu0 %v5780
      %6649 = vmatmul.mubr.bf16.gmra.mrb[0].mxu0 %v5779
      %v6650 = vpop.f32.mrb[0].mxu0
      %v6651 = vadd.f32 %v6578, %v6650
      %v6652 = vpop.f32.mrb[0].mxu0
      %v6653 = vpop.f32.mrb[0].mxu0
      %v6654 = vadd.f32 %v6581, %v6653
      %v6655 = vpop.f32.mrb[0].mxu0
      %6656 = vdwg.mxu0
      %6657 = vmatprep.subr.bf16.mxu0 0
      %6658 = vmatpush1.bf16.msra.mxu0 %v6285
      %6659 = vmatprep.subr.bf16.mxu0 0
      %6660 = vmatpush1.bf16.msra.mxu0 %v6286
      %6661 = vmatprep.subr.bf16.mxu0 0
      %6662 = vmatpush1.bf16.msra.mxu0 %v6287
      %6663 = vmatprep.subr.bf16.mxu0 0
      %6664 = vmatpush1.bf16.msra.mxu0 %v6288
      %6665 = vmatprep.subr.bf16.mxu0 0
      %6666 = vmatpush1.bf16.msra.mxu0 %v6289
      %6667 = vmatprep.subr.bf16.mxu0 0
      %6668 = vmatpush1.bf16.msra.mxu0 %v6290
      %6669 = vmatprep.subr.bf16.mxu0 0
      %6670 = vmatpush1.bf16.msra.mxu0 %v6291
      %6671 = vmatprep.subr.bf16.mxu0 0
      %6672 = vmatpush1.bf16.msra.mxu0 %v6292
      %6673 = vmatprep.subr.bf16.mxu0 0
      %6674 = vmatpush1.bf16.msra.mxu0 0
      %6675 = vmatprep.subr.bf16.mxu0 0
      %6676 = vmatpush1.bf16.msra.mxu0 0
      %6677 = vmatprep.subr.bf16.mxu0 0
      %6678 = vmatpush1.bf16.msra.mxu0 0
      %6679 = vmatprep.subr.bf16.mxu0 0
      %6680 = vmatpush1.bf16.msra.mxu0 0
      %6681 = vmatprep.subr.bf16.mxu0 0
      %6682 = vmatpush1.bf16.msra.mxu0 0
      %6683 = vmatprep.subr.bf16.mxu0 0
      %6684 = vmatpush1.bf16.msra.mxu0 0
      %6685 = vmatprep.subr.bf16.mxu0 0
      %6686 = vmatpush1.bf16.msra.mxu0 0
      %6687 = vmatprep.subr.bf16.mxu0 0
      %6688 = vmatpush1.bf16.msra.mxu0 0
      %6689 = vmatprep.mubr.bf16.mxu0 0
      %6690 = vmatmul.mubr.bf16.gmra.mrb[0].mxu0 %v5745
      %v6691 = vpop.f32.mrb[0].mxu0
      %v6692 = vadd.f32 %v6619, %v6691
      %v6693 = vpop.f32.mrb[0].mxu0
      %v6694 = vpop.f32.mrb[0].mxu0
      %v6695 = vadd.f32 %v6622, %v6694
      %v6696 = vpop.f32.mrb[0].mxu0
      %6697 = vmatprep.mubr.bf16.mxu0 0
      %6698 = vmatmul.mubr.bf16.gmra.mrb[0].mxu0 %v5754
      %v6699 = vpop.f32.mrb[0].mxu0
      %v6700 = vadd.f32 %v6627, %v6699
      %v6701 = vpop.f32.mrb[0].mxu0
      %v6702 = vpop.f32.mrb[0].mxu0
      %v6703 = vadd.f32 %v6630, %v6702
      %v6704 = vpop.f32.mrb[0].mxu0
      %6705 = vmatprep.mubr.bf16.mxu0 0
      %6706 = vmatmul.mubr.bf16.gmra.mrb[0].mxu0 %v5763
      %v6707 = vpop.f32.mrb[0].mxu0
      %v6708 = vadd.f32 %v6635, %v6707
      %v6709 = vpop.f32.mrb[0].mxu0
      %v6710 = vpop.f32.mrb[0].mxu0
      %v6711 = vadd.f32 %v6638, %v6710
      %v6712 = vpop.f32.mrb[0].mxu0
      %6713 = vmatprep.mubr.bf16.mxu0 0
      %6714 = vmatmul.mubr.bf16.gmra.mrb[0].mxu0 %v5772
      %v6715 = vpop.f32.mrb[0].mxu0
      %v6716 = vadd.f32 %v6643, %v6715
      %v6717 = vpop.f32.mrb[0].mxu0
      %v6718 = vpop.f32.mrb[0].mxu0
      %v6719 = vadd.f32 %v6646, %v6718
      %v6720 = vpop.f32.mrb[0].mxu0
      %6721 = vmatprep.mubr.bf16.mxu0 0
      %6722 = vmatmul.mubr.bf16.gmra.mrb[0].mxu0 %v5781
      %v6723 = vpop.f32.mrb[0].mxu0
      %v6724 = vadd.f32 %v6651, %v6723
      %v6725 = vpop.f32.mrb[0].mxu0
      %v6726 = vpop.f32.mrb[0].mxu0
      %v6727 = vadd.f32 %v6654, %v6726
      %v6728 = vpop.f32.mrb[0].mxu0
      %6729 = vdwg.mxu0
      %v6730 = vadd.f32 %v6692, %v4232
      %v6731 = vadd.f32 %v6695, %v4233
      %v6732 = vadd.f32 %v6700, %v4234
      %v6733 = vadd.f32 %v6703, %v4235
      %v6734 = vadd.f32 %v6708, %v4236
      %v6735 = vadd.f32 %v6711, %v4237
      %v6736 = vadd.f32 %v6716, %v4238
      %v6737 = vadd.f32 %v6719, %v4239
      %v6738 = vadd.f32 %v6724, %v4240
      %v6739 = vadd.f32 %v6727, %v4241
      %v6740 = vmax.f32 %v6730, 0.0
      %v6741 = vmax.f32 %v6731, 0.0
      %v6742 = vmax.f32 %v6732, 0.0
      %v6743 = vmax.f32 %v6733, 0.0
      %v6744 = vmax.f32 %v6734, 0.0
      %v6745 = vmax.f32 %v6735, 0.0
      %v6746 = vmax.f32 %v6736, 0.0
      %v6747 = vmax.f32 %v6737, 0.0
      %v6748 = vmax.f32 %v6738, 0.0
      %v6749 = vmax.f32 %v6739, 0.0
      %v6750 = vmul.f32 %v6740, %v2176
      %v6751 = vmul.f32 %v6741, %v2181
      %v6752 = vmul.f32 %v6742, %v2186
      %v6753 = vmul.f32 %v6743, %v2191
      %v6754 = vmul.f32 %v6744, %v2196
      %v6755 = vmul.f32 %v6745, %v2201
      %v6756 = vmul.f32 %v6746, %v2206
      %v6757 = vmul.f32 %v6747, %v2211
      %v6758 = vmul.f32 %v6748, %v2216
      %v6759 = vmul.f32 %v6749, %v2221
      %6760 = vst [vmem:[%s413] sm:$0xff] %v6750
      %6761 = vst [vmem:[%s413 + $0x8] sm:$0xff] %v6751
      %6762 = vst [vmem:[%s413 + $0x10] sm:$0xff] %v6752
      %6763 = vst [vmem:[%s413 + $0x18] sm:$0xff] %v6753
      %6764 = vst [vmem:[%s413 + $0x20] sm:$0xff] %v6754
      %6765 = vst [vmem:[%s413 + $0x28] sm:$0xff] %v6755
      %6766 = vst [vmem:[%s413 + $0x30] sm:$0xff] %v6756
      %6767 = vst [vmem:[%s413 + $0x38] sm:$0xff] %v6757
      %6768 = vst [vmem:[%s413 + $0x40] sm:$0xff] %v6758
      %6769 = vst [vmem:[%s413 + $0x48] sm:$0xff] %v6759
      %p6770 = scmp.lt.s32.totalorder %s23, 1
      %s6771 = scalar_select %p6770, %s23, 1
      %s6772 = smul.addr %s6771, 10
      %s6773 = smul.addr %s6772, 8
      %s6774 = scalar_lea.vmem %s12, %s6773
      // Predicated region
      $region69: #{basic_layer_forward.1} parent=67 // pred_check
        %p6775 = pneg %p298
      $region70: #{basic_layer_forward.1} parent=67 // pred_check_branch
        %6777 = sbr.rel (%p6775) target = $region72
      $region71: #{basic_layer_forward.1} parent=67 // pred_region
        _
      $region72: #{basic_layer_forward.1} parent=67 // pred_fallthru
        _
    $region68: #{basic_layer_forward.1} parent=5 // pred_fallthru
      _
    %p6778 = scmp.le.s32.totalorder 2, %s18
    // Predicated region
    $region73: #{basic_layer_forward.1} parent=5 // pred_check
      %p6779 = pneg %p6778
    $region74: #{basic_layer_forward.1} parent=5 // pred_check_branch
      %6781 = sbr.rel (%p6779) target = $region76
    $region75: #{basic_layer_forward.1} parent=5 // pred_region
      %s6782 = ssub.s32 %s18, 2
      // Predicated region
      $region77: #{basic_layer_forward.1} parent=75 // pred_check
        %p6783 = pneg %p304
      $region78: #{basic_layer_forward.1} parent=75 // pred_check_branch
        %6785 = sbr.rel (%p6783) target = $region80
      $region79: #{basic_layer_forward.1} parent=75 // pred_region
        %p6786 = scmp.lt.s32.totalorder %s24, 1
        %s6787 = scalar_select %p6786, %s24, 1
        %s6788 = smul.addr %s6787, 10
        %s6789 = smul.addr %s6788, 8
        %s6790 = scalar_lea.vmem %s12, %s6789
      $region80: #{basic_layer_forward.1} parent=75 // pred_fallthru
        _
    $region76: #{basic_layer_forward.1} parent=5 // pred_fallthru
      _
  $region6: #{basic_layer_forward.1} parent=0 // loop_footer
    %s22 = sadd.s32 1, %s18
  $region7: #{basic_layer_forward.1} parent=0 // loop_footer_branch
    %17 = sbr.rel target = $region3
  $region8: #{basic_layer_forward.1} parent=0 // loop_exit
    _

</llo_original>
